<compile_context>
chip_gen: v5e
topology: v5e:2x2
jax: 0.10.0
libtpu: 0.0.40
codegen_flags: <defaults>
</compile_context>

<pallas_src>
import functools

import numpy as np
import jax
import jax.numpy as jnp
from jax.experimental import pallas as pl
from jax.experimental.pallas import tpu as pltpu

# ----------------------------------------------------------------------------- geometry
C_IN, IMG = 4, 16
C1, C2, K, STRIDE = 8, 16, 3, 2
OH1 = (IMG - K) // STRIDE + 1          # 7
OH2 = (OH1 - K) // STRIDE + 1          # 3
HID = 32
N_ACT = 6
LANES = 128
NEG = -1e30

# output slab lane layout: [ h_new (0:32) | value (32) | logits (33:39) | logp (39) | action (40) | 0 ]
VAL_LANE = HID
LOGIT0 = HID + 1
LOGP_LANE = LOGIT0 + N_ACT
ACT_LANE = LOGP_LANE + 1

VMEM = pl.BlockSpec(memory_space=pltpu.MemorySpace.VMEM)


def _round_up(n, m):
    return (n + m - 1) // m * m


# ----------------------------------------------------------------------------- packed-slab layout
def _layout(batch):
    """Row offsets (all 8-aligned) of every section inside the single weight slab."""
    L = {"batch": batch,
         "b_pad": _round_up(batch, 8),
         "p1": batch * OH1 * OH1,
         "p2": batch * OH2 * OH2}
    L["p1_pad"] = _round_up(L["p1"], 8)
    L["p2_pad"] = _round_up(L["p2"], 8)
    L["width"] = _round_up(max(OH2 * OH2 * HID, K * K * C2, L["p1_pad"], LANES), LANES)
    off = 0
    for name, rows in (("w1", C_IN * K * K),          # conv1 weight (36, 8)
                       ("w2", C1),                    # conv2 taps lane-concat (8, 144)
                       ("wfc", C2),                   # fc positions lane-concat (16, 288)
                       ("wih", HID),                  # GRU input->gates (32, 128)
                       ("whh", HID),                  # GRU hidden->gates (32, 128)
                       ("whd", HID),                  # identity-augmented heads (32, 128)
                       ("bias", 8),                   # one bias per row: b1,b2,bfc,bg,bhd
                       ("selg", K * K * L["p2_pad"]),  # conv2 patch-gather selection
                       ("sels", OH2 * OH2 * L["b_pad"])):  # fc spatial-flatten selection
        L[name] = off
        off += _round_up(rows, 8)
    L["rows"] = off
    return L


# ----------------------------------------------------------------------------- fused kernel
def _fused_forward_kernel(w_ref, d_ref, out_ref, *, L, values_only, sample):
    f32 = jnp.float32
    b_pad, p1_pad, p2_pad = L["b_pad"], L["p1_pad"], L["p2_pad"]

    # --- static views into the packed slabs (zero runtime cost) ---------------
    biases = w_ref[L["bias"]:L["bias"] + 8, :]
    b1 = biases[0:1, 0:C1]
    b2 = biases[1:2, 0:C2]
    bfc = biases[2:3, 0:HID]
    bg = biases[3:4, 0:LANES]
    bhd = biases[4:5, 0:LANES]

    patches = d_ref[0:p1_pad, 0:C_IN * K * K]                       # (P1_pad, 36)
    h = d_ref[p1_pad:p1_pad + b_pad, 0:HID]                         # (B_pad, 32)

    # --- conv1: im2col patches @ (36,8) + bias, ReLU (channel-last rows) ------
    w1 = w_ref[L["w1"]:L["w1"] + C_IN * K * K, 0:C1]
    y1 = jnp.maximum(jnp.dot(patches, w1, preferred_element_type=f32) + b1, 0.0)

    # --- conv2 (tap-reassociated): one wide weight matmul + 9 selection matmuls
    w2 = w_ref[L["w2"]:L["w2"] + C1, 0:K * K * C2]                  # (8, 144)
    z2 = jnp.dot(y1, w2, preferred_element_type=f32)                # (P1_pad, 144)
    acc2 = jnp.zeros((p2_pad, C2), f32)
    for t in range(K * K):
        g = w_ref[L["selg"] + t * p2_pad:L["selg"] + (t + 1) * p2_pad, 0:p1_pad]
        acc2 = acc2 + jnp.dot(g, z2[:, t * C2:(t + 1) * C2], preferred_element_type=f32)
    y2 = jnp.maximum(acc2 + b2, 0.0)                                # (P2_pad, 16)

    # --- fc (tap-reassociated): one wide weight matmul + 9 selection matmuls --
    wfc = w_ref[L["wfc"]:L["wfc"] + C2, 0:OH2 * OH2 * HID]          # (16, 288)
    zf = jnp.dot(y2, wfc, preferred_element_type=f32)               # (P2_pad, 288)
    accf = jnp.zeros((b_pad, HID), f32)
    for pos in range(OH2 * OH2):
        s = w_ref[L["sels"] + pos * b_pad:L["sels"] + (pos + 1) * b_pad, 0:p2_pad]
        accf = accf + jnp.dot(s, zf[:, pos * HID:(pos + 1) * HID], preferred_element_type=f32)
    x = jnp.maximum(accf + bfc, 0.0)                                # (B_pad, 32)

    # --- GRU cell: 2 fused gate matmuls -> [r | z | i_n | h_n] on 128 lanes ---
    wih = w_ref[L["wih"]:L["wih"] + HID, 0:LANES]
    whh = w_ref[L["whh"]:L["whh"] + HID, 0:LANES]
    gates = (jnp.dot(x, wih, preferred_element_type=f32)
             + jnp.dot(h, whh, preferred_element_type=f32) + bg)    # (B_pad, 128)
    r = jax.nn.sigmoid(gates[:, 0:HID])
    z = jax.nn.sigmoid(gates[:, HID:2 * HID])
    n = jnp.tanh(gates[:, 2 * HID:3 * HID] + r * gates[:, 3 * HID:4 * HID])
    h_new = (1.0 - z) * n + z * h                                   # (B_pad, 32)

    # --- heads: identity-augmented weight -> [h_new | value | logits | 0] -----
    whd = w_ref[L["whd"]:L["whd"] + HID, 0:LANES]
    heads = jnp.dot(h_new, whd, preferred_element_type=f32) + bhd   # (B_pad, 128)

    if values_only or not sample:
        out_ref[...] = heads                                        # single lane-dense store
        return

    # --- log-softmax over actor lanes + Gumbel-max sampling -------------------
    lane = jax.lax.broadcasted_iota(jnp.int32, (b_pad, LANES), 1)
    amask = (lane >= LOGIT0) & (lane < LOGIT0 + N_ACT)
    ml = jnp.where(amask, heads, NEG)
    m = jnp.max(ml, axis=-1, keepdims=True)
    log_sm = ml - m - jnp.log(jnp.sum(jnp.exp(ml - m), axis=-1, keepdims=True))

    gum = d_ref[p1_pad + b_pad:p1_pad + 2 * b_pad, 0:LANES]         # host-side Gumbel noise
    pert = jnp.where(amask, heads + gum, NEG)
    pmax = jnp.max(pert, axis=-1, keepdims=True)
    hit = (pert >= pmax) & amask
    a_lane = jnp.min(jnp.where(hit, lane, LANES), axis=-1, keepdims=True)     # in LOGIT0..LOGIT0+5
    logp = jnp.sum(jnp.where(lane == a_lane, log_sm, 0.0), axis=-1, keepdims=True)
    act_f = (a_lane - LOGIT0).astype(f32)

    out_ref[...] = jnp.where(lane == LOGP_LANE, logp,
                             jnp.where(lane == ACT_LANE, act_f, heads))


# ----------------------------------------------------------------------------- parameter packing
def init_params(key):
    # Deterministic synthetic weights in PyTorch layout; biases zero
    # (matches initialize_weights bias fill_(0)).
    ks = jax.random.split(key, 8)

    def w(k, shape, scale=0.1):
        return (scale * jax.random.normal(k, shape)).astype(jnp.float32)

    return dict(
        conv1_w=w(ks[0], (C1, C_IN, K, K)), conv1_b=jnp.zeros((C1,), jnp.float32),
        conv2_w=w(ks[1], (C2, C1, K, K)),   conv2_b=jnp.zeros((C2,), jnp.float32),
        fc_w=w(ks[2], (HID, C2 * OH2 * OH2)), fc_b=jnp.zeros((HID,), jnp.float32),
        gru_wih=w(ks[3], (3 * HID, HID)),   gru_whh=w(ks[4], (3 * HID, HID)),
        gru_bih=jnp.zeros((3 * HID,), jnp.float32), gru_bhh=jnp.zeros((3 * HID,), jnp.float32),
        critic_w=w(ks[5], (1, HID)), critic_b=jnp.zeros((1,), jnp.float32),
        actor_w=w(ks[6], (N_ACT, HID)), actor_b=jnp.zeros((N_ACT,), jnp.float32),
    )


def prepare_params(p, batch):
    """One-time packing of PyTorch-style parameters (pre-transposed, tap/gate
    concatenated, identity-augmented heads) + constant 0/1 selection matrices
    into a single lane-padded f32 slab -> one HBM->VMEM DMA per forward call."""
    L = _layout(batch)
    slab = np.zeros((L["rows"], L["width"]), np.float32)

    # conv1: (Cin*K*K, C1); patch feature order (ci, di, dj) matches torch weight layout
    slab[L["w1"]:L["w1"] + C_IN * K * K, 0:C1] = np.asarray(p["conv1_w"]).reshape(C1, -1).T
    # conv2 taps lane-concatenated: w2cat[ci, t*C2 + co] = conv2_w[co, ci, di, dj], t = di*K + dj
    w2 = np.transpose(np.asarray(p["conv2_w"]), (2, 3, 1, 0)).reshape(K * K, C1, C2)
    slab[L["w2"]:L["w2"] + C1, 0:K * K * C2] = np.transpose(w2, (1, 0, 2)).reshape(C1, K * K * C2)
    # fc positions lane-concatenated: wfc_cat[c, p*HID + h] = fc_w[h, c*9 + p]
    wfc = np.asarray(p["fc_w"]).reshape(HID, C2, OH2 * OH2)
    slab[L["wfc"]:L["wfc"] + C2, 0:OH2 * OH2 * HID] = \
        np.transpose(wfc, (1, 2, 0)).reshape(C2, OH2 * OH2 * HID)

    # GRU: gate lanes [r | z | i_n | h_n]; i_n / h_n kept separate (nn.GRUCell semantics)
    wih = np.asarray(p["gru_wih"]).reshape(3, HID, HID)
    whh = np.asarray(p["gru_whh"]).reshape(3, HID, HID)
    bih = np.asarray(p["gru_bih"]).reshape(3, HID)
    bhh = np.asarray(p["gru_bhh"]).reshape(3, HID)
    for g, lane0 in ((0, 0), (1, HID), (2, 2 * HID)):
        slab[L["wih"]:L["wih"] + HID, lane0:lane0 + HID] = wih[g].T
    for g, lane0 in ((0, 0), (1, HID), (2, 3 * HID)):
        slab[L["whh"]:L["whh"] + HID, lane0:lane0 + HID] = whh[g].T
    b_gates = np.zeros((LANES,), np.float32)
    b_gates[0:HID] = bih[0] + bhh[0]
    b_gates[HID:2 * HID] = bih[1] + bhh[1]
    b_gates[2 * HID:3 * HID] = bih[2]
    b_gates[3 * HID:4 * HID] = bhh[2]

    # heads: identity block copies h_new through the same MXU pass; critic/actor columns follow
    whd = np.zeros((HID, LANES), np.float32)
    whd[:, 0:HID] = np.eye(HID, dtype=np.float32)
    whd[:, VAL_LANE] = np.asarray(p["critic_w"])[0]
    whd[:, LOGIT0:LOGIT0 + N_ACT] = np.asarray(p["actor_w"]).T
    slab[L["whd"]:L["whd"] + HID, 0:LANES] = whd
    b_heads = np.zeros((LANES,), np.float32)
    b_heads[VAL_LANE] = np.asarray(p["critic_b"])[0]
    b_heads[LOGIT0:LOGIT0 + N_ACT] = np.asarray(p["actor_b"])

    # bias block: one bias per row
    slab[L["bias"] + 0, 0:C1] = np.asarray(p["conv1_b"])
    slab[L["bias"] + 1, 0:C2] = np.asarray(p["conv2_b"])
    slab[L["bias"] + 2, 0:HID] = np.asarray(p["fc_b"])
    slab[L["bias"] + 3, 0:LANES] = b_gates
    slab[L["bias"] + 4, 0:LANES] = b_heads

    # constant 0/1 selection matrices: conv2 strided patch gather, fc spatial flatten.
    # (Large-batch: make these batch-tile-local with a constant index_map instead.)
    for di in range(K):
        for dj in range(K):
            t = di * K + dj
            base = L["selg"] + t * L["p2_pad"]
            for b in range(batch):
                for oi in range(OH2):
                    for oj in range(OH2):
                        r_out = b * OH2 * OH2 + oi * OH2 + oj
                        r_in = b * OH1 * OH1 + (STRIDE * oi + di) * OH1 + (STRIDE * oj + dj)
                        slab[base + r_out, r_in] = 1.0
    for pos in range(OH2 * OH2):
        base = L["sels"] + pos * L["b_pad"]
        for b in range(batch):
            slab[base + b, b * OH2 * OH2 + pos] = 1.0

    return jnp.asarray(slab)


# ----------------------------------------------------------------------------- wrapper
def _im2col_nchw(x, kh, kw, stride):
    # Runs once on the raw observation (layout plumbing on an *input*); all
    # inter-layer activations stay inside the fused kernel / VMEM.
    B, C, H, W = x.shape
    oh = (H - kh) // stride + 1
    ow = (W - kw) // stride + 1
    cols = []
    for di in range(kh):
        for dj in range(kw):
            cols.append(x[:, :, di:di + stride * (oh - 1) + 1:stride,
                              dj:dj + stride * (ow - 1) + 1:stride])
    p = jnp.stack(cols, axis=2)                      # (B, C, kh*kw, oh, ow)
    p = p.reshape(B, C * kh * kw, oh * ow)
    p = p.transpose(0, 2, 1).reshape(B * oh * ow, C * kh * kw)
    return p                                          # col order matches torch (Cin, kh, kw)


@functools.partial(jax.jit, static_argnames=("values_only", "sample_actions"))
def actor_critic_forward(w_slab, obs, rnn_states, gumbel=None,
                         values_only=False, sample_actions=True):
    """Mirrors _ActorCriticSharedWeights.forward(normalized_obs_dict, rnn_states)."""
    B = obs.shape[0]
    L = _layout(B)
    sample = bool(sample_actions) and not values_only

    # single per-step data slab: [ im2col patches | rnn state | (gumbel noise) ]
    patches = _im2col_nchw(obs, K, K, STRIDE)                                   # (B*49, 36)
    d_rows = L["p1_pad"] + L["b_pad"] + (L["b_pad"] if sample else 0)
    data = jnp.zeros((d_rows, LANES), jnp.float32)
    data = data.at[:patches.shape[0], :patches.shape[1]].set(patches)
    data = data.at[L["p1_pad"]:L["p1_pad"] + B, :HID].set(rnn_states)
    if sample:
        data = data.at[L["p1_pad"] + L["b_pad"]:L["p1_pad"] + L["b_pad"] + B,
                       LOGIT0:LOGIT0 + N_ACT].set(gumbel)

    flops = 2 * (L["p1_pad"] * C_IN * K * K * C1
                 + L["p1_pad"] * C1 * K * K * C2
                 + K * K * L["p2_pad"] * L["p1_pad"] * C2
                 + L["p2_pad"] * C2 * OH2 * OH2 * HID
                 + OH2 * OH2 * L["b_pad"] * L["p2_pad"] * HID
                 + 3 * L["b_pad"] * HID * LANES)
    bytes_accessed = 4 * (w_slab.size + data.size + L["b_pad"] * LANES)

    kernel = functools.partial(_fused_forward_kernel, L=L,
                               values_only=values_only, sample=sample)
    slab = pl.pallas_call(
        kernel,
        out_shape=jax.ShapeDtypeStruct((L["b_pad"], LANES), jnp.float32),
        in_specs=[VMEM, VMEM],
        out_specs=VMEM,
        cost_estimate=pl.CostEstimate(flops=flops,
                                      transcendentals=8 * L["b_pad"] * LANES,
                                      bytes_accessed=bytes_accessed),
    )(w_slab, data)

    # torch: critic_linear(core_output).squeeze()  (collapses batch when B == 1)
    values = jnp.squeeze(slab[:B, VAL_LANE:VAL_LANE + 1])
    if values_only:
        return {"values": values}

    result = {"action_logits": slab[:B, LOGIT0:LOGIT0 + N_ACT], "values": values}
    if sample:
        result["log_prob_actions"] = slab[:B, LOGP_LANE]
        result["actions"] = slab[:B, ACT_LANE].astype(jnp.int32)
    result["new_rnn_states"] = slab[:B, 0:HID]
    return result


# TODO(synk): ObservationNormalizer / RunningMeanStdInPlace / returns_normalizer maintain
# running statistics (stateful, not part of the pure forward hot path) and are not implemented.


# ----------------------------------------------------------------------------- reference (plain JAX)
def _reference_forward(params, obs, rnn_states):
    def conv(x, w, b, stride):
        y = jax.lax.conv_general_dilated(x, w, (stride, stride), "VALID",
                                         dimension_numbers=("NCHW", "OIHW", "NCHW"))
        return jax.nn.relu(y + b.reshape(1, -1, 1, 1))
    x = conv(obs, params["conv1_w"], params["conv1_b"], STRIDE)
    x = conv(x, params["conv2_w"], params["conv2_b"], STRIDE)
    x = x.reshape(x.shape[0], -1)
    x = jax.nn.relu(x @ params["fc_w"].T + params["fc_b"])
    gi = x @ params["gru_wih"].T + params["gru_bih"]
    gh = rnn_states @ params["gru_whh"].T + params["gru_bhh"]
    r = jax.nn.sigmoid(gi[:, :HID] + gh[:, :HID])
    z = jax.nn.sigmoid(gi[:, HID:2 * HID] + gh[:, HID:2 * HID])
    n = jnp.tanh(gi[:, 2 * HID:] + r * gh[:, 2 * HID:])
    h = (1.0 - z) * n + z * rnn_states
    values = (h @ params["critic_w"].T + params["critic_b"])[:, 0]
    logits = h @ params["actor_w"].T + params["actor_b"]
    return values, logits, h


if __name__ == "__main__":
    jax.config.update("jax_default_matmul_precision", "highest")

    key = jax.random.PRNGKey(0)
    k_param, k_obs, k_gum = jax.random.split(key, 3)

    params = init_params(k_param)
    B = 2
    w_slab = prepare_params(params, B)

    obs = jax.random.normal(k_obs, (B, C_IN, IMG, IMG), dtype=jnp.float32)  # NCHW "normalized obs"
    rnn_states = jnp.zeros((B, HID), dtype=jnp.float32)
    gumbel = jax.random.gumbel(k_gum, (B, N_ACT), dtype=jnp.float32)

    out = actor_critic_forward(w_slab, obs, rnn_states, gumbel)
    jax.block_until_ready(out)

    assert out["values"].shape == (B,)
    assert out["action_logits"].shape == (B, N_ACT)
    assert out["new_rnn_states"].shape == (B, HID)
    assert out["actions"].shape == (B,)
    assert out["log_prob_actions"].shape == (B,)
    assert int(jnp.min(out["actions"])) >= 0 and int(jnp.max(out["actions"])) < N_ACT

    # numerical check of deterministic outputs vs. plain-JAX reference
    ref_v, ref_logits, ref_h = _reference_forward(params, obs, rnn_states)
    np.testing.assert_allclose(np.asarray(out["values"]), np.asarray(ref_v), rtol=1e-3, atol=1e-3)
    np.testing.assert_allclose(np.asarray(out["action_logits"]), np.asarray(ref_logits), rtol=1e-3, atol=1e-3)
    np.testing.assert_allclose(np.asarray(out["new_rnn_states"]), np.asarray(ref_h), rtol=1e-3, atol=1e-3)

    # Gumbel-max sampling check (same noise host-side -> same action + log-prob)
    ref_act = np.asarray(jnp.argmax(ref_logits + gumbel, axis=-1))
    assert np.array_equal(np.asarray(out["actions"]), ref_act)
    ref_logp = np.asarray(jax.nn.log_softmax(ref_logits, axis=-1))[np.arange(B), ref_act]
    np.testing.assert_allclose(np.asarray(out["log_prob_actions"]), ref_logp, rtol=1e-3, atol=1e-3)

    # values_only fast path (torch forward(values_only=True)); no gumbel rows / no PRNG
    out_v = actor_critic_forward(w_slab, obs, rnn_states, None, values_only=True)
    jax.block_until_ready(out_v)
    assert out_v["values"].shape == (B,)
    np.testing.assert_allclose(np.asarray(out_v["values"]), np.asarray(ref_v), rtol=1e-3, atol=1e-3)

    print("KERNEL_OK")
</pallas_src>

<mosaic_0001>
module attributes {stable_mosaic.version = 11 : i64} {
  func.func @_fused_forward_kernel(%arg0: memref<456x384xf32, #tpu.memory_space<vmem>>, %arg1: memref<120x128xf32, #tpu.memory_space<vmem>>, %arg2: memref<8x128xf32, #tpu.memory_space<vmem>>) attributes {dimension_semantics = [], scalar_prefetch = 0 : i64, scratch_operands = 0 : i64, tpu.core_type = #tpu.core_type<tc>} {
    %c160 = arith.constant 160 : index
    %c0 = arith.constant 0 : index
    %0 = vector.load %arg0[%c160, %c0] : memref<456x384xf32, #tpu.memory_space<vmem>>, vector<8x384xf32>
    %1 = vector.extract_strided_slice %0 {offsets = [0, 0], sizes = [1, 8], strides = [1, 1]} : vector<8x384xf32> to vector<1x8xf32>
    %2 = vector.extract_strided_slice %0 {offsets = [1, 0], sizes = [1, 16], strides = [1, 1]} : vector<8x384xf32> to vector<1x16xf32>
    %3 = vector.extract_strided_slice %0 {offsets = [2, 0], sizes = [1, 32], strides = [1, 1]} : vector<8x384xf32> to vector<1x32xf32>
    %4 = vector.extract_strided_slice %0 {offsets = [3, 0], sizes = [1, 128], strides = [1, 1]} : vector<8x384xf32> to vector<1x128xf32>
    %5 = vector.extract_strided_slice %0 {offsets = [4, 0], sizes = [1, 128], strides = [1, 1]} : vector<8x384xf32> to vector<1x128xf32>
    %c0_0 = arith.constant 0 : index
    %c0_1 = arith.constant 0 : index
    %6 = vector.load %arg1[%c0_0, %c0_1] : memref<120x128xf32, #tpu.memory_space<vmem>>, vector<104x36xf32>
    %c104 = arith.constant 104 : index
    %c0_2 = arith.constant 0 : index
    %7 = vector.load %arg1[%c104, %c0_2] : memref<120x128xf32, #tpu.memory_space<vmem>>, vector<8x32xf32>
    %c0_3 = arith.constant 0 : index
    %c0_4 = arith.constant 0 : index
    %8 = vector.load %arg0[%c0_3, %c0_4] : memref<456x384xf32, #tpu.memory_space<vmem>>, vector<36x8xf32>
    %cst = arith.constant dense<0.000000e+00> : vector<104x8xf32>
    %9 = tpu.matmul %6, %8, %cst {dimension_numbers = #tpu.dot_dimension_numbers<[1], [0], [0], [1], [0, 0, 1, 1], [], []>, precision = #tpu.contract_precision<fp32>} : vector<104x36xf32>, vector<36x8xf32>, vector<104x8xf32> -> vector<104x8xf32>
    %10 = vector.broadcast %1 : vector<1x8xf32> to vector<104x8xf32>
    %11 = arith.addf %9, %10 : vector<104x8xf32>
    %cst_5 = arith.constant 0.000000e+00 : f32
    %12 = vector.broadcast %cst_5 : f32 to vector<104x8xf32>
    %13 = arith.maximumf %11, %12 : vector<104x8xf32>
    %c40 = arith.constant 40 : index
    %c0_6 = arith.constant 0 : index
    %14 = vector.load %arg0[%c40, %c0_6] : memref<456x384xf32, #tpu.memory_space<vmem>>, vector<8x144xf32>
    %cst_7 = arith.constant dense<0.000000e+00> : vector<104x144xf32>
    %15 = tpu.matmul %13, %14, %cst_7 {dimension_numbers = #tpu.dot_dimension_numbers<[1], [0], [0], [1], [0, 0, 1, 1], [], []>, precision = #tpu.contract_precision<fp32>} : vector<104x8xf32>, vector<8x144xf32>, vector<104x144xf32> -> vector<104x144xf32>
    %cst_8 = arith.constant 0.000000e+00 : f32
    %16 = vector.broadcast %cst_8 : f32 to vector<24x16xf32>
    %c168 = arith.constant 168 : index
    %c0_9 = arith.constant 0 : index
    %17 = vector.load %arg0[%c168, %c0_9] : memref<456x384xf32, #tpu.memory_space<vmem>>, vector<24x104xf32>
    %18 = vector.extract_strided_slice %15 {offsets = [0, 0], sizes = [104, 16], strides = [1, 1]} : vector<104x144xf32> to vector<104x16xf32>
    %cst_10 = arith.constant dense<0.000000e+00> : vector<24x16xf32>
    %19 = tpu.matmul %17, %18, %cst_10 {dimension_numbers = #tpu.dot_dimension_numbers<[1], [0], [0], [1], [0, 0, 1, 1], [], []>, precision = #tpu.contract_precision<fp32>} : vector<24x104xf32>, vector<104x16xf32>, vector<24x16xf32> -> vector<24x16xf32>
    %20 = arith.addf %16, %19 : vector<24x16xf32>
    %c192 = arith.constant 192 : index
    %c0_11 = arith.constant 0 : index
    %21 = vector.load %arg0[%c192, %c0_11] : memref<456x384xf32, #tpu.memory_space<vmem>>, vector<24x104xf32>
    %22 = vector.extract_strided_slice %15 {offsets = [0, 16], sizes = [104, 16], strides = [1, 1]} : vector<104x144xf32> to vector<104x16xf32>
    %cst_12 = arith.constant dense<0.000000e+00> : vector<24x16xf32>
    %23 = tpu.matmul %21, %22, %cst_12 {dimension_numbers = #tpu.dot_dimension_numbers<[1], [0], [0], [1], [0, 0, 1, 1], [], []>, precision = #tpu.contract_precision<fp32>} : vector<24x104xf32>, vector<104x16xf32>, vector<24x16xf32> -> vector<24x16xf32>
    %24 = arith.addf %20, %23 : vector<24x16xf32>
    %c216 = arith.constant 216 : index
    %c0_13 = arith.constant 0 : index
    %25 = vector.load %arg0[%c216, %c0_13] : memref<456x384xf32, #tpu.memory_space<vmem>>, vector<24x104xf32>
    %26 = vector.extract_strided_slice %15 {offsets = [0, 32], sizes = [104, 16], strides = [1, 1]} : vector<104x144xf32> to vector<104x16xf32>
    %cst_14 = arith.constant dense<0.000000e+00> : vector<24x16xf32>
    %27 = tpu.matmul %25, %26, %cst_14 {dimension_numbers = #tpu.dot_dimension_numbers<[1], [0], [0], [1], [0, 0, 1, 1], [], []>, precision = #tpu.contract_precision<fp32>} : vector<24x104xf32>, vector<104x16xf32>, vector<24x16xf32> -> vector<24x16xf32>
    %28 = arith.addf %24, %27 : vector<24x16xf32>
    %c240 = arith.constant 240 : index
    %c0_15 = arith.constant 0 : index
    %29 = vector.load %arg0[%c240, %c0_15] : memref<456x384xf32, #tpu.memory_space<vmem>>, vector<24x104xf32>
    %30 = vector.extract_strided_slice %15 {offsets = [0, 48], sizes = [104, 16], strides = [1, 1]} : vector<104x144xf32> to vector<104x16xf32>
    %cst_16 = arith.constant dense<0.000000e+00> : vector<24x16xf32>
    %31 = tpu.matmul %29, %30, %cst_16 {dimension_numbers = #tpu.dot_dimension_numbers<[1], [0], [0], [1], [0, 0, 1, 1], [], []>, precision = #tpu.contract_precision<fp32>} : vector<24x104xf32>, vector<104x16xf32>, vector<24x16xf32> -> vector<24x16xf32>
    %32 = arith.addf %28, %31 : vector<24x16xf32>
    %c264 = arith.constant 264 : index
    %c0_17 = arith.constant 0 : index
    %33 = vector.load %arg0[%c264, %c0_17] : memref<456x384xf32, #tpu.memory_space<vmem>>, vector<24x104xf32>
    %34 = vector.extract_strided_slice %15 {offsets = [0, 64], sizes = [104, 16], strides = [1, 1]} : vector<104x144xf32> to vector<104x16xf32>
    %cst_18 = arith.constant dense<0.000000e+00> : vector<24x16xf32>
    %35 = tpu.matmul %33, %34, %cst_18 {dimension_numbers = #tpu.dot_dimension_numbers<[1], [0], [0], [1], [0, 0, 1, 1], [], []>, precision = #tpu.contract_precision<fp32>} : vector<24x104xf32>, vector<104x16xf32>, vector<24x16xf32> -> vector<24x16xf32>
    %36 = arith.addf %32, %35 : vector<24x16xf32>
    %c288 = arith.constant 288 : index
    %c0_19 = arith.constant 0 : index
    %37 = vector.load %arg0[%c288, %c0_19] : memref<456x384xf32, #tpu.memory_space<vmem>>, vector<24x104xf32>
    %38 = vector.extract_strided_slice %15 {offsets = [0, 80], sizes = [104, 16], strides = [1, 1]} : vector<104x144xf32> to vector<104x16xf32>
    %cst_20 = arith.constant dense<0.000000e+00> : vector<24x16xf32>
    %39 = tpu.matmul %37, %38, %cst_20 {dimension_numbers = #tpu.dot_dimension_numbers<[1], [0], [0], [1], [0, 0, 1, 1], [], []>, precision = #tpu.contract_precision<fp32>} : vector<24x104xf32>, vector<104x16xf32>, vector<24x16xf32> -> vector<24x16xf32>
    %40 = arith.addf %36, %39 : vector<24x16xf32>
    %c312 = arith.constant 312 : index
    %c0_21 = arith.constant 0 : index
    %41 = vector.load %arg0[%c312, %c0_21] : memref<456x384xf32, #tpu.memory_space<vmem>>, vector<24x104xf32>
    %42 = vector.extract_strided_slice %15 {offsets = [0, 96], sizes = [104, 16], strides = [1, 1]} : vector<104x144xf32> to vector<104x16xf32>
    %cst_22 = arith.constant dense<0.000000e+00> : vector<24x16xf32>
    %43 = tpu.matmul %41, %42, %cst_22 {dimension_numbers = #tpu.dot_dimension_numbers<[1], [0], [0], [1], [0, 0, 1, 1], [], []>, precision = #tpu.contract_precision<fp32>} : vector<24x104xf32>, vector<104x16xf32>, vector<24x16xf32> -> vector<24x16xf32>
    %44 = arith.addf %40, %43 : vector<24x16xf32>
    %c336 = arith.constant 336 : index
    %c0_23 = arith.constant 0 : index
    %45 = vector.load %arg0[%c336, %c0_23] : memref<456x384xf32, #tpu.memory_space<vmem>>, vector<24x104xf32>
    %46 = vector.extract_strided_slice %15 {offsets = [0, 112], sizes = [104, 16], strides = [1, 1]} : vector<104x144xf32> to vector<104x16xf32>
    %cst_24 = arith.constant dense<0.000000e+00> : vector<24x16xf32>
    %47 = tpu.matmul %45, %46, %cst_24 {dimension_numbers = #tpu.dot_dimension_numbers<[1], [0], [0], [1], [0, 0, 1, 1], [], []>, precision = #tpu.contract_precision<fp32>} : vector<24x104xf32>, vector<104x16xf32>, vector<24x16xf32> -> vector<24x16xf32>
    %48 = arith.addf %44, %47 : vector<24x16xf32>
    %c360 = arith.constant 360 : index
    %c0_25 = arith.constant 0 : index
    %49 = vector.load %arg0[%c360, %c0_25] : memref<456x384xf32, #tpu.memory_space<vmem>>, vector<24x104xf32>
    %50 = vector.extract_strided_slice %15 {offsets = [0, 128], sizes = [104, 16], strides = [1, 1]} : vector<104x144xf32> to vector<104x16xf32>
    %cst_26 = arith.constant dense<0.000000e+00> : vector<24x16xf32>
    %51 = tpu.matmul %49, %50, %cst_26 {dimension_numbers = #tpu.dot_dimension_numbers<[1], [0], [0], [1], [0, 0, 1, 1], [], []>, precision = #tpu.contract_precision<fp32>} : vector<24x104xf32>, vector<104x16xf32>, vector<24x16xf32> -> vector<24x16xf32>
    %52 = arith.addf %48, %51 : vector<24x16xf32>
    %53 = vector.broadcast %2 : vector<1x16xf32> to vector<24x16xf32>
    %54 = arith.addf %52, %53 : vector<24x16xf32>
    %cst_27 = arith.constant 0.000000e+00 : f32
    %55 = vector.broadcast %cst_27 : f32 to vector<24x16xf32>
    %56 = arith.maximumf %54, %55 : vector<24x16xf32>
    %c48 = arith.constant 48 : index
    %c0_28 = arith.constant 0 : index
    %57 = vector.load %arg0[%c48, %c0_28] : memref<456x384xf32, #tpu.memory_space<vmem>>, vector<16x288xf32>
    %cst_29 = arith.constant dense<0.000000e+00> : vector<24x288xf32>
    %58 = tpu.matmul %56, %57, %cst_29 {dimension_numbers = #tpu.dot_dimension_numbers<[1], [0], [0], [1], [0, 0, 1, 1], [], []>, precision = #tpu.contract_precision<fp32>} : vector<24x16xf32>, vector<16x288xf32>, vector<24x288xf32> -> vector<24x288xf32>
    %cst_30 = arith.constant 0.000000e+00 : f32
    %59 = vector.broadcast %cst_30 : f32 to vector<8x32xf32>
    %c384 = arith.constant 384 : index
    %c0_31 = arith.constant 0 : index
    %60 = vector.load %arg0[%c384, %c0_31] : memref<456x384xf32, #tpu.memory_space<vmem>>, vector<8x24xf32>
    %61 = vector.extract_strided_slice %58 {offsets = [0, 0], sizes = [24, 32], strides = [1, 1]} : vector<24x288xf32> to vector<24x32xf32>
    %cst_32 = arith.constant dense<0.000000e+00> : vector<8x32xf32>
    %62 = tpu.matmul %60, %61, %cst_32 {dimension_numbers = #tpu.dot_dimension_numbers<[1], [0], [0], [1], [0, 0, 1, 1], [], []>, precision = #tpu.contract_precision<fp32>} : vector<8x24xf32>, vector<24x32xf32>, vector<8x32xf32> -> vector<8x32xf32>
    %63 = arith.addf %59, %62 : vector<8x32xf32>
    %c392 = arith.constant 392 : index
    %c0_33 = arith.constant 0 : index
    %64 = vector.load %arg0[%c392, %c0_33] : memref<456x384xf32, #tpu.memory_space<vmem>>, vector<8x24xf32>
    %65 = vector.extract_strided_slice %58 {offsets = [0, 32], sizes = [24, 32], strides = [1, 1]} : vector<24x288xf32> to vector<24x32xf32>
    %cst_34 = arith.constant dense<0.000000e+00> : vector<8x32xf32>
    %66 = tpu.matmul %64, %65, %cst_34 {dimension_numbers = #tpu.dot_dimension_numbers<[1], [0], [0], [1], [0, 0, 1, 1], [], []>, precision = #tpu.contract_precision<fp32>} : vector<8x24xf32>, vector<24x32xf32>, vector<8x32xf32> -> vector<8x32xf32>
    %67 = arith.addf %63, %66 : vector<8x32xf32>
    %c400 = arith.constant 400 : index
    %c0_35 = arith.constant 0 : index
    %68 = vector.load %arg0[%c400, %c0_35] : memref<456x384xf32, #tpu.memory_space<vmem>>, vector<8x24xf32>
    %69 = vector.extract_strided_slice %58 {offsets = [0, 64], sizes = [24, 32], strides = [1, 1]} : vector<24x288xf32> to vector<24x32xf32>
    %cst_36 = arith.constant dense<0.000000e+00> : vector<8x32xf32>
    %70 = tpu.matmul %68, %69, %cst_36 {dimension_numbers = #tpu.dot_dimension_numbers<[1], [0], [0], [1], [0, 0, 1, 1], [], []>, precision = #tpu.contract_precision<fp32>} : vector<8x24xf32>, vector<24x32xf32>, vector<8x32xf32> -> vector<8x32xf32>
    %71 = arith.addf %67, %70 : vector<8x32xf32>
    %c408 = arith.constant 408 : index
    %c0_37 = arith.constant 0 : index
    %72 = vector.load %arg0[%c408, %c0_37] : memref<456x384xf32, #tpu.memory_space<vmem>>, vector<8x24xf32>
    %73 = vector.extract_strided_slice %58 {offsets = [0, 96], sizes = [24, 32], strides = [1, 1]} : vector<24x288xf32> to vector<24x32xf32>
    %cst_38 = arith.constant dense<0.000000e+00> : vector<8x32xf32>
    %74 = tpu.matmul %72, %73, %cst_38 {dimension_numbers = #tpu.dot_dimension_numbers<[1], [0], [0], [1], [0, 0, 1, 1], [], []>, precision = #tpu.contract_precision<fp32>} : vector<8x24xf32>, vector<24x32xf32>, vector<8x32xf32> -> vector<8x32xf32>
    %75 = arith.addf %71, %74 : vector<8x32xf32>
    %c416 = arith.constant 416 : index
    %c0_39 = arith.constant 0 : index
    %76 = vector.load %arg0[%c416, %c0_39] : memref<456x384xf32, #tpu.memory_space<vmem>>, vector<8x24xf32>
    %77 = vector.extract_strided_slice %58 {offsets = [0, 128], sizes = [24, 32], strides = [1, 1]} : vector<24x288xf32> to vector<24x32xf32>
    %cst_40 = arith.constant dense<0.000000e+00> : vector<8x32xf32>
    %78 = tpu.matmul %76, %77, %cst_40 {dimension_numbers = #tpu.dot_dimension_numbers<[1], [0], [0], [1], [0, 0, 1, 1], [], []>, precision = #tpu.contract_precision<fp32>} : vector<8x24xf32>, vector<24x32xf32>, vector<8x32xf32> -> vector<8x32xf32>
    %79 = arith.addf %75, %78 : vector<8x32xf32>
    %c424 = arith.constant 424 : index
    %c0_41 = arith.constant 0 : index
    %80 = vector.load %arg0[%c424, %c0_41] : memref<456x384xf32, #tpu.memory_space<vmem>>, vector<8x24xf32>
    %81 = vector.extract_strided_slice %58 {offsets = [0, 160], sizes = [24, 32], strides = [1, 1]} : vector<24x288xf32> to vector<24x32xf32>
    %cst_42 = arith.constant dense<0.000000e+00> : vector<8x32xf32>
    %82 = tpu.matmul %80, %81, %cst_42 {dimension_numbers = #tpu.dot_dimension_numbers<[1], [0], [0], [1], [0, 0, 1, 1], [], []>, precision = #tpu.contract_precision<fp32>} : vector<8x24xf32>, vector<24x32xf32>, vector<8x32xf32> -> vector<8x32xf32>
    %83 = arith.addf %79, %82 : vector<8x32xf32>
    %c432 = arith.constant 432 : index
    %c0_43 = arith.constant 0 : index
    %84 = vector.load %arg0[%c432, %c0_43] : memref<456x384xf32, #tpu.memory_space<vmem>>, vector<8x24xf32>
    %85 = vector.extract_strided_slice %58 {offsets = [0, 192], sizes = [24, 32], strides = [1, 1]} : vector<24x288xf32> to vector<24x32xf32>
    %cst_44 = arith.constant dense<0.000000e+00> : vector<8x32xf32>
    %86 = tpu.matmul %84, %85, %cst_44 {dimension_numbers = #tpu.dot_dimension_numbers<[1], [0], [0], [1], [0, 0, 1, 1], [], []>, precision = #tpu.contract_precision<fp32>} : vector<8x24xf32>, vector<24x32xf32>, vector<8x32xf32> -> vector<8x32xf32>
    %87 = arith.addf %83, %86 : vector<8x32xf32>
    %c440 = arith.constant 440 : index
    %c0_45 = arith.constant 0 : index
    %88 = vector.load %arg0[%c440, %c0_45] : memref<456x384xf32, #tpu.memory_space<vmem>>, vector<8x24xf32>
    %89 = vector.extract_strided_slice %58 {offsets = [0, 224], sizes = [24, 32], strides = [1, 1]} : vector<24x288xf32> to vector<24x32xf32>
    %cst_46 = arith.constant dense<0.000000e+00> : vector<8x32xf32>
    %90 = tpu.matmul %88, %89, %cst_46 {dimension_numbers = #tpu.dot_dimension_numbers<[1], [0], [0], [1], [0, 0, 1, 1], [], []>, precision = #tpu.contract_precision<fp32>} : vector<8x24xf32>, vector<24x32xf32>, vector<8x32xf32> -> vector<8x32xf32>
    %91 = arith.addf %87, %90 : vector<8x32xf32>
    %c448 = arith.constant 448 : index
    %c0_47 = arith.constant 0 : index
    %92 = vector.load %arg0[%c448, %c0_47] : memref<456x384xf32, #tpu.memory_space<vmem>>, vector<8x24xf32>
    %93 = vector.extract_strided_slice %58 {offsets = [0, 256], sizes = [24, 32], strides = [1, 1]} : vector<24x288xf32> to vector<24x32xf32>
    %cst_48 = arith.constant dense<0.000000e+00> : vector<8x32xf32>
    %94 = tpu.matmul %92, %93, %cst_48 {dimension_numbers = #tpu.dot_dimension_numbers<[1], [0], [0], [1], [0, 0, 1, 1], [], []>, precision = #tpu.contract_precision<fp32>} : vector<8x24xf32>, vector<24x32xf32>, vector<8x32xf32> -> vector<8x32xf32>
    %95 = arith.addf %91, %94 : vector<8x32xf32>
    %96 = vector.broadcast %3 : vector<1x32xf32> to vector<8x32xf32>
    %97 = arith.addf %95, %96 : vector<8x32xf32>
    %cst_49 = arith.constant 0.000000e+00 : f32
    %98 = vector.broadcast %cst_49 : f32 to vector<8x32xf32>
    %99 = arith.maximumf %97, %98 : vector<8x32xf32>
    %c64 = arith.constant 64 : index
    %c0_50 = arith.constant 0 : index
    %100 = vector.load %arg0[%c64, %c0_50] : memref<456x384xf32, #tpu.memory_space<vmem>>, vector<32x128xf32>
    %c96 = arith.constant 96 : index
    %c0_51 = arith.constant 0 : index
    %101 = vector.load %arg0[%c96, %c0_51] : memref<456x384xf32, #tpu.memory_space<vmem>>, vector<32x128xf32>
    %cst_52 = arith.constant dense<0.000000e+00> : vector<8x128xf32>
    %102 = tpu.matmul %99, %100, %cst_52 {dimension_numbers = #tpu.dot_dimension_numbers<[1], [0], [0], [1], [0, 0, 1, 1], [], []>, precision = #tpu.contract_precision<fp32>} : vector<8x32xf32>, vector<32x128xf32>, vector<8x128xf32> -> vector<8x128xf32>
    %cst_53 = arith.constant dense<0.000000e+00> : vector<8x128xf32>
    %103 = tpu.matmul %7, %101, %cst_53 {dimension_numbers = #tpu.dot_dimension_numbers<[1], [0], [0], [1], [0, 0, 1, 1], [], []>, precision = #tpu.contract_precision<fp32>} : vector<8x32xf32>, vector<32x128xf32>, vector<8x128xf32> -> vector<8x128xf32>
    %104 = arith.addf %102, %103 : vector<8x128xf32>
    %105 = vector.broadcast %4 : vector<1x128xf32> to vector<8x128xf32>
    %106 = arith.addf %104, %105 : vector<8x128xf32>
    %107 = vector.extract_strided_slice %106 {offsets = [0, 0], sizes = [8, 32], strides = [1, 1]} : vector<8x128xf32> to vector<8x32xf32>
    %108 = arith.negf %107 : vector<8x32xf32>
    %109 = math.exp %108 : vector<8x32xf32>
    %cst_54 = arith.constant 1.000000e+00 : f32
    %110 = vector.broadcast %cst_54 : f32 to vector<8x32xf32>
    %111 = arith.addf %110, %109 : vector<8x32xf32>
    %112 = arith.divf %110, %111 : vector<8x32xf32>
    %113 = vector.extract_strided_slice %106 {offsets = [0, 32], sizes = [8, 32], strides = [1, 1]} : vector<8x128xf32> to vector<8x32xf32>
    %114 = arith.negf %113 : vector<8x32xf32>
    %115 = math.exp %114 : vector<8x32xf32>
    %cst_55 = arith.constant 1.000000e+00 : f32
    %116 = vector.broadcast %cst_55 : f32 to vector<8x32xf32>
    %117 = arith.addf %116, %115 : vector<8x32xf32>
    %118 = arith.divf %116, %117 : vector<8x32xf32>
    %119 = vector.extract_strided_slice %106 {offsets = [0, 64], sizes = [8, 32], strides = [1, 1]} : vector<8x128xf32> to vector<8x32xf32>
    %120 = vector.extract_strided_slice %106 {offsets = [0, 96], sizes = [8, 32], strides = [1, 1]} : vector<8x128xf32> to vector<8x32xf32>
    %121 = arith.mulf %112, %120 : vector<8x32xf32>
    %122 = arith.addf %119, %121 : vector<8x32xf32>
    %123 = math.tanh %122 : vector<8x32xf32>
    %cst_56 = arith.constant 1.000000e+00 : f32
    %124 = vector.broadcast %cst_56 : f32 to vector<8x32xf32>
    %125 = arith.subf %124, %118 : vector<8x32xf32>
    %126 = arith.mulf %125, %123 : vector<8x32xf32>
    %127 = arith.mulf %118, %7 : vector<8x32xf32>
    %128 = arith.addf %126, %127 : vector<8x32xf32>
    %c128 = arith.constant 128 : index
    %c0_57 = arith.constant 0 : index
    %129 = vector.load %arg0[%c128, %c0_57] : memref<456x384xf32, #tpu.memory_space<vmem>>, vector<32x128xf32>
    %cst_58 = arith.constant dense<0.000000e+00> : vector<8x128xf32>
    %130 = tpu.matmul %128, %129, %cst_58 {dimension_numbers = #tpu.dot_dimension_numbers<[1], [0], [0], [1], [0, 0, 1, 1], [], []>, precision = #tpu.contract_precision<fp32>} : vector<8x32xf32>, vector<32x128xf32>, vector<8x128xf32> -> vector<8x128xf32>
    %131 = vector.broadcast %5 : vector<1x128xf32> to vector<8x128xf32>
    %132 = arith.addf %130, %131 : vector<8x128xf32>
    %133 = tpu.iota {dimensions = array<i32: 1>} : vector<8x128xi32>
    %c33_i32 = arith.constant 33 : i32
    %134 = vector.broadcast %c33_i32 : i32 to vector<8x128xi32>
    %135 = arith.cmpi sge, %133, %134 : vector<8x128xi32>
    %c39_i32 = arith.constant 39 : i32
    %136 = vector.broadcast %c39_i32 : i32 to vector<8x128xi32>
    %137 = arith.cmpi slt, %133, %136 : vector<8x128xi32>
    %138 = arith.andi %135, %137 : vector<8x128xi1>
    %cst_59 = arith.constant -1.000000e+30 : f32
    %139 = vector.broadcast %cst_59 : f32 to vector<8x128xf32>
    %140 = arith.select %138, %132, %139 : vector<8x128xi1>, vector<8x128xf32>
    %cst_60 = arith.constant dense<0xFF800000> : vector<8xf32>
    %141 = vector.multi_reduction <maximumf>, %140, %cst_60 [1] : vector<8x128xf32> to vector<8xf32>
    %142 = vector.shape_cast %141 : vector<8xf32> to vector<8x1xf32>
    %143 = vector.broadcast %142 : vector<8x1xf32> to vector<8x128xf32>
    %144 = arith.subf %140, %143 : vector<8x128xf32>
    %145 = vector.broadcast %142 : vector<8x1xf32> to vector<8x128xf32>
    %146 = arith.subf %140, %145 : vector<8x128xf32>
    %147 = math.exp %146 : vector<8x128xf32>
    %cst_61 = arith.constant dense<0.000000e+00> : vector<8xf32>
    %148 = vector.multi_reduction <add>, %147, %cst_61 [1] : vector<8x128xf32> to vector<8xf32>
    %149 = vector.shape_cast %148 : vector<8xf32> to vector<8x1xf32>
    %150 = math.log %149 : vector<8x1xf32>
    %151 = vector.broadcast %150 : vector<8x1xf32> to vector<8x128xf32>
    %152 = arith.subf %144, %151 : vector<8x128xf32>
    %c112 = arith.constant 112 : index
    %c0_62 = arith.constant 0 : index
    %153 = vector.load %arg1[%c112, %c0_62] : memref<120x128xf32, #tpu.memory_space<vmem>>, vector<8x128xf32>
    %154 = arith.addf %132, %153 : vector<8x128xf32>
    %cst_63 = arith.constant -1.000000e+30 : f32
    %155 = vector.broadcast %cst_63 : f32 to vector<8x128xf32>
    %156 = arith.select %138, %154, %155 : vector<8x128xi1>, vector<8x128xf32>
    %cst_64 = arith.constant dense<0xFF800000> : vector<8xf32>
    %157 = vector.multi_reduction <maximumf>, %156, %cst_64 [1] : vector<8x128xf32> to vector<8xf32>
    %158 = vector.shape_cast %157 : vector<8xf32> to vector<8x1xf32>
    %159 = vector.broadcast %158 : vector<8x1xf32> to vector<8x128xf32>
    %160 = arith.cmpf oge, %156, %159 : vector<8x128xf32>
    %161 = arith.andi %160, %138 : vector<8x128xi1>
    %c128_i32 = arith.constant 128 : i32
    %162 = vector.broadcast %c128_i32 : i32 to vector<8x128xi32>
    %163 = arith.select %161, %133, %162 : vector<8x128xi1>, vector<8x128xi32>
    %cst_65 = arith.constant dense<2147483647> : vector<8xi32>
    %164 = vector.multi_reduction <minsi>, %163, %cst_65 [1] : vector<8x128xi32> to vector<8xi32>
    %165 = vector.shape_cast %164 : vector<8xi32> to vector<8x1xi32>
    %166 = vector.broadcast %165 : vector<8x1xi32> to vector<8x128xi32>
    %167 = arith.cmpi eq, %133, %166 : vector<8x128xi32>
    %cst_66 = arith.constant 0.000000e+00 : f32
    %168 = vector.broadcast %cst_66 : f32 to vector<8x128xf32>
    %169 = arith.select %167, %152, %168 : vector<8x128xi1>, vector<8x128xf32>
    %cst_67 = arith.constant dense<0.000000e+00> : vector<8xf32>
    %170 = vector.multi_reduction <add>, %169, %cst_67 [1] : vector<8x128xf32> to vector<8xf32>
    %171 = vector.shape_cast %170 : vector<8xf32> to vector<8x1xf32>
    %c33_i32_68 = arith.constant 33 : i32
    %172 = vector.broadcast %c33_i32_68 : i32 to vector<8x1xi32>
    %173 = arith.subi %165, %172 : vector<8x1xi32>
    %174 = arith.sitofp %173 : vector<8x1xi32> to vector<8x1xf32>
    %c39_i32_69 = arith.constant 39 : i32
    %175 = vector.broadcast %c39_i32_69 : i32 to vector<8x128xi32>
    %176 = arith.cmpi eq, %133, %175 : vector<8x128xi32>
    %c40_i32 = arith.constant 40 : i32
    %177 = vector.broadcast %c40_i32 : i32 to vector<8x128xi32>
    %178 = arith.cmpi eq, %133, %177 : vector<8x128xi32>
    %179 = vector.shape_cast %174 : vector<8x1xf32> to vector<8x1xf32>
    %180 = vector.broadcast %179 : vector<8x1xf32> to vector<8x128xf32>
    %181 = arith.select %178, %180, %132 : vector<8x128xi1>, vector<8x128xf32>
    %182 = vector.shape_cast %171 : vector<8x1xf32> to vector<8x1xf32>
    %183 = vector.broadcast %182 : vector<8x1xf32> to vector<8x128xf32>
    %184 = arith.select %176, %183, %181 : vector<8x128xi1>, vector<8x128xf32>
    %c0_70 = arith.constant 0 : index
    %c0_71 = arith.constant 0 : index
    %185 = vector.load %arg2[%c0_70, %c0_71] : memref<8x128xf32, #tpu.memory_space<vmem>>, vector<8x128xf32>
    tpu.vector_store %arg2[%c0_70, %c0_71], %184 {strides = array<i32>} : memref<8x128xf32, #tpu.memory_space<vmem>>, vector<8x128xf32>,
    return
  }
}

</mosaic_0001>

<llo_original>
// kernel: actor_critic_forward.1
$region0: #{actor_critic_forward.1}
  #allocation0 [shape = 'u32[]', space=smem, size = 0x4, offset = 0x4, fixed_abs, tag = 'smem constant byte address 0x4 - core index']
  #allocation1 [shape = 'u32[72,128]{1,0:T(1,128)}', space=vmem, size = 0x9000, scoped, tag = 'internal scratch']
  %s0 = inlined_call_operand.vmem [shape: f32[456,384], index: 0, kind: input, shape index: {}]
  %s1 = inlined_call_operand.vmem [shape: f32[120,128], index: 1, kind: input, shape index: {}]
  %s2 = inlined_call_operand.vmem [shape: f32[8,128], index: 2, kind: output, shape index: {}]
  %s3 = sld [smem:[#allocation0]]
  $region18: #{actor_critic_forward.1} parent=0
    _
  %s5 = ssub.s32 1, %s3
  %s6 = scalar_select 0, %s5, %s3
  // Predicated region
  $region2: #{actor_critic_forward.1} parent=0 // pred_check
    _
  $region3: #{actor_critic_forward.1} parent=0 // pred_check_branch
    %8 = sbr.rel (0) target = $region5
  $region4: #{actor_critic_forward.1} parent=0 // pred_region
    _
  $region5: #{actor_critic_forward.1} parent=0 // pred_fallthru
    _
  // Predicated region
  $region6: #{actor_critic_forward.1} parent=0 // pred_check
    _
  $region7: #{actor_critic_forward.1} parent=0 // pred_check_branch
    %10 = sbr.rel (0) target = $region9
  $region8: #{actor_critic_forward.1} parent=0 // pred_region
    _
  $region9: #{actor_critic_forward.1} parent=0 // pred_fallthru
    _
  %v11 = vld [vmem:[%s0 + $0x1e0] sm:$0xff]
  %v12 = vld [vmem:[%s1] sm:$0xff]
  %v13 = vld [vmem:[%s1 + $0x8] sm:$0xff]
  %v14 = vld [vmem:[%s1 + $0x10] sm:$0xff]
  %v15 = vld [vmem:[%s1 + $0x18] sm:$0xff]
  %v16 = vld [vmem:[%s1 + $0x20] sm:$0xff]
  %v17 = vld [vmem:[%s1 + $0x28] sm:$0xff]
  %v18 = vld [vmem:[%s1 + $0x30] sm:$0xff]
  %v19 = vld [vmem:[%s1 + $0x38] sm:$0xff]
  %v20 = vld [vmem:[%s1 + $0x40] sm:$0xff]
  %v21 = vld [vmem:[%s1 + $0x48] sm:$0xff]
  %v22 = vld [vmem:[%s1 + $0x50] sm:$0xff]
  %v23 = vld [vmem:[%s1 + $0x58] sm:$0xff]
  %v24 = vld [vmem:[%s1 + $0x60] sm:$0xff]
  %v25 = vld [vmem:[%s1 + $0x68] sm:$0xff]
  %v26 = vld [vmem:[%s0] sm:$0xff]
  %v27 = vld [vmem:[%s0 + $0x18] sm:$0xff]
  %v28 = vld [vmem:[%s0 + $0x30] sm:$0xff]
  %v29 = vld [vmem:[%s0 + $0x48] sm:$0xff]
  %v30 = vld [vmem:[%s0 + $0x60] sm:$0xf]
  %v31 = vperm.slane %v11, 0
  %vm32 = vcmask 293888
  %v34 = vsel %vm32, %v12, 0
  %v37 = vsel %vm32, %v13, 0
  %v40 = vsel %vm32, %v14, 0
  %v43 = vsel %vm32, %v15, 0
  %v46 = vsel %vm32, %v16, 0
  %v49 = vsel %vm32, %v17, 0
  %v52 = vsel %vm32, %v18, 0
  %v55 = vsel %vm32, %v19, 0
  %v58 = vsel %vm32, %v20, 0
  %v61 = vsel %vm32, %v21, 0
  %v64 = vsel %vm32, %v22, 0
  %v67 = vsel %vm32, %v23, 0
  %v70 = vsel %vm32, %v24, 0
  %vm72 = vcmask 1043456
  %v74 = vsel %vm72, %v30, 0
  %76 = vmatpush.msra.mxu0 0.0
  %77 = vmatpush.msra.mxu0 0.0
  %78 = vmatpush.msra.mxu0 0.0
  %79 = vmatpush.msra.mxu0 0.0
  %80 = vmatpush.msra.mxu0 0.0
  %81 = vmatpush.msra.mxu0 0.0
  %82 = vmatpush.msra.mxu0 0.0
  %83 = vmatpush.msra.mxu0 0.0
  %84 = vmatpush.msra.mxu0 0.0
  %85 = vmatpush.msra.mxu0 0.0
  %86 = vmatpush.msra.mxu0 0.0
  %v87 = vand.u32 %v74, 4294901760
  %88 = vmatpush.msra.mxu0 %v87
  %v89 = vand.u32 %v29, 4294901760
  %90 = vmatpush.msra.mxu0 %v89
  %v91 = vand.u32 %v28, 4294901760
  %92 = vmatpush.msra.mxu0 %v91
  %v93 = vand.u32 %v27, 4294901760
  %94 = vmatpush.msra.mxu0 %v93
  %v95 = vand.u32 %v26, 4294901760
  %96 = vmatpush.msra.mxu0 %v95
  %v97 = vand.u32 %v34, 4294901760
  %v98 = vsub.f32 %v34, %v97
  %v99 = vand.u32 %v98, 4294901760
  %v100 = vsub.f32 %v98, %v99
  %v101 = vand.u32 %v100, 4294901760
  %102 = vmatmul.f32.gmra.mxu0 %v101
  %v103 = vpop.f32.mrf.mxu0
  %v104 = vadd.f32 %v31, %v103
  %v105 = vand.u32 %v37, 4294901760
  %v106 = vsub.f32 %v37, %v105
  %v107 = vand.u32 %v106, 4294901760
  %v108 = vsub.f32 %v106, %v107
  %v109 = vand.u32 %v108, 4294901760
  %110 = vmatmul.f32.gmra.mxu0 %v109
  %v111 = vpop.f32.mrf.mxu0
  %v112 = vadd.f32 %v31, %v111
  %v113 = vand.u32 %v40, 4294901760
  %v114 = vsub.f32 %v40, %v113
  %v115 = vand.u32 %v114, 4294901760
  %v116 = vsub.f32 %v114, %v115
  %v117 = vand.u32 %v116, 4294901760
  %118 = vmatmul.f32.gmra.mxu0 %v117
  %v119 = vpop.f32.mrf.mxu0
  %v120 = vadd.f32 %v31, %v119
  %v121 = vand.u32 %v43, 4294901760
  %v122 = vsub.f32 %v43, %v121
  %v123 = vand.u32 %v122, 4294901760
  %v124 = vsub.f32 %v122, %v123
  %v125 = vand.u32 %v124, 4294901760
  %126 = vmatmul.f32.gmra.mxu0 %v125
  %v127 = vpop.f32.mrf.mxu0
  %v128 = vadd.f32 %v31, %v127
  %v129 = vand.u32 %v46, 4294901760
  %v130 = vsub.f32 %v46, %v129
  %v131 = vand.u32 %v130, 4294901760
  %v132 = vsub.f32 %v130, %v131
  %v133 = vand.u32 %v132, 4294901760
  %134 = vmatmul.f32.gmra.mxu0 %v133
  %v135 = vpop.f32.mrf.mxu0
  %v136 = vadd.f32 %v31, %v135
  %v137 = vand.u32 %v49, 4294901760
  %v138 = vsub.f32 %v49, %v137
  %v139 = vand.u32 %v138, 4294901760
  %v140 = vsub.f32 %v138, %v139
  %v141 = vand.u32 %v140, 4294901760
  %142 = vmatmul.f32.gmra.mxu0 %v141
  %v143 = vpop.f32.mrf.mxu0
  %v144 = vadd.f32 %v31, %v143
  %v145 = vand.u32 %v52, 4294901760
  %v146 = vsub.f32 %v52, %v145
  %v147 = vand.u32 %v146, 4294901760
  %v148 = vsub.f32 %v146, %v147
  %v149 = vand.u32 %v148, 4294901760
  %150 = vmatmul.f32.gmra.mxu0 %v149
  %v151 = vpop.f32.mrf.mxu0
  %v152 = vadd.f32 %v31, %v151
  %v153 = vand.u32 %v55, 4294901760
  %v154 = vsub.f32 %v55, %v153
  %v155 = vand.u32 %v154, 4294901760
  %v156 = vsub.f32 %v154, %v155
  %v157 = vand.u32 %v156, 4294901760
  %158 = vmatmul.f32.gmra.mxu0 %v157
  %v159 = vpop.f32.mrf.mxu0
  %v160 = vadd.f32 %v31, %v159
  %v161 = vand.u32 %v58, 4294901760
  %v162 = vsub.f32 %v58, %v161
  %v163 = vand.u32 %v162, 4294901760
  %v164 = vsub.f32 %v162, %v163
  %v165 = vand.u32 %v164, 4294901760
  %166 = vmatmul.f32.gmra.mxu0 %v165
  %v167 = vpop.f32.mrf.mxu0
  %v168 = vadd.f32 %v31, %v167
  %v169 = vand.u32 %v61, 4294901760
  %v170 = vsub.f32 %v61, %v169
  %v171 = vand.u32 %v170, 4294901760
  %v172 = vsub.f32 %v170, %v171
  %v173 = vand.u32 %v172, 4294901760
  %174 = vmatmul.f32.gmra.mxu0 %v173
  %v175 = vpop.f32.mrf.mxu0
  %v176 = vadd.f32 %v31, %v175
  %v177 = vand.u32 %v64, 4294901760
  %v178 = vsub.f32 %v64, %v177
  %v179 = vand.u32 %v178, 4294901760
  %v180 = vsub.f32 %v178, %v179
  %v181 = vand.u32 %v180, 4294901760
  %182 = vmatmul.f32.gmra.mxu0 %v181
  %v183 = vpop.f32.mrf.mxu0
  %v184 = vadd.f32 %v31, %v183
  %v185 = vand.u32 %v67, 4294901760
  %v186 = vsub.f32 %v67, %v185
  %v187 = vand.u32 %v186, 4294901760
  %v188 = vsub.f32 %v186, %v187
  %v189 = vand.u32 %v188, 4294901760
  %190 = vmatmul.f32.gmra.mxu0 %v189
  %v191 = vpop.f32.mrf.mxu0
  %v192 = vadd.f32 %v31, %v191
  %v193 = vand.u32 %v70, 4294901760
  %v194 = vsub.f32 %v70, %v193
  %v195 = vand.u32 %v194, 4294901760
  %v196 = vsub.f32 %v194, %v195
  %v197 = vand.u32 %v196, 4294901760
  %198 = vmatmul.f32.gmra.mxu0 %v197
  %v199 = vpop.f32.mrf.mxu0
  %v200 = vadd.f32 %v31, %v199
  %201 = vdwg.mxu0
  %202 = vmatpush.msra.mxu0 0.0
  %203 = vmatpush.msra.mxu0 0.0
  %204 = vmatpush.msra.mxu0 0.0
  %205 = vmatpush.msra.mxu0 0.0
  %206 = vmatpush.msra.mxu0 0.0
  %207 = vmatpush.msra.mxu0 0.0
  %208 = vmatpush.msra.mxu0 0.0
  %209 = vmatpush.msra.mxu0 0.0
  %210 = vmatpush.msra.mxu0 0.0
  %211 = vmatpush.msra.mxu0 0.0
  %212 = vmatpush.msra.mxu0 0.0
  %v213 = vand.u32 %v74, 4294901760
  %v214 = vsub.f32 %v74, %v213
  %v215 = vand.u32 %v214, 4294901760
  %v216 = vsub.f32 %v214, %v215
  %v217 = vand.u32 %v216, 4294901760
  %218 = vmatpush.msra.mxu0 %v217
  %v219 = vand.u32 %v29, 4294901760
  %v220 = vsub.f32 %v29, %v219
  %v221 = vand.u32 %v220, 4294901760
  %v222 = vsub.f32 %v220, %v221
  %v223 = vand.u32 %v222, 4294901760
  %224 = vmatpush.msra.mxu0 %v223
  %v225 = vand.u32 %v28, 4294901760
  %v226 = vsub.f32 %v28, %v225
  %v227 = vand.u32 %v226, 4294901760
  %v228 = vsub.f32 %v226, %v227
  %v229 = vand.u32 %v228, 4294901760
  %230 = vmatpush.msra.mxu0 %v229
  %v231 = vand.u32 %v27, 4294901760
  %v232 = vsub.f32 %v27, %v231
  %v233 = vand.u32 %v232, 4294901760
  %v234 = vsub.f32 %v232, %v233
  %v235 = vand.u32 %v234, 4294901760
  %236 = vmatpush.msra.mxu0 %v235
  %v237 = vand.u32 %v26, 4294901760
  %v238 = vsub.f32 %v26, %v237
  %v239 = vand.u32 %v238, 4294901760
  %v240 = vsub.f32 %v238, %v239
  %v241 = vand.u32 %v240, 4294901760
  %242 = vmatpush.msra.mxu0 %v241
  %v243 = vand.u32 %v34, 4294901760
  %244 = vmatmul.f32.gmra.mxu0 %v243
  %v245 = vpop.f32.mrf.mxu0
  %v246 = vadd.f32 %v104, %v245
  %v247 = vand.u32 %v37, 4294901760
  %248 = vmatmul.f32.gmra.mxu0 %v247
  %v249 = vpop.f32.mrf.mxu0
  %v250 = vadd.f32 %v112, %v249
  %v251 = vand.u32 %v40, 4294901760
  %252 = vmatmul.f32.gmra.mxu0 %v251
  %v253 = vpop.f32.mrf.mxu0
  %v254 = vadd.f32 %v120, %v253
  %v255 = vand.u32 %v43, 4294901760
  %256 = vmatmul.f32.gmra.mxu0 %v255
  %v257 = vpop.f32.mrf.mxu0
  %v258 = vadd.f32 %v128, %v257
  %v259 = vand.u32 %v46, 4294901760
  %260 = vmatmul.f32.gmra.mxu0 %v259
  %v261 = vpop.f32.mrf.mxu0
  %v262 = vadd.f32 %v136, %v261
  %v263 = vand.u32 %v49, 4294901760
  %264 = vmatmul.f32.gmra.mxu0 %v263
  %v265 = vpop.f32.mrf.mxu0
  %v266 = vadd.f32 %v144, %v265
  %v267 = vand.u32 %v52, 4294901760
  %268 = vmatmul.f32.gmra.mxu0 %v267
  %v269 = vpop.f32.mrf.mxu0
  %v270 = vadd.f32 %v152, %v269
  %v271 = vand.u32 %v55, 4294901760
  %272 = vmatmul.f32.gmra.mxu0 %v271
  %v273 = vpop.f32.mrf.mxu0
  %v274 = vadd.f32 %v160, %v273
  %v275 = vand.u32 %v58, 4294901760
  %276 = vmatmul.f32.gmra.mxu0 %v275
  %v277 = vpop.f32.mrf.mxu0
  %v278 = vadd.f32 %v168, %v277
  %v279 = vand.u32 %v61, 4294901760
  %280 = vmatmul.f32.gmra.mxu0 %v279
  %v281 = vpop.f32.mrf.mxu0
  %v282 = vadd.f32 %v176, %v281
  %v283 = vand.u32 %v64, 4294901760
  %284 = vmatmul.f32.gmra.mxu0 %v283
  %v285 = vpop.f32.mrf.mxu0
  %v286 = vadd.f32 %v184, %v285
  %v287 = vand.u32 %v67, 4294901760
  %288 = vmatmul.f32.gmra.mxu0 %v287
  %v289 = vpop.f32.mrf.mxu0
  %v290 = vadd.f32 %v192, %v289
  %v291 = vand.u32 %v70, 4294901760
  %292 = vmatmul.f32.gmra.mxu0 %v291
  %v293 = vpop.f32.mrf.mxu0
  %v294 = vadd.f32 %v200, %v293
  %295 = vdwg.mxu0
  %296 = vmatpush.msra.mxu0 0.0
  %297 = vmatpush.msra.mxu0 0.0
  %298 = vmatpush.msra.mxu0 0.0
  %299 = vmatpush.msra.mxu0 0.0
  %300 = vmatpush.msra.mxu0 0.0
  %301 = vmatpush.msra.mxu0 0.0
  %302 = vmatpush.msra.mxu0 0.0
  %303 = vmatpush.msra.mxu0 0.0
  %304 = vmatpush.msra.mxu0 0.0
  %305 = vmatpush.msra.mxu0 0.0
  %306 = vmatpush.msra.mxu0 0.0
  %v307 = vand.u32 %v74, 4294901760
  %v308 = vsub.f32 %v74, %v307
  %309 = vmatpush.msra.mxu0 %v308
  %v310 = vand.u32 %v29, 4294901760
  %v311 = vsub.f32 %v29, %v310
  %312 = vmatpush.msra.mxu0 %v311
  %v313 = vand.u32 %v28, 4294901760
  %v314 = vsub.f32 %v28, %v313
  %315 = vmatpush.msra.mxu0 %v314
  %v316 = vand.u32 %v27, 4294901760
  %v317 = vsub.f32 %v27, %v316
  %318 = vmatpush.msra.mxu0 %v317
  %v319 = vand.u32 %v26, 4294901760
  %v320 = vsub.f32 %v26, %v319
  %321 = vmatpush.msra.mxu0 %v320
  %v322 = vand.u32 %v34, 4294901760
  %v323 = vsub.f32 %v34, %v322
  %324 = vmatmul.f32.gmra.mxu0 %v323
  %v325 = vpop.f32.mrf.mxu0
  %v326 = vadd.f32 %v246, %v325
  %v327 = vand.u32 %v37, 4294901760
  %v328 = vsub.f32 %v37, %v327
  %329 = vmatmul.f32.gmra.mxu0 %v328
  %v330 = vpop.f32.mrf.mxu0
  %v331 = vadd.f32 %v250, %v330
  %v332 = vand.u32 %v40, 4294901760
  %v333 = vsub.f32 %v40, %v332
  %334 = vmatmul.f32.gmra.mxu0 %v333
  %v335 = vpop.f32.mrf.mxu0
  %v336 = vadd.f32 %v254, %v335
  %v337 = vand.u32 %v43, 4294901760
  %v338 = vsub.f32 %v43, %v337
  %339 = vmatmul.f32.gmra.mxu0 %v338
  %v340 = vpop.f32.mrf.mxu0
  %v341 = vadd.f32 %v258, %v340
  %v342 = vand.u32 %v46, 4294901760
  %v343 = vsub.f32 %v46, %v342
  %344 = vmatmul.f32.gmra.mxu0 %v343
  %v345 = vpop.f32.mrf.mxu0
  %v346 = vadd.f32 %v262, %v345
  %v347 = vand.u32 %v49, 4294901760
  %v348 = vsub.f32 %v49, %v347
  %349 = vmatmul.f32.gmra.mxu0 %v348
  %v350 = vpop.f32.mrf.mxu0
  %v351 = vadd.f32 %v266, %v350
  %v352 = vand.u32 %v52, 4294901760
  %v353 = vsub.f32 %v52, %v352
  %354 = vmatmul.f32.gmra.mxu0 %v353
  %v355 = vpop.f32.mrf.mxu0
  %v356 = vadd.f32 %v270, %v355
  %v357 = vand.u32 %v55, 4294901760
  %v358 = vsub.f32 %v55, %v357
  %359 = vmatmul.f32.gmra.mxu0 %v358
  %v360 = vpop.f32.mrf.mxu0
  %v361 = vadd.f32 %v274, %v360
  %v362 = vand.u32 %v58, 4294901760
  %v363 = vsub.f32 %v58, %v362
  %364 = vmatmul.f32.gmra.mxu0 %v363
  %v365 = vpop.f32.mrf.mxu0
  %v366 = vadd.f32 %v278, %v365
  %v367 = vand.u32 %v61, 4294901760
  %v368 = vsub.f32 %v61, %v367
  %369 = vmatmul.f32.gmra.mxu0 %v368
  %v370 = vpop.f32.mrf.mxu0
  %v371 = vadd.f32 %v282, %v370
  %v372 = vand.u32 %v64, 4294901760
  %v373 = vsub.f32 %v64, %v372
  %374 = vmatmul.f32.gmra.mxu0 %v373
  %v375 = vpop.f32.mrf.mxu0
  %v376 = vadd.f32 %v286, %v375
  %v377 = vand.u32 %v67, 4294901760
  %v378 = vsub.f32 %v67, %v377
  %379 = vmatmul.f32.gmra.mxu0 %v378
  %v380 = vpop.f32.mrf.mxu0
  %v381 = vadd.f32 %v290, %v380
  %v382 = vand.u32 %v70, 4294901760
  %v383 = vsub.f32 %v70, %v382
  %384 = vmatmul.f32.gmra.mxu0 %v383
  %v385 = vpop.f32.mrf.mxu0
  %v386 = vadd.f32 %v294, %v385
  %387 = vdwg.mxu0
  %388 = vmatpush.msra.mxu0 0.0
  %389 = vmatpush.msra.mxu0 0.0
  %390 = vmatpush.msra.mxu0 0.0
  %391 = vmatpush.msra.mxu0 0.0
  %392 = vmatpush.msra.mxu0 0.0
  %393 = vmatpush.msra.mxu0 0.0
  %394 = vmatpush.msra.mxu0 0.0
  %395 = vmatpush.msra.mxu0 0.0
  %396 = vmatpush.msra.mxu0 0.0
  %397 = vmatpush.msra.mxu0 0.0
  %398 = vmatpush.msra.mxu0 0.0
  %v399 = vand.u32 %v74, 4294901760
  %400 = vmatpush.msra.mxu0 %v399
  %v401 = vand.u32 %v29, 4294901760
  %402 = vmatpush.msra.mxu0 %v401
  %v403 = vand.u32 %v28, 4294901760
  %404 = vmatpush.msra.mxu0 %v403
  %v405 = vand.u32 %v27, 4294901760
  %406 = vmatpush.msra.mxu0 %v405
  %v407 = vand.u32 %v26, 4294901760
  %408 = vmatpush.msra.mxu0 %v407
  %v409 = vand.u32 %v34, 4294901760
  %v410 = vsub.f32 %v34, %v409
  %v411 = vand.u32 %v410, 4294901760
  %412 = vmatmul.f32.gmra.mxu0 %v411
  %v413 = vpop.f32.mrf.mxu0
  %v414 = vadd.f32 %v326, %v413
  %v415 = vand.u32 %v37, 4294901760
  %v416 = vsub.f32 %v37, %v415
  %v417 = vand.u32 %v416, 4294901760
  %418 = vmatmul.f32.gmra.mxu0 %v417
  %v419 = vpop.f32.mrf.mxu0
  %v420 = vadd.f32 %v331, %v419
  %v421 = vand.u32 %v40, 4294901760
  %v422 = vsub.f32 %v40, %v421
  %v423 = vand.u32 %v422, 4294901760
  %424 = vmatmul.f32.gmra.mxu0 %v423
  %v425 = vpop.f32.mrf.mxu0
  %v426 = vadd.f32 %v336, %v425
  %v427 = vand.u32 %v43, 4294901760
  %v428 = vsub.f32 %v43, %v427
  %v429 = vand.u32 %v428, 4294901760
  %430 = vmatmul.f32.gmra.mxu0 %v429
  %v431 = vpop.f32.mrf.mxu0
  %v432 = vadd.f32 %v341, %v431
  %v433 = vand.u32 %v46, 4294901760
  %v434 = vsub.f32 %v46, %v433
  %v435 = vand.u32 %v434, 4294901760
  %436 = vmatmul.f32.gmra.mxu0 %v435
  %v437 = vpop.f32.mrf.mxu0
  %v438 = vadd.f32 %v346, %v437
  %v439 = vand.u32 %v49, 4294901760
  %v440 = vsub.f32 %v49, %v439
  %v441 = vand.u32 %v440, 4294901760
  %442 = vmatmul.f32.gmra.mxu0 %v441
  %v443 = vpop.f32.mrf.mxu0
  %v444 = vadd.f32 %v351, %v443
  %v445 = vand.u32 %v52, 4294901760
  %v446 = vsub.f32 %v52, %v445
  %v447 = vand.u32 %v446, 4294901760
  %448 = vmatmul.f32.gmra.mxu0 %v447
  %v449 = vpop.f32.mrf.mxu0
  %v450 = vadd.f32 %v356, %v449
  %v451 = vand.u32 %v55, 4294901760
  %v452 = vsub.f32 %v55, %v451
  %v453 = vand.u32 %v452, 4294901760
  %454 = vmatmul.f32.gmra.mxu0 %v453
  %v455 = vpop.f32.mrf.mxu0
  %v456 = vadd.f32 %v361, %v455
  %v457 = vand.u32 %v58, 4294901760
  %v458 = vsub.f32 %v58, %v457
  %v459 = vand.u32 %v458, 4294901760
  %460 = vmatmul.f32.gmra.mxu0 %v459
  %v461 = vpop.f32.mrf.mxu0
  %v462 = vadd.f32 %v366, %v461
  %v463 = vand.u32 %v61, 4294901760
  %v464 = vsub.f32 %v61, %v463
  %v465 = vand.u32 %v464, 4294901760
  %466 = vmatmul.f32.gmra.mxu0 %v465
  %v467 = vpop.f32.mrf.mxu0
  %v468 = vadd.f32 %v371, %v467
  %v469 = vand.u32 %v64, 4294901760
  %v470 = vsub.f32 %v64, %v469
  %v471 = vand.u32 %v470, 4294901760
  %472 = vmatmul.f32.gmra.mxu0 %v471
  %v473 = vpop.f32.mrf.mxu0
  %v474 = vadd.f32 %v376, %v473
  %v475 = vand.u32 %v67, 4294901760
  %v476 = vsub.f32 %v67, %v475
  %v477 = vand.u32 %v476, 4294901760
  %478 = vmatmul.f32.gmra.mxu0 %v477
  %v479 = vpop.f32.mrf.mxu0
  %v480 = vadd.f32 %v381, %v479
  %v481 = vand.u32 %v70, 4294901760
  %v482 = vsub.f32 %v70, %v481
  %v483 = vand.u32 %v482, 4294901760
  %484 = vmatmul.f32.gmra.mxu0 %v483
  %v485 = vpop.f32.mrf.mxu0
  %v486 = vadd.f32 %v386, %v485
  %487 = vdwg.mxu0
  %488 = vmatpush.msra.mxu0 0.0
  %489 = vmatpush.msra.mxu0 0.0
  %490 = vmatpush.msra.mxu0 0.0
  %491 = vmatpush.msra.mxu0 0.0
  %492 = vmatpush.msra.mxu0 0.0
  %493 = vmatpush.msra.mxu0 0.0
  %494 = vmatpush.msra.mxu0 0.0
  %495 = vmatpush.msra.mxu0 0.0
  %496 = vmatpush.msra.mxu0 0.0
  %497 = vmatpush.msra.mxu0 0.0
  %498 = vmatpush.msra.mxu0 0.0
  %v499 = vand.u32 %v74, 4294901760
  %v500 = vsub.f32 %v74, %v499
  %v501 = vand.u32 %v500, 4294901760
  %502 = vmatpush.msra.mxu0 %v501
  %v503 = vand.u32 %v29, 4294901760
  %v504 = vsub.f32 %v29, %v503
  %v505 = vand.u32 %v504, 4294901760
  %506 = vmatpush.msra.mxu0 %v505
  %v507 = vand.u32 %v28, 4294901760
  %v508 = vsub.f32 %v28, %v507
  %v509 = vand.u32 %v508, 4294901760
  %510 = vmatpush.msra.mxu0 %v509
  %v511 = vand.u32 %v27, 4294901760
  %v512 = vsub.f32 %v27, %v511
  %v513 = vand.u32 %v512, 4294901760
  %514 = vmatpush.msra.mxu0 %v513
  %v515 = vand.u32 %v26, 4294901760
  %v516 = vsub.f32 %v26, %v515
  %v517 = vand.u32 %v516, 4294901760
  %518 = vmatpush.msra.mxu0 %v517
  %v519 = vand.u32 %v34, 4294901760
  %520 = vmatmul.f32.gmra.mxu0 %v519
  %v521 = vpop.f32.mrf.mxu0
  %v522 = vadd.f32 %v414, %v521
  %v523 = vand.u32 %v37, 4294901760
  %524 = vmatmul.f32.gmra.mxu0 %v523
  %v525 = vpop.f32.mrf.mxu0
  %v526 = vadd.f32 %v420, %v525
  %v527 = vand.u32 %v40, 4294901760
  %528 = vmatmul.f32.gmra.mxu0 %v527
  %v529 = vpop.f32.mrf.mxu0
  %v530 = vadd.f32 %v426, %v529
  %v531 = vand.u32 %v43, 4294901760
  %532 = vmatmul.f32.gmra.mxu0 %v531
  %v533 = vpop.f32.mrf.mxu0
  %v534 = vadd.f32 %v432, %v533
  %v535 = vand.u32 %v46, 4294901760
  %536 = vmatmul.f32.gmra.mxu0 %v535
  %v537 = vpop.f32.mrf.mxu0
  %v538 = vadd.f32 %v438, %v537
  %v539 = vand.u32 %v49, 4294901760
  %540 = vmatmul.f32.gmra.mxu0 %v539
  %v541 = vpop.f32.mrf.mxu0
  %v542 = vadd.f32 %v444, %v541
  %v543 = vand.u32 %v52, 4294901760
  %544 = vmatmul.f32.gmra.mxu0 %v543
  %v545 = vpop.f32.mrf.mxu0
  %v546 = vadd.f32 %v450, %v545
  %v547 = vand.u32 %v55, 4294901760
  %548 = vmatmul.f32.gmra.mxu0 %v547
  %v549 = vpop.f32.mrf.mxu0
  %v550 = vadd.f32 %v456, %v549
  %v551 = vand.u32 %v58, 4294901760
  %552 = vmatmul.f32.gmra.mxu0 %v551
  %v553 = vpop.f32.mrf.mxu0
  %v554 = vadd.f32 %v462, %v553
  %v555 = vand.u32 %v61, 4294901760
  %556 = vmatmul.f32.gmra.mxu0 %v555
  %v557 = vpop.f32.mrf.mxu0
  %v558 = vadd.f32 %v468, %v557
  %v559 = vand.u32 %v64, 4294901760
  %560 = vmatmul.f32.gmra.mxu0 %v559
  %v561 = vpop.f32.mrf.mxu0
  %v562 = vadd.f32 %v474, %v561
  %v563 = vand.u32 %v67, 4294901760
  %564 = vmatmul.f32.gmra.mxu0 %v563
  %v565 = vpop.f32.mrf.mxu0
  %v566 = vadd.f32 %v480, %v565
  %v567 = vand.u32 %v70, 4294901760
  %568 = vmatmul.f32.gmra.mxu0 %v567
  %v569 = vpop.f32.mrf.mxu0
  %v570 = vadd.f32 %v486, %v569
  %571 = vdwg.mxu0
  %572 = vmatpush.msra.mxu0 0.0
  %573 = vmatpush.msra.mxu0 0.0
  %574 = vmatpush.msra.mxu0 0.0
  %575 = vmatpush.msra.mxu0 0.0
  %576 = vmatpush.msra.mxu0 0.0
  %577 = vmatpush.msra.mxu0 0.0
  %578 = vmatpush.msra.mxu0 0.0
  %579 = vmatpush.msra.mxu0 0.0
  %580 = vmatpush.msra.mxu0 0.0
  %581 = vmatpush.msra.mxu0 0.0
  %582 = vmatpush.msra.mxu0 0.0
  %v583 = vand.u32 %v74, 4294901760
  %584 = vmatpush.msra.mxu0 %v583
  %v585 = vand.u32 %v29, 4294901760
  %586 = vmatpush.msra.mxu0 %v585
  %v587 = vand.u32 %v28, 4294901760
  %588 = vmatpush.msra.mxu0 %v587
  %v589 = vand.u32 %v27, 4294901760
  %590 = vmatpush.msra.mxu0 %v589
  %v591 = vand.u32 %v26, 4294901760
  %592 = vmatpush.msra.mxu0 %v591
  %v593 = vand.u32 %v34, 4294901760
  %594 = vmatmul.f32.gmra.mxu0 %v593
  %v595 = vpop.f32.mrf.mxu0
  %v596 = vadd.f32 %v522, %v595
  %v597 = vand.u32 %v37, 4294901760
  %598 = vmatmul.f32.gmra.mxu0 %v597
  %v599 = vpop.f32.mrf.mxu0
  %v600 = vadd.f32 %v526, %v599
  %v601 = vand.u32 %v40, 4294901760
  %602 = vmatmul.f32.gmra.mxu0 %v601
  %v603 = vpop.f32.mrf.mxu0
  %v604 = vadd.f32 %v530, %v603
  %v605 = vand.u32 %v43, 4294901760
  %606 = vmatmul.f32.gmra.mxu0 %v605
  %v607 = vpop.f32.mrf.mxu0
  %v608 = vadd.f32 %v534, %v607
  %v609 = vand.u32 %v46, 4294901760
  %610 = vmatmul.f32.gmra.mxu0 %v609
  %v611 = vpop.f32.mrf.mxu0
  %v612 = vadd.f32 %v538, %v611
  %v613 = vand.u32 %v49, 4294901760
  %614 = vmatmul.f32.gmra.mxu0 %v613
  %v615 = vpop.f32.mrf.mxu0
  %v616 = vadd.f32 %v542, %v615
  %v617 = vand.u32 %v52, 4294901760
  %618 = vmatmul.f32.gmra.mxu0 %v617
  %v619 = vpop.f32.mrf.mxu0
  %v620 = vadd.f32 %v546, %v619
  %v621 = vand.u32 %v55, 4294901760
  %622 = vmatmul.f32.gmra.mxu0 %v621
  %v623 = vpop.f32.mrf.mxu0
  %v624 = vadd.f32 %v550, %v623
  %v625 = vand.u32 %v58, 4294901760
  %626 = vmatmul.f32.gmra.mxu0 %v625
  %v627 = vpop.f32.mrf.mxu0
  %v628 = vadd.f32 %v554, %v627
  %v629 = vand.u32 %v61, 4294901760
  %630 = vmatmul.f32.gmra.mxu0 %v629
  %v631 = vpop.f32.mrf.mxu0
  %v632 = vadd.f32 %v558, %v631
  %v633 = vand.u32 %v64, 4294901760
  %634 = vmatmul.f32.gmra.mxu0 %v633
  %v635 = vpop.f32.mrf.mxu0
  %v636 = vadd.f32 %v562, %v635
  %v637 = vand.u32 %v67, 4294901760
  %638 = vmatmul.f32.gmra.mxu0 %v637
  %v639 = vpop.f32.mrf.mxu0
  %v640 = vadd.f32 %v566, %v639
  %v641 = vand.u32 %v70, 4294901760
  %642 = vmatmul.f32.gmra.mxu0 %v641
  %v643 = vpop.f32.mrf.mxu0
  %v644 = vadd.f32 %v570, %v643
  %645 = vdwg.mxu0
  %v646 = vmax.f32 %v596, 0.0
  %v647 = vmax.f32 %v600, 0.0
  %v648 = vmax.f32 %v604, 0.0
  %v649 = vmax.f32 %v608, 0.0
  %v650 = vmax.f32 %v612, 0.0
  %v651 = vmax.f32 %v616, 0.0
  %v652 = vmax.f32 %v620, 0.0
  %v653 = vmax.f32 %v624, 0.0
  %v654 = vmax.f32 %v628, 0.0
  %v655 = vmax.f32 %v632, 0.0
  %v656 = vmax.f32 %v636, 0.0
  %v657 = vmax.f32 %v640, 0.0
  %v658 = vmax.f32 %v644, 0.0
  %v659 = vld [vmem:[%s0 + $0x78] sm:$0xff]
  %v660 = vld [vmem:[%s0 + $0x80] sm:$0xff]
  %vm661 = vcmask 64512
  %v663 = vsel %vm661, %v646, 0
  %v666 = vsel %vm661, %v647, 0
  %v669 = vsel %vm661, %v648, 0
  %v672 = vsel %vm661, %v649, 0
  %v675 = vsel %vm661, %v650, 0
  %v678 = vsel %vm661, %v651, 0
  %v681 = vsel %vm661, %v652, 0
  %v684 = vsel %vm661, %v653, 0
  %v687 = vsel %vm661, %v654, 0
  %v690 = vsel %vm661, %v655, 0
  %v693 = vsel %vm661, %v656, 0
  %v696 = vsel %vm661, %v657, 0
  %v699 = vsel %vm661, %v658, 0
  %701 = vmatpush.msra.mxu0 0.0
  %702 = vmatpush.msra.mxu0 0.0
  %703 = vmatpush.msra.mxu0 0.0
  %704 = vmatpush.msra.mxu0 0.0
  %705 = vmatpush.msra.mxu0 0.0
  %706 = vmatpush.msra.mxu0 0.0
  %707 = vmatpush.msra.mxu0 0.0
  %708 = vmatpush.msra.mxu0 0.0
  %709 = vmatpush.msra.mxu0 0.0
  %710 = vmatpush.msra.mxu0 0.0
  %711 = vmatpush.msra.mxu0 0.0
  %712 = vmatpush.msra.mxu0 0.0
  %713 = vmatpush.msra.mxu0 0.0
  %714 = vmatpush.msra.mxu0 0.0
  %715 = vmatpush.msra.mxu0 0.0
  %v716 = vand.u32 %v659, 4294901760
  %717 = vmatpush.msra.mxu0 %v716
  %v718 = vand.u32 %v663, 4294901760
  %v719 = vsub.f32 %v663, %v718
  %v720 = vand.u32 %v719, 4294901760
  %v721 = vsub.f32 %v719, %v720
  %v722 = vand.u32 %v721, 4294901760
  %723 = vmatmul.f32.gmra.mxu0 %v722
  %v724 = vpop.f32.mrf.mxu0
  %v725 = vadd.f32 0.0, %v724
  %v726 = vand.u32 %v666, 4294901760
  %v727 = vsub.f32 %v666, %v726
  %v728 = vand.u32 %v727, 4294901760
  %v729 = vsub.f32 %v727, %v728
  %v730 = vand.u32 %v729, 4294901760
  %731 = vmatmul.f32.gmra.mxu0 %v730
  %v732 = vpop.f32.mrf.mxu0
  %v733 = vadd.f32 0.0, %v732
  %v734 = vand.u32 %v669, 4294901760
  %v735 = vsub.f32 %v669, %v734
  %v736 = vand.u32 %v735, 4294901760
  %v737 = vsub.f32 %v735, %v736
  %v738 = vand.u32 %v737, 4294901760
  %739 = vmatmul.f32.gmra.mxu0 %v738
  %v740 = vpop.f32.mrf.mxu0
  %v741 = vadd.f32 0.0, %v740
  %v742 = vand.u32 %v672, 4294901760
  %v743 = vsub.f32 %v672, %v742
  %v744 = vand.u32 %v743, 4294901760
  %v745 = vsub.f32 %v743, %v744
  %v746 = vand.u32 %v745, 4294901760
  %747 = vmatmul.f32.gmra.mxu0 %v746
  %v748 = vpop.f32.mrf.mxu0
  %v749 = vadd.f32 0.0, %v748
  %v750 = vand.u32 %v675, 4294901760
  %v751 = vsub.f32 %v675, %v750
  %v752 = vand.u32 %v751, 4294901760
  %v753 = vsub.f32 %v751, %v752
  %v754 = vand.u32 %v753, 4294901760
  %755 = vmatmul.f32.gmra.mxu0 %v754
  %v756 = vpop.f32.mrf.mxu0
  %v757 = vadd.f32 0.0, %v756
  %v758 = vand.u32 %v678, 4294901760
  %v759 = vsub.f32 %v678, %v758
  %v760 = vand.u32 %v759, 4294901760
  %v761 = vsub.f32 %v759, %v760
  %v762 = vand.u32 %v761, 4294901760
  %763 = vmatmul.f32.gmra.mxu0 %v762
  %v764 = vpop.f32.mrf.mxu0
  %v765 = vadd.f32 0.0, %v764
  %v766 = vand.u32 %v681, 4294901760
  %v767 = vsub.f32 %v681, %v766
  %v768 = vand.u32 %v767, 4294901760
  %v769 = vsub.f32 %v767, %v768
  %v770 = vand.u32 %v769, 4294901760
  %771 = vmatmul.f32.gmra.mxu0 %v770
  %v772 = vpop.f32.mrf.mxu0
  %v773 = vadd.f32 0.0, %v772
  %v774 = vand.u32 %v684, 4294901760
  %v775 = vsub.f32 %v684, %v774
  %v776 = vand.u32 %v775, 4294901760
  %v777 = vsub.f32 %v775, %v776
  %v778 = vand.u32 %v777, 4294901760
  %779 = vmatmul.f32.gmra.mxu0 %v778
  %v780 = vpop.f32.mrf.mxu0
  %v781 = vadd.f32 0.0, %v780
  %v782 = vand.u32 %v687, 4294901760
  %v783 = vsub.f32 %v687, %v782
  %v784 = vand.u32 %v783, 4294901760
  %v785 = vsub.f32 %v783, %v784
  %v786 = vand.u32 %v785, 4294901760
  %787 = vmatmul.f32.gmra.mxu0 %v786
  %v788 = vpop.f32.mrf.mxu0
  %v789 = vadd.f32 0.0, %v788
  %v790 = vand.u32 %v690, 4294901760
  %v791 = vsub.f32 %v690, %v790
  %v792 = vand.u32 %v791, 4294901760
  %v793 = vsub.f32 %v791, %v792
  %v794 = vand.u32 %v793, 4294901760
  %795 = vmatmul.f32.gmra.mxu0 %v794
  %v796 = vpop.f32.mrf.mxu0
  %v797 = vadd.f32 0.0, %v796
  %v798 = vand.u32 %v693, 4294901760
  %v799 = vsub.f32 %v693, %v798
  %v800 = vand.u32 %v799, 4294901760
  %v801 = vsub.f32 %v799, %v800
  %v802 = vand.u32 %v801, 4294901760
  %803 = vmatmul.f32.gmra.mxu0 %v802
  %v804 = vpop.f32.mrf.mxu0
  %v805 = vadd.f32 0.0, %v804
  %v806 = vand.u32 %v696, 4294901760
  %v807 = vsub.f32 %v696, %v806
  %v808 = vand.u32 %v807, 4294901760
  %v809 = vsub.f32 %v807, %v808
  %v810 = vand.u32 %v809, 4294901760
  %811 = vmatmul.f32.gmra.mxu0 %v810
  %v812 = vpop.f32.mrf.mxu0
  %v813 = vadd.f32 0.0, %v812
  %v814 = vand.u32 %v699, 4294901760
  %v815 = vsub.f32 %v699, %v814
  %v816 = vand.u32 %v815, 4294901760
  %v817 = vsub.f32 %v815, %v816
  %v818 = vand.u32 %v817, 4294901760
  %819 = vmatmul.f32.gmra.mxu0 %v818
  %v820 = vpop.f32.mrf.mxu0
  %v821 = vadd.f32 0.0, %v820
  %822 = vdwg.mxu0
  %823 = vmatpush.msra.mxu0 0.0
  %824 = vmatpush.msra.mxu0 0.0
  %825 = vmatpush.msra.mxu0 0.0
  %826 = vmatpush.msra.mxu0 0.0
  %827 = vmatpush.msra.mxu0 0.0
  %828 = vmatpush.msra.mxu0 0.0
  %829 = vmatpush.msra.mxu0 0.0
  %830 = vmatpush.msra.mxu0 0.0
  %831 = vmatpush.msra.mxu0 0.0
  %832 = vmatpush.msra.mxu0 0.0
  %833 = vmatpush.msra.mxu0 0.0
  %834 = vmatpush.msra.mxu0 0.0
  %835 = vmatpush.msra.mxu0 0.0
  %836 = vmatpush.msra.mxu0 0.0
  %837 = vmatpush.msra.mxu0 0.0
  %v838 = vand.u32 %v659, 4294901760
  %v839 = vsub.f32 %v659, %v838
  %v840 = vand.u32 %v839, 4294901760
  %v841 = vsub.f32 %v839, %v840
  %v842 = vand.u32 %v841, 4294901760
  %843 = vmatpush.msra.mxu0 %v842
  %v844 = vand.u32 %v663, 4294901760
  %845 = vmatmul.f32.gmra.mxu0 %v844
  %v846 = vpop.f32.mrf.mxu0
  %v847 = vadd.f32 %v725, %v846
  %v848 = vand.u32 %v666, 4294901760
  %849 = vmatmul.f32.gmra.mxu0 %v848
  %v850 = vpop.f32.mrf.mxu0
  %v851 = vadd.f32 %v733, %v850
  %v852 = vand.u32 %v669, 4294901760
  %853 = vmatmul.f32.gmra.mxu0 %v852
  %v854 = vpop.f32.mrf.mxu0
  %v855 = vadd.f32 %v741, %v854
  %v856 = vand.u32 %v672, 4294901760
  %857 = vmatmul.f32.gmra.mxu0 %v856
  %v858 = vpop.f32.mrf.mxu0
  %v859 = vadd.f32 %v749, %v858
  %v860 = vand.u32 %v675, 4294901760
  %861 = vmatmul.f32.gmra.mxu0 %v860
  %v862 = vpop.f32.mrf.mxu0
  %v863 = vadd.f32 %v757, %v862
  %v864 = vand.u32 %v678, 4294901760
  %865 = vmatmul.f32.gmra.mxu0 %v864
  %v866 = vpop.f32.mrf.mxu0
  %v867 = vadd.f32 %v765, %v866
  %v868 = vand.u32 %v681, 4294901760
  %869 = vmatmul.f32.gmra.mxu0 %v868
  %v870 = vpop.f32.mrf.mxu0
  %v871 = vadd.f32 %v773, %v870
  %v872 = vand.u32 %v684, 4294901760
  %873 = vmatmul.f32.gmra.mxu0 %v872
  %v874 = vpop.f32.mrf.mxu0
  %v875 = vadd.f32 %v781, %v874
  %v876 = vand.u32 %v687, 4294901760
  %877 = vmatmul.f32.gmra.mxu0 %v876
  %v878 = vpop.f32.mrf.mxu0
  %v879 = vadd.f32 %v789, %v878
  %v880 = vand.u32 %v690, 4294901760
  %881 = vmatmul.f32.gmra.mxu0 %v880
  %v882 = vpop.f32.mrf.mxu0
  %v883 = vadd.f32 %v797, %v882
  %v884 = vand.u32 %v693, 4294901760
  %885 = vmatmul.f32.gmra.mxu0 %v884
  %v886 = vpop.f32.mrf.mxu0
  %v887 = vadd.f32 %v805, %v886
  %v888 = vand.u32 %v696, 4294901760
  %889 = vmatmul.f32.gmra.mxu0 %v888
  %v890 = vpop.f32.mrf.mxu0
  %v891 = vadd.f32 %v813, %v890
  %v892 = vand.u32 %v699, 4294901760
  %893 = vmatmul.f32.gmra.mxu0 %v892
  %v894 = vpop.f32.mrf.mxu0
  %v895 = vadd.f32 %v821, %v894
  %896 = vdwg.mxu0
  %897 = vmatpush.msra.mxu0 0.0
  %898 = vmatpush.msra.mxu0 0.0
  %899 = vmatpush.msra.mxu0 0.0
  %900 = vmatpush.msra.mxu0 0.0
  %901 = vmatpush.msra.mxu0 0.0
  %902 = vmatpush.msra.mxu0 0.0
  %903 = vmatpush.msra.mxu0 0.0
  %904 = vmatpush.msra.mxu0 0.0
  %905 = vmatpush.msra.mxu0 0.0
  %906 = vmatpush.msra.mxu0 0.0
  %907 = vmatpush.msra.mxu0 0.0
  %908 = vmatpush.msra.mxu0 0.0
  %909 = vmatpush.msra.mxu0 0.0
  %910 = vmatpush.msra.mxu0 0.0
  %911 = vmatpush.msra.mxu0 0.0
  %v912 = vand.u32 %v659, 4294901760
  %v913 = vsub.f32 %v659, %v912
  %914 = vmatpush.msra.mxu0 %v913
  %v915 = vand.u32 %v663, 4294901760
  %v916 = vsub.f32 %v663, %v915
  %917 = vmatmul.f32.gmra.mxu0 %v916
  %v918 = vpop.f32.mrf.mxu0
  %v919 = vadd.f32 %v847, %v918
  %v920 = vand.u32 %v666, 4294901760
  %v921 = vsub.f32 %v666, %v920
  %922 = vmatmul.f32.gmra.mxu0 %v921
  %v923 = vpop.f32.mrf.mxu0
  %v924 = vadd.f32 %v851, %v923
  %v925 = vand.u32 %v669, 4294901760
  %v926 = vsub.f32 %v669, %v925
  %927 = vmatmul.f32.gmra.mxu0 %v926
  %v928 = vpop.f32.mrf.mxu0
  %v929 = vadd.f32 %v855, %v928
  %v930 = vand.u32 %v672, 4294901760
  %v931 = vsub.f32 %v672, %v930
  %932 = vmatmul.f32.gmra.mxu0 %v931
  %v933 = vpop.f32.mrf.mxu0
  %v934 = vadd.f32 %v859, %v933
  %v935 = vand.u32 %v675, 4294901760
  %v936 = vsub.f32 %v675, %v935
  %937 = vmatmul.f32.gmra.mxu0 %v936
  %v938 = vpop.f32.mrf.mxu0
  %v939 = vadd.f32 %v863, %v938
  %v940 = vand.u32 %v678, 4294901760
  %v941 = vsub.f32 %v678, %v940
  %942 = vmatmul.f32.gmra.mxu0 %v941
  %v943 = vpop.f32.mrf.mxu0
  %v944 = vadd.f32 %v867, %v943
  %v945 = vand.u32 %v681, 4294901760
  %v946 = vsub.f32 %v681, %v945
  %947 = vmatmul.f32.gmra.mxu0 %v946
  %v948 = vpop.f32.mrf.mxu0
  %v949 = vadd.f32 %v871, %v948
  %v950 = vand.u32 %v684, 4294901760
  %v951 = vsub.f32 %v684, %v950
  %952 = vmatmul.f32.gmra.mxu0 %v951
  %v953 = vpop.f32.mrf.mxu0
  %v954 = vadd.f32 %v875, %v953
  %v955 = vand.u32 %v687, 4294901760
  %v956 = vsub.f32 %v687, %v955
  %957 = vmatmul.f32.gmra.mxu0 %v956
  %v958 = vpop.f32.mrf.mxu0
  %v959 = vadd.f32 %v879, %v958
  %v960 = vand.u32 %v690, 4294901760
  %v961 = vsub.f32 %v690, %v960
  %962 = vmatmul.f32.gmra.mxu0 %v961
  %v963 = vpop.f32.mrf.mxu0
  %v964 = vadd.f32 %v883, %v963
  %v965 = vand.u32 %v693, 4294901760
  %v966 = vsub.f32 %v693, %v965
  %967 = vmatmul.f32.gmra.mxu0 %v966
  %v968 = vpop.f32.mrf.mxu0
  %v969 = vadd.f32 %v887, %v968
  %v970 = vand.u32 %v696, 4294901760
  %v971 = vsub.f32 %v696, %v970
  %972 = vmatmul.f32.gmra.mxu0 %v971
  %v973 = vpop.f32.mrf.mxu0
  %v974 = vadd.f32 %v891, %v973
  %v975 = vand.u32 %v699, 4294901760
  %v976 = vsub.f32 %v699, %v975
  %977 = vmatmul.f32.gmra.mxu0 %v976
  %v978 = vpop.f32.mrf.mxu0
  %v979 = vadd.f32 %v895, %v978
  %980 = vdwg.mxu0
  %981 = vmatpush.msra.mxu0 0.0
  %982 = vmatpush.msra.mxu0 0.0
  %983 = vmatpush.msra.mxu0 0.0
  %984 = vmatpush.msra.mxu0 0.0
  %985 = vmatpush.msra.mxu0 0.0
  %986 = vmatpush.msra.mxu0 0.0
  %987 = vmatpush.msra.mxu0 0.0
  %988 = vmatpush.msra.mxu0 0.0
  %989 = vmatpush.msra.mxu0 0.0
  %990 = vmatpush.msra.mxu0 0.0
  %991 = vmatpush.msra.mxu0 0.0
  %992 = vmatpush.msra.mxu0 0.0
  %993 = vmatpush.msra.mxu0 0.0
  %994 = vmatpush.msra.mxu0 0.0
  %995 = vmatpush.msra.mxu0 0.0
  %v996 = vand.u32 %v659, 4294901760
  %997 = vmatpush.msra.mxu0 %v996
  %v998 = vand.u32 %v663, 4294901760
  %v999 = vsub.f32 %v663, %v998
  %v1000 = vand.u32 %v999, 4294901760
  %1001 = vmatmul.f32.gmra.mxu0 %v1000
  %v1002 = vpop.f32.mrf.mxu0
  %v1003 = vadd.f32 %v919, %v1002
  %v1004 = vand.u32 %v666, 4294901760
  %v1005 = vsub.f32 %v666, %v1004
  %v1006 = vand.u32 %v1005, 4294901760
  %1007 = vmatmul.f32.gmra.mxu0 %v1006
  %v1008 = vpop.f32.mrf.mxu0
  %v1009 = vadd.f32 %v924, %v1008
  %v1010 = vand.u32 %v669, 4294901760
  %v1011 = vsub.f32 %v669, %v1010
  %v1012 = vand.u32 %v1011, 4294901760
  %1013 = vmatmul.f32.gmra.mxu0 %v1012
  %v1014 = vpop.f32.mrf.mxu0
  %v1015 = vadd.f32 %v929, %v1014
  %v1016 = vand.u32 %v672, 4294901760
  %v1017 = vsub.f32 %v672, %v1016
  %v1018 = vand.u32 %v1017, 4294901760
  %1019 = vmatmul.f32.gmra.mxu0 %v1018
  %v1020 = vpop.f32.mrf.mxu0
  %v1021 = vadd.f32 %v934, %v1020
  %v1022 = vand.u32 %v675, 4294901760
  %v1023 = vsub.f32 %v675, %v1022
  %v1024 = vand.u32 %v1023, 4294901760
  %1025 = vmatmul.f32.gmra.mxu0 %v1024
  %v1026 = vpop.f32.mrf.mxu0
  %v1027 = vadd.f32 %v939, %v1026
  %v1028 = vand.u32 %v678, 4294901760
  %v1029 = vsub.f32 %v678, %v1028
  %v1030 = vand.u32 %v1029, 4294901760
  %1031 = vmatmul.f32.gmra.mxu0 %v1030
  %v1032 = vpop.f32.mrf.mxu0
  %v1033 = vadd.f32 %v944, %v1032
  %v1034 = vand.u32 %v681, 4294901760
  %v1035 = vsub.f32 %v681, %v1034
  %v1036 = vand.u32 %v1035, 4294901760
  %1037 = vmatmul.f32.gmra.mxu0 %v1036
  %v1038 = vpop.f32.mrf.mxu0
  %v1039 = vadd.f32 %v949, %v1038
  %v1040 = vand.u32 %v684, 4294901760
  %v1041 = vsub.f32 %v684, %v1040
  %v1042 = vand.u32 %v1041, 4294901760
  %1043 = vmatmul.f32.gmra.mxu0 %v1042
  %v1044 = vpop.f32.mrf.mxu0
  %v1045 = vadd.f32 %v954, %v1044
  %v1046 = vand.u32 %v687, 4294901760
  %v1047 = vsub.f32 %v687, %v1046
  %v1048 = vand.u32 %v1047, 4294901760
  %1049 = vmatmul.f32.gmra.mxu0 %v1048
  %v1050 = vpop.f32.mrf.mxu0
  %v1051 = vadd.f32 %v959, %v1050
  %v1052 = vand.u32 %v690, 4294901760
  %v1053 = vsub.f32 %v690, %v1052
  %v1054 = vand.u32 %v1053, 4294901760
  %1055 = vmatmul.f32.gmra.mxu0 %v1054
  %v1056 = vpop.f32.mrf.mxu0
  %v1057 = vadd.f32 %v964, %v1056
  %v1058 = vand.u32 %v693, 4294901760
  %v1059 = vsub.f32 %v693, %v1058
  %v1060 = vand.u32 %v1059, 4294901760
  %1061 = vmatmul.f32.gmra.mxu0 %v1060
  %v1062 = vpop.f32.mrf.mxu0
  %v1063 = vadd.f32 %v969, %v1062
  %v1064 = vand.u32 %v696, 4294901760
  %v1065 = vsub.f32 %v696, %v1064
  %v1066 = vand.u32 %v1065, 4294901760
  %1067 = vmatmul.f32.gmra.mxu0 %v1066
  %v1068 = vpop.f32.mrf.mxu0
  %v1069 = vadd.f32 %v974, %v1068
  %v1070 = vand.u32 %v699, 4294901760
  %v1071 = vsub.f32 %v699, %v1070
  %v1072 = vand.u32 %v1071, 4294901760
  %1073 = vmatmul.f32.gmra.mxu0 %v1072
  %v1074 = vpop.f32.mrf.mxu0
  %v1075 = vadd.f32 %v979, %v1074
  %1076 = vdwg.mxu0
  %1077 = vmatpush.msra.mxu0 0.0
  %1078 = vmatpush.msra.mxu0 0.0
  %1079 = vmatpush.msra.mxu0 0.0
  %1080 = vmatpush.msra.mxu0 0.0
  %1081 = vmatpush.msra.mxu0 0.0
  %1082 = vmatpush.msra.mxu0 0.0
  %1083 = vmatpush.msra.mxu0 0.0
  %1084 = vmatpush.msra.mxu0 0.0
  %1085 = vmatpush.msra.mxu0 0.0
  %1086 = vmatpush.msra.mxu0 0.0
  %1087 = vmatpush.msra.mxu0 0.0
  %1088 = vmatpush.msra.mxu0 0.0
  %1089 = vmatpush.msra.mxu0 0.0
  %1090 = vmatpush.msra.mxu0 0.0
  %1091 = vmatpush.msra.mxu0 0.0
  %v1092 = vand.u32 %v659, 4294901760
  %v1093 = vsub.f32 %v659, %v1092
  %v1094 = vand.u32 %v1093, 4294901760
  %1095 = vmatpush.msra.mxu0 %v1094
  %v1096 = vand.u32 %v663, 4294901760
  %1097 = vmatmul.f32.gmra.mxu0 %v1096
  %v1098 = vpop.f32.mrf.mxu0
  %v1099 = vadd.f32 %v1003, %v1098
  %v1100 = vand.u32 %v666, 4294901760
  %1101 = vmatmul.f32.gmra.mxu0 %v1100
  %v1102 = vpop.f32.mrf.mxu0
  %v1103 = vadd.f32 %v1009, %v1102
  %v1104 = vand.u32 %v669, 4294901760
  %1105 = vmatmul.f32.gmra.mxu0 %v1104
  %v1106 = vpop.f32.mrf.mxu0
  %v1107 = vadd.f32 %v1015, %v1106
  %v1108 = vand.u32 %v672, 4294901760
  %1109 = vmatmul.f32.gmra.mxu0 %v1108
  %v1110 = vpop.f32.mrf.mxu0
  %v1111 = vadd.f32 %v1021, %v1110
  %v1112 = vand.u32 %v675, 4294901760
  %1113 = vmatmul.f32.gmra.mxu0 %v1112
  %v1114 = vpop.f32.mrf.mxu0
  %v1115 = vadd.f32 %v1027, %v1114
  %v1116 = vand.u32 %v678, 4294901760
  %1117 = vmatmul.f32.gmra.mxu0 %v1116
  %v1118 = vpop.f32.mrf.mxu0
  %v1119 = vadd.f32 %v1033, %v1118
  %v1120 = vand.u32 %v681, 4294901760
  %1121 = vmatmul.f32.gmra.mxu0 %v1120
  %v1122 = vpop.f32.mrf.mxu0
  %v1123 = vadd.f32 %v1039, %v1122
  %v1124 = vand.u32 %v684, 4294901760
  %1125 = vmatmul.f32.gmra.mxu0 %v1124
  %v1126 = vpop.f32.mrf.mxu0
  %v1127 = vadd.f32 %v1045, %v1126
  %v1128 = vand.u32 %v687, 4294901760
  %1129 = vmatmul.f32.gmra.mxu0 %v1128
  %v1130 = vpop.f32.mrf.mxu0
  %v1131 = vadd.f32 %v1051, %v1130
  %v1132 = vand.u32 %v690, 4294901760
  %1133 = vmatmul.f32.gmra.mxu0 %v1132
  %v1134 = vpop.f32.mrf.mxu0
  %v1135 = vadd.f32 %v1057, %v1134
  %v1136 = vand.u32 %v693, 4294901760
  %1137 = vmatmul.f32.gmra.mxu0 %v1136
  %v1138 = vpop.f32.mrf.mxu0
  %v1139 = vadd.f32 %v1063, %v1138
  %v1140 = vand.u32 %v696, 4294901760
  %1141 = vmatmul.f32.gmra.mxu0 %v1140
  %v1142 = vpop.f32.mrf.mxu0
  %v1143 = vadd.f32 %v1069, %v1142
  %v1144 = vand.u32 %v699, 4294901760
  %1145 = vmatmul.f32.gmra.mxu0 %v1144
  %v1146 = vpop.f32.mrf.mxu0
  %v1147 = vadd.f32 %v1075, %v1146
  %1148 = vdwg.mxu0
  %1149 = vmatpush.msra.mxu0 0.0
  %1150 = vmatpush.msra.mxu0 0.0
  %1151 = vmatpush.msra.mxu0 0.0
  %1152 = vmatpush.msra.mxu0 0.0
  %1153 = vmatpush.msra.mxu0 0.0
  %1154 = vmatpush.msra.mxu0 0.0
  %1155 = vmatpush.msra.mxu0 0.0
  %1156 = vmatpush.msra.mxu0 0.0
  %1157 = vmatpush.msra.mxu0 0.0
  %1158 = vmatpush.msra.mxu0 0.0
  %1159 = vmatpush.msra.mxu0 0.0
  %1160 = vmatpush.msra.mxu0 0.0
  %1161 = vmatpush.msra.mxu0 0.0
  %1162 = vmatpush.msra.mxu0 0.0
  %1163 = vmatpush.msra.mxu0 0.0
  %v1164 = vand.u32 %v659, 4294901760
  %1165 = vmatpush.msra.mxu0 %v1164
  %v1166 = vand.u32 %v663, 4294901760
  %1167 = vmatmul.f32.gmra.mxu0 %v1166
  %v1168 = vpop.f32.mrf.mxu0
  %v1169 = vadd.f32 %v1099, %v1168
  %v1170 = vand.u32 %v666, 4294901760
  %1171 = vmatmul.f32.gmra.mxu0 %v1170
  %v1172 = vpop.f32.mrf.mxu0
  %v1173 = vadd.f32 %v1103, %v1172
  %v1174 = vand.u32 %v669, 4294901760
  %1175 = vmatmul.f32.gmra.mxu0 %v1174
  %v1176 = vpop.f32.mrf.mxu0
  %v1177 = vadd.f32 %v1107, %v1176
  %v1178 = vand.u32 %v672, 4294901760
  %1179 = vmatmul.f32.gmra.mxu0 %v1178
  %v1180 = vpop.f32.mrf.mxu0
  %v1181 = vadd.f32 %v1111, %v1180
  %v1182 = vand.u32 %v675, 4294901760
  %1183 = vmatmul.f32.gmra.mxu0 %v1182
  %v1184 = vpop.f32.mrf.mxu0
  %v1185 = vadd.f32 %v1115, %v1184
  %v1186 = vand.u32 %v678, 4294901760
  %1187 = vmatmul.f32.gmra.mxu0 %v1186
  %v1188 = vpop.f32.mrf.mxu0
  %v1189 = vadd.f32 %v1119, %v1188
  %v1190 = vand.u32 %v681, 4294901760
  %1191 = vmatmul.f32.gmra.mxu0 %v1190
  %v1192 = vpop.f32.mrf.mxu0
  %v1193 = vadd.f32 %v1123, %v1192
  %v1194 = vand.u32 %v684, 4294901760
  %1195 = vmatmul.f32.gmra.mxu0 %v1194
  %v1196 = vpop.f32.mrf.mxu0
  %v1197 = vadd.f32 %v1127, %v1196
  %v1198 = vand.u32 %v687, 4294901760
  %1199 = vmatmul.f32.gmra.mxu0 %v1198
  %v1200 = vpop.f32.mrf.mxu0
  %v1201 = vadd.f32 %v1131, %v1200
  %v1202 = vand.u32 %v690, 4294901760
  %1203 = vmatmul.f32.gmra.mxu0 %v1202
  %v1204 = vpop.f32.mrf.mxu0
  %v1205 = vadd.f32 %v1135, %v1204
  %v1206 = vand.u32 %v693, 4294901760
  %1207 = vmatmul.f32.gmra.mxu0 %v1206
  %v1208 = vpop.f32.mrf.mxu0
  %v1209 = vadd.f32 %v1139, %v1208
  %v1210 = vand.u32 %v696, 4294901760
  %1211 = vmatmul.f32.gmra.mxu0 %v1210
  %v1212 = vpop.f32.mrf.mxu0
  %v1213 = vadd.f32 %v1143, %v1212
  %v1214 = vand.u32 %v699, 4294901760
  %1215 = vmatmul.f32.gmra.mxu0 %v1214
  %v1216 = vpop.f32.mrf.mxu0
  %v1217 = vadd.f32 %v1147, %v1216
  %1218 = vdwg.mxu0
  %1219 = vmatpush.msra.mxu0 0.0
  %1220 = vmatpush.msra.mxu0 0.0
  %1221 = vmatpush.msra.mxu0 0.0
  %1222 = vmatpush.msra.mxu0 0.0
  %1223 = vmatpush.msra.mxu0 0.0
  %1224 = vmatpush.msra.mxu0 0.0
  %1225 = vmatpush.msra.mxu0 0.0
  %1226 = vmatpush.msra.mxu0 0.0
  %1227 = vmatpush.msra.mxu0 0.0
  %1228 = vmatpush.msra.mxu0 0.0
  %1229 = vmatpush.msra.mxu0 0.0
  %1230 = vmatpush.msra.mxu0 0.0
  %1231 = vmatpush.msra.mxu0 0.0
  %1232 = vmatpush.msra.mxu0 0.0
  %1233 = vmatpush.msra.mxu0 0.0
  %v1234 = vand.u32 %v660, 4294901760
  %1235 = vmatpush.msra.mxu0 %v1234
  %v1236 = vand.u32 %v663, 4294901760
  %v1237 = vsub.f32 %v663, %v1236
  %v1238 = vand.u32 %v1237, 4294901760
  %v1239 = vsub.f32 %v1237, %v1238
  %v1240 = vand.u32 %v1239, 4294901760
  %1241 = vmatmul.f32.gmra.mxu0 %v1240
  %v1242 = vpop.f32.mrf.mxu0
  %v1243 = vadd.f32 0.0, %v1242
  %v1244 = vand.u32 %v666, 4294901760
  %v1245 = vsub.f32 %v666, %v1244
  %v1246 = vand.u32 %v1245, 4294901760
  %v1247 = vsub.f32 %v1245, %v1246
  %v1248 = vand.u32 %v1247, 4294901760
  %1249 = vmatmul.f32.gmra.mxu0 %v1248
  %v1250 = vpop.f32.mrf.mxu0
  %v1251 = vadd.f32 0.0, %v1250
  %v1252 = vand.u32 %v669, 4294901760
  %v1253 = vsub.f32 %v669, %v1252
  %v1254 = vand.u32 %v1253, 4294901760
  %v1255 = vsub.f32 %v1253, %v1254
  %v1256 = vand.u32 %v1255, 4294901760
  %1257 = vmatmul.f32.gmra.mxu0 %v1256
  %v1258 = vpop.f32.mrf.mxu0
  %v1259 = vadd.f32 0.0, %v1258
  %v1260 = vand.u32 %v672, 4294901760
  %v1261 = vsub.f32 %v672, %v1260
  %v1262 = vand.u32 %v1261, 4294901760
  %v1263 = vsub.f32 %v1261, %v1262
  %v1264 = vand.u32 %v1263, 4294901760
  %1265 = vmatmul.f32.gmra.mxu0 %v1264
  %v1266 = vpop.f32.mrf.mxu0
  %v1267 = vadd.f32 0.0, %v1266
  %v1268 = vand.u32 %v675, 4294901760
  %v1269 = vsub.f32 %v675, %v1268
  %v1270 = vand.u32 %v1269, 4294901760
  %v1271 = vsub.f32 %v1269, %v1270
  %v1272 = vand.u32 %v1271, 4294901760
  %1273 = vmatmul.f32.gmra.mxu0 %v1272
  %v1274 = vpop.f32.mrf.mxu0
  %v1275 = vadd.f32 0.0, %v1274
  %v1276 = vand.u32 %v678, 4294901760
  %v1277 = vsub.f32 %v678, %v1276
  %v1278 = vand.u32 %v1277, 4294901760
  %v1279 = vsub.f32 %v1277, %v1278
  %v1280 = vand.u32 %v1279, 4294901760
  %1281 = vmatmul.f32.gmra.mxu0 %v1280
  %v1282 = vpop.f32.mrf.mxu0
  %v1283 = vadd.f32 0.0, %v1282
  %v1284 = vand.u32 %v681, 4294901760
  %v1285 = vsub.f32 %v681, %v1284
  %v1286 = vand.u32 %v1285, 4294901760
  %v1287 = vsub.f32 %v1285, %v1286
  %v1288 = vand.u32 %v1287, 4294901760
  %1289 = vmatmul.f32.gmra.mxu0 %v1288
  %v1290 = vpop.f32.mrf.mxu0
  %v1291 = vadd.f32 0.0, %v1290
  %v1292 = vand.u32 %v684, 4294901760
  %v1293 = vsub.f32 %v684, %v1292
  %v1294 = vand.u32 %v1293, 4294901760
  %v1295 = vsub.f32 %v1293, %v1294
  %v1296 = vand.u32 %v1295, 4294901760
  %1297 = vmatmul.f32.gmra.mxu0 %v1296
  %v1298 = vpop.f32.mrf.mxu0
  %v1299 = vadd.f32 0.0, %v1298
  %v1300 = vand.u32 %v687, 4294901760
  %v1301 = vsub.f32 %v687, %v1300
  %v1302 = vand.u32 %v1301, 4294901760
  %v1303 = vsub.f32 %v1301, %v1302
  %v1304 = vand.u32 %v1303, 4294901760
  %1305 = vmatmul.f32.gmra.mxu0 %v1304
  %v1306 = vpop.f32.mrf.mxu0
  %v1307 = vadd.f32 0.0, %v1306
  %v1308 = vand.u32 %v690, 4294901760
  %v1309 = vsub.f32 %v690, %v1308
  %v1310 = vand.u32 %v1309, 4294901760
  %v1311 = vsub.f32 %v1309, %v1310
  %v1312 = vand.u32 %v1311, 4294901760
  %1313 = vmatmul.f32.gmra.mxu0 %v1312
  %v1314 = vpop.f32.mrf.mxu0
  %v1315 = vadd.f32 0.0, %v1314
  %v1316 = vand.u32 %v693, 4294901760
  %v1317 = vsub.f32 %v693, %v1316
  %v1318 = vand.u32 %v1317, 4294901760
  %v1319 = vsub.f32 %v1317, %v1318
  %v1320 = vand.u32 %v1319, 4294901760
  %1321 = vmatmul.f32.gmra.mxu0 %v1320
  %v1322 = vpop.f32.mrf.mxu0
  %v1323 = vadd.f32 0.0, %v1322
  %v1324 = vand.u32 %v696, 4294901760
  %v1325 = vsub.f32 %v696, %v1324
  %v1326 = vand.u32 %v1325, 4294901760
  %v1327 = vsub.f32 %v1325, %v1326
  %v1328 = vand.u32 %v1327, 4294901760
  %1329 = vmatmul.f32.gmra.mxu0 %v1328
  %v1330 = vpop.f32.mrf.mxu0
  %v1331 = vadd.f32 0.0, %v1330
  %v1332 = vand.u32 %v699, 4294901760
  %v1333 = vsub.f32 %v699, %v1332
  %v1334 = vand.u32 %v1333, 4294901760
  %v1335 = vsub.f32 %v1333, %v1334
  %v1336 = vand.u32 %v1335, 4294901760
  %1337 = vmatmul.f32.gmra.mxu0 %v1336
  %v1338 = vpop.f32.mrf.mxu0
  %v1339 = vadd.f32 0.0, %v1338
  %1340 = vdwg.mxu0
  %1341 = vmatpush.msra.mxu0 0.0
  %1342 = vmatpush.msra.mxu0 0.0
  %1343 = vmatpush.msra.mxu0 0.0
  %1344 = vmatpush.msra.mxu0 0.0
  %1345 = vmatpush.msra.mxu0 0.0
  %1346 = vmatpush.msra.mxu0 0.0
  %1347 = vmatpush.msra.mxu0 0.0
  %1348 = vmatpush.msra.mxu0 0.0
  %1349 = vmatpush.msra.mxu0 0.0
  %1350 = vmatpush.msra.mxu0 0.0
  %1351 = vmatpush.msra.mxu0 0.0
  %1352 = vmatpush.msra.mxu0 0.0
  %1353 = vmatpush.msra.mxu0 0.0
  %1354 = vmatpush.msra.mxu0 0.0
  %1355 = vmatpush.msra.mxu0 0.0
  %v1356 = vand.u32 %v660, 4294901760
  %v1357 = vsub.f32 %v660, %v1356
  %v1358 = vand.u32 %v1357, 4294901760
  %v1359 = vsub.f32 %v1357, %v1358
  %v1360 = vand.u32 %v1359, 4294901760
  %1361 = vmatpush.msra.mxu0 %v1360
  %v1362 = vand.u32 %v663, 4294901760
  %1363 = vmatmul.f32.gmra.mxu0 %v1362
  %v1364 = vpop.f32.mrf.mxu0
  %v1365 = vadd.f32 %v1243, %v1364
  %v1366 = vand.u32 %v666, 4294901760
  %1367 = vmatmul.f32.gmra.mxu0 %v1366
  %v1368 = vpop.f32.mrf.mxu0
  %v1369 = vadd.f32 %v1251, %v1368
  %v1370 = vand.u32 %v669, 4294901760
  %1371 = vmatmul.f32.gmra.mxu0 %v1370
  %v1372 = vpop.f32.mrf.mxu0
  %v1373 = vadd.f32 %v1259, %v1372
  %v1374 = vand.u32 %v672, 4294901760
  %1375 = vmatmul.f32.gmra.mxu0 %v1374
  %v1376 = vpop.f32.mrf.mxu0
  %v1377 = vadd.f32 %v1267, %v1376
  %v1378 = vand.u32 %v675, 4294901760
  %1379 = vmatmul.f32.gmra.mxu0 %v1378
  %v1380 = vpop.f32.mrf.mxu0
  %v1381 = vadd.f32 %v1275, %v1380
  %v1382 = vand.u32 %v678, 4294901760
  %1383 = vmatmul.f32.gmra.mxu0 %v1382
  %v1384 = vpop.f32.mrf.mxu0
  %v1385 = vadd.f32 %v1283, %v1384
  %v1386 = vand.u32 %v681, 4294901760
  %1387 = vmatmul.f32.gmra.mxu0 %v1386
  %v1388 = vpop.f32.mrf.mxu0
  %v1389 = vadd.f32 %v1291, %v1388
  %v1390 = vand.u32 %v684, 4294901760
  %1391 = vmatmul.f32.gmra.mxu0 %v1390
  %v1392 = vpop.f32.mrf.mxu0
  %v1393 = vadd.f32 %v1299, %v1392
  %v1394 = vand.u32 %v687, 4294901760
  %1395 = vmatmul.f32.gmra.mxu0 %v1394
  %v1396 = vpop.f32.mrf.mxu0
  %v1397 = vadd.f32 %v1307, %v1396
  %v1398 = vand.u32 %v690, 4294901760
  %1399 = vmatmul.f32.gmra.mxu0 %v1398
  %v1400 = vpop.f32.mrf.mxu0
  %v1401 = vadd.f32 %v1315, %v1400
  %v1402 = vand.u32 %v693, 4294901760
  %1403 = vmatmul.f32.gmra.mxu0 %v1402
  %v1404 = vpop.f32.mrf.mxu0
  %v1405 = vadd.f32 %v1323, %v1404
  %v1406 = vand.u32 %v696, 4294901760
  %1407 = vmatmul.f32.gmra.mxu0 %v1406
  %v1408 = vpop.f32.mrf.mxu0
  %v1409 = vadd.f32 %v1331, %v1408
  %v1410 = vand.u32 %v699, 4294901760
  %1411 = vmatmul.f32.gmra.mxu0 %v1410
  %v1412 = vpop.f32.mrf.mxu0
  %v1413 = vadd.f32 %v1339, %v1412
  %1414 = vdwg.mxu0
  %1415 = vmatpush.msra.mxu0 0.0
  %1416 = vmatpush.msra.mxu0 0.0
  %1417 = vmatpush.msra.mxu0 0.0
  %1418 = vmatpush.msra.mxu0 0.0
  %1419 = vmatpush.msra.mxu0 0.0
  %1420 = vmatpush.msra.mxu0 0.0
  %1421 = vmatpush.msra.mxu0 0.0
  %1422 = vmatpush.msra.mxu0 0.0
  %1423 = vmatpush.msra.mxu0 0.0
  %1424 = vmatpush.msra.mxu0 0.0
  %1425 = vmatpush.msra.mxu0 0.0
  %1426 = vmatpush.msra.mxu0 0.0
  %1427 = vmatpush.msra.mxu0 0.0
  %1428 = vmatpush.msra.mxu0 0.0
  %1429 = vmatpush.msra.mxu0 0.0
  %v1430 = vand.u32 %v660, 4294901760
  %v1431 = vsub.f32 %v660, %v1430
  %1432 = vmatpush.msra.mxu0 %v1431
  %v1433 = vand.u32 %v663, 4294901760
  %v1434 = vsub.f32 %v663, %v1433
  %1435 = vmatmul.f32.gmra.mxu0 %v1434
  %v1436 = vpop.f32.mrf.mxu0
  %v1437 = vadd.f32 %v1365, %v1436
  %v1438 = vand.u32 %v666, 4294901760
  %v1439 = vsub.f32 %v666, %v1438
  %1440 = vmatmul.f32.gmra.mxu0 %v1439
  %v1441 = vpop.f32.mrf.mxu0
  %v1442 = vadd.f32 %v1369, %v1441
  %v1443 = vand.u32 %v669, 4294901760
  %v1444 = vsub.f32 %v669, %v1443
  %1445 = vmatmul.f32.gmra.mxu0 %v1444
  %v1446 = vpop.f32.mrf.mxu0
  %v1447 = vadd.f32 %v1373, %v1446
  %v1448 = vand.u32 %v672, 4294901760
  %v1449 = vsub.f32 %v672, %v1448
  %1450 = vmatmul.f32.gmra.mxu0 %v1449
  %v1451 = vpop.f32.mrf.mxu0
  %v1452 = vadd.f32 %v1377, %v1451
  %v1453 = vand.u32 %v675, 4294901760
  %v1454 = vsub.f32 %v675, %v1453
  %1455 = vmatmul.f32.gmra.mxu0 %v1454
  %v1456 = vpop.f32.mrf.mxu0
  %v1457 = vadd.f32 %v1381, %v1456
  %v1458 = vand.u32 %v678, 4294901760
  %v1459 = vsub.f32 %v678, %v1458
  %1460 = vmatmul.f32.gmra.mxu0 %v1459
  %v1461 = vpop.f32.mrf.mxu0
  %v1462 = vadd.f32 %v1385, %v1461
  %v1463 = vand.u32 %v681, 4294901760
  %v1464 = vsub.f32 %v681, %v1463
  %1465 = vmatmul.f32.gmra.mxu0 %v1464
  %v1466 = vpop.f32.mrf.mxu0
  %v1467 = vadd.f32 %v1389, %v1466
  %v1468 = vand.u32 %v684, 4294901760
  %v1469 = vsub.f32 %v684, %v1468
  %1470 = vmatmul.f32.gmra.mxu0 %v1469
  %v1471 = vpop.f32.mrf.mxu0
  %v1472 = vadd.f32 %v1393, %v1471
  %v1473 = vand.u32 %v687, 4294901760
  %v1474 = vsub.f32 %v687, %v1473
  %1475 = vmatmul.f32.gmra.mxu0 %v1474
  %v1476 = vpop.f32.mrf.mxu0
  %v1477 = vadd.f32 %v1397, %v1476
  %v1478 = vand.u32 %v690, 4294901760
  %v1479 = vsub.f32 %v690, %v1478
  %1480 = vmatmul.f32.gmra.mxu0 %v1479
  %v1481 = vpop.f32.mrf.mxu0
  %v1482 = vadd.f32 %v1401, %v1481
  %v1483 = vand.u32 %v693, 4294901760
  %v1484 = vsub.f32 %v693, %v1483
  %1485 = vmatmul.f32.gmra.mxu0 %v1484
  %v1486 = vpop.f32.mrf.mxu0
  %v1487 = vadd.f32 %v1405, %v1486
  %v1488 = vand.u32 %v696, 4294901760
  %v1489 = vsub.f32 %v696, %v1488
  %1490 = vmatmul.f32.gmra.mxu0 %v1489
  %v1491 = vpop.f32.mrf.mxu0
  %v1492 = vadd.f32 %v1409, %v1491
  %v1493 = vand.u32 %v699, 4294901760
  %v1494 = vsub.f32 %v699, %v1493
  %1495 = vmatmul.f32.gmra.mxu0 %v1494
  %v1496 = vpop.f32.mrf.mxu0
  %v1497 = vadd.f32 %v1413, %v1496
  %1498 = vdwg.mxu0
  %1499 = vmatpush.msra.mxu0 0.0
  %1500 = vmatpush.msra.mxu0 0.0
  %1501 = vmatpush.msra.mxu0 0.0
  %1502 = vmatpush.msra.mxu0 0.0
  %1503 = vmatpush.msra.mxu0 0.0
  %1504 = vmatpush.msra.mxu0 0.0
  %1505 = vmatpush.msra.mxu0 0.0
  %1506 = vmatpush.msra.mxu0 0.0
  %1507 = vmatpush.msra.mxu0 0.0
  %1508 = vmatpush.msra.mxu0 0.0
  %1509 = vmatpush.msra.mxu0 0.0
  %1510 = vmatpush.msra.mxu0 0.0
  %1511 = vmatpush.msra.mxu0 0.0
  %1512 = vmatpush.msra.mxu0 0.0
  %1513 = vmatpush.msra.mxu0 0.0
  %v1514 = vand.u32 %v660, 4294901760
  %1515 = vmatpush.msra.mxu0 %v1514
  %v1516 = vand.u32 %v663, 4294901760
  %v1517 = vsub.f32 %v663, %v1516
  %v1518 = vand.u32 %v1517, 4294901760
  %1519 = vmatmul.f32.gmra.mxu0 %v1518
  %v1520 = vpop.f32.mrf.mxu0
  %v1521 = vadd.f32 %v1437, %v1520
  %v1522 = vand.u32 %v666, 4294901760
  %v1523 = vsub.f32 %v666, %v1522
  %v1524 = vand.u32 %v1523, 4294901760
  %1525 = vmatmul.f32.gmra.mxu0 %v1524
  %v1526 = vpop.f32.mrf.mxu0
  %v1527 = vadd.f32 %v1442, %v1526
  %v1528 = vand.u32 %v669, 4294901760
  %v1529 = vsub.f32 %v669, %v1528
  %v1530 = vand.u32 %v1529, 4294901760
  %1531 = vmatmul.f32.gmra.mxu0 %v1530
  %v1532 = vpop.f32.mrf.mxu0
  %v1533 = vadd.f32 %v1447, %v1532
  %v1534 = vand.u32 %v672, 4294901760
  %v1535 = vsub.f32 %v672, %v1534
  %v1536 = vand.u32 %v1535, 4294901760
  %1537 = vmatmul.f32.gmra.mxu0 %v1536
  %v1538 = vpop.f32.mrf.mxu0
  %v1539 = vadd.f32 %v1452, %v1538
  %v1540 = vand.u32 %v675, 4294901760
  %v1541 = vsub.f32 %v675, %v1540
  %v1542 = vand.u32 %v1541, 4294901760
  %1543 = vmatmul.f32.gmra.mxu0 %v1542
  %v1544 = vpop.f32.mrf.mxu0
  %v1545 = vadd.f32 %v1457, %v1544
  %v1546 = vand.u32 %v678, 4294901760
  %v1547 = vsub.f32 %v678, %v1546
  %v1548 = vand.u32 %v1547, 4294901760
  %1549 = vmatmul.f32.gmra.mxu0 %v1548
  %v1550 = vpop.f32.mrf.mxu0
  %v1551 = vadd.f32 %v1462, %v1550
  %v1552 = vand.u32 %v681, 4294901760
  %v1553 = vsub.f32 %v681, %v1552
  %v1554 = vand.u32 %v1553, 4294901760
  %1555 = vmatmul.f32.gmra.mxu0 %v1554
  %v1556 = vpop.f32.mrf.mxu0
  %v1557 = vadd.f32 %v1467, %v1556
  %v1558 = vand.u32 %v684, 4294901760
  %v1559 = vsub.f32 %v684, %v1558
  %v1560 = vand.u32 %v1559, 4294901760
  %1561 = vmatmul.f32.gmra.mxu0 %v1560
  %v1562 = vpop.f32.mrf.mxu0
  %v1563 = vadd.f32 %v1472, %v1562
  %v1564 = vand.u32 %v687, 4294901760
  %v1565 = vsub.f32 %v687, %v1564
  %v1566 = vand.u32 %v1565, 4294901760
  %1567 = vmatmul.f32.gmra.mxu0 %v1566
  %v1568 = vpop.f32.mrf.mxu0
  %v1569 = vadd.f32 %v1477, %v1568
  %v1570 = vand.u32 %v690, 4294901760
  %v1571 = vsub.f32 %v690, %v1570
  %v1572 = vand.u32 %v1571, 4294901760
  %1573 = vmatmul.f32.gmra.mxu0 %v1572
  %v1574 = vpop.f32.mrf.mxu0
  %v1575 = vadd.f32 %v1482, %v1574
  %v1576 = vand.u32 %v693, 4294901760
  %v1577 = vsub.f32 %v693, %v1576
  %v1578 = vand.u32 %v1577, 4294901760
  %1579 = vmatmul.f32.gmra.mxu0 %v1578
  %v1580 = vpop.f32.mrf.mxu0
  %v1581 = vadd.f32 %v1487, %v1580
  %v1582 = vand.u32 %v696, 4294901760
  %v1583 = vsub.f32 %v696, %v1582
  %v1584 = vand.u32 %v1583, 4294901760
  %1585 = vmatmul.f32.gmra.mxu0 %v1584
  %v1586 = vpop.f32.mrf.mxu0
  %v1587 = vadd.f32 %v1492, %v1586
  %v1588 = vand.u32 %v699, 4294901760
  %v1589 = vsub.f32 %v699, %v1588
  %v1590 = vand.u32 %v1589, 4294901760
  %1591 = vmatmul.f32.gmra.mxu0 %v1590
  %v1592 = vpop.f32.mrf.mxu0
  %v1593 = vadd.f32 %v1497, %v1592
  %1594 = vdwg.mxu0
  %1595 = vmatpush.msra.mxu0 0.0
  %1596 = vmatpush.msra.mxu0 0.0
  %1597 = vmatpush.msra.mxu0 0.0
  %1598 = vmatpush.msra.mxu0 0.0
  %1599 = vmatpush.msra.mxu0 0.0
  %1600 = vmatpush.msra.mxu0 0.0
  %1601 = vmatpush.msra.mxu0 0.0
  %1602 = vmatpush.msra.mxu0 0.0
  %1603 = vmatpush.msra.mxu0 0.0
  %1604 = vmatpush.msra.mxu0 0.0
  %1605 = vmatpush.msra.mxu0 0.0
  %1606 = vmatpush.msra.mxu0 0.0
  %1607 = vmatpush.msra.mxu0 0.0
  %1608 = vmatpush.msra.mxu0 0.0
  %1609 = vmatpush.msra.mxu0 0.0
  %v1610 = vand.u32 %v660, 4294901760
  %v1611 = vsub.f32 %v660, %v1610
  %v1612 = vand.u32 %v1611, 4294901760
  %1613 = vmatpush.msra.mxu0 %v1612
  %v1614 = vand.u32 %v663, 4294901760
  %1615 = vmatmul.f32.gmra.mxu0 %v1614
  %v1616 = vpop.f32.mrf.mxu0
  %v1617 = vadd.f32 %v1521, %v1616
  %v1618 = vand.u32 %v666, 4294901760
  %1619 = vmatmul.f32.gmra.mxu0 %v1618
  %v1620 = vpop.f32.mrf.mxu0
  %v1621 = vadd.f32 %v1527, %v1620
  %v1622 = vand.u32 %v669, 4294901760
  %1623 = vmatmul.f32.gmra.mxu0 %v1622
  %v1624 = vpop.f32.mrf.mxu0
  %v1625 = vadd.f32 %v1533, %v1624
  %v1626 = vand.u32 %v672, 4294901760
  %1627 = vmatmul.f32.gmra.mxu0 %v1626
  %v1628 = vpop.f32.mrf.mxu0
  %v1629 = vadd.f32 %v1539, %v1628
  %v1630 = vand.u32 %v675, 4294901760
  %1631 = vmatmul.f32.gmra.mxu0 %v1630
  %v1632 = vpop.f32.mrf.mxu0
  %v1633 = vadd.f32 %v1545, %v1632
  %v1634 = vand.u32 %v678, 4294901760
  %1635 = vmatmul.f32.gmra.mxu0 %v1634
  %v1636 = vpop.f32.mrf.mxu0
  %v1637 = vadd.f32 %v1551, %v1636
  %v1638 = vand.u32 %v681, 4294901760
  %1639 = vmatmul.f32.gmra.mxu0 %v1638
  %v1640 = vpop.f32.mrf.mxu0
  %v1641 = vadd.f32 %v1557, %v1640
  %v1642 = vand.u32 %v684, 4294901760
  %1643 = vmatmul.f32.gmra.mxu0 %v1642
  %v1644 = vpop.f32.mrf.mxu0
  %v1645 = vadd.f32 %v1563, %v1644
  %v1646 = vand.u32 %v687, 4294901760
  %1647 = vmatmul.f32.gmra.mxu0 %v1646
  %v1648 = vpop.f32.mrf.mxu0
  %v1649 = vadd.f32 %v1569, %v1648
  %v1650 = vand.u32 %v690, 4294901760
  %1651 = vmatmul.f32.gmra.mxu0 %v1650
  %v1652 = vpop.f32.mrf.mxu0
  %v1653 = vadd.f32 %v1575, %v1652
  %v1654 = vand.u32 %v693, 4294901760
  %1655 = vmatmul.f32.gmra.mxu0 %v1654
  %v1656 = vpop.f32.mrf.mxu0
  %v1657 = vadd.f32 %v1581, %v1656
  %v1658 = vand.u32 %v696, 4294901760
  %1659 = vmatmul.f32.gmra.mxu0 %v1658
  %v1660 = vpop.f32.mrf.mxu0
  %v1661 = vadd.f32 %v1587, %v1660
  %v1662 = vand.u32 %v699, 4294901760
  %1663 = vmatmul.f32.gmra.mxu0 %v1662
  %v1664 = vpop.f32.mrf.mxu0
  %v1665 = vadd.f32 %v1593, %v1664
  %1666 = vdwg.mxu0
  %1667 = vmatpush.msra.mxu0 0.0
  %1668 = vmatpush.msra.mxu0 0.0
  %1669 = vmatpush.msra.mxu0 0.0
  %1670 = vmatpush.msra.mxu0 0.0
  %1671 = vmatpush.msra.mxu0 0.0
  %1672 = vmatpush.msra.mxu0 0.0
  %1673 = vmatpush.msra.mxu0 0.0
  %1674 = vmatpush.msra.mxu0 0.0
  %1675 = vmatpush.msra.mxu0 0.0
  %1676 = vmatpush.msra.mxu0 0.0
  %1677 = vmatpush.msra.mxu0 0.0
  %1678 = vmatpush.msra.mxu0 0.0
  %1679 = vmatpush.msra.mxu0 0.0
  %1680 = vmatpush.msra.mxu0 0.0
  %1681 = vmatpush.msra.mxu0 0.0
  %v1682 = vand.u32 %v660, 4294901760
  %1683 = vmatpush.msra.mxu0 %v1682
  %v1684 = vand.u32 %v663, 4294901760
  %1685 = vmatmul.f32.gmra.mxu0 %v1684
  %v1686 = vpop.f32.mrf.mxu0
  %v1687 = vadd.f32 %v1617, %v1686
  %v1688 = vand.u32 %v666, 4294901760
  %1689 = vmatmul.f32.gmra.mxu0 %v1688
  %v1690 = vpop.f32.mrf.mxu0
  %v1691 = vadd.f32 %v1621, %v1690
  %v1692 = vand.u32 %v669, 4294901760
  %1693 = vmatmul.f32.gmra.mxu0 %v1692
  %v1694 = vpop.f32.mrf.mxu0
  %v1695 = vadd.f32 %v1625, %v1694
  %v1696 = vand.u32 %v672, 4294901760
  %1697 = vmatmul.f32.gmra.mxu0 %v1696
  %v1698 = vpop.f32.mrf.mxu0
  %v1699 = vadd.f32 %v1629, %v1698
  %v1700 = vand.u32 %v675, 4294901760
  %1701 = vmatmul.f32.gmra.mxu0 %v1700
  %v1702 = vpop.f32.mrf.mxu0
  %v1703 = vadd.f32 %v1633, %v1702
  %v1704 = vand.u32 %v678, 4294901760
  %1705 = vmatmul.f32.gmra.mxu0 %v1704
  %v1706 = vpop.f32.mrf.mxu0
  %v1707 = vadd.f32 %v1637, %v1706
  %v1708 = vand.u32 %v681, 4294901760
  %1709 = vmatmul.f32.gmra.mxu0 %v1708
  %v1710 = vpop.f32.mrf.mxu0
  %v1711 = vadd.f32 %v1641, %v1710
  %v1712 = vand.u32 %v684, 4294901760
  %1713 = vmatmul.f32.gmra.mxu0 %v1712
  %v1714 = vpop.f32.mrf.mxu0
  %v1715 = vadd.f32 %v1645, %v1714
  %v1716 = vand.u32 %v687, 4294901760
  %1717 = vmatmul.f32.gmra.mxu0 %v1716
  %v1718 = vpop.f32.mrf.mxu0
  %v1719 = vadd.f32 %v1649, %v1718
  %v1720 = vand.u32 %v690, 4294901760
  %1721 = vmatmul.f32.gmra.mxu0 %v1720
  %v1722 = vpop.f32.mrf.mxu0
  %v1723 = vadd.f32 %v1653, %v1722
  %v1724 = vand.u32 %v693, 4294901760
  %1725 = vmatmul.f32.gmra.mxu0 %v1724
  %v1726 = vpop.f32.mrf.mxu0
  %v1727 = vadd.f32 %v1657, %v1726
  %v1728 = vand.u32 %v696, 4294901760
  %1729 = vmatmul.f32.gmra.mxu0 %v1728
  %v1730 = vpop.f32.mrf.mxu0
  %v1731 = vadd.f32 %v1661, %v1730
  %v1732 = vand.u32 %v699, 4294901760
  %1733 = vmatmul.f32.gmra.mxu0 %v1732
  %v1734 = vpop.f32.mrf.mxu0
  %v1735 = vadd.f32 %v1665, %v1734
  %1736 = vdwg.mxu0
  %v1737 = vld [vmem:[%s0 + $0x1f8] sm:$0xff]
  %v1738 = vld [vmem:[%s0 + $0x210] sm:$0xff]
  %v1739 = vld [vmem:[%s0 + $0x228] sm:$0xff]
  %v1740 = vld [vmem:[%s0 + $0x240] sm:$0xff]
  %v1741 = vld [vmem:[%s0 + $0x258] sm:$0xff]
  %v1742 = vld [vmem:[%s0 + $0x270] sm:$0xff]
  %1756 = vrot.lane.b32.xlu0 %v1169, 112
  %v1757 = vpop.permute.xlu0 %1756
  %1758 = vrot.lane.b32.xlu0 %v1173, 112
  %v1759 = vpop.permute.xlu0 %1758
  %1760 = vrot.lane.b32.xlu0 %v1177, 112
  %v1761 = vpop.permute.xlu0 %1760
  %1762 = vrot.lane.b32.xlu0 %v1181, 112
  %v1763 = vpop.permute.xlu0 %1762
  %1764 = vrot.lane.b32.xlu0 %v1185, 112
  %v1765 = vpop.permute.xlu0 %1764
  %1766 = vrot.lane.b32.xlu0 %v1189, 112
  %v1767 = vpop.permute.xlu0 %1766
  %1768 = vrot.lane.b32.xlu0 %v1193, 112
  %v1769 = vpop.permute.xlu0 %1768
  %1770 = vrot.lane.b32.xlu0 %v1197, 112
  %v1771 = vpop.permute.xlu0 %1770
  %1772 = vrot.lane.b32.xlu0 %v1201, 112
  %v1773 = vpop.permute.xlu0 %1772
  %1774 = vrot.lane.b32.xlu0 %v1205, 112
  %v1775 = vpop.permute.xlu0 %1774
  %1776 = vrot.lane.b32.xlu0 %v1209, 112
  %v1777 = vpop.permute.xlu0 %1776
  %1778 = vrot.lane.b32.xlu0 %v1213, 112
  %v1779 = vpop.permute.xlu0 %1778
  %1780 = vrot.lane.b32.xlu0 %v1217, 112
  %v1781 = vpop.permute.xlu0 %1780
  %vm1795 = vcmask 850944
  %v1797 = vsel %vm1795, %v1740, 0
  %v1800 = vsel %vm1795, %v1741, 0
  %v1803 = vsel %vm1795, %v1742, 0
  %1805 = vmatpush.msra.mxu0 0.0
  %1806 = vmatpush.msra.mxu0 0.0
  %1807 = vmatpush.msra.mxu0 0.0
  %v1808 = vand.u32 %v1781, 4294901760
  %1809 = vmatpush.msra.mxu0 %v1808
  %v1810 = vand.u32 %v1779, 4294901760
  %1811 = vmatpush.msra.mxu0 %v1810
  %v1812 = vand.u32 %v1777, 4294901760
  %1813 = vmatpush.msra.mxu0 %v1812
  %v1814 = vand.u32 %v1775, 4294901760
  %1815 = vmatpush.msra.mxu0 %v1814
  %v1816 = vand.u32 %v1773, 4294901760
  %1817 = vmatpush.msra.mxu0 %v1816
  %v1818 = vand.u32 %v1771, 4294901760
  %1819 = vmatpush.msra.mxu0 %v1818
  %v1820 = vand.u32 %v1769, 4294901760
  %1821 = vmatpush.msra.mxu0 %v1820
  %v1822 = vand.u32 %v1767, 4294901760
  %1823 = vmatpush.msra.mxu0 %v1822
  %v1824 = vand.u32 %v1765, 4294901760
  %1825 = vmatpush.msra.mxu0 %v1824
  %v1826 = vand.u32 %v1763, 4294901760
  %1827 = vmatpush.msra.mxu0 %v1826
  %v1828 = vand.u32 %v1761, 4294901760
  %1829 = vmatpush.msra.mxu0 %v1828
  %v1830 = vand.u32 %v1759, 4294901760
  %1831 = vmatpush.msra.mxu0 %v1830
  %v1832 = vand.u32 %v1757, 4294901760
  %1833 = vmatpush.msra.mxu0 %v1832
  %v1834 = vand.u32 %v1797, 4294901760
  %v1835 = vsub.f32 %v1797, %v1834
  %v1836 = vand.u32 %v1835, 4294901760
  %v1837 = vsub.f32 %v1835, %v1836
  %v1838 = vand.u32 %v1837, 4294901760
  %1839 = vmatmul.f32.gmra.mxu0 %v1838
  %v1840 = vpop.f32.mrf.mxu0
  %v1841 = vadd.f32 0.0, %v1840
  %v1842 = vand.u32 %v1800, 4294901760
  %v1843 = vsub.f32 %v1800, %v1842
  %v1844 = vand.u32 %v1843, 4294901760
  %v1845 = vsub.f32 %v1843, %v1844
  %v1846 = vand.u32 %v1845, 4294901760
  %1847 = vmatmul.f32.gmra.mxu0 %v1846
  %v1848 = vpop.f32.mrf.mxu0
  %v1849 = vadd.f32 0.0, %v1848
  %v1850 = vand.u32 %v1803, 4294901760
  %v1851 = vsub.f32 %v1803, %v1850
  %v1852 = vand.u32 %v1851, 4294901760
  %v1853 = vsub.f32 %v1851, %v1852
  %v1854 = vand.u32 %v1853, 4294901760
  %1855 = vmatmul.f32.gmra.mxu0 %v1854
  %v1856 = vpop.f32.mrf.mxu0
  %v1857 = vadd.f32 0.0, %v1856
  %1858 = vdwg.mxu0
  %1859 = vmatpush.msra.mxu0 0.0
  %1860 = vmatpush.msra.mxu0 0.0
  %1861 = vmatpush.msra.mxu0 0.0
  %v1862 = vand.u32 %v1781, 4294901760
  %v1863 = vsub.f32 %v1781, %v1862
  %v1864 = vand.u32 %v1863, 4294901760
  %v1865 = vsub.f32 %v1863, %v1864
  %v1866 = vand.u32 %v1865, 4294901760
  %1867 = vmatpush.msra.mxu0 %v1866
  %v1868 = vand.u32 %v1779, 4294901760
  %v1869 = vsub.f32 %v1779, %v1868
  %v1870 = vand.u32 %v1869, 4294901760
  %v1871 = vsub.f32 %v1869, %v1870
  %v1872 = vand.u32 %v1871, 4294901760
  %1873 = vmatpush.msra.mxu0 %v1872
  %v1874 = vand.u32 %v1777, 4294901760
  %v1875 = vsub.f32 %v1777, %v1874
  %v1876 = vand.u32 %v1875, 4294901760
  %v1877 = vsub.f32 %v1875, %v1876
  %v1878 = vand.u32 %v1877, 4294901760
  %1879 = vmatpush.msra.mxu0 %v1878
  %v1880 = vand.u32 %v1775, 4294901760
  %v1881 = vsub.f32 %v1775, %v1880
  %v1882 = vand.u32 %v1881, 4294901760
  %v1883 = vsub.f32 %v1881, %v1882
  %v1884 = vand.u32 %v1883, 4294901760
  %1885 = vmatpush.msra.mxu0 %v1884
  %v1886 = vand.u32 %v1773, 4294901760
  %v1887 = vsub.f32 %v1773, %v1886
  %v1888 = vand.u32 %v1887, 4294901760
  %v1889 = vsub.f32 %v1887, %v1888
  %v1890 = vand.u32 %v1889, 4294901760
  %1891 = vmatpush.msra.mxu0 %v1890
  %v1892 = vand.u32 %v1771, 4294901760
  %v1893 = vsub.f32 %v1771, %v1892
  %v1894 = vand.u32 %v1893, 4294901760
  %v1895 = vsub.f32 %v1893, %v1894
  %v1896 = vand.u32 %v1895, 4294901760
  %1897 = vmatpush.msra.mxu0 %v1896
  %v1898 = vand.u32 %v1769, 4294901760
  %v1899 = vsub.f32 %v1769, %v1898
  %v1900 = vand.u32 %v1899, 4294901760
  %v1901 = vsub.f32 %v1899, %v1900
  %v1902 = vand.u32 %v1901, 4294901760
  %1903 = vmatpush.msra.mxu0 %v1902
  %v1904 = vand.u32 %v1767, 4294901760
  %v1905 = vsub.f32 %v1767, %v1904
  %v1906 = vand.u32 %v1905, 4294901760
  %v1907 = vsub.f32 %v1905, %v1906
  %v1908 = vand.u32 %v1907, 4294901760
  %1909 = vmatpush.msra.mxu0 %v1908
  %v1910 = vand.u32 %v1765, 4294901760
  %v1911 = vsub.f32 %v1765, %v1910
  %v1912 = vand.u32 %v1911, 4294901760
  %v1913 = vsub.f32 %v1911, %v1912
  %v1914 = vand.u32 %v1913, 4294901760
  %1915 = vmatpush.msra.mxu0 %v1914
  %v1916 = vand.u32 %v1763, 4294901760
  %v1917 = vsub.f32 %v1763, %v1916
  %v1918 = vand.u32 %v1917, 4294901760
  %v1919 = vsub.f32 %v1917, %v1918
  %v1920 = vand.u32 %v1919, 4294901760
  %1921 = vmatpush.msra.mxu0 %v1920
  %v1922 = vand.u32 %v1761, 4294901760
  %v1923 = vsub.f32 %v1761, %v1922
  %v1924 = vand.u32 %v1923, 4294901760
  %v1925 = vsub.f32 %v1923, %v1924
  %v1926 = vand.u32 %v1925, 4294901760
  %1927 = vmatpush.msra.mxu0 %v1926
  %v1928 = vand.u32 %v1759, 4294901760
  %v1929 = vsub.f32 %v1759, %v1928
  %v1930 = vand.u32 %v1929, 4294901760
  %v1931 = vsub.f32 %v1929, %v1930
  %v1932 = vand.u32 %v1931, 4294901760
  %1933 = vmatpush.msra.mxu0 %v1932
  %v1934 = vand.u32 %v1757, 4294901760
  %v1935 = vsub.f32 %v1757, %v1934
  %v1936 = vand.u32 %v1935, 4294901760
  %v1937 = vsub.f32 %v1935, %v1936
  %v1938 = vand.u32 %v1937, 4294901760
  %1939 = vmatpush.msra.mxu0 %v1938
  %v1940 = vand.u32 %v1797, 4294901760
  %1941 = vmatmul.f32.gmra.mxu0 %v1940
  %v1942 = vpop.f32.mrf.mxu0
  %v1943 = vadd.f32 %v1841, %v1942
  %v1944 = vand.u32 %v1800, 4294901760
  %1945 = vmatmul.f32.gmra.mxu0 %v1944
  %v1946 = vpop.f32.mrf.mxu0
  %v1947 = vadd.f32 %v1849, %v1946
  %v1948 = vand.u32 %v1803, 4294901760
  %1949 = vmatmul.f32.gmra.mxu0 %v1948
  %v1950 = vpop.f32.mrf.mxu0
  %v1951 = vadd.f32 %v1857, %v1950
  %1952 = vdwg.mxu0
  %1953 = vmatpush.msra.mxu0 0.0
  %1954 = vmatpush.msra.mxu0 0.0
  %1955 = vmatpush.msra.mxu0 0.0
  %v1956 = vand.u32 %v1781, 4294901760
  %v1957 = vsub.f32 %v1781, %v1956
  %1958 = vmatpush.msra.mxu0 %v1957
  %v1959 = vand.u32 %v1779, 4294901760
  %v1960 = vsub.f32 %v1779, %v1959
  %1961 = vmatpush.msra.mxu0 %v1960
  %v1962 = vand.u32 %v1777, 4294901760
  %v1963 = vsub.f32 %v1777, %v1962
  %1964 = vmatpush.msra.mxu0 %v1963
  %v1965 = vand.u32 %v1775, 4294901760
  %v1966 = vsub.f32 %v1775, %v1965
  %1967 = vmatpush.msra.mxu0 %v1966
  %v1968 = vand.u32 %v1773, 4294901760
  %v1969 = vsub.f32 %v1773, %v1968
  %1970 = vmatpush.msra.mxu0 %v1969
  %v1971 = vand.u32 %v1771, 4294901760
  %v1972 = vsub.f32 %v1771, %v1971
  %1973 = vmatpush.msra.mxu0 %v1972
  %v1974 = vand.u32 %v1769, 4294901760
  %v1975 = vsub.f32 %v1769, %v1974
  %1976 = vmatpush.msra.mxu0 %v1975
  %v1977 = vand.u32 %v1767, 4294901760
  %v1978 = vsub.f32 %v1767, %v1977
  %1979 = vmatpush.msra.mxu0 %v1978
  %v1980 = vand.u32 %v1765, 4294901760
  %v1981 = vsub.f32 %v1765, %v1980
  %1982 = vmatpush.msra.mxu0 %v1981
  %v1983 = vand.u32 %v1763, 4294901760
  %v1984 = vsub.f32 %v1763, %v1983
  %1985 = vmatpush.msra.mxu0 %v1984
  %v1986 = vand.u32 %v1761, 4294901760
  %v1987 = vsub.f32 %v1761, %v1986
  %1988 = vmatpush.msra.mxu0 %v1987
  %v1989 = vand.u32 %v1759, 4294901760
  %v1990 = vsub.f32 %v1759, %v1989
  %1991 = vmatpush.msra.mxu0 %v1990
  %v1992 = vand.u32 %v1757, 4294901760
  %v1993 = vsub.f32 %v1757, %v1992
  %1994 = vmatpush.msra.mxu0 %v1993
  %v1995 = vand.u32 %v1797, 4294901760
  %v1996 = vsub.f32 %v1797, %v1995
  %1997 = vmatmul.f32.gmra.mxu0 %v1996
  %v1998 = vpop.f32.mrf.mxu0
  %v1999 = vadd.f32 %v1943, %v1998
  %v2000 = vand.u32 %v1800, 4294901760
  %v2001 = vsub.f32 %v1800, %v2000
  %2002 = vmatmul.f32.gmra.mxu0 %v2001
  %v2003 = vpop.f32.mrf.mxu0
  %v2004 = vadd.f32 %v1947, %v2003
  %v2005 = vand.u32 %v1803, 4294901760
  %v2006 = vsub.f32 %v1803, %v2005
  %2007 = vmatmul.f32.gmra.mxu0 %v2006
  %v2008 = vpop.f32.mrf.mxu0
  %v2009 = vadd.f32 %v1951, %v2008
  %2010 = vdwg.mxu0
  %2011 = vmatpush.msra.mxu0 0.0
  %2012 = vmatpush.msra.mxu0 0.0
  %2013 = vmatpush.msra.mxu0 0.0
  %v2014 = vand.u32 %v1781, 4294901760
  %2015 = vmatpush.msra.mxu0 %v2014
  %v2016 = vand.u32 %v1779, 4294901760
  %2017 = vmatpush.msra.mxu0 %v2016
  %v2018 = vand.u32 %v1777, 4294901760
  %2019 = vmatpush.msra.mxu0 %v2018
  %v2020 = vand.u32 %v1775, 4294901760
  %2021 = vmatpush.msra.mxu0 %v2020
  %v2022 = vand.u32 %v1773, 4294901760
  %2023 = vmatpush.msra.mxu0 %v2022
  %v2024 = vand.u32 %v1771, 4294901760
  %2025 = vmatpush.msra.mxu0 %v2024
  %v2026 = vand.u32 %v1769, 4294901760
  %2027 = vmatpush.msra.mxu0 %v2026
  %v2028 = vand.u32 %v1767, 4294901760
  %2029 = vmatpush.msra.mxu0 %v2028
  %v2030 = vand.u32 %v1765, 4294901760
  %2031 = vmatpush.msra.mxu0 %v2030
  %v2032 = vand.u32 %v1763, 4294901760
  %2033 = vmatpush.msra.mxu0 %v2032
  %v2034 = vand.u32 %v1761, 4294901760
  %2035 = vmatpush.msra.mxu0 %v2034
  %v2036 = vand.u32 %v1759, 4294901760
  %2037 = vmatpush.msra.mxu0 %v2036
  %v2038 = vand.u32 %v1757, 4294901760
  %2039 = vmatpush.msra.mxu0 %v2038
  %v2040 = vand.u32 %v1797, 4294901760
  %v2041 = vsub.f32 %v1797, %v2040
  %v2042 = vand.u32 %v2041, 4294901760
  %2043 = vmatmul.f32.gmra.mxu0 %v2042
  %v2044 = vpop.f32.mrf.mxu0
  %v2045 = vadd.f32 %v1999, %v2044
  %v2046 = vand.u32 %v1800, 4294901760
  %v2047 = vsub.f32 %v1800, %v2046
  %v2048 = vand.u32 %v2047, 4294901760
  %2049 = vmatmul.f32.gmra.mxu0 %v2048
  %v2050 = vpop.f32.mrf.mxu0
  %v2051 = vadd.f32 %v2004, %v2050
  %v2052 = vand.u32 %v1803, 4294901760
  %v2053 = vsub.f32 %v1803, %v2052
  %v2054 = vand.u32 %v2053, 4294901760
  %2055 = vmatmul.f32.gmra.mxu0 %v2054
  %v2056 = vpop.f32.mrf.mxu0
  %v2057 = vadd.f32 %v2009, %v2056
  %2058 = vdwg.mxu0
  %2059 = vmatpush.msra.mxu0 0.0
  %2060 = vmatpush.msra.mxu0 0.0
  %2061 = vmatpush.msra.mxu0 0.0
  %v2062 = vand.u32 %v1781, 4294901760
  %v2063 = vsub.f32 %v1781, %v2062
  %v2064 = vand.u32 %v2063, 4294901760
  %2065 = vmatpush.msra.mxu0 %v2064
  %v2066 = vand.u32 %v1779, 4294901760
  %v2067 = vsub.f32 %v1779, %v2066
  %v2068 = vand.u32 %v2067, 4294901760
  %2069 = vmatpush.msra.mxu0 %v2068
  %v2070 = vand.u32 %v1777, 4294901760
  %v2071 = vsub.f32 %v1777, %v2070
  %v2072 = vand.u32 %v2071, 4294901760
  %2073 = vmatpush.msra.mxu0 %v2072
  %v2074 = vand.u32 %v1775, 4294901760
  %v2075 = vsub.f32 %v1775, %v2074
  %v2076 = vand.u32 %v2075, 4294901760
  %2077 = vmatpush.msra.mxu0 %v2076
  %v2078 = vand.u32 %v1773, 4294901760
  %v2079 = vsub.f32 %v1773, %v2078
  %v2080 = vand.u32 %v2079, 4294901760
  %2081 = vmatpush.msra.mxu0 %v2080
  %v2082 = vand.u32 %v1771, 4294901760
  %v2083 = vsub.f32 %v1771, %v2082
  %v2084 = vand.u32 %v2083, 4294901760
  %2085 = vmatpush.msra.mxu0 %v2084
  %v2086 = vand.u32 %v1769, 4294901760
  %v2087 = vsub.f32 %v1769, %v2086
  %v2088 = vand.u32 %v2087, 4294901760
  %2089 = vmatpush.msra.mxu0 %v2088
  %v2090 = vand.u32 %v1767, 4294901760
  %v2091 = vsub.f32 %v1767, %v2090
  %v2092 = vand.u32 %v2091, 4294901760
  %2093 = vmatpush.msra.mxu0 %v2092
  %v2094 = vand.u32 %v1765, 4294901760
  %v2095 = vsub.f32 %v1765, %v2094
  %v2096 = vand.u32 %v2095, 4294901760
  %2097 = vmatpush.msra.mxu0 %v2096
  %v2098 = vand.u32 %v1763, 4294901760
  %v2099 = vsub.f32 %v1763, %v2098
  %v2100 = vand.u32 %v2099, 4294901760
  %2101 = vmatpush.msra.mxu0 %v2100
  %v2102 = vand.u32 %v1761, 4294901760
  %v2103 = vsub.f32 %v1761, %v2102
  %v2104 = vand.u32 %v2103, 4294901760
  %2105 = vmatpush.msra.mxu0 %v2104
  %v2106 = vand.u32 %v1759, 4294901760
  %v2107 = vsub.f32 %v1759, %v2106
  %v2108 = vand.u32 %v2107, 4294901760
  %2109 = vmatpush.msra.mxu0 %v2108
  %v2110 = vand.u32 %v1757, 4294901760
  %v2111 = vsub.f32 %v1757, %v2110
  %v2112 = vand.u32 %v2111, 4294901760
  %2113 = vmatpush.msra.mxu0 %v2112
  %v2114 = vand.u32 %v1797, 4294901760
  %2115 = vmatmul.f32.gmra.mxu0 %v2114
  %v2116 = vpop.f32.mrf.mxu0
  %v2117 = vadd.f32 %v2045, %v2116
  %v2118 = vand.u32 %v1800, 4294901760
  %2119 = vmatmul.f32.gmra.mxu0 %v2118
  %v2120 = vpop.f32.mrf.mxu0
  %v2121 = vadd.f32 %v2051, %v2120
  %v2122 = vand.u32 %v1803, 4294901760
  %2123 = vmatmul.f32.gmra.mxu0 %v2122
  %v2124 = vpop.f32.mrf.mxu0
  %v2125 = vadd.f32 %v2057, %v2124
  %2126 = vdwg.mxu0
  %2127 = vmatpush.msra.mxu0 0.0
  %2128 = vmatpush.msra.mxu0 0.0
  %2129 = vmatpush.msra.mxu0 0.0
  %v2130 = vand.u32 %v1781, 4294901760
  %2131 = vmatpush.msra.mxu0 %v2130
  %v2132 = vand.u32 %v1779, 4294901760
  %2133 = vmatpush.msra.mxu0 %v2132
  %v2134 = vand.u32 %v1777, 4294901760
  %2135 = vmatpush.msra.mxu0 %v2134
  %v2136 = vand.u32 %v1775, 4294901760
  %2137 = vmatpush.msra.mxu0 %v2136
  %v2138 = vand.u32 %v1773, 4294901760
  %2139 = vmatpush.msra.mxu0 %v2138
  %v2140 = vand.u32 %v1771, 4294901760
  %2141 = vmatpush.msra.mxu0 %v2140
  %v2142 = vand.u32 %v1769, 4294901760
  %2143 = vmatpush.msra.mxu0 %v2142
  %v2144 = vand.u32 %v1767, 4294901760
  %2145 = vmatpush.msra.mxu0 %v2144
  %v2146 = vand.u32 %v1765, 4294901760
  %2147 = vmatpush.msra.mxu0 %v2146
  %v2148 = vand.u32 %v1763, 4294901760
  %2149 = vmatpush.msra.mxu0 %v2148
  %v2150 = vand.u32 %v1761, 4294901760
  %2151 = vmatpush.msra.mxu0 %v2150
  %v2152 = vand.u32 %v1759, 4294901760
  %2153 = vmatpush.msra.mxu0 %v2152
  %v2154 = vand.u32 %v1757, 4294901760
  %2155 = vmatpush.msra.mxu0 %v2154
  %v2156 = vand.u32 %v1797, 4294901760
  %2157 = vmatmul.f32.gmra.mxu0 %v2156
  %v2158 = vpop.f32.mrf.mxu0
  %v2159 = vadd.f32 %v2117, %v2158
  %v2160 = vand.u32 %v1800, 4294901760
  %2161 = vmatmul.f32.gmra.mxu0 %v2160
  %v2162 = vpop.f32.mrf.mxu0
  %v2163 = vadd.f32 %v2121, %v2162
  %v2164 = vand.u32 %v1803, 4294901760
  %2165 = vmatmul.f32.gmra.mxu0 %v2164
  %v2166 = vpop.f32.mrf.mxu0
  %v2167 = vadd.f32 %v2125, %v2166
  %2168 = vdwg.mxu0
  %v2170 = vsel %vm1795, %v1737, 0
  %v2173 = vsel %vm1795, %v1738, 0
  %v2176 = vsel %vm1795, %v1739, 0
  %2178 = vmatpush.msra.mxu0 0.0
  %2179 = vmatpush.msra.mxu0 0.0
  %2180 = vmatpush.msra.mxu0 0.0
  %v2181 = vand.u32 %v1217, 4294901760
  %2182 = vmatpush.msra.mxu0 %v2181
  %v2183 = vand.u32 %v1213, 4294901760
  %2184 = vmatpush.msra.mxu0 %v2183
  %v2185 = vand.u32 %v1209, 4294901760
  %2186 = vmatpush.msra.mxu0 %v2185
  %v2187 = vand.u32 %v1205, 4294901760
  %2188 = vmatpush.msra.mxu0 %v2187
  %v2189 = vand.u32 %v1201, 4294901760
  %2190 = vmatpush.msra.mxu0 %v2189
  %v2191 = vand.u32 %v1197, 4294901760
  %2192 = vmatpush.msra.mxu0 %v2191
  %v2193 = vand.u32 %v1193, 4294901760
  %2194 = vmatpush.msra.mxu0 %v2193
  %v2195 = vand.u32 %v1189, 4294901760
  %2196 = vmatpush.msra.mxu0 %v2195
  %v2197 = vand.u32 %v1185, 4294901760
  %2198 = vmatpush.msra.mxu0 %v2197
  %v2199 = vand.u32 %v1181, 4294901760
  %2200 = vmatpush.msra.mxu0 %v2199
  %v2201 = vand.u32 %v1177, 4294901760
  %2202 = vmatpush.msra.mxu0 %v2201
  %v2203 = vand.u32 %v1173, 4294901760
  %2204 = vmatpush.msra.mxu0 %v2203
  %v2205 = vand.u32 %v1169, 4294901760
  %2206 = vmatpush.msra.mxu0 %v2205
  %v2207 = vand.u32 %v2170, 4294901760
  %v2208 = vsub.f32 %v2170, %v2207
  %v2209 = vand.u32 %v2208, 4294901760
  %v2210 = vsub.f32 %v2208, %v2209
  %v2211 = vand.u32 %v2210, 4294901760
  %2212 = vmatmul.f32.gmra.mxu0 %v2211
  %v2213 = vpop.f32.mrf.mxu0
  %v2214 = vadd.f32 %v2159, %v2213
  %v2215 = vand.u32 %v2173, 4294901760
  %v2216 = vsub.f32 %v2173, %v2215
  %v2217 = vand.u32 %v2216, 4294901760
  %v2218 = vsub.f32 %v2216, %v2217
  %v2219 = vand.u32 %v2218, 4294901760
  %2220 = vmatmul.f32.gmra.mxu0 %v2219
  %v2221 = vpop.f32.mrf.mxu0
  %v2222 = vadd.f32 %v2163, %v2221
  %v2223 = vand.u32 %v2176, 4294901760
  %v2224 = vsub.f32 %v2176, %v2223
  %v2225 = vand.u32 %v2224, 4294901760
  %v2226 = vsub.f32 %v2224, %v2225
  %v2227 = vand.u32 %v2226, 4294901760
  %2228 = vmatmul.f32.gmra.mxu0 %v2227
  %v2229 = vpop.f32.mrf.mxu0
  %v2230 = vadd.f32 %v2167, %v2229
  %2231 = vdwg.mxu0
  %2232 = vmatpush.msra.mxu0 0.0
  %2233 = vmatpush.msra.mxu0 0.0
  %2234 = vmatpush.msra.mxu0 0.0
  %v2235 = vand.u32 %v1217, 4294901760
  %v2236 = vsub.f32 %v1217, %v2235
  %v2237 = vand.u32 %v2236, 4294901760
  %v2238 = vsub.f32 %v2236, %v2237
  %v2239 = vand.u32 %v2238, 4294901760
  %2240 = vmatpush.msra.mxu0 %v2239
  %v2241 = vand.u32 %v1213, 4294901760
  %v2242 = vsub.f32 %v1213, %v2241
  %v2243 = vand.u32 %v2242, 4294901760
  %v2244 = vsub.f32 %v2242, %v2243
  %v2245 = vand.u32 %v2244, 4294901760
  %2246 = vmatpush.msra.mxu0 %v2245
  %v2247 = vand.u32 %v1209, 4294901760
  %v2248 = vsub.f32 %v1209, %v2247
  %v2249 = vand.u32 %v2248, 4294901760
  %v2250 = vsub.f32 %v2248, %v2249
  %v2251 = vand.u32 %v2250, 4294901760
  %2252 = vmatpush.msra.mxu0 %v2251
  %v2253 = vand.u32 %v1205, 4294901760
  %v2254 = vsub.f32 %v1205, %v2253
  %v2255 = vand.u32 %v2254, 4294901760
  %v2256 = vsub.f32 %v2254, %v2255
  %v2257 = vand.u32 %v2256, 4294901760
  %2258 = vmatpush.msra.mxu0 %v2257
  %v2259 = vand.u32 %v1201, 4294901760
  %v2260 = vsub.f32 %v1201, %v2259
  %v2261 = vand.u32 %v2260, 4294901760
  %v2262 = vsub.f32 %v2260, %v2261
  %v2263 = vand.u32 %v2262, 4294901760
  %2264 = vmatpush.msra.mxu0 %v2263
  %v2265 = vand.u32 %v1197, 4294901760
  %v2266 = vsub.f32 %v1197, %v2265
  %v2267 = vand.u32 %v2266, 4294901760
  %v2268 = vsub.f32 %v2266, %v2267
  %v2269 = vand.u32 %v2268, 4294901760
  %2270 = vmatpush.msra.mxu0 %v2269
  %v2271 = vand.u32 %v1193, 4294901760
  %v2272 = vsub.f32 %v1193, %v2271
  %v2273 = vand.u32 %v2272, 4294901760
  %v2274 = vsub.f32 %v2272, %v2273
  %v2275 = vand.u32 %v2274, 4294901760
  %2276 = vmatpush.msra.mxu0 %v2275
  %v2277 = vand.u32 %v1189, 4294901760
  %v2278 = vsub.f32 %v1189, %v2277
  %v2279 = vand.u32 %v2278, 4294901760
  %v2280 = vsub.f32 %v2278, %v2279
  %v2281 = vand.u32 %v2280, 4294901760
  %2282 = vmatpush.msra.mxu0 %v2281
  %v2283 = vand.u32 %v1185, 4294901760
  %v2284 = vsub.f32 %v1185, %v2283
  %v2285 = vand.u32 %v2284, 4294901760
  %v2286 = vsub.f32 %v2284, %v2285
  %v2287 = vand.u32 %v2286, 4294901760
  %2288 = vmatpush.msra.mxu0 %v2287
  %v2289 = vand.u32 %v1181, 4294901760
  %v2290 = vsub.f32 %v1181, %v2289
  %v2291 = vand.u32 %v2290, 4294901760
  %v2292 = vsub.f32 %v2290, %v2291
  %v2293 = vand.u32 %v2292, 4294901760
  %2294 = vmatpush.msra.mxu0 %v2293
  %v2295 = vand.u32 %v1177, 4294901760
  %v2296 = vsub.f32 %v1177, %v2295
  %v2297 = vand.u32 %v2296, 4294901760
  %v2298 = vsub.f32 %v2296, %v2297
  %v2299 = vand.u32 %v2298, 4294901760
  %2300 = vmatpush.msra.mxu0 %v2299
  %v2301 = vand.u32 %v1173, 4294901760
  %v2302 = vsub.f32 %v1173, %v2301
  %v2303 = vand.u32 %v2302, 4294901760
  %v2304 = vsub.f32 %v2302, %v2303
  %v2305 = vand.u32 %v2304, 4294901760
  %2306 = vmatpush.msra.mxu0 %v2305
  %v2307 = vand.u32 %v1169, 4294901760
  %v2308 = vsub.f32 %v1169, %v2307
  %v2309 = vand.u32 %v2308, 4294901760
  %v2310 = vsub.f32 %v2308, %v2309
  %v2311 = vand.u32 %v2310, 4294901760
  %2312 = vmatpush.msra.mxu0 %v2311
  %v2313 = vand.u32 %v2170, 4294901760
  %2314 = vmatmul.f32.gmra.mxu0 %v2313
  %v2315 = vpop.f32.mrf.mxu0
  %v2316 = vadd.f32 %v2214, %v2315
  %v2317 = vand.u32 %v2173, 4294901760
  %2318 = vmatmul.f32.gmra.mxu0 %v2317
  %v2319 = vpop.f32.mrf.mxu0
  %v2320 = vadd.f32 %v2222, %v2319
  %v2321 = vand.u32 %v2176, 4294901760
  %2322 = vmatmul.f32.gmra.mxu0 %v2321
  %v2323 = vpop.f32.mrf.mxu0
  %v2324 = vadd.f32 %v2230, %v2323
  %2325 = vdwg.mxu0
  %2326 = vmatpush.msra.mxu0 0.0
  %2327 = vmatpush.msra.mxu0 0.0
  %2328 = vmatpush.msra.mxu0 0.0
  %v2329 = vand.u32 %v1217, 4294901760
  %v2330 = vsub.f32 %v1217, %v2329
  %2331 = vmatpush.msra.mxu0 %v2330
  %v2332 = vand.u32 %v1213, 4294901760
  %v2333 = vsub.f32 %v1213, %v2332
  %2334 = vmatpush.msra.mxu0 %v2333
  %v2335 = vand.u32 %v1209, 4294901760
  %v2336 = vsub.f32 %v1209, %v2335
  %2337 = vmatpush.msra.mxu0 %v2336
  %v2338 = vand.u32 %v1205, 4294901760
  %v2339 = vsub.f32 %v1205, %v2338
  %2340 = vmatpush.msra.mxu0 %v2339
  %v2341 = vand.u32 %v1201, 4294901760
  %v2342 = vsub.f32 %v1201, %v2341
  %2343 = vmatpush.msra.mxu0 %v2342
  %v2344 = vand.u32 %v1197, 4294901760
  %v2345 = vsub.f32 %v1197, %v2344
  %2346 = vmatpush.msra.mxu0 %v2345
  %v2347 = vand.u32 %v1193, 4294901760
  %v2348 = vsub.f32 %v1193, %v2347
  %2349 = vmatpush.msra.mxu0 %v2348
  %v2350 = vand.u32 %v1189, 4294901760
  %v2351 = vsub.f32 %v1189, %v2350
  %2352 = vmatpush.msra.mxu0 %v2351
  %v2353 = vand.u32 %v1185, 4294901760
  %v2354 = vsub.f32 %v1185, %v2353
  %2355 = vmatpush.msra.mxu0 %v2354
  %v2356 = vand.u32 %v1181, 4294901760
  %v2357 = vsub.f32 %v1181, %v2356
  %2358 = vmatpush.msra.mxu0 %v2357
  %v2359 = vand.u32 %v1177, 4294901760
  %v2360 = vsub.f32 %v1177, %v2359
  %2361 = vmatpush.msra.mxu0 %v2360
  %v2362 = vand.u32 %v1173, 4294901760
  %v2363 = vsub.f32 %v1173, %v2362
  %2364 = vmatpush.msra.mxu0 %v2363
  %v2365 = vand.u32 %v1169, 4294901760
  %v2366 = vsub.f32 %v1169, %v2365
  %2367 = vmatpush.msra.mxu0 %v2366
  %v2368 = vand.u32 %v2170, 4294901760
  %v2369 = vsub.f32 %v2170, %v2368
  %2370 = vmatmul.f32.gmra.mxu0 %v2369
  %v2371 = vpop.f32.mrf.mxu0
  %v2372 = vadd.f32 %v2316, %v2371
  %v2373 = vand.u32 %v2173, 4294901760
  %v2374 = vsub.f32 %v2173, %v2373
  %2375 = vmatmul.f32.gmra.mxu0 %v2374
  %v2376 = vpop.f32.mrf.mxu0
  %v2377 = vadd.f32 %v2320, %v2376
  %v2378 = vand.u32 %v2176, 4294901760
  %v2379 = vsub.f32 %v2176, %v2378
  %2380 = vmatmul.f32.gmra.mxu0 %v2379
  %v2381 = vpop.f32.mrf.mxu0
  %v2382 = vadd.f32 %v2324, %v2381
  %2383 = vdwg.mxu0
  %2384 = vmatpush.msra.mxu0 0.0
  %2385 = vmatpush.msra.mxu0 0.0
  %2386 = vmatpush.msra.mxu0 0.0
  %v2387 = vand.u32 %v1217, 4294901760
  %2388 = vmatpush.msra.mxu0 %v2387
  %v2389 = vand.u32 %v1213, 4294901760
  %2390 = vmatpush.msra.mxu0 %v2389
  %v2391 = vand.u32 %v1209, 4294901760
  %2392 = vmatpush.msra.mxu0 %v2391
  %v2393 = vand.u32 %v1205, 4294901760
  %2394 = vmatpush.msra.mxu0 %v2393
  %v2395 = vand.u32 %v1201, 4294901760
  %2396 = vmatpush.msra.mxu0 %v2395
  %v2397 = vand.u32 %v1197, 4294901760
  %2398 = vmatpush.msra.mxu0 %v2397
  %v2399 = vand.u32 %v1193, 4294901760
  %2400 = vmatpush.msra.mxu0 %v2399
  %v2401 = vand.u32 %v1189, 4294901760
  %2402 = vmatpush.msra.mxu0 %v2401
  %v2403 = vand.u32 %v1185, 4294901760
  %2404 = vmatpush.msra.mxu0 %v2403
  %v2405 = vand.u32 %v1181, 4294901760
  %2406 = vmatpush.msra.mxu0 %v2405
  %v2407 = vand.u32 %v1177, 4294901760
  %2408 = vmatpush.msra.mxu0 %v2407
  %v2409 = vand.u32 %v1173, 4294901760
  %2410 = vmatpush.msra.mxu0 %v2409
  %v2411 = vand.u32 %v1169, 4294901760
  %2412 = vmatpush.msra.mxu0 %v2411
  %v2413 = vand.u32 %v2170, 4294901760
  %v2414 = vsub.f32 %v2170, %v2413
  %v2415 = vand.u32 %v2414, 4294901760
  %2416 = vmatmul.f32.gmra.mxu0 %v2415
  %v2417 = vpop.f32.mrf.mxu0
  %v2418 = vadd.f32 %v2372, %v2417
  %v2419 = vand.u32 %v2173, 4294901760
  %v2420 = vsub.f32 %v2173, %v2419
  %v2421 = vand.u32 %v2420, 4294901760
  %2422 = vmatmul.f32.gmra.mxu0 %v2421
  %v2423 = vpop.f32.mrf.mxu0
  %v2424 = vadd.f32 %v2377, %v2423
  %v2425 = vand.u32 %v2176, 4294901760
  %v2426 = vsub.f32 %v2176, %v2425
  %v2427 = vand.u32 %v2426, 4294901760
  %2428 = vmatmul.f32.gmra.mxu0 %v2427
  %v2429 = vpop.f32.mrf.mxu0
  %v2430 = vadd.f32 %v2382, %v2429
  %2431 = vdwg.mxu0
  %2432 = vmatpush.msra.mxu0 0.0
  %2433 = vmatpush.msra.mxu0 0.0
  %2434 = vmatpush.msra.mxu0 0.0
  %v2435 = vand.u32 %v1217, 4294901760
  %v2436 = vsub.f32 %v1217, %v2435
  %v2437 = vand.u32 %v2436, 4294901760
  %2438 = vmatpush.msra.mxu0 %v2437
  %v2439 = vand.u32 %v1213, 4294901760
  %v2440 = vsub.f32 %v1213, %v2439
  %v2441 = vand.u32 %v2440, 4294901760
  %2442 = vmatpush.msra.mxu0 %v2441
  %v2443 = vand.u32 %v1209, 4294901760
  %v2444 = vsub.f32 %v1209, %v2443
  %v2445 = vand.u32 %v2444, 4294901760
  %2446 = vmatpush.msra.mxu0 %v2445
  %v2447 = vand.u32 %v1205, 4294901760
  %v2448 = vsub.f32 %v1205, %v2447
  %v2449 = vand.u32 %v2448, 4294901760
  %2450 = vmatpush.msra.mxu0 %v2449
  %v2451 = vand.u32 %v1201, 4294901760
  %v2452 = vsub.f32 %v1201, %v2451
  %v2453 = vand.u32 %v2452, 4294901760
  %2454 = vmatpush.msra.mxu0 %v2453
  %v2455 = vand.u32 %v1197, 4294901760
  %v2456 = vsub.f32 %v1197, %v2455
  %v2457 = vand.u32 %v2456, 4294901760
  %2458 = vmatpush.msra.mxu0 %v2457
  %v2459 = vand.u32 %v1193, 4294901760
  %v2460 = vsub.f32 %v1193, %v2459
  %v2461 = vand.u32 %v2460, 4294901760
  %2462 = vmatpush.msra.mxu0 %v2461
  %v2463 = vand.u32 %v1189, 4294901760
  %v2464 = vsub.f32 %v1189, %v2463
  %v2465 = vand.u32 %v2464, 4294901760
  %2466 = vmatpush.msra.mxu0 %v2465
  %v2467 = vand.u32 %v1185, 4294901760
  %v2468 = vsub.f32 %v1185, %v2467
  %v2469 = vand.u32 %v2468, 4294901760
  %2470 = vmatpush.msra.mxu0 %v2469
  %v2471 = vand.u32 %v1181, 4294901760
  %v2472 = vsub.f32 %v1181, %v2471
  %v2473 = vand.u32 %v2472, 4294901760
  %2474 = vmatpush.msra.mxu0 %v2473
  %v2475 = vand.u32 %v1177, 4294901760
  %v2476 = vsub.f32 %v1177, %v2475
  %v2477 = vand.u32 %v2476, 4294901760
  %2478 = vmatpush.msra.mxu0 %v2477
  %v2479 = vand.u32 %v1173, 4294901760
  %v2480 = vsub.f32 %v1173, %v2479
  %v2481 = vand.u32 %v2480, 4294901760
  %2482 = vmatpush.msra.mxu0 %v2481
  %v2483 = vand.u32 %v1169, 4294901760
  %v2484 = vsub.f32 %v1169, %v2483
  %v2485 = vand.u32 %v2484, 4294901760
  %2486 = vmatpush.msra.mxu0 %v2485
  %v2487 = vand.u32 %v2170, 4294901760
  %2488 = vmatmul.f32.gmra.mxu0 %v2487
  %v2489 = vpop.f32.mrf.mxu0
  %v2490 = vadd.f32 %v2418, %v2489
  %v2491 = vand.u32 %v2173, 4294901760
  %2492 = vmatmul.f32.gmra.mxu0 %v2491
  %v2493 = vpop.f32.mrf.mxu0
  %v2494 = vadd.f32 %v2424, %v2493
  %v2495 = vand.u32 %v2176, 4294901760
  %2496 = vmatmul.f32.gmra.mxu0 %v2495
  %v2497 = vpop.f32.mrf.mxu0
  %v2498 = vadd.f32 %v2430, %v2497
  %2499 = vdwg.mxu0
  %2500 = vmatpush.msra.mxu0 0.0
  %2501 = vmatpush.msra.mxu0 0.0
  %2502 = vmatpush.msra.mxu0 0.0
  %v2503 = vand.u32 %v1217, 4294901760
  %2504 = vmatpush.msra.mxu0 %v2503
  %v2505 = vand.u32 %v1213, 4294901760
  %2506 = vmatpush.msra.mxu0 %v2505
  %v2507 = vand.u32 %v1209, 4294901760
  %2508 = vmatpush.msra.mxu0 %v2507
  %v2509 = vand.u32 %v1205, 4294901760
  %2510 = vmatpush.msra.mxu0 %v2509
  %v2511 = vand.u32 %v1201, 4294901760
  %2512 = vmatpush.msra.mxu0 %v2511
  %v2513 = vand.u32 %v1197, 4294901760
  %2514 = vmatpush.msra.mxu0 %v2513
  %v2515 = vand.u32 %v1193, 4294901760
  %2516 = vmatpush.msra.mxu0 %v2515
  %v2517 = vand.u32 %v1189, 4294901760
  %2518 = vmatpush.msra.mxu0 %v2517
  %v2519 = vand.u32 %v1185, 4294901760
  %2520 = vmatpush.msra.mxu0 %v2519
  %v2521 = vand.u32 %v1181, 4294901760
  %2522 = vmatpush.msra.mxu0 %v2521
  %v2523 = vand.u32 %v1177, 4294901760
  %2524 = vmatpush.msra.mxu0 %v2523
  %v2525 = vand.u32 %v1173, 4294901760
  %2526 = vmatpush.msra.mxu0 %v2525
  %v2527 = vand.u32 %v1169, 4294901760
  %2528 = vmatpush.msra.mxu0 %v2527
  %v2529 = vand.u32 %v2170, 4294901760
  %2530 = vmatmul.f32.gmra.mxu0 %v2529
  %v2531 = vpop.f32.mrf.mxu0
  %v2532 = vadd.f32 %v2490, %v2531
  %v2533 = vand.u32 %v2173, 4294901760
  %2534 = vmatmul.f32.gmra.mxu0 %v2533
  %v2535 = vpop.f32.mrf.mxu0
  %v2536 = vadd.f32 %v2494, %v2535
  %v2537 = vand.u32 %v2176, 4294901760
  %2538 = vmatmul.f32.gmra.mxu0 %v2537
  %v2539 = vpop.f32.mrf.mxu0
  %v2540 = vadd.f32 %v2498, %v2539
  %2541 = vdwg.mxu0
  %v2542 = vld [vmem:[%s0 + $0x288] sm:$0xff]
  %v2543 = vld [vmem:[%s0 + $0x2a0] sm:$0xff]
  %v2544 = vld [vmem:[%s0 + $0x2b8] sm:$0xff]
  %2545 = vrot.lane.b32.xlu0 %v1169, 96
  %v2546 = vpop.permute.xlu0 %2545
  %2547 = vrot.lane.b32.xlu0 %v1173, 96
  %v2548 = vpop.permute.xlu0 %2547
  %2549 = vrot.lane.b32.xlu0 %v1177, 96
  %v2550 = vpop.permute.xlu0 %2549
  %2551 = vrot.lane.b32.xlu0 %v1181, 96
  %v2552 = vpop.permute.xlu0 %2551
  %2553 = vrot.lane.b32.xlu0 %v1185, 96
  %v2554 = vpop.permute.xlu0 %2553
  %2555 = vrot.lane.b32.xlu0 %v1189, 96
  %v2556 = vpop.permute.xlu0 %2555
  %2557 = vrot.lane.b32.xlu0 %v1193, 96
  %v2558 = vpop.permute.xlu0 %2557
  %2559 = vrot.lane.b32.xlu0 %v1197, 96
  %v2560 = vpop.permute.xlu0 %2559
  %2561 = vrot.lane.b32.xlu0 %v1201, 96
  %v2562 = vpop.permute.xlu0 %2561
  %2563 = vrot.lane.b32.xlu0 %v1205, 96
  %v2564 = vpop.permute.xlu0 %2563
  %2565 = vrot.lane.b32.xlu0 %v1209, 96
  %v2566 = vpop.permute.xlu0 %2565
  %2567 = vrot.lane.b32.xlu0 %v1213, 96
  %v2568 = vpop.permute.xlu0 %2567
  %2569 = vrot.lane.b32.xlu0 %v1217, 96
  %v2570 = vpop.permute.xlu0 %2569
  %v2585 = vsel %vm1795, %v2542, 0
  %v2588 = vsel %vm1795, %v2543, 0
  %v2591 = vsel %vm1795, %v2544, 0
  %2593 = vmatpush.msra.mxu0 0.0
  %2594 = vmatpush.msra.mxu0 0.0
  %2595 = vmatpush.msra.mxu0 0.0
  %v2596 = vand.u32 %v2570, 4294901760
  %2597 = vmatpush.msra.mxu0 %v2596
  %v2598 = vand.u32 %v2568, 4294901760
  %2599 = vmatpush.msra.mxu0 %v2598
  %v2600 = vand.u32 %v2566, 4294901760
  %2601 = vmatpush.msra.mxu0 %v2600
  %v2602 = vand.u32 %v2564, 4294901760
  %2603 = vmatpush.msra.mxu0 %v2602
  %v2604 = vand.u32 %v2562, 4294901760
  %2605 = vmatpush.msra.mxu0 %v2604
  %v2606 = vand.u32 %v2560, 4294901760
  %2607 = vmatpush.msra.mxu0 %v2606
  %v2608 = vand.u32 %v2558, 4294901760
  %2609 = vmatpush.msra.mxu0 %v2608
  %v2610 = vand.u32 %v2556, 4294901760
  %2611 = vmatpush.msra.mxu0 %v2610
  %v2612 = vand.u32 %v2554, 4294901760
  %2613 = vmatpush.msra.mxu0 %v2612
  %v2614 = vand.u32 %v2552, 4294901760
  %2615 = vmatpush.msra.mxu0 %v2614
  %v2616 = vand.u32 %v2550, 4294901760
  %2617 = vmatpush.msra.mxu0 %v2616
  %v2618 = vand.u32 %v2548, 4294901760
  %2619 = vmatpush.msra.mxu0 %v2618
  %v2620 = vand.u32 %v2546, 4294901760
  %2621 = vmatpush.msra.mxu0 %v2620
  %v2622 = vand.u32 %v2585, 4294901760
  %v2623 = vsub.f32 %v2585, %v2622
  %v2624 = vand.u32 %v2623, 4294901760
  %v2625 = vsub.f32 %v2623, %v2624
  %v2626 = vand.u32 %v2625, 4294901760
  %2627 = vmatmul.f32.gmra.mxu0 %v2626
  %v2628 = vpop.f32.mrf.mxu0
  %v2629 = vadd.f32 0.0, %v2628
  %v2630 = vand.u32 %v2588, 4294901760
  %v2631 = vsub.f32 %v2588, %v2630
  %v2632 = vand.u32 %v2631, 4294901760
  %v2633 = vsub.f32 %v2631, %v2632
  %v2634 = vand.u32 %v2633, 4294901760
  %2635 = vmatmul.f32.gmra.mxu0 %v2634
  %v2636 = vpop.f32.mrf.mxu0
  %v2637 = vadd.f32 0.0, %v2636
  %v2638 = vand.u32 %v2591, 4294901760
  %v2639 = vsub.f32 %v2591, %v2638
  %v2640 = vand.u32 %v2639, 4294901760
  %v2641 = vsub.f32 %v2639, %v2640
  %v2642 = vand.u32 %v2641, 4294901760
  %2643 = vmatmul.f32.gmra.mxu0 %v2642
  %v2644 = vpop.f32.mrf.mxu0
  %v2645 = vadd.f32 0.0, %v2644
  %2646 = vdwg.mxu0
  %2647 = vmatpush.msra.mxu0 0.0
  %2648 = vmatpush.msra.mxu0 0.0
  %2649 = vmatpush.msra.mxu0 0.0
  %v2650 = vand.u32 %v2570, 4294901760
  %v2651 = vsub.f32 %v2570, %v2650
  %v2652 = vand.u32 %v2651, 4294901760
  %v2653 = vsub.f32 %v2651, %v2652
  %v2654 = vand.u32 %v2653, 4294901760
  %2655 = vmatpush.msra.mxu0 %v2654
  %v2656 = vand.u32 %v2568, 4294901760
  %v2657 = vsub.f32 %v2568, %v2656
  %v2658 = vand.u32 %v2657, 4294901760
  %v2659 = vsub.f32 %v2657, %v2658
  %v2660 = vand.u32 %v2659, 4294901760
  %2661 = vmatpush.msra.mxu0 %v2660
  %v2662 = vand.u32 %v2566, 4294901760
  %v2663 = vsub.f32 %v2566, %v2662
  %v2664 = vand.u32 %v2663, 4294901760
  %v2665 = vsub.f32 %v2663, %v2664
  %v2666 = vand.u32 %v2665, 4294901760
  %2667 = vmatpush.msra.mxu0 %v2666
  %v2668 = vand.u32 %v2564, 4294901760
  %v2669 = vsub.f32 %v2564, %v2668
  %v2670 = vand.u32 %v2669, 4294901760
  %v2671 = vsub.f32 %v2669, %v2670
  %v2672 = vand.u32 %v2671, 4294901760
  %2673 = vmatpush.msra.mxu0 %v2672
  %v2674 = vand.u32 %v2562, 4294901760
  %v2675 = vsub.f32 %v2562, %v2674
  %v2676 = vand.u32 %v2675, 4294901760
  %v2677 = vsub.f32 %v2675, %v2676
  %v2678 = vand.u32 %v2677, 4294901760
  %2679 = vmatpush.msra.mxu0 %v2678
  %v2680 = vand.u32 %v2560, 4294901760
  %v2681 = vsub.f32 %v2560, %v2680
  %v2682 = vand.u32 %v2681, 4294901760
  %v2683 = vsub.f32 %v2681, %v2682
  %v2684 = vand.u32 %v2683, 4294901760
  %2685 = vmatpush.msra.mxu0 %v2684
  %v2686 = vand.u32 %v2558, 4294901760
  %v2687 = vsub.f32 %v2558, %v2686
  %v2688 = vand.u32 %v2687, 4294901760
  %v2689 = vsub.f32 %v2687, %v2688
  %v2690 = vand.u32 %v2689, 4294901760
  %2691 = vmatpush.msra.mxu0 %v2690
  %v2692 = vand.u32 %v2556, 4294901760
  %v2693 = vsub.f32 %v2556, %v2692
  %v2694 = vand.u32 %v2693, 4294901760
  %v2695 = vsub.f32 %v2693, %v2694
  %v2696 = vand.u32 %v2695, 4294901760
  %2697 = vmatpush.msra.mxu0 %v2696
  %v2698 = vand.u32 %v2554, 4294901760
  %v2699 = vsub.f32 %v2554, %v2698
  %v2700 = vand.u32 %v2699, 4294901760
  %v2701 = vsub.f32 %v2699, %v2700
  %v2702 = vand.u32 %v2701, 4294901760
  %2703 = vmatpush.msra.mxu0 %v2702
  %v2704 = vand.u32 %v2552, 4294901760
  %v2705 = vsub.f32 %v2552, %v2704
  %v2706 = vand.u32 %v2705, 4294901760
  %v2707 = vsub.f32 %v2705, %v2706
  %v2708 = vand.u32 %v2707, 4294901760
  %2709 = vmatpush.msra.mxu0 %v2708
  %v2710 = vand.u32 %v2550, 4294901760
  %v2711 = vsub.f32 %v2550, %v2710
  %v2712 = vand.u32 %v2711, 4294901760
  %v2713 = vsub.f32 %v2711, %v2712
  %v2714 = vand.u32 %v2713, 4294901760
  %2715 = vmatpush.msra.mxu0 %v2714
  %v2716 = vand.u32 %v2548, 4294901760
  %v2717 = vsub.f32 %v2548, %v2716
  %v2718 = vand.u32 %v2717, 4294901760
  %v2719 = vsub.f32 %v2717, %v2718
  %v2720 = vand.u32 %v2719, 4294901760
  %2721 = vmatpush.msra.mxu0 %v2720
  %v2722 = vand.u32 %v2546, 4294901760
  %v2723 = vsub.f32 %v2546, %v2722
  %v2724 = vand.u32 %v2723, 4294901760
  %v2725 = vsub.f32 %v2723, %v2724
  %v2726 = vand.u32 %v2725, 4294901760
  %2727 = vmatpush.msra.mxu0 %v2726
  %v2728 = vand.u32 %v2585, 4294901760
  %2729 = vmatmul.f32.gmra.mxu0 %v2728
  %v2730 = vpop.f32.mrf.mxu0
  %v2731 = vadd.f32 %v2629, %v2730
  %v2732 = vand.u32 %v2588, 4294901760
  %2733 = vmatmul.f32.gmra.mxu0 %v2732
  %v2734 = vpop.f32.mrf.mxu0
  %v2735 = vadd.f32 %v2637, %v2734
  %v2736 = vand.u32 %v2591, 4294901760
  %2737 = vmatmul.f32.gmra.mxu0 %v2736
  %v2738 = vpop.f32.mrf.mxu0
  %v2739 = vadd.f32 %v2645, %v2738
  %2740 = vdwg.mxu0
  %2741 = vmatpush.msra.mxu0 0.0
  %2742 = vmatpush.msra.mxu0 0.0
  %2743 = vmatpush.msra.mxu0 0.0
  %v2744 = vand.u32 %v2570, 4294901760
  %v2745 = vsub.f32 %v2570, %v2744
  %2746 = vmatpush.msra.mxu0 %v2745
  %v2747 = vand.u32 %v2568, 4294901760
  %v2748 = vsub.f32 %v2568, %v2747
  %2749 = vmatpush.msra.mxu0 %v2748
  %v2750 = vand.u32 %v2566, 4294901760
  %v2751 = vsub.f32 %v2566, %v2750
  %2752 = vmatpush.msra.mxu0 %v2751
  %v2753 = vand.u32 %v2564, 4294901760
  %v2754 = vsub.f32 %v2564, %v2753
  %2755 = vmatpush.msra.mxu0 %v2754
  %v2756 = vand.u32 %v2562, 4294901760
  %v2757 = vsub.f32 %v2562, %v2756
  %2758 = vmatpush.msra.mxu0 %v2757
  %v2759 = vand.u32 %v2560, 4294901760
  %v2760 = vsub.f32 %v2560, %v2759
  %2761 = vmatpush.msra.mxu0 %v2760
  %v2762 = vand.u32 %v2558, 4294901760
  %v2763 = vsub.f32 %v2558, %v2762
  %2764 = vmatpush.msra.mxu0 %v2763
  %v2765 = vand.u32 %v2556, 4294901760
  %v2766 = vsub.f32 %v2556, %v2765
  %2767 = vmatpush.msra.mxu0 %v2766
  %v2768 = vand.u32 %v2554, 4294901760
  %v2769 = vsub.f32 %v2554, %v2768
  %2770 = vmatpush.msra.mxu0 %v2769
  %v2771 = vand.u32 %v2552, 4294901760
  %v2772 = vsub.f32 %v2552, %v2771
  %2773 = vmatpush.msra.mxu0 %v2772
  %v2774 = vand.u32 %v2550, 4294901760
  %v2775 = vsub.f32 %v2550, %v2774
  %2776 = vmatpush.msra.mxu0 %v2775
  %v2777 = vand.u32 %v2548, 4294901760
  %v2778 = vsub.f32 %v2548, %v2777
  %2779 = vmatpush.msra.mxu0 %v2778
  %v2780 = vand.u32 %v2546, 4294901760
  %v2781 = vsub.f32 %v2546, %v2780
  %2782 = vmatpush.msra.mxu0 %v2781
  %v2783 = vand.u32 %v2585, 4294901760
  %v2784 = vsub.f32 %v2585, %v2783
  %2785 = vmatmul.f32.gmra.mxu0 %v2784
  %v2786 = vpop.f32.mrf.mxu0
  %v2787 = vadd.f32 %v2731, %v2786
  %v2788 = vand.u32 %v2588, 4294901760
  %v2789 = vsub.f32 %v2588, %v2788
  %2790 = vmatmul.f32.gmra.mxu0 %v2789
  %v2791 = vpop.f32.mrf.mxu0
  %v2792 = vadd.f32 %v2735, %v2791
  %v2793 = vand.u32 %v2591, 4294901760
  %v2794 = vsub.f32 %v2591, %v2793
  %2795 = vmatmul.f32.gmra.mxu0 %v2794
  %v2796 = vpop.f32.mrf.mxu0
  %v2797 = vadd.f32 %v2739, %v2796
  %2798 = vdwg.mxu0
  %2799 = vmatpush.msra.mxu0 0.0
  %2800 = vmatpush.msra.mxu0 0.0
  %2801 = vmatpush.msra.mxu0 0.0
  %v2802 = vand.u32 %v2570, 4294901760
  %2803 = vmatpush.msra.mxu0 %v2802
  %v2804 = vand.u32 %v2568, 4294901760
  %2805 = vmatpush.msra.mxu0 %v2804
  %v2806 = vand.u32 %v2566, 4294901760
  %2807 = vmatpush.msra.mxu0 %v2806
  %v2808 = vand.u32 %v2564, 4294901760
  %2809 = vmatpush.msra.mxu0 %v2808
  %v2810 = vand.u32 %v2562, 4294901760
  %2811 = vmatpush.msra.mxu0 %v2810
  %v2812 = vand.u32 %v2560, 4294901760
  %2813 = vmatpush.msra.mxu0 %v2812
  %v2814 = vand.u32 %v2558, 4294901760
  %2815 = vmatpush.msra.mxu0 %v2814
  %v2816 = vand.u32 %v2556, 4294901760
  %2817 = vmatpush.msra.mxu0 %v2816
  %v2818 = vand.u32 %v2554, 4294901760
  %2819 = vmatpush.msra.mxu0 %v2818
  %v2820 = vand.u32 %v2552, 4294901760
  %2821 = vmatpush.msra.mxu0 %v2820
  %v2822 = vand.u32 %v2550, 4294901760
  %2823 = vmatpush.msra.mxu0 %v2822
  %v2824 = vand.u32 %v2548, 4294901760
  %2825 = vmatpush.msra.mxu0 %v2824
  %v2826 = vand.u32 %v2546, 4294901760
  %2827 = vmatpush.msra.mxu0 %v2826
  %v2828 = vand.u32 %v2585, 4294901760
  %v2829 = vsub.f32 %v2585, %v2828
  %v2830 = vand.u32 %v2829, 4294901760
  %2831 = vmatmul.f32.gmra.mxu0 %v2830
  %v2832 = vpop.f32.mrf.mxu0
  %v2833 = vadd.f32 %v2787, %v2832
  %v2834 = vand.u32 %v2588, 4294901760
  %v2835 = vsub.f32 %v2588, %v2834
  %v2836 = vand.u32 %v2835, 4294901760
  %2837 = vmatmul.f32.gmra.mxu0 %v2836
  %v2838 = vpop.f32.mrf.mxu0
  %v2839 = vadd.f32 %v2792, %v2838
  %v2840 = vand.u32 %v2591, 4294901760
  %v2841 = vsub.f32 %v2591, %v2840
  %v2842 = vand.u32 %v2841, 4294901760
  %2843 = vmatmul.f32.gmra.mxu0 %v2842
  %v2844 = vpop.f32.mrf.mxu0
  %v2845 = vadd.f32 %v2797, %v2844
  %2846 = vdwg.mxu0
  %2847 = vmatpush.msra.mxu0 0.0
  %2848 = vmatpush.msra.mxu0 0.0
  %2849 = vmatpush.msra.mxu0 0.0
  %v2850 = vand.u32 %v2570, 4294901760
  %v2851 = vsub.f32 %v2570, %v2850
  %v2852 = vand.u32 %v2851, 4294901760
  %2853 = vmatpush.msra.mxu0 %v2852
  %v2854 = vand.u32 %v2568, 4294901760
  %v2855 = vsub.f32 %v2568, %v2854
  %v2856 = vand.u32 %v2855, 4294901760
  %2857 = vmatpush.msra.mxu0 %v2856
  %v2858 = vand.u32 %v2566, 4294901760
  %v2859 = vsub.f32 %v2566, %v2858
  %v2860 = vand.u32 %v2859, 4294901760
  %2861 = vmatpush.msra.mxu0 %v2860
  %v2862 = vand.u32 %v2564, 4294901760
  %v2863 = vsub.f32 %v2564, %v2862
  %v2864 = vand.u32 %v2863, 4294901760
  %2865 = vmatpush.msra.mxu0 %v2864
  %v2866 = vand.u32 %v2562, 4294901760
  %v2867 = vsub.f32 %v2562, %v2866
  %v2868 = vand.u32 %v2867, 4294901760
  %2869 = vmatpush.msra.mxu0 %v2868
  %v2870 = vand.u32 %v2560, 4294901760
  %v2871 = vsub.f32 %v2560, %v2870
  %v2872 = vand.u32 %v2871, 4294901760
  %2873 = vmatpush.msra.mxu0 %v2872
  %v2874 = vand.u32 %v2558, 4294901760
  %v2875 = vsub.f32 %v2558, %v2874
  %v2876 = vand.u32 %v2875, 4294901760
  %2877 = vmatpush.msra.mxu0 %v2876
  %v2878 = vand.u32 %v2556, 4294901760
  %v2879 = vsub.f32 %v2556, %v2878
  %v2880 = vand.u32 %v2879, 4294901760
  %2881 = vmatpush.msra.mxu0 %v2880
  %v2882 = vand.u32 %v2554, 4294901760
  %v2883 = vsub.f32 %v2554, %v2882
  %v2884 = vand.u32 %v2883, 4294901760
  %2885 = vmatpush.msra.mxu0 %v2884
  %v2886 = vand.u32 %v2552, 4294901760
  %v2887 = vsub.f32 %v2552, %v2886
  %v2888 = vand.u32 %v2887, 4294901760
  %2889 = vmatpush.msra.mxu0 %v2888
  %v2890 = vand.u32 %v2550, 4294901760
  %v2891 = vsub.f32 %v2550, %v2890
  %v2892 = vand.u32 %v2891, 4294901760
  %2893 = vmatpush.msra.mxu0 %v2892
  %v2894 = vand.u32 %v2548, 4294901760
  %v2895 = vsub.f32 %v2548, %v2894
  %v2896 = vand.u32 %v2895, 4294901760
  %2897 = vmatpush.msra.mxu0 %v2896
  %v2898 = vand.u32 %v2546, 4294901760
  %v2899 = vsub.f32 %v2546, %v2898
  %v2900 = vand.u32 %v2899, 4294901760
  %2901 = vmatpush.msra.mxu0 %v2900
  %v2902 = vand.u32 %v2585, 4294901760
  %2903 = vmatmul.f32.gmra.mxu0 %v2902
  %v2904 = vpop.f32.mrf.mxu0
  %v2905 = vadd.f32 %v2833, %v2904
  %v2906 = vand.u32 %v2588, 4294901760
  %2907 = vmatmul.f32.gmra.mxu0 %v2906
  %v2908 = vpop.f32.mrf.mxu0
  %v2909 = vadd.f32 %v2839, %v2908
  %v2910 = vand.u32 %v2591, 4294901760
  %2911 = vmatmul.f32.gmra.mxu0 %v2910
  %v2912 = vpop.f32.mrf.mxu0
  %v2913 = vadd.f32 %v2845, %v2912
  %2914 = vdwg.mxu0
  %2915 = vmatpush.msra.mxu0 0.0
  %2916 = vmatpush.msra.mxu0 0.0
  %2917 = vmatpush.msra.mxu0 0.0
  %v2918 = vand.u32 %v2570, 4294901760
  %2919 = vmatpush.msra.mxu0 %v2918
  %v2920 = vand.u32 %v2568, 4294901760
  %2921 = vmatpush.msra.mxu0 %v2920
  %v2922 = vand.u32 %v2566, 4294901760
  %2923 = vmatpush.msra.mxu0 %v2922
  %v2924 = vand.u32 %v2564, 4294901760
  %2925 = vmatpush.msra.mxu0 %v2924
  %v2926 = vand.u32 %v2562, 4294901760
  %2927 = vmatpush.msra.mxu0 %v2926
  %v2928 = vand.u32 %v2560, 4294901760
  %2929 = vmatpush.msra.mxu0 %v2928
  %v2930 = vand.u32 %v2558, 4294901760
  %2931 = vmatpush.msra.mxu0 %v2930
  %v2932 = vand.u32 %v2556, 4294901760
  %2933 = vmatpush.msra.mxu0 %v2932
  %v2934 = vand.u32 %v2554, 4294901760
  %2935 = vmatpush.msra.mxu0 %v2934
  %v2936 = vand.u32 %v2552, 4294901760
  %2937 = vmatpush.msra.mxu0 %v2936
  %v2938 = vand.u32 %v2550, 4294901760
  %2939 = vmatpush.msra.mxu0 %v2938
  %v2940 = vand.u32 %v2548, 4294901760
  %2941 = vmatpush.msra.mxu0 %v2940
  %v2942 = vand.u32 %v2546, 4294901760
  %2943 = vmatpush.msra.mxu0 %v2942
  %v2944 = vand.u32 %v2585, 4294901760
  %2945 = vmatmul.f32.gmra.mxu0 %v2944
  %v2946 = vpop.f32.mrf.mxu0
  %v2947 = vadd.f32 %v2905, %v2946
  %v2948 = vand.u32 %v2588, 4294901760
  %2949 = vmatmul.f32.gmra.mxu0 %v2948
  %v2950 = vpop.f32.mrf.mxu0
  %v2951 = vadd.f32 %v2909, %v2950
  %v2952 = vand.u32 %v2591, 4294901760
  %2953 = vmatmul.f32.gmra.mxu0 %v2952
  %v2954 = vpop.f32.mrf.mxu0
  %v2955 = vadd.f32 %v2913, %v2954
  %2956 = vdwg.mxu0
  %v2957 = vadd.f32 %v2532, %v2947
  %v2958 = vadd.f32 %v2536, %v2951
  %v2959 = vadd.f32 %v2540, %v2955
  %v2960 = vld [vmem:[%s0 + $0x2d0] sm:$0xff]
  %v2961 = vld [vmem:[%s0 + $0x2e8] sm:$0xff]
  %v2962 = vld [vmem:[%s0 + $0x300] sm:$0xff]
  %2963 = vrot.lane.b32.xlu0 %v1169, 80
  %v2964 = vpop.permute.xlu0 %2963
  %2965 = vrot.lane.b32.xlu0 %v1173, 80
  %v2966 = vpop.permute.xlu0 %2965
  %2967 = vrot.lane.b32.xlu0 %v1177, 80
  %v2968 = vpop.permute.xlu0 %2967
  %2969 = vrot.lane.b32.xlu0 %v1181, 80
  %v2970 = vpop.permute.xlu0 %2969
  %2971 = vrot.lane.b32.xlu0 %v1185, 80
  %v2972 = vpop.permute.xlu0 %2971
  %2973 = vrot.lane.b32.xlu0 %v1189, 80
  %v2974 = vpop.permute.xlu0 %2973
  %2975 = vrot.lane.b32.xlu0 %v1193, 80
  %v2976 = vpop.permute.xlu0 %2975
  %2977 = vrot.lane.b32.xlu0 %v1197, 80
  %v2978 = vpop.permute.xlu0 %2977
  %2979 = vrot.lane.b32.xlu0 %v1201, 80
  %v2980 = vpop.permute.xlu0 %2979
  %2981 = vrot.lane.b32.xlu0 %v1205, 80
  %v2982 = vpop.permute.xlu0 %2981
  %2983 = vrot.lane.b32.xlu0 %v1209, 80
  %v2984 = vpop.permute.xlu0 %2983
  %2985 = vrot.lane.b32.xlu0 %v1213, 80
  %v2986 = vpop.permute.xlu0 %2985
  %2987 = vrot.lane.b32.xlu0 %v1217, 80
  %v2988 = vpop.permute.xlu0 %2987
  %v3003 = vsel %vm1795, %v2960, 0
  %v3006 = vsel %vm1795, %v2961, 0
  %v3009 = vsel %vm1795, %v2962, 0
  %3011 = vmatpush.msra.mxu0 0.0
  %3012 = vmatpush.msra.mxu0 0.0
  %3013 = vmatpush.msra.mxu0 0.0
  %v3014 = vand.u32 %v2988, 4294901760
  %3015 = vmatpush.msra.mxu0 %v3014
  %v3016 = vand.u32 %v2986, 4294901760
  %3017 = vmatpush.msra.mxu0 %v3016
  %v3018 = vand.u32 %v2984, 4294901760
  %3019 = vmatpush.msra.mxu0 %v3018
  %v3020 = vand.u32 %v2982, 4294901760
  %3021 = vmatpush.msra.mxu0 %v3020
  %v3022 = vand.u32 %v2980, 4294901760
  %3023 = vmatpush.msra.mxu0 %v3022
  %v3024 = vand.u32 %v2978, 4294901760
  %3025 = vmatpush.msra.mxu0 %v3024
  %v3026 = vand.u32 %v2976, 4294901760
  %3027 = vmatpush.msra.mxu0 %v3026
  %v3028 = vand.u32 %v2974, 4294901760
  %3029 = vmatpush.msra.mxu0 %v3028
  %v3030 = vand.u32 %v2972, 4294901760
  %3031 = vmatpush.msra.mxu0 %v3030
  %v3032 = vand.u32 %v2970, 4294901760
  %3033 = vmatpush.msra.mxu0 %v3032
  %v3034 = vand.u32 %v2968, 4294901760
  %3035 = vmatpush.msra.mxu0 %v3034
  %v3036 = vand.u32 %v2966, 4294901760
  %3037 = vmatpush.msra.mxu0 %v3036
  %v3038 = vand.u32 %v2964, 4294901760
  %3039 = vmatpush.msra.mxu0 %v3038
  %v3040 = vand.u32 %v3003, 4294901760
  %v3041 = vsub.f32 %v3003, %v3040
  %v3042 = vand.u32 %v3041, 4294901760
  %v3043 = vsub.f32 %v3041, %v3042
  %v3044 = vand.u32 %v3043, 4294901760
  %3045 = vmatmul.f32.gmra.mxu0 %v3044
  %v3046 = vpop.f32.mrf.mxu0
  %v3047 = vadd.f32 0.0, %v3046
  %v3048 = vand.u32 %v3006, 4294901760
  %v3049 = vsub.f32 %v3006, %v3048
  %v3050 = vand.u32 %v3049, 4294901760
  %v3051 = vsub.f32 %v3049, %v3050
  %v3052 = vand.u32 %v3051, 4294901760
  %3053 = vmatmul.f32.gmra.mxu0 %v3052
  %v3054 = vpop.f32.mrf.mxu0
  %v3055 = vadd.f32 0.0, %v3054
  %v3056 = vand.u32 %v3009, 4294901760
  %v3057 = vsub.f32 %v3009, %v3056
  %v3058 = vand.u32 %v3057, 4294901760
  %v3059 = vsub.f32 %v3057, %v3058
  %v3060 = vand.u32 %v3059, 4294901760
  %3061 = vmatmul.f32.gmra.mxu0 %v3060
  %v3062 = vpop.f32.mrf.mxu0
  %v3063 = vadd.f32 0.0, %v3062
  %3064 = vdwg.mxu0
  %3065 = vmatpush.msra.mxu0 0.0
  %3066 = vmatpush.msra.mxu0 0.0
  %3067 = vmatpush.msra.mxu0 0.0
  %v3068 = vand.u32 %v2988, 4294901760
  %v3069 = vsub.f32 %v2988, %v3068
  %v3070 = vand.u32 %v3069, 4294901760
  %v3071 = vsub.f32 %v3069, %v3070
  %v3072 = vand.u32 %v3071, 4294901760
  %3073 = vmatpush.msra.mxu0 %v3072
  %v3074 = vand.u32 %v2986, 4294901760
  %v3075 = vsub.f32 %v2986, %v3074
  %v3076 = vand.u32 %v3075, 4294901760
  %v3077 = vsub.f32 %v3075, %v3076
  %v3078 = vand.u32 %v3077, 4294901760
  %3079 = vmatpush.msra.mxu0 %v3078
  %v3080 = vand.u32 %v2984, 4294901760
  %v3081 = vsub.f32 %v2984, %v3080
  %v3082 = vand.u32 %v3081, 4294901760
  %v3083 = vsub.f32 %v3081, %v3082
  %v3084 = vand.u32 %v3083, 4294901760
  %3085 = vmatpush.msra.mxu0 %v3084
  %v3086 = vand.u32 %v2982, 4294901760
  %v3087 = vsub.f32 %v2982, %v3086
  %v3088 = vand.u32 %v3087, 4294901760
  %v3089 = vsub.f32 %v3087, %v3088
  %v3090 = vand.u32 %v3089, 4294901760
  %3091 = vmatpush.msra.mxu0 %v3090
  %v3092 = vand.u32 %v2980, 4294901760
  %v3093 = vsub.f32 %v2980, %v3092
  %v3094 = vand.u32 %v3093, 4294901760
  %v3095 = vsub.f32 %v3093, %v3094
  %v3096 = vand.u32 %v3095, 4294901760
  %3097 = vmatpush.msra.mxu0 %v3096
  %v3098 = vand.u32 %v2978, 4294901760
  %v3099 = vsub.f32 %v2978, %v3098
  %v3100 = vand.u32 %v3099, 4294901760
  %v3101 = vsub.f32 %v3099, %v3100
  %v3102 = vand.u32 %v3101, 4294901760
  %3103 = vmatpush.msra.mxu0 %v3102
  %v3104 = vand.u32 %v2976, 4294901760
  %v3105 = vsub.f32 %v2976, %v3104
  %v3106 = vand.u32 %v3105, 4294901760
  %v3107 = vsub.f32 %v3105, %v3106
  %v3108 = vand.u32 %v3107, 4294901760
  %3109 = vmatpush.msra.mxu0 %v3108
  %v3110 = vand.u32 %v2974, 4294901760
  %v3111 = vsub.f32 %v2974, %v3110
  %v3112 = vand.u32 %v3111, 4294901760
  %v3113 = vsub.f32 %v3111, %v3112
  %v3114 = vand.u32 %v3113, 4294901760
  %3115 = vmatpush.msra.mxu0 %v3114
  %v3116 = vand.u32 %v2972, 4294901760
  %v3117 = vsub.f32 %v2972, %v3116
  %v3118 = vand.u32 %v3117, 4294901760
  %v3119 = vsub.f32 %v3117, %v3118
  %v3120 = vand.u32 %v3119, 4294901760
  %3121 = vmatpush.msra.mxu0 %v3120
  %v3122 = vand.u32 %v2970, 4294901760
  %v3123 = vsub.f32 %v2970, %v3122
  %v3124 = vand.u32 %v3123, 4294901760
  %v3125 = vsub.f32 %v3123, %v3124
  %v3126 = vand.u32 %v3125, 4294901760
  %3127 = vmatpush.msra.mxu0 %v3126
  %v3128 = vand.u32 %v2968, 4294901760
  %v3129 = vsub.f32 %v2968, %v3128
  %v3130 = vand.u32 %v3129, 4294901760
  %v3131 = vsub.f32 %v3129, %v3130
  %v3132 = vand.u32 %v3131, 4294901760
  %3133 = vmatpush.msra.mxu0 %v3132
  %v3134 = vand.u32 %v2966, 4294901760
  %v3135 = vsub.f32 %v2966, %v3134
  %v3136 = vand.u32 %v3135, 4294901760
  %v3137 = vsub.f32 %v3135, %v3136
  %v3138 = vand.u32 %v3137, 4294901760
  %3139 = vmatpush.msra.mxu0 %v3138
  %v3140 = vand.u32 %v2964, 4294901760
  %v3141 = vsub.f32 %v2964, %v3140
  %v3142 = vand.u32 %v3141, 4294901760
  %v3143 = vsub.f32 %v3141, %v3142
  %v3144 = vand.u32 %v3143, 4294901760
  %3145 = vmatpush.msra.mxu0 %v3144
  %v3146 = vand.u32 %v3003, 4294901760
  %3147 = vmatmul.f32.gmra.mxu0 %v3146
  %v3148 = vpop.f32.mrf.mxu0
  %v3149 = vadd.f32 %v3047, %v3148
  %v3150 = vand.u32 %v3006, 4294901760
  %3151 = vmatmul.f32.gmra.mxu0 %v3150
  %v3152 = vpop.f32.mrf.mxu0
  %v3153 = vadd.f32 %v3055, %v3152
  %v3154 = vand.u32 %v3009, 4294901760
  %3155 = vmatmul.f32.gmra.mxu0 %v3154
  %v3156 = vpop.f32.mrf.mxu0
  %v3157 = vadd.f32 %v3063, %v3156
  %3158 = vdwg.mxu0
  %3159 = vmatpush.msra.mxu0 0.0
  %3160 = vmatpush.msra.mxu0 0.0
  %3161 = vmatpush.msra.mxu0 0.0
  %v3162 = vand.u32 %v2988, 4294901760
  %v3163 = vsub.f32 %v2988, %v3162
  %3164 = vmatpush.msra.mxu0 %v3163
  %v3165 = vand.u32 %v2986, 4294901760
  %v3166 = vsub.f32 %v2986, %v3165
  %3167 = vmatpush.msra.mxu0 %v3166
  %v3168 = vand.u32 %v2984, 4294901760
  %v3169 = vsub.f32 %v2984, %v3168
  %3170 = vmatpush.msra.mxu0 %v3169
  %v3171 = vand.u32 %v2982, 4294901760
  %v3172 = vsub.f32 %v2982, %v3171
  %3173 = vmatpush.msra.mxu0 %v3172
  %v3174 = vand.u32 %v2980, 4294901760
  %v3175 = vsub.f32 %v2980, %v3174
  %3176 = vmatpush.msra.mxu0 %v3175
  %v3177 = vand.u32 %v2978, 4294901760
  %v3178 = vsub.f32 %v2978, %v3177
  %3179 = vmatpush.msra.mxu0 %v3178
  %v3180 = vand.u32 %v2976, 4294901760
  %v3181 = vsub.f32 %v2976, %v3180
  %3182 = vmatpush.msra.mxu0 %v3181
  %v3183 = vand.u32 %v2974, 4294901760
  %v3184 = vsub.f32 %v2974, %v3183
  %3185 = vmatpush.msra.mxu0 %v3184
  %v3186 = vand.u32 %v2972, 4294901760
  %v3187 = vsub.f32 %v2972, %v3186
  %3188 = vmatpush.msra.mxu0 %v3187
  %v3189 = vand.u32 %v2970, 4294901760
  %v3190 = vsub.f32 %v2970, %v3189
  %3191 = vmatpush.msra.mxu0 %v3190
  %v3192 = vand.u32 %v2968, 4294901760
  %v3193 = vsub.f32 %v2968, %v3192
  %3194 = vmatpush.msra.mxu0 %v3193
  %v3195 = vand.u32 %v2966, 4294901760
  %v3196 = vsub.f32 %v2966, %v3195
  %3197 = vmatpush.msra.mxu0 %v3196
  %v3198 = vand.u32 %v2964, 4294901760
  %v3199 = vsub.f32 %v2964, %v3198
  %3200 = vmatpush.msra.mxu0 %v3199
  %v3201 = vand.u32 %v3003, 4294901760
  %v3202 = vsub.f32 %v3003, %v3201
  %3203 = vmatmul.f32.gmra.mxu0 %v3202
  %v3204 = vpop.f32.mrf.mxu0
  %v3205 = vadd.f32 %v3149, %v3204
  %v3206 = vand.u32 %v3006, 4294901760
  %v3207 = vsub.f32 %v3006, %v3206
  %3208 = vmatmul.f32.gmra.mxu0 %v3207
  %v3209 = vpop.f32.mrf.mxu0
  %v3210 = vadd.f32 %v3153, %v3209
  %v3211 = vand.u32 %v3009, 4294901760
  %v3212 = vsub.f32 %v3009, %v3211
  %3213 = vmatmul.f32.gmra.mxu0 %v3212
  %v3214 = vpop.f32.mrf.mxu0
  %v3215 = vadd.f32 %v3157, %v3214
  %3216 = vdwg.mxu0
  %3217 = vmatpush.msra.mxu0 0.0
  %3218 = vmatpush.msra.mxu0 0.0
  %3219 = vmatpush.msra.mxu0 0.0
  %v3220 = vand.u32 %v2988, 4294901760
  %3221 = vmatpush.msra.mxu0 %v3220
  %v3222 = vand.u32 %v2986, 4294901760
  %3223 = vmatpush.msra.mxu0 %v3222
  %v3224 = vand.u32 %v2984, 4294901760
  %3225 = vmatpush.msra.mxu0 %v3224
  %v3226 = vand.u32 %v2982, 4294901760
  %3227 = vmatpush.msra.mxu0 %v3226
  %v3228 = vand.u32 %v2980, 4294901760
  %3229 = vmatpush.msra.mxu0 %v3228
  %v3230 = vand.u32 %v2978, 4294901760
  %3231 = vmatpush.msra.mxu0 %v3230
  %v3232 = vand.u32 %v2976, 4294901760
  %3233 = vmatpush.msra.mxu0 %v3232
  %v3234 = vand.u32 %v2974, 4294901760
  %3235 = vmatpush.msra.mxu0 %v3234
  %v3236 = vand.u32 %v2972, 4294901760
  %3237 = vmatpush.msra.mxu0 %v3236
  %v3238 = vand.u32 %v2970, 4294901760
  %3239 = vmatpush.msra.mxu0 %v3238
  %v3240 = vand.u32 %v2968, 4294901760
  %3241 = vmatpush.msra.mxu0 %v3240
  %v3242 = vand.u32 %v2966, 4294901760
  %3243 = vmatpush.msra.mxu0 %v3242
  %v3244 = vand.u32 %v2964, 4294901760
  %3245 = vmatpush.msra.mxu0 %v3244
  %v3246 = vand.u32 %v3003, 4294901760
  %v3247 = vsub.f32 %v3003, %v3246
  %v3248 = vand.u32 %v3247, 4294901760
  %3249 = vmatmul.f32.gmra.mxu0 %v3248
  %v3250 = vpop.f32.mrf.mxu0
  %v3251 = vadd.f32 %v3205, %v3250
  %v3252 = vand.u32 %v3006, 4294901760
  %v3253 = vsub.f32 %v3006, %v3252
  %v3254 = vand.u32 %v3253, 4294901760
  %3255 = vmatmul.f32.gmra.mxu0 %v3254
  %v3256 = vpop.f32.mrf.mxu0
  %v3257 = vadd.f32 %v3210, %v3256
  %v3258 = vand.u32 %v3009, 4294901760
  %v3259 = vsub.f32 %v3009, %v3258
  %v3260 = vand.u32 %v3259, 4294901760
  %3261 = vmatmul.f32.gmra.mxu0 %v3260
  %v3262 = vpop.f32.mrf.mxu0
  %v3263 = vadd.f32 %v3215, %v3262
  %3264 = vdwg.mxu0
  %3265 = vmatpush.msra.mxu0 0.0
  %3266 = vmatpush.msra.mxu0 0.0
  %3267 = vmatpush.msra.mxu0 0.0
  %v3268 = vand.u32 %v2988, 4294901760
  %v3269 = vsub.f32 %v2988, %v3268
  %v3270 = vand.u32 %v3269, 4294901760
  %3271 = vmatpush.msra.mxu0 %v3270
  %v3272 = vand.u32 %v2986, 4294901760
  %v3273 = vsub.f32 %v2986, %v3272
  %v3274 = vand.u32 %v3273, 4294901760
  %3275 = vmatpush.msra.mxu0 %v3274
  %v3276 = vand.u32 %v2984, 4294901760
  %v3277 = vsub.f32 %v2984, %v3276
  %v3278 = vand.u32 %v3277, 4294901760
  %3279 = vmatpush.msra.mxu0 %v3278
  %v3280 = vand.u32 %v2982, 4294901760
  %v3281 = vsub.f32 %v2982, %v3280
  %v3282 = vand.u32 %v3281, 4294901760
  %3283 = vmatpush.msra.mxu0 %v3282
  %v3284 = vand.u32 %v2980, 4294901760
  %v3285 = vsub.f32 %v2980, %v3284
  %v3286 = vand.u32 %v3285, 4294901760
  %3287 = vmatpush.msra.mxu0 %v3286
  %v3288 = vand.u32 %v2978, 4294901760
  %v3289 = vsub.f32 %v2978, %v3288
  %v3290 = vand.u32 %v3289, 4294901760
  %3291 = vmatpush.msra.mxu0 %v3290
  %v3292 = vand.u32 %v2976, 4294901760
  %v3293 = vsub.f32 %v2976, %v3292
  %v3294 = vand.u32 %v3293, 4294901760
  %3295 = vmatpush.msra.mxu0 %v3294
  %v3296 = vand.u32 %v2974, 4294901760
  %v3297 = vsub.f32 %v2974, %v3296
  %v3298 = vand.u32 %v3297, 4294901760
  %3299 = vmatpush.msra.mxu0 %v3298
  %v3300 = vand.u32 %v2972, 4294901760
  %v3301 = vsub.f32 %v2972, %v3300
  %v3302 = vand.u32 %v3301, 4294901760
  %3303 = vmatpush.msra.mxu0 %v3302
  %v3304 = vand.u32 %v2970, 4294901760
  %v3305 = vsub.f32 %v2970, %v3304
  %v3306 = vand.u32 %v3305, 4294901760
  %3307 = vmatpush.msra.mxu0 %v3306
  %v3308 = vand.u32 %v2968, 4294901760
  %v3309 = vsub.f32 %v2968, %v3308
  %v3310 = vand.u32 %v3309, 4294901760
  %3311 = vmatpush.msra.mxu0 %v3310
  %v3312 = vand.u32 %v2966, 4294901760
  %v3313 = vsub.f32 %v2966, %v3312
  %v3314 = vand.u32 %v3313, 4294901760
  %3315 = vmatpush.msra.mxu0 %v3314
  %v3316 = vand.u32 %v2964, 4294901760
  %v3317 = vsub.f32 %v2964, %v3316
  %v3318 = vand.u32 %v3317, 4294901760
  %3319 = vmatpush.msra.mxu0 %v3318
  %v3320 = vand.u32 %v3003, 4294901760
  %3321 = vmatmul.f32.gmra.mxu0 %v3320
  %v3322 = vpop.f32.mrf.mxu0
  %v3323 = vadd.f32 %v3251, %v3322
  %v3324 = vand.u32 %v3006, 4294901760
  %3325 = vmatmul.f32.gmra.mxu0 %v3324
  %v3326 = vpop.f32.mrf.mxu0
  %v3327 = vadd.f32 %v3257, %v3326
  %v3328 = vand.u32 %v3009, 4294901760
  %3329 = vmatmul.f32.gmra.mxu0 %v3328
  %v3330 = vpop.f32.mrf.mxu0
  %v3331 = vadd.f32 %v3263, %v3330
  %3332 = vdwg.mxu0
  %3333 = vmatpush.msra.mxu0 0.0
  %3334 = vmatpush.msra.mxu0 0.0
  %3335 = vmatpush.msra.mxu0 0.0
  %v3336 = vand.u32 %v2988, 4294901760
  %3337 = vmatpush.msra.mxu0 %v3336
  %v3338 = vand.u32 %v2986, 4294901760
  %3339 = vmatpush.msra.mxu0 %v3338
  %v3340 = vand.u32 %v2984, 4294901760
  %3341 = vmatpush.msra.mxu0 %v3340
  %v3342 = vand.u32 %v2982, 4294901760
  %3343 = vmatpush.msra.mxu0 %v3342
  %v3344 = vand.u32 %v2980, 4294901760
  %3345 = vmatpush.msra.mxu0 %v3344
  %v3346 = vand.u32 %v2978, 4294901760
  %3347 = vmatpush.msra.mxu0 %v3346
  %v3348 = vand.u32 %v2976, 4294901760
  %3349 = vmatpush.msra.mxu0 %v3348
  %v3350 = vand.u32 %v2974, 4294901760
  %3351 = vmatpush.msra.mxu0 %v3350
  %v3352 = vand.u32 %v2972, 4294901760
  %3353 = vmatpush.msra.mxu0 %v3352
  %v3354 = vand.u32 %v2970, 4294901760
  %3355 = vmatpush.msra.mxu0 %v3354
  %v3356 = vand.u32 %v2968, 4294901760
  %3357 = vmatpush.msra.mxu0 %v3356
  %v3358 = vand.u32 %v2966, 4294901760
  %3359 = vmatpush.msra.mxu0 %v3358
  %v3360 = vand.u32 %v2964, 4294901760
  %3361 = vmatpush.msra.mxu0 %v3360
  %v3362 = vand.u32 %v3003, 4294901760
  %3363 = vmatmul.f32.gmra.mxu0 %v3362
  %v3364 = vpop.f32.mrf.mxu0
  %v3365 = vadd.f32 %v3323, %v3364
  %v3366 = vand.u32 %v3006, 4294901760
  %3367 = vmatmul.f32.gmra.mxu0 %v3366
  %v3368 = vpop.f32.mrf.mxu0
  %v3369 = vadd.f32 %v3327, %v3368
  %v3370 = vand.u32 %v3009, 4294901760
  %3371 = vmatmul.f32.gmra.mxu0 %v3370
  %v3372 = vpop.f32.mrf.mxu0
  %v3373 = vadd.f32 %v3331, %v3372
  %3374 = vdwg.mxu0
  %v3375 = vadd.f32 %v2957, %v3365
  %v3376 = vadd.f32 %v2958, %v3369
  %v3377 = vadd.f32 %v2959, %v3373
  %v3378 = vld [vmem:[%s0 + $0x318] sm:$0xff]
  %v3379 = vld [vmem:[%s0 + $0x330] sm:$0xff]
  %v3380 = vld [vmem:[%s0 + $0x348] sm:$0xff]
  %3381 = vrot.lane.b32.xlu0 %v1169, 64
  %v3382 = vpop.permute.xlu0 %3381
  %3383 = vrot.lane.b32.xlu0 %v1173, 64
  %v3384 = vpop.permute.xlu0 %3383
  %3385 = vrot.lane.b32.xlu0 %v1177, 64
  %v3386 = vpop.permute.xlu0 %3385
  %3387 = vrot.lane.b32.xlu0 %v1181, 64
  %v3388 = vpop.permute.xlu0 %3387
  %3389 = vrot.lane.b32.xlu0 %v1185, 64
  %v3390 = vpop.permute.xlu0 %3389
  %3391 = vrot.lane.b32.xlu0 %v1189, 64
  %v3392 = vpop.permute.xlu0 %3391
  %3393 = vrot.lane.b32.xlu0 %v1193, 64
  %v3394 = vpop.permute.xlu0 %3393
  %3395 = vrot.lane.b32.xlu0 %v1197, 64
  %v3396 = vpop.permute.xlu0 %3395
  %3397 = vrot.lane.b32.xlu0 %v1201, 64
  %v3398 = vpop.permute.xlu0 %3397
  %3399 = vrot.lane.b32.xlu0 %v1205, 64
  %v3400 = vpop.permute.xlu0 %3399
  %3401 = vrot.lane.b32.xlu0 %v1209, 64
  %v3402 = vpop.permute.xlu0 %3401
  %3403 = vrot.lane.b32.xlu0 %v1213, 64
  %v3404 = vpop.permute.xlu0 %3403
  %3405 = vrot.lane.b32.xlu0 %v1217, 64
  %v3406 = vpop.permute.xlu0 %3405
  %v3421 = vsel %vm1795, %v3378, 0
  %v3424 = vsel %vm1795, %v3379, 0
  %v3427 = vsel %vm1795, %v3380, 0
  %3429 = vmatpush.msra.mxu0 0.0
  %3430 = vmatpush.msra.mxu0 0.0
  %3431 = vmatpush.msra.mxu0 0.0
  %v3432 = vand.u32 %v3406, 4294901760
  %3433 = vmatpush.msra.mxu0 %v3432
  %v3434 = vand.u32 %v3404, 4294901760
  %3435 = vmatpush.msra.mxu0 %v3434
  %v3436 = vand.u32 %v3402, 4294901760
  %3437 = vmatpush.msra.mxu0 %v3436
  %v3438 = vand.u32 %v3400, 4294901760
  %3439 = vmatpush.msra.mxu0 %v3438
  %v3440 = vand.u32 %v3398, 4294901760
  %3441 = vmatpush.msra.mxu0 %v3440
  %v3442 = vand.u32 %v3396, 4294901760
  %3443 = vmatpush.msra.mxu0 %v3442
  %v3444 = vand.u32 %v3394, 4294901760
  %3445 = vmatpush.msra.mxu0 %v3444
  %v3446 = vand.u32 %v3392, 4294901760
  %3447 = vmatpush.msra.mxu0 %v3446
  %v3448 = vand.u32 %v3390, 4294901760
  %3449 = vmatpush.msra.mxu0 %v3448
  %v3450 = vand.u32 %v3388, 4294901760
  %3451 = vmatpush.msra.mxu0 %v3450
  %v3452 = vand.u32 %v3386, 4294901760
  %3453 = vmatpush.msra.mxu0 %v3452
  %v3454 = vand.u32 %v3384, 4294901760
  %3455 = vmatpush.msra.mxu0 %v3454
  %v3456 = vand.u32 %v3382, 4294901760
  %3457 = vmatpush.msra.mxu0 %v3456
  %v3458 = vand.u32 %v3421, 4294901760
  %v3459 = vsub.f32 %v3421, %v3458
  %v3460 = vand.u32 %v3459, 4294901760
  %v3461 = vsub.f32 %v3459, %v3460
  %v3462 = vand.u32 %v3461, 4294901760
  %3463 = vmatmul.f32.gmra.mxu0 %v3462
  %v3464 = vpop.f32.mrf.mxu0
  %v3465 = vadd.f32 0.0, %v3464
  %v3466 = vand.u32 %v3424, 4294901760
  %v3467 = vsub.f32 %v3424, %v3466
  %v3468 = vand.u32 %v3467, 4294901760
  %v3469 = vsub.f32 %v3467, %v3468
  %v3470 = vand.u32 %v3469, 4294901760
  %3471 = vmatmul.f32.gmra.mxu0 %v3470
  %v3472 = vpop.f32.mrf.mxu0
  %v3473 = vadd.f32 0.0, %v3472
  %v3474 = vand.u32 %v3427, 4294901760
  %v3475 = vsub.f32 %v3427, %v3474
  %v3476 = vand.u32 %v3475, 4294901760
  %v3477 = vsub.f32 %v3475, %v3476
  %v3478 = vand.u32 %v3477, 4294901760
  %3479 = vmatmul.f32.gmra.mxu0 %v3478
  %v3480 = vpop.f32.mrf.mxu0
  %v3481 = vadd.f32 0.0, %v3480
  %3482 = vdwg.mxu0
  %3483 = vmatpush.msra.mxu0 0.0
  %3484 = vmatpush.msra.mxu0 0.0
  %3485 = vmatpush.msra.mxu0 0.0
  %v3486 = vand.u32 %v3406, 4294901760
  %v3487 = vsub.f32 %v3406, %v3486
  %v3488 = vand.u32 %v3487, 4294901760
  %v3489 = vsub.f32 %v3487, %v3488
  %v3490 = vand.u32 %v3489, 4294901760
  %3491 = vmatpush.msra.mxu0 %v3490
  %v3492 = vand.u32 %v3404, 4294901760
  %v3493 = vsub.f32 %v3404, %v3492
  %v3494 = vand.u32 %v3493, 4294901760
  %v3495 = vsub.f32 %v3493, %v3494
  %v3496 = vand.u32 %v3495, 4294901760
  %3497 = vmatpush.msra.mxu0 %v3496
  %v3498 = vand.u32 %v3402, 4294901760
  %v3499 = vsub.f32 %v3402, %v3498
  %v3500 = vand.u32 %v3499, 4294901760
  %v3501 = vsub.f32 %v3499, %v3500
  %v3502 = vand.u32 %v3501, 4294901760
  %3503 = vmatpush.msra.mxu0 %v3502
  %v3504 = vand.u32 %v3400, 4294901760
  %v3505 = vsub.f32 %v3400, %v3504
  %v3506 = vand.u32 %v3505, 4294901760
  %v3507 = vsub.f32 %v3505, %v3506
  %v3508 = vand.u32 %v3507, 4294901760
  %3509 = vmatpush.msra.mxu0 %v3508
  %v3510 = vand.u32 %v3398, 4294901760
  %v3511 = vsub.f32 %v3398, %v3510
  %v3512 = vand.u32 %v3511, 4294901760
  %v3513 = vsub.f32 %v3511, %v3512
  %v3514 = vand.u32 %v3513, 4294901760
  %3515 = vmatpush.msra.mxu0 %v3514
  %v3516 = vand.u32 %v3396, 4294901760
  %v3517 = vsub.f32 %v3396, %v3516
  %v3518 = vand.u32 %v3517, 4294901760
  %v3519 = vsub.f32 %v3517, %v3518
  %v3520 = vand.u32 %v3519, 4294901760
  %3521 = vmatpush.msra.mxu0 %v3520
  %v3522 = vand.u32 %v3394, 4294901760
  %v3523 = vsub.f32 %v3394, %v3522
  %v3524 = vand.u32 %v3523, 4294901760
  %v3525 = vsub.f32 %v3523, %v3524
  %v3526 = vand.u32 %v3525, 4294901760
  %3527 = vmatpush.msra.mxu0 %v3526
  %v3528 = vand.u32 %v3392, 4294901760
  %v3529 = vsub.f32 %v3392, %v3528
  %v3530 = vand.u32 %v3529, 4294901760
  %v3531 = vsub.f32 %v3529, %v3530
  %v3532 = vand.u32 %v3531, 4294901760
  %3533 = vmatpush.msra.mxu0 %v3532
  %v3534 = vand.u32 %v3390, 4294901760
  %v3535 = vsub.f32 %v3390, %v3534
  %v3536 = vand.u32 %v3535, 4294901760
  %v3537 = vsub.f32 %v3535, %v3536
  %v3538 = vand.u32 %v3537, 4294901760
  %3539 = vmatpush.msra.mxu0 %v3538
  %v3540 = vand.u32 %v3388, 4294901760
  %v3541 = vsub.f32 %v3388, %v3540
  %v3542 = vand.u32 %v3541, 4294901760
  %v3543 = vsub.f32 %v3541, %v3542
  %v3544 = vand.u32 %v3543, 4294901760
  %3545 = vmatpush.msra.mxu0 %v3544
  %v3546 = vand.u32 %v3386, 4294901760
  %v3547 = vsub.f32 %v3386, %v3546
  %v3548 = vand.u32 %v3547, 4294901760
  %v3549 = vsub.f32 %v3547, %v3548
  %v3550 = vand.u32 %v3549, 4294901760
  %3551 = vmatpush.msra.mxu0 %v3550
  %v3552 = vand.u32 %v3384, 4294901760
  %v3553 = vsub.f32 %v3384, %v3552
  %v3554 = vand.u32 %v3553, 4294901760
  %v3555 = vsub.f32 %v3553, %v3554
  %v3556 = vand.u32 %v3555, 4294901760
  %3557 = vmatpush.msra.mxu0 %v3556
  %v3558 = vand.u32 %v3382, 4294901760
  %v3559 = vsub.f32 %v3382, %v3558
  %v3560 = vand.u32 %v3559, 4294901760
  %v3561 = vsub.f32 %v3559, %v3560
  %v3562 = vand.u32 %v3561, 4294901760
  %3563 = vmatpush.msra.mxu0 %v3562
  %v3564 = vand.u32 %v3421, 4294901760
  %3565 = vmatmul.f32.gmra.mxu0 %v3564
  %v3566 = vpop.f32.mrf.mxu0
  %v3567 = vadd.f32 %v3465, %v3566
  %v3568 = vand.u32 %v3424, 4294901760
  %3569 = vmatmul.f32.gmra.mxu0 %v3568
  %v3570 = vpop.f32.mrf.mxu0
  %v3571 = vadd.f32 %v3473, %v3570
  %v3572 = vand.u32 %v3427, 4294901760
  %3573 = vmatmul.f32.gmra.mxu0 %v3572
  %v3574 = vpop.f32.mrf.mxu0
  %v3575 = vadd.f32 %v3481, %v3574
  %3576 = vdwg.mxu0
  %3577 = vmatpush.msra.mxu0 0.0
  %3578 = vmatpush.msra.mxu0 0.0
  %3579 = vmatpush.msra.mxu0 0.0
  %v3580 = vand.u32 %v3406, 4294901760
  %v3581 = vsub.f32 %v3406, %v3580
  %3582 = vmatpush.msra.mxu0 %v3581
  %v3583 = vand.u32 %v3404, 4294901760
  %v3584 = vsub.f32 %v3404, %v3583
  %3585 = vmatpush.msra.mxu0 %v3584
  %v3586 = vand.u32 %v3402, 4294901760
  %v3587 = vsub.f32 %v3402, %v3586
  %3588 = vmatpush.msra.mxu0 %v3587
  %v3589 = vand.u32 %v3400, 4294901760
  %v3590 = vsub.f32 %v3400, %v3589
  %3591 = vmatpush.msra.mxu0 %v3590
  %v3592 = vand.u32 %v3398, 4294901760
  %v3593 = vsub.f32 %v3398, %v3592
  %3594 = vmatpush.msra.mxu0 %v3593
  %v3595 = vand.u32 %v3396, 4294901760
  %v3596 = vsub.f32 %v3396, %v3595
  %3597 = vmatpush.msra.mxu0 %v3596
  %v3598 = vand.u32 %v3394, 4294901760
  %v3599 = vsub.f32 %v3394, %v3598
  %3600 = vmatpush.msra.mxu0 %v3599
  %v3601 = vand.u32 %v3392, 4294901760
  %v3602 = vsub.f32 %v3392, %v3601
  %3603 = vmatpush.msra.mxu0 %v3602
  %v3604 = vand.u32 %v3390, 4294901760
  %v3605 = vsub.f32 %v3390, %v3604
  %3606 = vmatpush.msra.mxu0 %v3605
  %v3607 = vand.u32 %v3388, 4294901760
  %v3608 = vsub.f32 %v3388, %v3607
  %3609 = vmatpush.msra.mxu0 %v3608
  %v3610 = vand.u32 %v3386, 4294901760
  %v3611 = vsub.f32 %v3386, %v3610
  %3612 = vmatpush.msra.mxu0 %v3611
  %v3613 = vand.u32 %v3384, 4294901760
  %v3614 = vsub.f32 %v3384, %v3613
  %3615 = vmatpush.msra.mxu0 %v3614
  %v3616 = vand.u32 %v3382, 4294901760
  %v3617 = vsub.f32 %v3382, %v3616
  %3618 = vmatpush.msra.mxu0 %v3617
  %v3619 = vand.u32 %v3421, 4294901760
  %v3620 = vsub.f32 %v3421, %v3619
  %3621 = vmatmul.f32.gmra.mxu0 %v3620
  %v3622 = vpop.f32.mrf.mxu0
  %v3623 = vadd.f32 %v3567, %v3622
  %v3624 = vand.u32 %v3424, 4294901760
  %v3625 = vsub.f32 %v3424, %v3624
  %3626 = vmatmul.f32.gmra.mxu0 %v3625
  %v3627 = vpop.f32.mrf.mxu0
  %v3628 = vadd.f32 %v3571, %v3627
  %v3629 = vand.u32 %v3427, 4294901760
  %v3630 = vsub.f32 %v3427, %v3629
  %3631 = vmatmul.f32.gmra.mxu0 %v3630
  %v3632 = vpop.f32.mrf.mxu0
  %v3633 = vadd.f32 %v3575, %v3632
  %3634 = vdwg.mxu0
  %3635 = vmatpush.msra.mxu0 0.0
  %3636 = vmatpush.msra.mxu0 0.0
  %3637 = vmatpush.msra.mxu0 0.0
  %v3638 = vand.u32 %v3406, 4294901760
  %3639 = vmatpush.msra.mxu0 %v3638
  %v3640 = vand.u32 %v3404, 4294901760
  %3641 = vmatpush.msra.mxu0 %v3640
  %v3642 = vand.u32 %v3402, 4294901760
  %3643 = vmatpush.msra.mxu0 %v3642
  %v3644 = vand.u32 %v3400, 4294901760
  %3645 = vmatpush.msra.mxu0 %v3644
  %v3646 = vand.u32 %v3398, 4294901760
  %3647 = vmatpush.msra.mxu0 %v3646
  %v3648 = vand.u32 %v3396, 4294901760
  %3649 = vmatpush.msra.mxu0 %v3648
  %v3650 = vand.u32 %v3394, 4294901760
  %3651 = vmatpush.msra.mxu0 %v3650
  %v3652 = vand.u32 %v3392, 4294901760
  %3653 = vmatpush.msra.mxu0 %v3652
  %v3654 = vand.u32 %v3390, 4294901760
  %3655 = vmatpush.msra.mxu0 %v3654
  %v3656 = vand.u32 %v3388, 4294901760
  %3657 = vmatpush.msra.mxu0 %v3656
  %v3658 = vand.u32 %v3386, 4294901760
  %3659 = vmatpush.msra.mxu0 %v3658
  %v3660 = vand.u32 %v3384, 4294901760
  %3661 = vmatpush.msra.mxu0 %v3660
  %v3662 = vand.u32 %v3382, 4294901760
  %3663 = vmatpush.msra.mxu0 %v3662
  %v3664 = vand.u32 %v3421, 4294901760
  %v3665 = vsub.f32 %v3421, %v3664
  %v3666 = vand.u32 %v3665, 4294901760
  %3667 = vmatmul.f32.gmra.mxu0 %v3666
  %v3668 = vpop.f32.mrf.mxu0
  %v3669 = vadd.f32 %v3623, %v3668
  %v3670 = vand.u32 %v3424, 4294901760
  %v3671 = vsub.f32 %v3424, %v3670
  %v3672 = vand.u32 %v3671, 4294901760
  %3673 = vmatmul.f32.gmra.mxu0 %v3672
  %v3674 = vpop.f32.mrf.mxu0
  %v3675 = vadd.f32 %v3628, %v3674
  %v3676 = vand.u32 %v3427, 4294901760
  %v3677 = vsub.f32 %v3427, %v3676
  %v3678 = vand.u32 %v3677, 4294901760
  %3679 = vmatmul.f32.gmra.mxu0 %v3678
  %v3680 = vpop.f32.mrf.mxu0
  %v3681 = vadd.f32 %v3633, %v3680
  %3682 = vdwg.mxu0
  %3683 = vmatpush.msra.mxu0 0.0
  %3684 = vmatpush.msra.mxu0 0.0
  %3685 = vmatpush.msra.mxu0 0.0
  %v3686 = vand.u32 %v3406, 4294901760
  %v3687 = vsub.f32 %v3406, %v3686
  %v3688 = vand.u32 %v3687, 4294901760
  %3689 = vmatpush.msra.mxu0 %v3688
  %v3690 = vand.u32 %v3404, 4294901760
  %v3691 = vsub.f32 %v3404, %v3690
  %v3692 = vand.u32 %v3691, 4294901760
  %3693 = vmatpush.msra.mxu0 %v3692
  %v3694 = vand.u32 %v3402, 4294901760
  %v3695 = vsub.f32 %v3402, %v3694
  %v3696 = vand.u32 %v3695, 4294901760
  %3697 = vmatpush.msra.mxu0 %v3696
  %v3698 = vand.u32 %v3400, 4294901760
  %v3699 = vsub.f32 %v3400, %v3698
  %v3700 = vand.u32 %v3699, 4294901760
  %3701 = vmatpush.msra.mxu0 %v3700
  %v3702 = vand.u32 %v3398, 4294901760
  %v3703 = vsub.f32 %v3398, %v3702
  %v3704 = vand.u32 %v3703, 4294901760
  %3705 = vmatpush.msra.mxu0 %v3704
  %v3706 = vand.u32 %v3396, 4294901760
  %v3707 = vsub.f32 %v3396, %v3706
  %v3708 = vand.u32 %v3707, 4294901760
  %3709 = vmatpush.msra.mxu0 %v3708
  %v3710 = vand.u32 %v3394, 4294901760
  %v3711 = vsub.f32 %v3394, %v3710
  %v3712 = vand.u32 %v3711, 4294901760
  %3713 = vmatpush.msra.mxu0 %v3712
  %v3714 = vand.u32 %v3392, 4294901760
  %v3715 = vsub.f32 %v3392, %v3714
  %v3716 = vand.u32 %v3715, 4294901760
  %3717 = vmatpush.msra.mxu0 %v3716
  %v3718 = vand.u32 %v3390, 4294901760
  %v3719 = vsub.f32 %v3390, %v3718
  %v3720 = vand.u32 %v3719, 4294901760
  %3721 = vmatpush.msra.mxu0 %v3720
  %v3722 = vand.u32 %v3388, 4294901760
  %v3723 = vsub.f32 %v3388, %v3722
  %v3724 = vand.u32 %v3723, 4294901760
  %3725 = vmatpush.msra.mxu0 %v3724
  %v3726 = vand.u32 %v3386, 4294901760
  %v3727 = vsub.f32 %v3386, %v3726
  %v3728 = vand.u32 %v3727, 4294901760
  %3729 = vmatpush.msra.mxu0 %v3728
  %v3730 = vand.u32 %v3384, 4294901760
  %v3731 = vsub.f32 %v3384, %v3730
  %v3732 = vand.u32 %v3731, 4294901760
  %3733 = vmatpush.msra.mxu0 %v3732
  %v3734 = vand.u32 %v3382, 4294901760
  %v3735 = vsub.f32 %v3382, %v3734
  %v3736 = vand.u32 %v3735, 4294901760
  %3737 = vmatpush.msra.mxu0 %v3736
  %v3738 = vand.u32 %v3421, 4294901760
  %3739 = vmatmul.f32.gmra.mxu0 %v3738
  %v3740 = vpop.f32.mrf.mxu0
  %v3741 = vadd.f32 %v3669, %v3740
  %v3742 = vand.u32 %v3424, 4294901760
  %3743 = vmatmul.f32.gmra.mxu0 %v3742
  %v3744 = vpop.f32.mrf.mxu0
  %v3745 = vadd.f32 %v3675, %v3744
  %v3746 = vand.u32 %v3427, 4294901760
  %3747 = vmatmul.f32.gmra.mxu0 %v3746
  %v3748 = vpop.f32.mrf.mxu0
  %v3749 = vadd.f32 %v3681, %v3748
  %3750 = vdwg.mxu0
  %3751 = vmatpush.msra.mxu0 0.0
  %3752 = vmatpush.msra.mxu0 0.0
  %3753 = vmatpush.msra.mxu0 0.0
  %v3754 = vand.u32 %v3406, 4294901760
  %3755 = vmatpush.msra.mxu0 %v3754
  %v3756 = vand.u32 %v3404, 4294901760
  %3757 = vmatpush.msra.mxu0 %v3756
  %v3758 = vand.u32 %v3402, 4294901760
  %3759 = vmatpush.msra.mxu0 %v3758
  %v3760 = vand.u32 %v3400, 4294901760
  %3761 = vmatpush.msra.mxu0 %v3760
  %v3762 = vand.u32 %v3398, 4294901760
  %3763 = vmatpush.msra.mxu0 %v3762
  %v3764 = vand.u32 %v3396, 4294901760
  %3765 = vmatpush.msra.mxu0 %v3764
  %v3766 = vand.u32 %v3394, 4294901760
  %3767 = vmatpush.msra.mxu0 %v3766
  %v3768 = vand.u32 %v3392, 4294901760
  %3769 = vmatpush.msra.mxu0 %v3768
  %v3770 = vand.u32 %v3390, 4294901760
  %3771 = vmatpush.msra.mxu0 %v3770
  %v3772 = vand.u32 %v3388, 4294901760
  %3773 = vmatpush.msra.mxu0 %v3772
  %v3774 = vand.u32 %v3386, 4294901760
  %3775 = vmatpush.msra.mxu0 %v3774
  %v3776 = vand.u32 %v3384, 4294901760
  %3777 = vmatpush.msra.mxu0 %v3776
  %v3778 = vand.u32 %v3382, 4294901760
  %3779 = vmatpush.msra.mxu0 %v3778
  %v3780 = vand.u32 %v3421, 4294901760
  %3781 = vmatmul.f32.gmra.mxu0 %v3780
  %v3782 = vpop.f32.mrf.mxu0
  %v3783 = vadd.f32 %v3741, %v3782
  %v3784 = vand.u32 %v3424, 4294901760
  %3785 = vmatmul.f32.gmra.mxu0 %v3784
  %v3786 = vpop.f32.mrf.mxu0
  %v3787 = vadd.f32 %v3745, %v3786
  %v3788 = vand.u32 %v3427, 4294901760
  %3789 = vmatmul.f32.gmra.mxu0 %v3788
  %v3790 = vpop.f32.mrf.mxu0
  %v3791 = vadd.f32 %v3749, %v3790
  %3792 = vdwg.mxu0
  %v3793 = vadd.f32 %v3375, %v3783
  %v3794 = vadd.f32 %v3376, %v3787
  %v3795 = vadd.f32 %v3377, %v3791
  %v3796 = vld [vmem:[%s0 + $0x360] sm:$0xff]
  %v3797 = vld [vmem:[%s0 + $0x378] sm:$0xff]
  %v3798 = vld [vmem:[%s0 + $0x390] sm:$0xff]
  %3799 = vrot.lane.b32.xlu0 %v1169, 48
  %v3800 = vpop.permute.xlu0 %3799
  %3801 = vrot.lane.b32.xlu0 %v1173, 48
  %v3802 = vpop.permute.xlu0 %3801
  %3803 = vrot.lane.b32.xlu0 %v1177, 48
  %v3804 = vpop.permute.xlu0 %3803
  %3805 = vrot.lane.b32.xlu0 %v1181, 48
  %v3806 = vpop.permute.xlu0 %3805
  %3807 = vrot.lane.b32.xlu0 %v1185, 48
  %v3808 = vpop.permute.xlu0 %3807
  %3809 = vrot.lane.b32.xlu0 %v1189, 48
  %v3810 = vpop.permute.xlu0 %3809
  %3811 = vrot.lane.b32.xlu0 %v1193, 48
  %v3812 = vpop.permute.xlu0 %3811
  %3813 = vrot.lane.b32.xlu0 %v1197, 48
  %v3814 = vpop.permute.xlu0 %3813
  %3815 = vrot.lane.b32.xlu0 %v1201, 48
  %v3816 = vpop.permute.xlu0 %3815
  %3817 = vrot.lane.b32.xlu0 %v1205, 48
  %v3818 = vpop.permute.xlu0 %3817
  %3819 = vrot.lane.b32.xlu0 %v1209, 48
  %v3820 = vpop.permute.xlu0 %3819
  %3821 = vrot.lane.b32.xlu0 %v1213, 48
  %v3822 = vpop.permute.xlu0 %3821
  %3823 = vrot.lane.b32.xlu0 %v1217, 48
  %v3824 = vpop.permute.xlu0 %3823
  %v3839 = vsel %vm1795, %v3796, 0
  %v3842 = vsel %vm1795, %v3797, 0
  %v3845 = vsel %vm1795, %v3798, 0
  %3847 = vmatpush.msra.mxu0 0.0
  %3848 = vmatpush.msra.mxu0 0.0
  %3849 = vmatpush.msra.mxu0 0.0
  %v3850 = vand.u32 %v3824, 4294901760
  %3851 = vmatpush.msra.mxu0 %v3850
  %v3852 = vand.u32 %v3822, 4294901760
  %3853 = vmatpush.msra.mxu0 %v3852
  %v3854 = vand.u32 %v3820, 4294901760
  %3855 = vmatpush.msra.mxu0 %v3854
  %v3856 = vand.u32 %v3818, 4294901760
  %3857 = vmatpush.msra.mxu0 %v3856
  %v3858 = vand.u32 %v3816, 4294901760
  %3859 = vmatpush.msra.mxu0 %v3858
  %v3860 = vand.u32 %v3814, 4294901760
  %3861 = vmatpush.msra.mxu0 %v3860
  %v3862 = vand.u32 %v3812, 4294901760
  %3863 = vmatpush.msra.mxu0 %v3862
  %v3864 = vand.u32 %v3810, 4294901760
  %3865 = vmatpush.msra.mxu0 %v3864
  %v3866 = vand.u32 %v3808, 4294901760
  %3867 = vmatpush.msra.mxu0 %v3866
  %v3868 = vand.u32 %v3806, 4294901760
  %3869 = vmatpush.msra.mxu0 %v3868
  %v3870 = vand.u32 %v3804, 4294901760
  %3871 = vmatpush.msra.mxu0 %v3870
  %v3872 = vand.u32 %v3802, 4294901760
  %3873 = vmatpush.msra.mxu0 %v3872
  %v3874 = vand.u32 %v3800, 4294901760
  %3875 = vmatpush.msra.mxu0 %v3874
  %v3876 = vand.u32 %v3839, 4294901760
  %v3877 = vsub.f32 %v3839, %v3876
  %v3878 = vand.u32 %v3877, 4294901760
  %v3879 = vsub.f32 %v3877, %v3878
  %v3880 = vand.u32 %v3879, 4294901760
  %3881 = vmatmul.f32.gmra.mxu0 %v3880
  %v3882 = vpop.f32.mrf.mxu0
  %v3883 = vadd.f32 0.0, %v3882
  %v3884 = vand.u32 %v3842, 4294901760
  %v3885 = vsub.f32 %v3842, %v3884
  %v3886 = vand.u32 %v3885, 4294901760
  %v3887 = vsub.f32 %v3885, %v3886
  %v3888 = vand.u32 %v3887, 4294901760
  %3889 = vmatmul.f32.gmra.mxu0 %v3888
  %v3890 = vpop.f32.mrf.mxu0
  %v3891 = vadd.f32 0.0, %v3890
  %v3892 = vand.u32 %v3845, 4294901760
  %v3893 = vsub.f32 %v3845, %v3892
  %v3894 = vand.u32 %v3893, 4294901760
  %v3895 = vsub.f32 %v3893, %v3894
  %v3896 = vand.u32 %v3895, 4294901760
  %3897 = vmatmul.f32.gmra.mxu0 %v3896
  %v3898 = vpop.f32.mrf.mxu0
  %v3899 = vadd.f32 0.0, %v3898
  %3900 = vdwg.mxu0
  %3901 = vmatpush.msra.mxu0 0.0
  %3902 = vmatpush.msra.mxu0 0.0
  %3903 = vmatpush.msra.mxu0 0.0
  %v3904 = vand.u32 %v3824, 4294901760
  %v3905 = vsub.f32 %v3824, %v3904
  %v3906 = vand.u32 %v3905, 4294901760
  %v3907 = vsub.f32 %v3905, %v3906
  %v3908 = vand.u32 %v3907, 4294901760
  %3909 = vmatpush.msra.mxu0 %v3908
  %v3910 = vand.u32 %v3822, 4294901760
  %v3911 = vsub.f32 %v3822, %v3910
  %v3912 = vand.u32 %v3911, 4294901760
  %v3913 = vsub.f32 %v3911, %v3912
  %v3914 = vand.u32 %v3913, 4294901760
  %3915 = vmatpush.msra.mxu0 %v3914
  %v3916 = vand.u32 %v3820, 4294901760
  %v3917 = vsub.f32 %v3820, %v3916
  %v3918 = vand.u32 %v3917, 4294901760
  %v3919 = vsub.f32 %v3917, %v3918
  %v3920 = vand.u32 %v3919, 4294901760
  %3921 = vmatpush.msra.mxu0 %v3920
  %v3922 = vand.u32 %v3818, 4294901760
  %v3923 = vsub.f32 %v3818, %v3922
  %v3924 = vand.u32 %v3923, 4294901760
  %v3925 = vsub.f32 %v3923, %v3924
  %v3926 = vand.u32 %v3925, 4294901760
  %3927 = vmatpush.msra.mxu0 %v3926
  %v3928 = vand.u32 %v3816, 4294901760
  %v3929 = vsub.f32 %v3816, %v3928
  %v3930 = vand.u32 %v3929, 4294901760
  %v3931 = vsub.f32 %v3929, %v3930
  %v3932 = vand.u32 %v3931, 4294901760
  %3933 = vmatpush.msra.mxu0 %v3932
  %v3934 = vand.u32 %v3814, 4294901760
  %v3935 = vsub.f32 %v3814, %v3934
  %v3936 = vand.u32 %v3935, 4294901760
  %v3937 = vsub.f32 %v3935, %v3936
  %v3938 = vand.u32 %v3937, 4294901760
  %3939 = vmatpush.msra.mxu0 %v3938
  %v3940 = vand.u32 %v3812, 4294901760
  %v3941 = vsub.f32 %v3812, %v3940
  %v3942 = vand.u32 %v3941, 4294901760
  %v3943 = vsub.f32 %v3941, %v3942
  %v3944 = vand.u32 %v3943, 4294901760
  %3945 = vmatpush.msra.mxu0 %v3944
  %v3946 = vand.u32 %v3810, 4294901760
  %v3947 = vsub.f32 %v3810, %v3946
  %v3948 = vand.u32 %v3947, 4294901760
  %v3949 = vsub.f32 %v3947, %v3948
  %v3950 = vand.u32 %v3949, 4294901760
  %3951 = vmatpush.msra.mxu0 %v3950
  %v3952 = vand.u32 %v3808, 4294901760
  %v3953 = vsub.f32 %v3808, %v3952
  %v3954 = vand.u32 %v3953, 4294901760
  %v3955 = vsub.f32 %v3953, %v3954
  %v3956 = vand.u32 %v3955, 4294901760
  %3957 = vmatpush.msra.mxu0 %v3956
  %v3958 = vand.u32 %v3806, 4294901760
  %v3959 = vsub.f32 %v3806, %v3958
  %v3960 = vand.u32 %v3959, 4294901760
  %v3961 = vsub.f32 %v3959, %v3960
  %v3962 = vand.u32 %v3961, 4294901760
  %3963 = vmatpush.msra.mxu0 %v3962
  %v3964 = vand.u32 %v3804, 4294901760
  %v3965 = vsub.f32 %v3804, %v3964
  %v3966 = vand.u32 %v3965, 4294901760
  %v3967 = vsub.f32 %v3965, %v3966
  %v3968 = vand.u32 %v3967, 4294901760
  %3969 = vmatpush.msra.mxu0 %v3968
  %v3970 = vand.u32 %v3802, 4294901760
  %v3971 = vsub.f32 %v3802, %v3970
  %v3972 = vand.u32 %v3971, 4294901760
  %v3973 = vsub.f32 %v3971, %v3972
  %v3974 = vand.u32 %v3973, 4294901760
  %3975 = vmatpush.msra.mxu0 %v3974
  %v3976 = vand.u32 %v3800, 4294901760
  %v3977 = vsub.f32 %v3800, %v3976
  %v3978 = vand.u32 %v3977, 4294901760
  %v3979 = vsub.f32 %v3977, %v3978
  %v3980 = vand.u32 %v3979, 4294901760
  %3981 = vmatpush.msra.mxu0 %v3980
  %v3982 = vand.u32 %v3839, 4294901760
  %3983 = vmatmul.f32.gmra.mxu0 %v3982
  %v3984 = vpop.f32.mrf.mxu0
  %v3985 = vadd.f32 %v3883, %v3984
  %v3986 = vand.u32 %v3842, 4294901760
  %3987 = vmatmul.f32.gmra.mxu0 %v3986
  %v3988 = vpop.f32.mrf.mxu0
  %v3989 = vadd.f32 %v3891, %v3988
  %v3990 = vand.u32 %v3845, 4294901760
  %3991 = vmatmul.f32.gmra.mxu0 %v3990
  %v3992 = vpop.f32.mrf.mxu0
  %v3993 = vadd.f32 %v3899, %v3992
  %3994 = vdwg.mxu0
  %3995 = vmatpush.msra.mxu0 0.0
  %3996 = vmatpush.msra.mxu0 0.0
  %3997 = vmatpush.msra.mxu0 0.0
  %v3998 = vand.u32 %v3824, 4294901760
  %v3999 = vsub.f32 %v3824, %v3998
  %4000 = vmatpush.msra.mxu0 %v3999
  %v4001 = vand.u32 %v3822, 4294901760
  %v4002 = vsub.f32 %v3822, %v4001
  %4003 = vmatpush.msra.mxu0 %v4002
  %v4004 = vand.u32 %v3820, 4294901760
  %v4005 = vsub.f32 %v3820, %v4004
  %4006 = vmatpush.msra.mxu0 %v4005
  %v4007 = vand.u32 %v3818, 4294901760
  %v4008 = vsub.f32 %v3818, %v4007
  %4009 = vmatpush.msra.mxu0 %v4008
  %v4010 = vand.u32 %v3816, 4294901760
  %v4011 = vsub.f32 %v3816, %v4010
  %4012 = vmatpush.msra.mxu0 %v4011
  %v4013 = vand.u32 %v3814, 4294901760
  %v4014 = vsub.f32 %v3814, %v4013
  %4015 = vmatpush.msra.mxu0 %v4014
  %v4016 = vand.u32 %v3812, 4294901760
  %v4017 = vsub.f32 %v3812, %v4016
  %4018 = vmatpush.msra.mxu0 %v4017
  %v4019 = vand.u32 %v3810, 4294901760
  %v4020 = vsub.f32 %v3810, %v4019
  %4021 = vmatpush.msra.mxu0 %v4020
  %v4022 = vand.u32 %v3808, 4294901760
  %v4023 = vsub.f32 %v3808, %v4022
  %4024 = vmatpush.msra.mxu0 %v4023
  %v4025 = vand.u32 %v3806, 4294901760
  %v4026 = vsub.f32 %v3806, %v4025
  %4027 = vmatpush.msra.mxu0 %v4026
  %v4028 = vand.u32 %v3804, 4294901760
  %v4029 = vsub.f32 %v3804, %v4028
  %4030 = vmatpush.msra.mxu0 %v4029
  %v4031 = vand.u32 %v3802, 4294901760
  %v4032 = vsub.f32 %v3802, %v4031
  %4033 = vmatpush.msra.mxu0 %v4032
  %v4034 = vand.u32 %v3800, 4294901760
  %v4035 = vsub.f32 %v3800, %v4034
  %4036 = vmatpush.msra.mxu0 %v4035
  %v4037 = vand.u32 %v3839, 4294901760
  %v4038 = vsub.f32 %v3839, %v4037
  %4039 = vmatmul.f32.gmra.mxu0 %v4038
  %v4040 = vpop.f32.mrf.mxu0
  %v4041 = vadd.f32 %v3985, %v4040
  %v4042 = vand.u32 %v3842, 4294901760
  %v4043 = vsub.f32 %v3842, %v4042
  %4044 = vmatmul.f32.gmra.mxu0 %v4043
  %v4045 = vpop.f32.mrf.mxu0
  %v4046 = vadd.f32 %v3989, %v4045
  %v4047 = vand.u32 %v3845, 4294901760
  %v4048 = vsub.f32 %v3845, %v4047
  %4049 = vmatmul.f32.gmra.mxu0 %v4048
  %v4050 = vpop.f32.mrf.mxu0
  %v4051 = vadd.f32 %v3993, %v4050
  %4052 = vdwg.mxu0
  %4053 = vmatpush.msra.mxu0 0.0
  %4054 = vmatpush.msra.mxu0 0.0
  %4055 = vmatpush.msra.mxu0 0.0
  %v4056 = vand.u32 %v3824, 4294901760
  %4057 = vmatpush.msra.mxu0 %v4056
  %v4058 = vand.u32 %v3822, 4294901760
  %4059 = vmatpush.msra.mxu0 %v4058
  %v4060 = vand.u32 %v3820, 4294901760
  %4061 = vmatpush.msra.mxu0 %v4060
  %v4062 = vand.u32 %v3818, 4294901760
  %4063 = vmatpush.msra.mxu0 %v4062
  %v4064 = vand.u32 %v3816, 4294901760
  %4065 = vmatpush.msra.mxu0 %v4064
  %v4066 = vand.u32 %v3814, 4294901760
  %4067 = vmatpush.msra.mxu0 %v4066
  %v4068 = vand.u32 %v3812, 4294901760
  %4069 = vmatpush.msra.mxu0 %v4068
  %v4070 = vand.u32 %v3810, 4294901760
  %4071 = vmatpush.msra.mxu0 %v4070
  %v4072 = vand.u32 %v3808, 4294901760
  %4073 = vmatpush.msra.mxu0 %v4072
  %v4074 = vand.u32 %v3806, 4294901760
  %4075 = vmatpush.msra.mxu0 %v4074
  %v4076 = vand.u32 %v3804, 4294901760
  %4077 = vmatpush.msra.mxu0 %v4076
  %v4078 = vand.u32 %v3802, 4294901760
  %4079 = vmatpush.msra.mxu0 %v4078
  %v4080 = vand.u32 %v3800, 4294901760
  %4081 = vmatpush.msra.mxu0 %v4080
  %v4082 = vand.u32 %v3839, 4294901760
  %v4083 = vsub.f32 %v3839, %v4082
  %v4084 = vand.u32 %v4083, 4294901760
  %4085 = vmatmul.f32.gmra.mxu0 %v4084
  %v4086 = vpop.f32.mrf.mxu0
  %v4087 = vadd.f32 %v4041, %v4086
  %v4088 = vand.u32 %v3842, 4294901760
  %v4089 = vsub.f32 %v3842, %v4088
  %v4090 = vand.u32 %v4089, 4294901760
  %4091 = vmatmul.f32.gmra.mxu0 %v4090
  %v4092 = vpop.f32.mrf.mxu0
  %v4093 = vadd.f32 %v4046, %v4092
  %v4094 = vand.u32 %v3845, 4294901760
  %v4095 = vsub.f32 %v3845, %v4094
  %v4096 = vand.u32 %v4095, 4294901760
  %4097 = vmatmul.f32.gmra.mxu0 %v4096
  %v4098 = vpop.f32.mrf.mxu0
  %v4099 = vadd.f32 %v4051, %v4098
  %4100 = vdwg.mxu0
  %4101 = vmatpush.msra.mxu0 0.0
  %4102 = vmatpush.msra.mxu0 0.0
  %4103 = vmatpush.msra.mxu0 0.0
  %v4104 = vand.u32 %v3824, 4294901760
  %v4105 = vsub.f32 %v3824, %v4104
  %v4106 = vand.u32 %v4105, 4294901760
  %4107 = vmatpush.msra.mxu0 %v4106
  %v4108 = vand.u32 %v3822, 4294901760
  %v4109 = vsub.f32 %v3822, %v4108
  %v4110 = vand.u32 %v4109, 4294901760
  %4111 = vmatpush.msra.mxu0 %v4110
  %v4112 = vand.u32 %v3820, 4294901760
  %v4113 = vsub.f32 %v3820, %v4112
  %v4114 = vand.u32 %v4113, 4294901760
  %4115 = vmatpush.msra.mxu0 %v4114
  %v4116 = vand.u32 %v3818, 4294901760
  %v4117 = vsub.f32 %v3818, %v4116
  %v4118 = vand.u32 %v4117, 4294901760
  %4119 = vmatpush.msra.mxu0 %v4118
  %v4120 = vand.u32 %v3816, 4294901760
  %v4121 = vsub.f32 %v3816, %v4120
  %v4122 = vand.u32 %v4121, 4294901760
  %4123 = vmatpush.msra.mxu0 %v4122
  %v4124 = vand.u32 %v3814, 4294901760
  %v4125 = vsub.f32 %v3814, %v4124
  %v4126 = vand.u32 %v4125, 4294901760
  %4127 = vmatpush.msra.mxu0 %v4126
  %v4128 = vand.u32 %v3812, 4294901760
  %v4129 = vsub.f32 %v3812, %v4128
  %v4130 = vand.u32 %v4129, 4294901760
  %4131 = vmatpush.msra.mxu0 %v4130
  %v4132 = vand.u32 %v3810, 4294901760
  %v4133 = vsub.f32 %v3810, %v4132
  %v4134 = vand.u32 %v4133, 4294901760
  %4135 = vmatpush.msra.mxu0 %v4134
  %v4136 = vand.u32 %v3808, 4294901760
  %v4137 = vsub.f32 %v3808, %v4136
  %v4138 = vand.u32 %v4137, 4294901760
  %4139 = vmatpush.msra.mxu0 %v4138
  %v4140 = vand.u32 %v3806, 4294901760
  %v4141 = vsub.f32 %v3806, %v4140
  %v4142 = vand.u32 %v4141, 4294901760
  %4143 = vmatpush.msra.mxu0 %v4142
  %v4144 = vand.u32 %v3804, 4294901760
  %v4145 = vsub.f32 %v3804, %v4144
  %v4146 = vand.u32 %v4145, 4294901760
  %4147 = vmatpush.msra.mxu0 %v4146
  %v4148 = vand.u32 %v3802, 4294901760
  %v4149 = vsub.f32 %v3802, %v4148
  %v4150 = vand.u32 %v4149, 4294901760
  %4151 = vmatpush.msra.mxu0 %v4150
  %v4152 = vand.u32 %v3800, 4294901760
  %v4153 = vsub.f32 %v3800, %v4152
  %v4154 = vand.u32 %v4153, 4294901760
  %4155 = vmatpush.msra.mxu0 %v4154
  %v4156 = vand.u32 %v3839, 4294901760
  %4157 = vmatmul.f32.gmra.mxu0 %v4156
  %v4158 = vpop.f32.mrf.mxu0
  %v4159 = vadd.f32 %v4087, %v4158
  %v4160 = vand.u32 %v3842, 4294901760
  %4161 = vmatmul.f32.gmra.mxu0 %v4160
  %v4162 = vpop.f32.mrf.mxu0
  %v4163 = vadd.f32 %v4093, %v4162
  %v4164 = vand.u32 %v3845, 4294901760
  %4165 = vmatmul.f32.gmra.mxu0 %v4164
  %v4166 = vpop.f32.mrf.mxu0
  %v4167 = vadd.f32 %v4099, %v4166
  %4168 = vdwg.mxu0
  %4169 = vmatpush.msra.mxu0 0.0
  %4170 = vmatpush.msra.mxu0 0.0
  %4171 = vmatpush.msra.mxu0 0.0
  %v4172 = vand.u32 %v3824, 4294901760
  %4173 = vmatpush.msra.mxu0 %v4172
  %v4174 = vand.u32 %v3822, 4294901760
  %4175 = vmatpush.msra.mxu0 %v4174
  %v4176 = vand.u32 %v3820, 4294901760
  %4177 = vmatpush.msra.mxu0 %v4176
  %v4178 = vand.u32 %v3818, 4294901760
  %4179 = vmatpush.msra.mxu0 %v4178
  %v4180 = vand.u32 %v3816, 4294901760
  %4181 = vmatpush.msra.mxu0 %v4180
  %v4182 = vand.u32 %v3814, 4294901760
  %4183 = vmatpush.msra.mxu0 %v4182
  %v4184 = vand.u32 %v3812, 4294901760
  %4185 = vmatpush.msra.mxu0 %v4184
  %v4186 = vand.u32 %v3810, 4294901760
  %4187 = vmatpush.msra.mxu0 %v4186
  %v4188 = vand.u32 %v3808, 4294901760
  %4189 = vmatpush.msra.mxu0 %v4188
  %v4190 = vand.u32 %v3806, 4294901760
  %4191 = vmatpush.msra.mxu0 %v4190
  %v4192 = vand.u32 %v3804, 4294901760
  %4193 = vmatpush.msra.mxu0 %v4192
  %v4194 = vand.u32 %v3802, 4294901760
  %4195 = vmatpush.msra.mxu0 %v4194
  %v4196 = vand.u32 %v3800, 4294901760
  %4197 = vmatpush.msra.mxu0 %v4196
  %v4198 = vand.u32 %v3839, 4294901760
  %4199 = vmatmul.f32.gmra.mxu0 %v4198
  %v4200 = vpop.f32.mrf.mxu0
  %v4201 = vadd.f32 %v4159, %v4200
  %v4202 = vand.u32 %v3842, 4294901760
  %4203 = vmatmul.f32.gmra.mxu0 %v4202
  %v4204 = vpop.f32.mrf.mxu0
  %v4205 = vadd.f32 %v4163, %v4204
  %v4206 = vand.u32 %v3845, 4294901760
  %4207 = vmatmul.f32.gmra.mxu0 %v4206
  %v4208 = vpop.f32.mrf.mxu0
  %v4209 = vadd.f32 %v4167, %v4208
  %4210 = vdwg.mxu0
  %v4211 = vadd.f32 %v3793, %v4201
  %v4212 = vadd.f32 %v3794, %v4205
  %v4213 = vadd.f32 %v3795, %v4209
  %v4214 = vld [vmem:[%s0 + $0x3a8] sm:$0xff]
  %v4215 = vld [vmem:[%s0 + $0x3c0] sm:$0xff]
  %v4216 = vld [vmem:[%s0 + $0x3d8] sm:$0xff]
  %4217 = vrot.lane.b32.xlu0 %v1169, 32
  %v4218 = vpop.permute.xlu0 %4217
  %4219 = vrot.lane.b32.xlu0 %v1173, 32
  %v4220 = vpop.permute.xlu0 %4219
  %4221 = vrot.lane.b32.xlu0 %v1177, 32
  %v4222 = vpop.permute.xlu0 %4221
  %4223 = vrot.lane.b32.xlu0 %v1181, 32
  %v4224 = vpop.permute.xlu0 %4223
  %4225 = vrot.lane.b32.xlu0 %v1185, 32
  %v4226 = vpop.permute.xlu0 %4225
  %4227 = vrot.lane.b32.xlu0 %v1189, 32
  %v4228 = vpop.permute.xlu0 %4227
  %4229 = vrot.lane.b32.xlu0 %v1193, 32
  %v4230 = vpop.permute.xlu0 %4229
  %4231 = vrot.lane.b32.xlu0 %v1197, 32
  %v4232 = vpop.permute.xlu0 %4231
  %4233 = vrot.lane.b32.xlu0 %v1201, 32
  %v4234 = vpop.permute.xlu0 %4233
  %4235 = vrot.lane.b32.xlu0 %v1205, 32
  %v4236 = vpop.permute.xlu0 %4235
  %4237 = vrot.lane.b32.xlu0 %v1209, 32
  %v4238 = vpop.permute.xlu0 %4237
  %4239 = vrot.lane.b32.xlu0 %v1213, 32
  %v4240 = vpop.permute.xlu0 %4239
  %4241 = vrot.lane.b32.xlu0 %v1217, 32
  %v4242 = vpop.permute.xlu0 %4241
  %v4257 = vsel %vm1795, %v4214, 0
  %v4260 = vsel %vm1795, %v4215, 0
  %v4263 = vsel %vm1795, %v4216, 0
  %4265 = vmatpush.msra.mxu0 0.0
  %4266 = vmatpush.msra.mxu0 0.0
  %4267 = vmatpush.msra.mxu0 0.0
  %v4268 = vand.u32 %v4242, 4294901760
  %4269 = vmatpush.msra.mxu0 %v4268
  %v4270 = vand.u32 %v4240, 4294901760
  %4271 = vmatpush.msra.mxu0 %v4270
  %v4272 = vand.u32 %v4238, 4294901760
  %4273 = vmatpush.msra.mxu0 %v4272
  %v4274 = vand.u32 %v4236, 4294901760
  %4275 = vmatpush.msra.mxu0 %v4274
  %v4276 = vand.u32 %v4234, 4294901760
  %4277 = vmatpush.msra.mxu0 %v4276
  %v4278 = vand.u32 %v4232, 4294901760
  %4279 = vmatpush.msra.mxu0 %v4278
  %v4280 = vand.u32 %v4230, 4294901760
  %4281 = vmatpush.msra.mxu0 %v4280
  %v4282 = vand.u32 %v4228, 4294901760
  %4283 = vmatpush.msra.mxu0 %v4282
  %v4284 = vand.u32 %v4226, 4294901760
  %4285 = vmatpush.msra.mxu0 %v4284
  %v4286 = vand.u32 %v4224, 4294901760
  %4287 = vmatpush.msra.mxu0 %v4286
  %v4288 = vand.u32 %v4222, 4294901760
  %4289 = vmatpush.msra.mxu0 %v4288
  %v4290 = vand.u32 %v4220, 4294901760
  %4291 = vmatpush.msra.mxu0 %v4290
  %v4292 = vand.u32 %v4218, 4294901760
  %4293 = vmatpush.msra.mxu0 %v4292
  %v4294 = vand.u32 %v4257, 4294901760
  %v4295 = vsub.f32 %v4257, %v4294
  %v4296 = vand.u32 %v4295, 4294901760
  %v4297 = vsub.f32 %v4295, %v4296
  %v4298 = vand.u32 %v4297, 4294901760
  %4299 = vmatmul.f32.gmra.mxu0 %v4298
  %v4300 = vpop.f32.mrf.mxu0
  %v4301 = vadd.f32 0.0, %v4300
  %v4302 = vand.u32 %v4260, 4294901760
  %v4303 = vsub.f32 %v4260, %v4302
  %v4304 = vand.u32 %v4303, 4294901760
  %v4305 = vsub.f32 %v4303, %v4304
  %v4306 = vand.u32 %v4305, 4294901760
  %4307 = vmatmul.f32.gmra.mxu0 %v4306
  %v4308 = vpop.f32.mrf.mxu0
  %v4309 = vadd.f32 0.0, %v4308
  %v4310 = vand.u32 %v4263, 4294901760
  %v4311 = vsub.f32 %v4263, %v4310
  %v4312 = vand.u32 %v4311, 4294901760
  %v4313 = vsub.f32 %v4311, %v4312
  %v4314 = vand.u32 %v4313, 4294901760
  %4315 = vmatmul.f32.gmra.mxu0 %v4314
  %v4316 = vpop.f32.mrf.mxu0
  %v4317 = vadd.f32 0.0, %v4316
  %4318 = vdwg.mxu0
  %4319 = vmatpush.msra.mxu0 0.0
  %4320 = vmatpush.msra.mxu0 0.0
  %4321 = vmatpush.msra.mxu0 0.0
  %v4322 = vand.u32 %v4242, 4294901760
  %v4323 = vsub.f32 %v4242, %v4322
  %v4324 = vand.u32 %v4323, 4294901760
  %v4325 = vsub.f32 %v4323, %v4324
  %v4326 = vand.u32 %v4325, 4294901760
  %4327 = vmatpush.msra.mxu0 %v4326
  %v4328 = vand.u32 %v4240, 4294901760
  %v4329 = vsub.f32 %v4240, %v4328
  %v4330 = vand.u32 %v4329, 4294901760
  %v4331 = vsub.f32 %v4329, %v4330
  %v4332 = vand.u32 %v4331, 4294901760
  %4333 = vmatpush.msra.mxu0 %v4332
  %v4334 = vand.u32 %v4238, 4294901760
  %v4335 = vsub.f32 %v4238, %v4334
  %v4336 = vand.u32 %v4335, 4294901760
  %v4337 = vsub.f32 %v4335, %v4336
  %v4338 = vand.u32 %v4337, 4294901760
  %4339 = vmatpush.msra.mxu0 %v4338
  %v4340 = vand.u32 %v4236, 4294901760
  %v4341 = vsub.f32 %v4236, %v4340
  %v4342 = vand.u32 %v4341, 4294901760
  %v4343 = vsub.f32 %v4341, %v4342
  %v4344 = vand.u32 %v4343, 4294901760
  %4345 = vmatpush.msra.mxu0 %v4344
  %v4346 = vand.u32 %v4234, 4294901760
  %v4347 = vsub.f32 %v4234, %v4346
  %v4348 = vand.u32 %v4347, 4294901760
  %v4349 = vsub.f32 %v4347, %v4348
  %v4350 = vand.u32 %v4349, 4294901760
  %4351 = vmatpush.msra.mxu0 %v4350
  %v4352 = vand.u32 %v4232, 4294901760
  %v4353 = vsub.f32 %v4232, %v4352
  %v4354 = vand.u32 %v4353, 4294901760
  %v4355 = vsub.f32 %v4353, %v4354
  %v4356 = vand.u32 %v4355, 4294901760
  %4357 = vmatpush.msra.mxu0 %v4356
  %v4358 = vand.u32 %v4230, 4294901760
  %v4359 = vsub.f32 %v4230, %v4358
  %v4360 = vand.u32 %v4359, 4294901760
  %v4361 = vsub.f32 %v4359, %v4360
  %v4362 = vand.u32 %v4361, 4294901760
  %4363 = vmatpush.msra.mxu0 %v4362
  %v4364 = vand.u32 %v4228, 4294901760
  %v4365 = vsub.f32 %v4228, %v4364
  %v4366 = vand.u32 %v4365, 4294901760
  %v4367 = vsub.f32 %v4365, %v4366
  %v4368 = vand.u32 %v4367, 4294901760
  %4369 = vmatpush.msra.mxu0 %v4368
  %v4370 = vand.u32 %v4226, 4294901760
  %v4371 = vsub.f32 %v4226, %v4370
  %v4372 = vand.u32 %v4371, 4294901760
  %v4373 = vsub.f32 %v4371, %v4372
  %v4374 = vand.u32 %v4373, 4294901760
  %4375 = vmatpush.msra.mxu0 %v4374
  %v4376 = vand.u32 %v4224, 4294901760
  %v4377 = vsub.f32 %v4224, %v4376
  %v4378 = vand.u32 %v4377, 4294901760
  %v4379 = vsub.f32 %v4377, %v4378
  %v4380 = vand.u32 %v4379, 4294901760
  %4381 = vmatpush.msra.mxu0 %v4380
  %v4382 = vand.u32 %v4222, 4294901760
  %v4383 = vsub.f32 %v4222, %v4382
  %v4384 = vand.u32 %v4383, 4294901760
  %v4385 = vsub.f32 %v4383, %v4384
  %v4386 = vand.u32 %v4385, 4294901760
  %4387 = vmatpush.msra.mxu0 %v4386
  %v4388 = vand.u32 %v4220, 4294901760
  %v4389 = vsub.f32 %v4220, %v4388
  %v4390 = vand.u32 %v4389, 4294901760
  %v4391 = vsub.f32 %v4389, %v4390
  %v4392 = vand.u32 %v4391, 4294901760
  %4393 = vmatpush.msra.mxu0 %v4392
  %v4394 = vand.u32 %v4218, 4294901760
  %v4395 = vsub.f32 %v4218, %v4394
  %v4396 = vand.u32 %v4395, 4294901760
  %v4397 = vsub.f32 %v4395, %v4396
  %v4398 = vand.u32 %v4397, 4294901760
  %4399 = vmatpush.msra.mxu0 %v4398
  %v4400 = vand.u32 %v4257, 4294901760
  %4401 = vmatmul.f32.gmra.mxu0 %v4400
  %v4402 = vpop.f32.mrf.mxu0
  %v4403 = vadd.f32 %v4301, %v4402
  %v4404 = vand.u32 %v4260, 4294901760
  %4405 = vmatmul.f32.gmra.mxu0 %v4404
  %v4406 = vpop.f32.mrf.mxu0
  %v4407 = vadd.f32 %v4309, %v4406
  %v4408 = vand.u32 %v4263, 4294901760
  %4409 = vmatmul.f32.gmra.mxu0 %v4408
  %v4410 = vpop.f32.mrf.mxu0
  %v4411 = vadd.f32 %v4317, %v4410
  %4412 = vdwg.mxu0
  %4413 = vmatpush.msra.mxu0 0.0
  %4414 = vmatpush.msra.mxu0 0.0
  %4415 = vmatpush.msra.mxu0 0.0
  %v4416 = vand.u32 %v4242, 4294901760
  %v4417 = vsub.f32 %v4242, %v4416
  %4418 = vmatpush.msra.mxu0 %v4417
  %v4419 = vand.u32 %v4240, 4294901760
  %v4420 = vsub.f32 %v4240, %v4419
  %4421 = vmatpush.msra.mxu0 %v4420
  %v4422 = vand.u32 %v4238, 4294901760
  %v4423 = vsub.f32 %v4238, %v4422
  %4424 = vmatpush.msra.mxu0 %v4423
  %v4425 = vand.u32 %v4236, 4294901760
  %v4426 = vsub.f32 %v4236, %v4425
  %4427 = vmatpush.msra.mxu0 %v4426
  %v4428 = vand.u32 %v4234, 4294901760
  %v4429 = vsub.f32 %v4234, %v4428
  %4430 = vmatpush.msra.mxu0 %v4429
  %v4431 = vand.u32 %v4232, 4294901760
  %v4432 = vsub.f32 %v4232, %v4431
  %4433 = vmatpush.msra.mxu0 %v4432
  %v4434 = vand.u32 %v4230, 4294901760
  %v4435 = vsub.f32 %v4230, %v4434
  %4436 = vmatpush.msra.mxu0 %v4435
  %v4437 = vand.u32 %v4228, 4294901760
  %v4438 = vsub.f32 %v4228, %v4437
  %4439 = vmatpush.msra.mxu0 %v4438
  %v4440 = vand.u32 %v4226, 4294901760
  %v4441 = vsub.f32 %v4226, %v4440
  %4442 = vmatpush.msra.mxu0 %v4441
  %v4443 = vand.u32 %v4224, 4294901760
  %v4444 = vsub.f32 %v4224, %v4443
  %4445 = vmatpush.msra.mxu0 %v4444
  %v4446 = vand.u32 %v4222, 4294901760
  %v4447 = vsub.f32 %v4222, %v4446
  %4448 = vmatpush.msra.mxu0 %v4447
  %v4449 = vand.u32 %v4220, 4294901760
  %v4450 = vsub.f32 %v4220, %v4449
  %4451 = vmatpush.msra.mxu0 %v4450
  %v4452 = vand.u32 %v4218, 4294901760
  %v4453 = vsub.f32 %v4218, %v4452
  %4454 = vmatpush.msra.mxu0 %v4453
  %v4455 = vand.u32 %v4257, 4294901760
  %v4456 = vsub.f32 %v4257, %v4455
  %4457 = vmatmul.f32.gmra.mxu0 %v4456
  %v4458 = vpop.f32.mrf.mxu0
  %v4459 = vadd.f32 %v4403, %v4458
  %v4460 = vand.u32 %v4260, 4294901760
  %v4461 = vsub.f32 %v4260, %v4460
  %4462 = vmatmul.f32.gmra.mxu0 %v4461
  %v4463 = vpop.f32.mrf.mxu0
  %v4464 = vadd.f32 %v4407, %v4463
  %v4465 = vand.u32 %v4263, 4294901760
  %v4466 = vsub.f32 %v4263, %v4465
  %4467 = vmatmul.f32.gmra.mxu0 %v4466
  %v4468 = vpop.f32.mrf.mxu0
  %v4469 = vadd.f32 %v4411, %v4468
  %4470 = vdwg.mxu0
  %4471 = vmatpush.msra.mxu0 0.0
  %4472 = vmatpush.msra.mxu0 0.0
  %4473 = vmatpush.msra.mxu0 0.0
  %v4474 = vand.u32 %v4242, 4294901760
  %4475 = vmatpush.msra.mxu0 %v4474
  %v4476 = vand.u32 %v4240, 4294901760
  %4477 = vmatpush.msra.mxu0 %v4476
  %v4478 = vand.u32 %v4238, 4294901760
  %4479 = vmatpush.msra.mxu0 %v4478
  %v4480 = vand.u32 %v4236, 4294901760
  %4481 = vmatpush.msra.mxu0 %v4480
  %v4482 = vand.u32 %v4234, 4294901760
  %4483 = vmatpush.msra.mxu0 %v4482
  %v4484 = vand.u32 %v4232, 4294901760
  %4485 = vmatpush.msra.mxu0 %v4484
  %v4486 = vand.u32 %v4230, 4294901760
  %4487 = vmatpush.msra.mxu0 %v4486
  %v4488 = vand.u32 %v4228, 4294901760
  %4489 = vmatpush.msra.mxu0 %v4488
  %v4490 = vand.u32 %v4226, 4294901760
  %4491 = vmatpush.msra.mxu0 %v4490
  %v4492 = vand.u32 %v4224, 4294901760
  %4493 = vmatpush.msra.mxu0 %v4492
  %v4494 = vand.u32 %v4222, 4294901760
  %4495 = vmatpush.msra.mxu0 %v4494
  %v4496 = vand.u32 %v4220, 4294901760
  %4497 = vmatpush.msra.mxu0 %v4496
  %v4498 = vand.u32 %v4218, 4294901760
  %4499 = vmatpush.msra.mxu0 %v4498
  %v4500 = vand.u32 %v4257, 4294901760
  %v4501 = vsub.f32 %v4257, %v4500
  %v4502 = vand.u32 %v4501, 4294901760
  %4503 = vmatmul.f32.gmra.mxu0 %v4502
  %v4504 = vpop.f32.mrf.mxu0
  %v4505 = vadd.f32 %v4459, %v4504
  %v4506 = vand.u32 %v4260, 4294901760
  %v4507 = vsub.f32 %v4260, %v4506
  %v4508 = vand.u32 %v4507, 4294901760
  %4509 = vmatmul.f32.gmra.mxu0 %v4508
  %v4510 = vpop.f32.mrf.mxu0
  %v4511 = vadd.f32 %v4464, %v4510
  %v4512 = vand.u32 %v4263, 4294901760
  %v4513 = vsub.f32 %v4263, %v4512
  %v4514 = vand.u32 %v4513, 4294901760
  %4515 = vmatmul.f32.gmra.mxu0 %v4514
  %v4516 = vpop.f32.mrf.mxu0
  %v4517 = vadd.f32 %v4469, %v4516
  %4518 = vdwg.mxu0
  %4519 = vmatpush.msra.mxu0 0.0
  %4520 = vmatpush.msra.mxu0 0.0
  %4521 = vmatpush.msra.mxu0 0.0
  %v4522 = vand.u32 %v4242, 4294901760
  %v4523 = vsub.f32 %v4242, %v4522
  %v4524 = vand.u32 %v4523, 4294901760
  %4525 = vmatpush.msra.mxu0 %v4524
  %v4526 = vand.u32 %v4240, 4294901760
  %v4527 = vsub.f32 %v4240, %v4526
  %v4528 = vand.u32 %v4527, 4294901760
  %4529 = vmatpush.msra.mxu0 %v4528
  %v4530 = vand.u32 %v4238, 4294901760
  %v4531 = vsub.f32 %v4238, %v4530
  %v4532 = vand.u32 %v4531, 4294901760
  %4533 = vmatpush.msra.mxu0 %v4532
  %v4534 = vand.u32 %v4236, 4294901760
  %v4535 = vsub.f32 %v4236, %v4534
  %v4536 = vand.u32 %v4535, 4294901760
  %4537 = vmatpush.msra.mxu0 %v4536
  %v4538 = vand.u32 %v4234, 4294901760
  %v4539 = vsub.f32 %v4234, %v4538
  %v4540 = vand.u32 %v4539, 4294901760
  %4541 = vmatpush.msra.mxu0 %v4540
  %v4542 = vand.u32 %v4232, 4294901760
  %v4543 = vsub.f32 %v4232, %v4542
  %v4544 = vand.u32 %v4543, 4294901760
  %4545 = vmatpush.msra.mxu0 %v4544
  %v4546 = vand.u32 %v4230, 4294901760
  %v4547 = vsub.f32 %v4230, %v4546
  %v4548 = vand.u32 %v4547, 4294901760
  %4549 = vmatpush.msra.mxu0 %v4548
  %v4550 = vand.u32 %v4228, 4294901760
  %v4551 = vsub.f32 %v4228, %v4550
  %v4552 = vand.u32 %v4551, 4294901760
  %4553 = vmatpush.msra.mxu0 %v4552
  %v4554 = vand.u32 %v4226, 4294901760
  %v4555 = vsub.f32 %v4226, %v4554
  %v4556 = vand.u32 %v4555, 4294901760
  %4557 = vmatpush.msra.mxu0 %v4556
  %v4558 = vand.u32 %v4224, 4294901760
  %v4559 = vsub.f32 %v4224, %v4558
  %v4560 = vand.u32 %v4559, 4294901760
  %4561 = vmatpush.msra.mxu0 %v4560
  %v4562 = vand.u32 %v4222, 4294901760
  %v4563 = vsub.f32 %v4222, %v4562
  %v4564 = vand.u32 %v4563, 4294901760
  %4565 = vmatpush.msra.mxu0 %v4564
  %v4566 = vand.u32 %v4220, 4294901760
  %v4567 = vsub.f32 %v4220, %v4566
  %v4568 = vand.u32 %v4567, 4294901760
  %4569 = vmatpush.msra.mxu0 %v4568
  %v4570 = vand.u32 %v4218, 4294901760
  %v4571 = vsub.f32 %v4218, %v4570
  %v4572 = vand.u32 %v4571, 4294901760
  %4573 = vmatpush.msra.mxu0 %v4572
  %v4574 = vand.u32 %v4257, 4294901760
  %4575 = vmatmul.f32.gmra.mxu0 %v4574
  %v4576 = vpop.f32.mrf.mxu0
  %v4577 = vadd.f32 %v4505, %v4576
  %v4578 = vand.u32 %v4260, 4294901760
  %4579 = vmatmul.f32.gmra.mxu0 %v4578
  %v4580 = vpop.f32.mrf.mxu0
  %v4581 = vadd.f32 %v4511, %v4580
  %v4582 = vand.u32 %v4263, 4294901760
  %4583 = vmatmul.f32.gmra.mxu0 %v4582
  %v4584 = vpop.f32.mrf.mxu0
  %v4585 = vadd.f32 %v4517, %v4584
  %4586 = vdwg.mxu0
  %4587 = vmatpush.msra.mxu0 0.0
  %4588 = vmatpush.msra.mxu0 0.0
  %4589 = vmatpush.msra.mxu0 0.0
  %v4590 = vand.u32 %v4242, 4294901760
  %4591 = vmatpush.msra.mxu0 %v4590
  %v4592 = vand.u32 %v4240, 4294901760
  %4593 = vmatpush.msra.mxu0 %v4592
  %v4594 = vand.u32 %v4238, 4294901760
  %4595 = vmatpush.msra.mxu0 %v4594
  %v4596 = vand.u32 %v4236, 4294901760
  %4597 = vmatpush.msra.mxu0 %v4596
  %v4598 = vand.u32 %v4234, 4294901760
  %4599 = vmatpush.msra.mxu0 %v4598
  %v4600 = vand.u32 %v4232, 4294901760
  %4601 = vmatpush.msra.mxu0 %v4600
  %v4602 = vand.u32 %v4230, 4294901760
  %4603 = vmatpush.msra.mxu0 %v4602
  %v4604 = vand.u32 %v4228, 4294901760
  %4605 = vmatpush.msra.mxu0 %v4604
  %v4606 = vand.u32 %v4226, 4294901760
  %4607 = vmatpush.msra.mxu0 %v4606
  %v4608 = vand.u32 %v4224, 4294901760
  %4609 = vmatpush.msra.mxu0 %v4608
  %v4610 = vand.u32 %v4222, 4294901760
  %4611 = vmatpush.msra.mxu0 %v4610
  %v4612 = vand.u32 %v4220, 4294901760
  %4613 = vmatpush.msra.mxu0 %v4612
  %v4614 = vand.u32 %v4218, 4294901760
  %4615 = vmatpush.msra.mxu0 %v4614
  %v4616 = vand.u32 %v4257, 4294901760
  %4617 = vmatmul.f32.gmra.mxu0 %v4616
  %v4618 = vpop.f32.mrf.mxu0
  %v4619 = vadd.f32 %v4577, %v4618
  %v4620 = vand.u32 %v4260, 4294901760
  %4621 = vmatmul.f32.gmra.mxu0 %v4620
  %v4622 = vpop.f32.mrf.mxu0
  %v4623 = vadd.f32 %v4581, %v4622
  %v4624 = vand.u32 %v4263, 4294901760
  %4625 = vmatmul.f32.gmra.mxu0 %v4624
  %v4626 = vpop.f32.mrf.mxu0
  %v4627 = vadd.f32 %v4585, %v4626
  %4628 = vdwg.mxu0
  %v4629 = vadd.f32 %v4211, %v4619
  %v4630 = vadd.f32 %v4212, %v4623
  %v4631 = vadd.f32 %v4213, %v4627
  %v4632 = vld [vmem:[%s0 + $0x3f0] sm:$0xff]
  %v4633 = vld [vmem:[%s0 + $0x408] sm:$0xff]
  %v4634 = vld [vmem:[%s0 + $0x420] sm:$0xff]
  %4635 = vrot.lane.b32.xlu0 %v1169, 16
  %v4636 = vpop.permute.xlu0 %4635
  %4637 = vrot.lane.b32.xlu0 %v1173, 16
  %v4638 = vpop.permute.xlu0 %4637
  %4639 = vrot.lane.b32.xlu0 %v1177, 16
  %v4640 = vpop.permute.xlu0 %4639
  %4641 = vrot.lane.b32.xlu0 %v1181, 16
  %v4642 = vpop.permute.xlu0 %4641
  %4643 = vrot.lane.b32.xlu0 %v1185, 16
  %v4644 = vpop.permute.xlu0 %4643
  %4645 = vrot.lane.b32.xlu0 %v1189, 16
  %v4646 = vpop.permute.xlu0 %4645
  %4647 = vrot.lane.b32.xlu0 %v1193, 16
  %v4648 = vpop.permute.xlu0 %4647
  %4649 = vrot.lane.b32.xlu0 %v1197, 16
  %v4650 = vpop.permute.xlu0 %4649
  %4651 = vrot.lane.b32.xlu0 %v1201, 16
  %v4652 = vpop.permute.xlu0 %4651
  %4653 = vrot.lane.b32.xlu0 %v1205, 16
  %v4654 = vpop.permute.xlu0 %4653
  %4655 = vrot.lane.b32.xlu0 %v1209, 16
  %v4656 = vpop.permute.xlu0 %4655
  %4657 = vrot.lane.b32.xlu0 %v1213, 16
  %v4658 = vpop.permute.xlu0 %4657
  %4659 = vrot.lane.b32.xlu0 %v1217, 16
  %v4660 = vpop.permute.xlu0 %4659
  %v4675 = vsel %vm1795, %v4632, 0
  %v4678 = vsel %vm1795, %v4633, 0
  %v4681 = vsel %vm1795, %v4634, 0
  %4683 = vmatpush.msra.mxu0 0.0
  %4684 = vmatpush.msra.mxu0 0.0
  %4685 = vmatpush.msra.mxu0 0.0
  %v4686 = vand.u32 %v4660, 4294901760
  %4687 = vmatpush.msra.mxu0 %v4686
  %v4688 = vand.u32 %v4658, 4294901760
  %4689 = vmatpush.msra.mxu0 %v4688
  %v4690 = vand.u32 %v4656, 4294901760
  %4691 = vmatpush.msra.mxu0 %v4690
  %v4692 = vand.u32 %v4654, 4294901760
  %4693 = vmatpush.msra.mxu0 %v4692
  %v4694 = vand.u32 %v4652, 4294901760
  %4695 = vmatpush.msra.mxu0 %v4694
  %v4696 = vand.u32 %v4650, 4294901760
  %4697 = vmatpush.msra.mxu0 %v4696
  %v4698 = vand.u32 %v4648, 4294901760
  %4699 = vmatpush.msra.mxu0 %v4698
  %v4700 = vand.u32 %v4646, 4294901760
  %4701 = vmatpush.msra.mxu0 %v4700
  %v4702 = vand.u32 %v4644, 4294901760
  %4703 = vmatpush.msra.mxu0 %v4702
  %v4704 = vand.u32 %v4642, 4294901760
  %4705 = vmatpush.msra.mxu0 %v4704
  %v4706 = vand.u32 %v4640, 4294901760
  %4707 = vmatpush.msra.mxu0 %v4706
  %v4708 = vand.u32 %v4638, 4294901760
  %4709 = vmatpush.msra.mxu0 %v4708
  %v4710 = vand.u32 %v4636, 4294901760
  %4711 = vmatpush.msra.mxu0 %v4710
  %v4712 = vand.u32 %v4675, 4294901760
  %v4713 = vsub.f32 %v4675, %v4712
  %v4714 = vand.u32 %v4713, 4294901760
  %v4715 = vsub.f32 %v4713, %v4714
  %v4716 = vand.u32 %v4715, 4294901760
  %4717 = vmatmul.f32.gmra.mxu0 %v4716
  %v4718 = vpop.f32.mrf.mxu0
  %v4719 = vadd.f32 0.0, %v4718
  %v4720 = vand.u32 %v4678, 4294901760
  %v4721 = vsub.f32 %v4678, %v4720
  %v4722 = vand.u32 %v4721, 4294901760
  %v4723 = vsub.f32 %v4721, %v4722
  %v4724 = vand.u32 %v4723, 4294901760
  %4725 = vmatmul.f32.gmra.mxu0 %v4724
  %v4726 = vpop.f32.mrf.mxu0
  %v4727 = vadd.f32 0.0, %v4726
  %v4728 = vand.u32 %v4681, 4294901760
  %v4729 = vsub.f32 %v4681, %v4728
  %v4730 = vand.u32 %v4729, 4294901760
  %v4731 = vsub.f32 %v4729, %v4730
  %v4732 = vand.u32 %v4731, 4294901760
  %4733 = vmatmul.f32.gmra.mxu0 %v4732
  %v4734 = vpop.f32.mrf.mxu0
  %v4735 = vadd.f32 0.0, %v4734
  %4736 = vdwg.mxu0
  %4737 = vmatpush.msra.mxu0 0.0
  %4738 = vmatpush.msra.mxu0 0.0
  %4739 = vmatpush.msra.mxu0 0.0
  %v4740 = vand.u32 %v4660, 4294901760
  %v4741 = vsub.f32 %v4660, %v4740
  %v4742 = vand.u32 %v4741, 4294901760
  %v4743 = vsub.f32 %v4741, %v4742
  %v4744 = vand.u32 %v4743, 4294901760
  %4745 = vmatpush.msra.mxu0 %v4744
  %v4746 = vand.u32 %v4658, 4294901760
  %v4747 = vsub.f32 %v4658, %v4746
  %v4748 = vand.u32 %v4747, 4294901760
  %v4749 = vsub.f32 %v4747, %v4748
  %v4750 = vand.u32 %v4749, 4294901760
  %4751 = vmatpush.msra.mxu0 %v4750
  %v4752 = vand.u32 %v4656, 4294901760
  %v4753 = vsub.f32 %v4656, %v4752
  %v4754 = vand.u32 %v4753, 4294901760
  %v4755 = vsub.f32 %v4753, %v4754
  %v4756 = vand.u32 %v4755, 4294901760
  %4757 = vmatpush.msra.mxu0 %v4756
  %v4758 = vand.u32 %v4654, 4294901760
  %v4759 = vsub.f32 %v4654, %v4758
  %v4760 = vand.u32 %v4759, 4294901760
  %v4761 = vsub.f32 %v4759, %v4760
  %v4762 = vand.u32 %v4761, 4294901760
  %4763 = vmatpush.msra.mxu0 %v4762
  %v4764 = vand.u32 %v4652, 4294901760
  %v4765 = vsub.f32 %v4652, %v4764
  %v4766 = vand.u32 %v4765, 4294901760
  %v4767 = vsub.f32 %v4765, %v4766
  %v4768 = vand.u32 %v4767, 4294901760
  %4769 = vmatpush.msra.mxu0 %v4768
  %v4770 = vand.u32 %v4650, 4294901760
  %v4771 = vsub.f32 %v4650, %v4770
  %v4772 = vand.u32 %v4771, 4294901760
  %v4773 = vsub.f32 %v4771, %v4772
  %v4774 = vand.u32 %v4773, 4294901760
  %4775 = vmatpush.msra.mxu0 %v4774
  %v4776 = vand.u32 %v4648, 4294901760
  %v4777 = vsub.f32 %v4648, %v4776
  %v4778 = vand.u32 %v4777, 4294901760
  %v4779 = vsub.f32 %v4777, %v4778
  %v4780 = vand.u32 %v4779, 4294901760
  %4781 = vmatpush.msra.mxu0 %v4780
  %v4782 = vand.u32 %v4646, 4294901760
  %v4783 = vsub.f32 %v4646, %v4782
  %v4784 = vand.u32 %v4783, 4294901760
  %v4785 = vsub.f32 %v4783, %v4784
  %v4786 = vand.u32 %v4785, 4294901760
  %4787 = vmatpush.msra.mxu0 %v4786
  %v4788 = vand.u32 %v4644, 4294901760
  %v4789 = vsub.f32 %v4644, %v4788
  %v4790 = vand.u32 %v4789, 4294901760
  %v4791 = vsub.f32 %v4789, %v4790
  %v4792 = vand.u32 %v4791, 4294901760
  %4793 = vmatpush.msra.mxu0 %v4792
  %v4794 = vand.u32 %v4642, 4294901760
  %v4795 = vsub.f32 %v4642, %v4794
  %v4796 = vand.u32 %v4795, 4294901760
  %v4797 = vsub.f32 %v4795, %v4796
  %v4798 = vand.u32 %v4797, 4294901760
  %4799 = vmatpush.msra.mxu0 %v4798
  %v4800 = vand.u32 %v4640, 4294901760
  %v4801 = vsub.f32 %v4640, %v4800
  %v4802 = vand.u32 %v4801, 4294901760
  %v4803 = vsub.f32 %v4801, %v4802
  %v4804 = vand.u32 %v4803, 4294901760
  %4805 = vmatpush.msra.mxu0 %v4804
  %v4806 = vand.u32 %v4638, 4294901760
  %v4807 = vsub.f32 %v4638, %v4806
  %v4808 = vand.u32 %v4807, 4294901760
  %v4809 = vsub.f32 %v4807, %v4808
  %v4810 = vand.u32 %v4809, 4294901760
  %4811 = vmatpush.msra.mxu0 %v4810
  %v4812 = vand.u32 %v4636, 4294901760
  %v4813 = vsub.f32 %v4636, %v4812
  %v4814 = vand.u32 %v4813, 4294901760
  %v4815 = vsub.f32 %v4813, %v4814
  %v4816 = vand.u32 %v4815, 4294901760
  %4817 = vmatpush.msra.mxu0 %v4816
  %v4818 = vand.u32 %v4675, 4294901760
  %4819 = vmatmul.f32.gmra.mxu0 %v4818
  %v4820 = vpop.f32.mrf.mxu0
  %v4821 = vadd.f32 %v4719, %v4820
  %v4822 = vand.u32 %v4678, 4294901760
  %4823 = vmatmul.f32.gmra.mxu0 %v4822
  %v4824 = vpop.f32.mrf.mxu0
  %v4825 = vadd.f32 %v4727, %v4824
  %v4826 = vand.u32 %v4681, 4294901760
  %4827 = vmatmul.f32.gmra.mxu0 %v4826
  %v4828 = vpop.f32.mrf.mxu0
  %v4829 = vadd.f32 %v4735, %v4828
  %4830 = vdwg.mxu0
  %4831 = vmatpush.msra.mxu0 0.0
  %4832 = vmatpush.msra.mxu0 0.0
  %4833 = vmatpush.msra.mxu0 0.0
  %v4834 = vand.u32 %v4660, 4294901760
  %v4835 = vsub.f32 %v4660, %v4834
  %4836 = vmatpush.msra.mxu0 %v4835
  %v4837 = vand.u32 %v4658, 4294901760
  %v4838 = vsub.f32 %v4658, %v4837
  %4839 = vmatpush.msra.mxu0 %v4838
  %v4840 = vand.u32 %v4656, 4294901760
  %v4841 = vsub.f32 %v4656, %v4840
  %4842 = vmatpush.msra.mxu0 %v4841
  %v4843 = vand.u32 %v4654, 4294901760
  %v4844 = vsub.f32 %v4654, %v4843
  %4845 = vmatpush.msra.mxu0 %v4844
  %v4846 = vand.u32 %v4652, 4294901760
  %v4847 = vsub.f32 %v4652, %v4846
  %4848 = vmatpush.msra.mxu0 %v4847
  %v4849 = vand.u32 %v4650, 4294901760
  %v4850 = vsub.f32 %v4650, %v4849
  %4851 = vmatpush.msra.mxu0 %v4850
  %v4852 = vand.u32 %v4648, 4294901760
  %v4853 = vsub.f32 %v4648, %v4852
  %4854 = vmatpush.msra.mxu0 %v4853
  %v4855 = vand.u32 %v4646, 4294901760
  %v4856 = vsub.f32 %v4646, %v4855
  %4857 = vmatpush.msra.mxu0 %v4856
  %v4858 = vand.u32 %v4644, 4294901760
  %v4859 = vsub.f32 %v4644, %v4858
  %4860 = vmatpush.msra.mxu0 %v4859
  %v4861 = vand.u32 %v4642, 4294901760
  %v4862 = vsub.f32 %v4642, %v4861
  %4863 = vmatpush.msra.mxu0 %v4862
  %v4864 = vand.u32 %v4640, 4294901760
  %v4865 = vsub.f32 %v4640, %v4864
  %4866 = vmatpush.msra.mxu0 %v4865
  %v4867 = vand.u32 %v4638, 4294901760
  %v4868 = vsub.f32 %v4638, %v4867
  %4869 = vmatpush.msra.mxu0 %v4868
  %v4870 = vand.u32 %v4636, 4294901760
  %v4871 = vsub.f32 %v4636, %v4870
  %4872 = vmatpush.msra.mxu0 %v4871
  %v4873 = vand.u32 %v4675, 4294901760
  %v4874 = vsub.f32 %v4675, %v4873
  %4875 = vmatmul.f32.gmra.mxu0 %v4874
  %v4876 = vpop.f32.mrf.mxu0
  %v4877 = vadd.f32 %v4821, %v4876
  %v4878 = vand.u32 %v4678, 4294901760
  %v4879 = vsub.f32 %v4678, %v4878
  %4880 = vmatmul.f32.gmra.mxu0 %v4879
  %v4881 = vpop.f32.mrf.mxu0
  %v4882 = vadd.f32 %v4825, %v4881
  %v4883 = vand.u32 %v4681, 4294901760
  %v4884 = vsub.f32 %v4681, %v4883
  %4885 = vmatmul.f32.gmra.mxu0 %v4884
  %v4886 = vpop.f32.mrf.mxu0
  %v4887 = vadd.f32 %v4829, %v4886
  %4888 = vdwg.mxu0
  %4889 = vmatpush.msra.mxu0 0.0
  %4890 = vmatpush.msra.mxu0 0.0
  %4891 = vmatpush.msra.mxu0 0.0
  %v4892 = vand.u32 %v4660, 4294901760
  %4893 = vmatpush.msra.mxu0 %v4892
  %v4894 = vand.u32 %v4658, 4294901760
  %4895 = vmatpush.msra.mxu0 %v4894
  %v4896 = vand.u32 %v4656, 4294901760
  %4897 = vmatpush.msra.mxu0 %v4896
  %v4898 = vand.u32 %v4654, 4294901760
  %4899 = vmatpush.msra.mxu0 %v4898
  %v4900 = vand.u32 %v4652, 4294901760
  %4901 = vmatpush.msra.mxu0 %v4900
  %v4902 = vand.u32 %v4650, 4294901760
  %4903 = vmatpush.msra.mxu0 %v4902
  %v4904 = vand.u32 %v4648, 4294901760
  %4905 = vmatpush.msra.mxu0 %v4904
  %v4906 = vand.u32 %v4646, 4294901760
  %4907 = vmatpush.msra.mxu0 %v4906
  %v4908 = vand.u32 %v4644, 4294901760
  %4909 = vmatpush.msra.mxu0 %v4908
  %v4910 = vand.u32 %v4642, 4294901760
  %4911 = vmatpush.msra.mxu0 %v4910
  %v4912 = vand.u32 %v4640, 4294901760
  %4913 = vmatpush.msra.mxu0 %v4912
  %v4914 = vand.u32 %v4638, 4294901760
  %4915 = vmatpush.msra.mxu0 %v4914
  %v4916 = vand.u32 %v4636, 4294901760
  %4917 = vmatpush.msra.mxu0 %v4916
  %v4918 = vand.u32 %v4675, 4294901760
  %v4919 = vsub.f32 %v4675, %v4918
  %v4920 = vand.u32 %v4919, 4294901760
  %4921 = vmatmul.f32.gmra.mxu0 %v4920
  %v4922 = vpop.f32.mrf.mxu0
  %v4923 = vadd.f32 %v4877, %v4922
  %v4924 = vand.u32 %v4678, 4294901760
  %v4925 = vsub.f32 %v4678, %v4924
  %v4926 = vand.u32 %v4925, 4294901760
  %4927 = vmatmul.f32.gmra.mxu0 %v4926
  %v4928 = vpop.f32.mrf.mxu0
  %v4929 = vadd.f32 %v4882, %v4928
  %v4930 = vand.u32 %v4681, 4294901760
  %v4931 = vsub.f32 %v4681, %v4930
  %v4932 = vand.u32 %v4931, 4294901760
  %4933 = vmatmul.f32.gmra.mxu0 %v4932
  %v4934 = vpop.f32.mrf.mxu0
  %v4935 = vadd.f32 %v4887, %v4934
  %4936 = vdwg.mxu0
  %4937 = vmatpush.msra.mxu0 0.0
  %4938 = vmatpush.msra.mxu0 0.0
  %4939 = vmatpush.msra.mxu0 0.0
  %v4940 = vand.u32 %v4660, 4294901760
  %v4941 = vsub.f32 %v4660, %v4940
  %v4942 = vand.u32 %v4941, 4294901760
  %4943 = vmatpush.msra.mxu0 %v4942
  %v4944 = vand.u32 %v4658, 4294901760
  %v4945 = vsub.f32 %v4658, %v4944
  %v4946 = vand.u32 %v4945, 4294901760
  %4947 = vmatpush.msra.mxu0 %v4946
  %v4948 = vand.u32 %v4656, 4294901760
  %v4949 = vsub.f32 %v4656, %v4948
  %v4950 = vand.u32 %v4949, 4294901760
  %4951 = vmatpush.msra.mxu0 %v4950
  %v4952 = vand.u32 %v4654, 4294901760
  %v4953 = vsub.f32 %v4654, %v4952
  %v4954 = vand.u32 %v4953, 4294901760
  %4955 = vmatpush.msra.mxu0 %v4954
  %v4956 = vand.u32 %v4652, 4294901760
  %v4957 = vsub.f32 %v4652, %v4956
  %v4958 = vand.u32 %v4957, 4294901760
  %4959 = vmatpush.msra.mxu0 %v4958
  %v4960 = vand.u32 %v4650, 4294901760
  %v4961 = vsub.f32 %v4650, %v4960
  %v4962 = vand.u32 %v4961, 4294901760
  %4963 = vmatpush.msra.mxu0 %v4962
  %v4964 = vand.u32 %v4648, 4294901760
  %v4965 = vsub.f32 %v4648, %v4964
  %v4966 = vand.u32 %v4965, 4294901760
  %4967 = vmatpush.msra.mxu0 %v4966
  %v4968 = vand.u32 %v4646, 4294901760
  %v4969 = vsub.f32 %v4646, %v4968
  %v4970 = vand.u32 %v4969, 4294901760
  %4971 = vmatpush.msra.mxu0 %v4970
  %v4972 = vand.u32 %v4644, 4294901760
  %v4973 = vsub.f32 %v4644, %v4972
  %v4974 = vand.u32 %v4973, 4294901760
  %4975 = vmatpush.msra.mxu0 %v4974
  %v4976 = vand.u32 %v4642, 4294901760
  %v4977 = vsub.f32 %v4642, %v4976
  %v4978 = vand.u32 %v4977, 4294901760
  %4979 = vmatpush.msra.mxu0 %v4978
  %v4980 = vand.u32 %v4640, 4294901760
  %v4981 = vsub.f32 %v4640, %v4980
  %v4982 = vand.u32 %v4981, 4294901760
  %4983 = vmatpush.msra.mxu0 %v4982
  %v4984 = vand.u32 %v4638, 4294901760
  %v4985 = vsub.f32 %v4638, %v4984
  %v4986 = vand.u32 %v4985, 4294901760
  %4987 = vmatpush.msra.mxu0 %v4986
  %v4988 = vand.u32 %v4636, 4294901760
  %v4989 = vsub.f32 %v4636, %v4988
  %v4990 = vand.u32 %v4989, 4294901760
  %4991 = vmatpush.msra.mxu0 %v4990
  %v4992 = vand.u32 %v4675, 4294901760
  %4993 = vmatmul.f32.gmra.mxu0 %v4992
  %v4994 = vpop.f32.mrf.mxu0
  %v4995 = vadd.f32 %v4923, %v4994
  %v4996 = vand.u32 %v4678, 4294901760
  %4997 = vmatmul.f32.gmra.mxu0 %v4996
  %v4998 = vpop.f32.mrf.mxu0
  %v4999 = vadd.f32 %v4929, %v4998
  %v5000 = vand.u32 %v4681, 4294901760
  %5001 = vmatmul.f32.gmra.mxu0 %v5000
  %v5002 = vpop.f32.mrf.mxu0
  %v5003 = vadd.f32 %v4935, %v5002
  %5004 = vdwg.mxu0
  %5005 = vmatpush.msra.mxu0 0.0
  %5006 = vmatpush.msra.mxu0 0.0
  %5007 = vmatpush.msra.mxu0 0.0
  %v5008 = vand.u32 %v4660, 4294901760
  %5009 = vmatpush.msra.mxu0 %v5008
  %v5010 = vand.u32 %v4658, 4294901760
  %5011 = vmatpush.msra.mxu0 %v5010
  %v5012 = vand.u32 %v4656, 4294901760
  %5013 = vmatpush.msra.mxu0 %v5012
  %v5014 = vand.u32 %v4654, 4294901760
  %5015 = vmatpush.msra.mxu0 %v5014
  %v5016 = vand.u32 %v4652, 4294901760
  %5017 = vmatpush.msra.mxu0 %v5016
  %v5018 = vand.u32 %v4650, 4294901760
  %5019 = vmatpush.msra.mxu0 %v5018
  %v5020 = vand.u32 %v4648, 4294901760
  %5021 = vmatpush.msra.mxu0 %v5020
  %v5022 = vand.u32 %v4646, 4294901760
  %5023 = vmatpush.msra.mxu0 %v5022
  %v5024 = vand.u32 %v4644, 4294901760
  %5025 = vmatpush.msra.mxu0 %v5024
  %v5026 = vand.u32 %v4642, 4294901760
  %5027 = vmatpush.msra.mxu0 %v5026
  %v5028 = vand.u32 %v4640, 4294901760
  %5029 = vmatpush.msra.mxu0 %v5028
  %v5030 = vand.u32 %v4638, 4294901760
  %5031 = vmatpush.msra.mxu0 %v5030
  %v5032 = vand.u32 %v4636, 4294901760
  %5033 = vmatpush.msra.mxu0 %v5032
  %v5034 = vand.u32 %v4675, 4294901760
  %5035 = vmatmul.f32.gmra.mxu0 %v5034
  %v5036 = vpop.f32.mrf.mxu0
  %v5037 = vadd.f32 %v4995, %v5036
  %v5038 = vand.u32 %v4678, 4294901760
  %5039 = vmatmul.f32.gmra.mxu0 %v5038
  %v5040 = vpop.f32.mrf.mxu0
  %v5041 = vadd.f32 %v4999, %v5040
  %v5042 = vand.u32 %v4681, 4294901760
  %5043 = vmatmul.f32.gmra.mxu0 %v5042
  %v5044 = vpop.f32.mrf.mxu0
  %v5045 = vadd.f32 %v5003, %v5044
  %5046 = vdwg.mxu0
  %v5047 = vadd.f32 %v4629, %v5037
  %v5048 = vadd.f32 %v4630, %v5041
  %v5049 = vadd.f32 %v4631, %v5045
  %v5050 = vld [vmem:[%s0 + $0x438] sm:$0xff]
  %v5051 = vld [vmem:[%s0 + $0x450] sm:$0xff]
  %v5052 = vld [vmem:[%s0 + $0x468] sm:$0xff]
  %v5054 = vsel %vm1795, %v5050, 0
  %v5057 = vsel %vm1795, %v5051, 0
  %v5060 = vsel %vm1795, %v5052, 0
  %5062 = vmatpush.msra.mxu0 0.0
  %5063 = vmatpush.msra.mxu0 0.0
  %5064 = vmatpush.msra.mxu0 0.0
  %v5065 = vand.u32 %v1735, 4294901760
  %5066 = vmatpush.msra.mxu0 %v5065
  %v5067 = vand.u32 %v1731, 4294901760
  %5068 = vmatpush.msra.mxu0 %v5067
  %v5069 = vand.u32 %v1727, 4294901760
  %5070 = vmatpush.msra.mxu0 %v5069
  %v5071 = vand.u32 %v1723, 4294901760
  %5072 = vmatpush.msra.mxu0 %v5071
  %v5073 = vand.u32 %v1719, 4294901760
  %5074 = vmatpush.msra.mxu0 %v5073
  %v5075 = vand.u32 %v1715, 4294901760
  %5076 = vmatpush.msra.mxu0 %v5075
  %v5077 = vand.u32 %v1711, 4294901760
  %5078 = vmatpush.msra.mxu0 %v5077
  %v5079 = vand.u32 %v1707, 4294901760
  %5080 = vmatpush.msra.mxu0 %v5079
  %v5081 = vand.u32 %v1703, 4294901760
  %5082 = vmatpush.msra.mxu0 %v5081
  %v5083 = vand.u32 %v1699, 4294901760
  %5084 = vmatpush.msra.mxu0 %v5083
  %v5085 = vand.u32 %v1695, 4294901760
  %5086 = vmatpush.msra.mxu0 %v5085
  %v5087 = vand.u32 %v1691, 4294901760
  %5088 = vmatpush.msra.mxu0 %v5087
  %v5089 = vand.u32 %v1687, 4294901760
  %5090 = vmatpush.msra.mxu0 %v5089
  %v5091 = vand.u32 %v5054, 4294901760
  %v5092 = vsub.f32 %v5054, %v5091
  %v5093 = vand.u32 %v5092, 4294901760
  %v5094 = vsub.f32 %v5092, %v5093
  %v5095 = vand.u32 %v5094, 4294901760
  %5096 = vmatmul.f32.gmra.mxu0 %v5095
  %v5097 = vpop.f32.mrf.mxu0
  %v5098 = vadd.f32 0.0, %v5097
  %v5099 = vand.u32 %v5057, 4294901760
  %v5100 = vsub.f32 %v5057, %v5099
  %v5101 = vand.u32 %v5100, 4294901760
  %v5102 = vsub.f32 %v5100, %v5101
  %v5103 = vand.u32 %v5102, 4294901760
  %5104 = vmatmul.f32.gmra.mxu0 %v5103
  %v5105 = vpop.f32.mrf.mxu0
  %v5106 = vadd.f32 0.0, %v5105
  %v5107 = vand.u32 %v5060, 4294901760
  %v5108 = vsub.f32 %v5060, %v5107
  %v5109 = vand.u32 %v5108, 4294901760
  %v5110 = vsub.f32 %v5108, %v5109
  %v5111 = vand.u32 %v5110, 4294901760
  %5112 = vmatmul.f32.gmra.mxu0 %v5111
  %v5113 = vpop.f32.mrf.mxu0
  %v5114 = vadd.f32 0.0, %v5113
  %5115 = vdwg.mxu0
  %5116 = vmatpush.msra.mxu0 0.0
  %5117 = vmatpush.msra.mxu0 0.0
  %5118 = vmatpush.msra.mxu0 0.0
  %v5119 = vand.u32 %v1735, 4294901760
  %v5120 = vsub.f32 %v1735, %v5119
  %v5121 = vand.u32 %v5120, 4294901760
  %v5122 = vsub.f32 %v5120, %v5121
  %v5123 = vand.u32 %v5122, 4294901760
  %5124 = vmatpush.msra.mxu0 %v5123
  %v5125 = vand.u32 %v1731, 4294901760
  %v5126 = vsub.f32 %v1731, %v5125
  %v5127 = vand.u32 %v5126, 4294901760
  %v5128 = vsub.f32 %v5126, %v5127
  %v5129 = vand.u32 %v5128, 4294901760
  %5130 = vmatpush.msra.mxu0 %v5129
  %v5131 = vand.u32 %v1727, 4294901760
  %v5132 = vsub.f32 %v1727, %v5131
  %v5133 = vand.u32 %v5132, 4294901760
  %v5134 = vsub.f32 %v5132, %v5133
  %v5135 = vand.u32 %v5134, 4294901760
  %5136 = vmatpush.msra.mxu0 %v5135
  %v5137 = vand.u32 %v1723, 4294901760
  %v5138 = vsub.f32 %v1723, %v5137
  %v5139 = vand.u32 %v5138, 4294901760
  %v5140 = vsub.f32 %v5138, %v5139
  %v5141 = vand.u32 %v5140, 4294901760
  %5142 = vmatpush.msra.mxu0 %v5141
  %v5143 = vand.u32 %v1719, 4294901760
  %v5144 = vsub.f32 %v1719, %v5143
  %v5145 = vand.u32 %v5144, 4294901760
  %v5146 = vsub.f32 %v5144, %v5145
  %v5147 = vand.u32 %v5146, 4294901760
  %5148 = vmatpush.msra.mxu0 %v5147
  %v5149 = vand.u32 %v1715, 4294901760
  %v5150 = vsub.f32 %v1715, %v5149
  %v5151 = vand.u32 %v5150, 4294901760
  %v5152 = vsub.f32 %v5150, %v5151
  %v5153 = vand.u32 %v5152, 4294901760
  %5154 = vmatpush.msra.mxu0 %v5153
  %v5155 = vand.u32 %v1711, 4294901760
  %v5156 = vsub.f32 %v1711, %v5155
  %v5157 = vand.u32 %v5156, 4294901760
  %v5158 = vsub.f32 %v5156, %v5157
  %v5159 = vand.u32 %v5158, 4294901760
  %5160 = vmatpush.msra.mxu0 %v5159
  %v5161 = vand.u32 %v1707, 4294901760
  %v5162 = vsub.f32 %v1707, %v5161
  %v5163 = vand.u32 %v5162, 4294901760
  %v5164 = vsub.f32 %v5162, %v5163
  %v5165 = vand.u32 %v5164, 4294901760
  %5166 = vmatpush.msra.mxu0 %v5165
  %v5167 = vand.u32 %v1703, 4294901760
  %v5168 = vsub.f32 %v1703, %v5167
  %v5169 = vand.u32 %v5168, 4294901760
  %v5170 = vsub.f32 %v5168, %v5169
  %v5171 = vand.u32 %v5170, 4294901760
  %5172 = vmatpush.msra.mxu0 %v5171
  %v5173 = vand.u32 %v1699, 4294901760
  %v5174 = vsub.f32 %v1699, %v5173
  %v5175 = vand.u32 %v5174, 4294901760
  %v5176 = vsub.f32 %v5174, %v5175
  %v5177 = vand.u32 %v5176, 4294901760
  %5178 = vmatpush.msra.mxu0 %v5177
  %v5179 = vand.u32 %v1695, 4294901760
  %v5180 = vsub.f32 %v1695, %v5179
  %v5181 = vand.u32 %v5180, 4294901760
  %v5182 = vsub.f32 %v5180, %v5181
  %v5183 = vand.u32 %v5182, 4294901760
  %5184 = vmatpush.msra.mxu0 %v5183
  %v5185 = vand.u32 %v1691, 4294901760
  %v5186 = vsub.f32 %v1691, %v5185
  %v5187 = vand.u32 %v5186, 4294901760
  %v5188 = vsub.f32 %v5186, %v5187
  %v5189 = vand.u32 %v5188, 4294901760
  %5190 = vmatpush.msra.mxu0 %v5189
  %v5191 = vand.u32 %v1687, 4294901760
  %v5192 = vsub.f32 %v1687, %v5191
  %v5193 = vand.u32 %v5192, 4294901760
  %v5194 = vsub.f32 %v5192, %v5193
  %v5195 = vand.u32 %v5194, 4294901760
  %5196 = vmatpush.msra.mxu0 %v5195
  %v5197 = vand.u32 %v5054, 4294901760
  %5198 = vmatmul.f32.gmra.mxu0 %v5197
  %v5199 = vpop.f32.mrf.mxu0
  %v5200 = vadd.f32 %v5098, %v5199
  %v5201 = vand.u32 %v5057, 4294901760
  %5202 = vmatmul.f32.gmra.mxu0 %v5201
  %v5203 = vpop.f32.mrf.mxu0
  %v5204 = vadd.f32 %v5106, %v5203
  %v5205 = vand.u32 %v5060, 4294901760
  %5206 = vmatmul.f32.gmra.mxu0 %v5205
  %v5207 = vpop.f32.mrf.mxu0
  %v5208 = vadd.f32 %v5114, %v5207
  %5209 = vdwg.mxu0
  %5210 = vmatpush.msra.mxu0 0.0
  %5211 = vmatpush.msra.mxu0 0.0
  %5212 = vmatpush.msra.mxu0 0.0
  %v5213 = vand.u32 %v1735, 4294901760
  %v5214 = vsub.f32 %v1735, %v5213
  %5215 = vmatpush.msra.mxu0 %v5214
  %v5216 = vand.u32 %v1731, 4294901760
  %v5217 = vsub.f32 %v1731, %v5216
  %5218 = vmatpush.msra.mxu0 %v5217
  %v5219 = vand.u32 %v1727, 4294901760
  %v5220 = vsub.f32 %v1727, %v5219
  %5221 = vmatpush.msra.mxu0 %v5220
  %v5222 = vand.u32 %v1723, 4294901760
  %v5223 = vsub.f32 %v1723, %v5222
  %5224 = vmatpush.msra.mxu0 %v5223
  %v5225 = vand.u32 %v1719, 4294901760
  %v5226 = vsub.f32 %v1719, %v5225
  %5227 = vmatpush.msra.mxu0 %v5226
  %v5228 = vand.u32 %v1715, 4294901760
  %v5229 = vsub.f32 %v1715, %v5228
  %5230 = vmatpush.msra.mxu0 %v5229
  %v5231 = vand.u32 %v1711, 4294901760
  %v5232 = vsub.f32 %v1711, %v5231
  %5233 = vmatpush.msra.mxu0 %v5232
  %v5234 = vand.u32 %v1707, 4294901760
  %v5235 = vsub.f32 %v1707, %v5234
  %5236 = vmatpush.msra.mxu0 %v5235
  %v5237 = vand.u32 %v1703, 4294901760
  %v5238 = vsub.f32 %v1703, %v5237
  %5239 = vmatpush.msra.mxu0 %v5238
  %v5240 = vand.u32 %v1699, 4294901760
  %v5241 = vsub.f32 %v1699, %v5240
  %5242 = vmatpush.msra.mxu0 %v5241
  %v5243 = vand.u32 %v1695, 4294901760
  %v5244 = vsub.f32 %v1695, %v5243
  %5245 = vmatpush.msra.mxu0 %v5244
  %v5246 = vand.u32 %v1691, 4294901760
  %v5247 = vsub.f32 %v1691, %v5246
  %5248 = vmatpush.msra.mxu0 %v5247
  %v5249 = vand.u32 %v1687, 4294901760
  %v5250 = vsub.f32 %v1687, %v5249
  %5251 = vmatpush.msra.mxu0 %v5250
  %v5252 = vand.u32 %v5054, 4294901760
  %v5253 = vsub.f32 %v5054, %v5252
  %5254 = vmatmul.f32.gmra.mxu0 %v5253
  %v5255 = vpop.f32.mrf.mxu0
  %v5256 = vadd.f32 %v5200, %v5255
  %v5257 = vand.u32 %v5057, 4294901760
  %v5258 = vsub.f32 %v5057, %v5257
  %5259 = vmatmul.f32.gmra.mxu0 %v5258
  %v5260 = vpop.f32.mrf.mxu0
  %v5261 = vadd.f32 %v5204, %v5260
  %v5262 = vand.u32 %v5060, 4294901760
  %v5263 = vsub.f32 %v5060, %v5262
  %5264 = vmatmul.f32.gmra.mxu0 %v5263
  %v5265 = vpop.f32.mrf.mxu0
  %v5266 = vadd.f32 %v5208, %v5265
  %5267 = vdwg.mxu0
  %5268 = vmatpush.msra.mxu0 0.0
  %5269 = vmatpush.msra.mxu0 0.0
  %5270 = vmatpush.msra.mxu0 0.0
  %v5271 = vand.u32 %v1735, 4294901760
  %5272 = vmatpush.msra.mxu0 %v5271
  %v5273 = vand.u32 %v1731, 4294901760
  %5274 = vmatpush.msra.mxu0 %v5273
  %v5275 = vand.u32 %v1727, 4294901760
  %5276 = vmatpush.msra.mxu0 %v5275
  %v5277 = vand.u32 %v1723, 4294901760
  %5278 = vmatpush.msra.mxu0 %v5277
  %v5279 = vand.u32 %v1719, 4294901760
  %5280 = vmatpush.msra.mxu0 %v5279
  %v5281 = vand.u32 %v1715, 4294901760
  %5282 = vmatpush.msra.mxu0 %v5281
  %v5283 = vand.u32 %v1711, 4294901760
  %5284 = vmatpush.msra.mxu0 %v5283
  %v5285 = vand.u32 %v1707, 4294901760
  %5286 = vmatpush.msra.mxu0 %v5285
  %v5287 = vand.u32 %v1703, 4294901760
  %5288 = vmatpush.msra.mxu0 %v5287
  %v5289 = vand.u32 %v1699, 4294901760
  %5290 = vmatpush.msra.mxu0 %v5289
  %v5291 = vand.u32 %v1695, 4294901760
  %5292 = vmatpush.msra.mxu0 %v5291
  %v5293 = vand.u32 %v1691, 4294901760
  %5294 = vmatpush.msra.mxu0 %v5293
  %v5295 = vand.u32 %v1687, 4294901760
  %5296 = vmatpush.msra.mxu0 %v5295
  %v5297 = vand.u32 %v5054, 4294901760
  %v5298 = vsub.f32 %v5054, %v5297
  %v5299 = vand.u32 %v5298, 4294901760
  %5300 = vmatmul.f32.gmra.mxu0 %v5299
  %v5301 = vpop.f32.mrf.mxu0
  %v5302 = vadd.f32 %v5256, %v5301
  %v5303 = vand.u32 %v5057, 4294901760
  %v5304 = vsub.f32 %v5057, %v5303
  %v5305 = vand.u32 %v5304, 4294901760
  %5306 = vmatmul.f32.gmra.mxu0 %v5305
  %v5307 = vpop.f32.mrf.mxu0
  %v5308 = vadd.f32 %v5261, %v5307
  %v5309 = vand.u32 %v5060, 4294901760
  %v5310 = vsub.f32 %v5060, %v5309
  %v5311 = vand.u32 %v5310, 4294901760
  %5312 = vmatmul.f32.gmra.mxu0 %v5311
  %v5313 = vpop.f32.mrf.mxu0
  %v5314 = vadd.f32 %v5266, %v5313
  %5315 = vdwg.mxu0
  %5316 = vmatpush.msra.mxu0 0.0
  %5317 = vmatpush.msra.mxu0 0.0
  %5318 = vmatpush.msra.mxu0 0.0
  %v5319 = vand.u32 %v1735, 4294901760
  %v5320 = vsub.f32 %v1735, %v5319
  %v5321 = vand.u32 %v5320, 4294901760
  %5322 = vmatpush.msra.mxu0 %v5321
  %v5323 = vand.u32 %v1731, 4294901760
  %v5324 = vsub.f32 %v1731, %v5323
  %v5325 = vand.u32 %v5324, 4294901760
  %5326 = vmatpush.msra.mxu0 %v5325
  %v5327 = vand.u32 %v1727, 4294901760
  %v5328 = vsub.f32 %v1727, %v5327
  %v5329 = vand.u32 %v5328, 4294901760
  %5330 = vmatpush.msra.mxu0 %v5329
  %v5331 = vand.u32 %v1723, 4294901760
  %v5332 = vsub.f32 %v1723, %v5331
  %v5333 = vand.u32 %v5332, 4294901760
  %5334 = vmatpush.msra.mxu0 %v5333
  %v5335 = vand.u32 %v1719, 4294901760
  %v5336 = vsub.f32 %v1719, %v5335
  %v5337 = vand.u32 %v5336, 4294901760
  %5338 = vmatpush.msra.mxu0 %v5337
  %v5339 = vand.u32 %v1715, 4294901760
  %v5340 = vsub.f32 %v1715, %v5339
  %v5341 = vand.u32 %v5340, 4294901760
  %5342 = vmatpush.msra.mxu0 %v5341
  %v5343 = vand.u32 %v1711, 4294901760
  %v5344 = vsub.f32 %v1711, %v5343
  %v5345 = vand.u32 %v5344, 4294901760
  %5346 = vmatpush.msra.mxu0 %v5345
  %v5347 = vand.u32 %v1707, 4294901760
  %v5348 = vsub.f32 %v1707, %v5347
  %v5349 = vand.u32 %v5348, 4294901760
  %5350 = vmatpush.msra.mxu0 %v5349
  %v5351 = vand.u32 %v1703, 4294901760
  %v5352 = vsub.f32 %v1703, %v5351
  %v5353 = vand.u32 %v5352, 4294901760
  %5354 = vmatpush.msra.mxu0 %v5353
  %v5355 = vand.u32 %v1699, 4294901760
  %v5356 = vsub.f32 %v1699, %v5355
  %v5357 = vand.u32 %v5356, 4294901760
  %5358 = vmatpush.msra.mxu0 %v5357
  %v5359 = vand.u32 %v1695, 4294901760
  %v5360 = vsub.f32 %v1695, %v5359
  %v5361 = vand.u32 %v5360, 4294901760
  %5362 = vmatpush.msra.mxu0 %v5361
  %v5363 = vand.u32 %v1691, 4294901760
  %v5364 = vsub.f32 %v1691, %v5363
  %v5365 = vand.u32 %v5364, 4294901760
  %5366 = vmatpush.msra.mxu0 %v5365
  %v5367 = vand.u32 %v1687, 4294901760
  %v5368 = vsub.f32 %v1687, %v5367
  %v5369 = vand.u32 %v5368, 4294901760
  %5370 = vmatpush.msra.mxu0 %v5369
  %v5371 = vand.u32 %v5054, 4294901760
  %5372 = vmatmul.f32.gmra.mxu0 %v5371
  %v5373 = vpop.f32.mrf.mxu0
  %v5374 = vadd.f32 %v5302, %v5373
  %v5375 = vand.u32 %v5057, 4294901760
  %5376 = vmatmul.f32.gmra.mxu0 %v5375
  %v5377 = vpop.f32.mrf.mxu0
  %v5378 = vadd.f32 %v5308, %v5377
  %v5379 = vand.u32 %v5060, 4294901760
  %5380 = vmatmul.f32.gmra.mxu0 %v5379
  %v5381 = vpop.f32.mrf.mxu0
  %v5382 = vadd.f32 %v5314, %v5381
  %5383 = vdwg.mxu0
  %5384 = vmatpush.msra.mxu0 0.0
  %5385 = vmatpush.msra.mxu0 0.0
  %5386 = vmatpush.msra.mxu0 0.0
  %v5387 = vand.u32 %v1735, 4294901760
  %5388 = vmatpush.msra.mxu0 %v5387
  %v5389 = vand.u32 %v1731, 4294901760
  %5390 = vmatpush.msra.mxu0 %v5389
  %v5391 = vand.u32 %v1727, 4294901760
  %5392 = vmatpush.msra.mxu0 %v5391
  %v5393 = vand.u32 %v1723, 4294901760
  %5394 = vmatpush.msra.mxu0 %v5393
  %v5395 = vand.u32 %v1719, 4294901760
  %5396 = vmatpush.msra.mxu0 %v5395
  %v5397 = vand.u32 %v1715, 4294901760
  %5398 = vmatpush.msra.mxu0 %v5397
  %v5399 = vand.u32 %v1711, 4294901760
  %5400 = vmatpush.msra.mxu0 %v5399
  %v5401 = vand.u32 %v1707, 4294901760
  %5402 = vmatpush.msra.mxu0 %v5401
  %v5403 = vand.u32 %v1703, 4294901760
  %5404 = vmatpush.msra.mxu0 %v5403
  %v5405 = vand.u32 %v1699, 4294901760
  %5406 = vmatpush.msra.mxu0 %v5405
  %v5407 = vand.u32 %v1695, 4294901760
  %5408 = vmatpush.msra.mxu0 %v5407
  %v5409 = vand.u32 %v1691, 4294901760
  %5410 = vmatpush.msra.mxu0 %v5409
  %v5411 = vand.u32 %v1687, 4294901760
  %5412 = vmatpush.msra.mxu0 %v5411
  %v5413 = vand.u32 %v5054, 4294901760
  %5414 = vmatmul.f32.gmra.mxu0 %v5413
  %v5415 = vpop.f32.mrf.mxu0
  %v5416 = vadd.f32 %v5374, %v5415
  %v5417 = vand.u32 %v5057, 4294901760
  %5418 = vmatmul.f32.gmra.mxu0 %v5417
  %v5419 = vpop.f32.mrf.mxu0
  %v5420 = vadd.f32 %v5378, %v5419
  %v5421 = vand.u32 %v5060, 4294901760
  %5422 = vmatmul.f32.gmra.mxu0 %v5421
  %v5423 = vpop.f32.mrf.mxu0
  %v5424 = vadd.f32 %v5382, %v5423
  %5425 = vdwg.mxu0
  %v5426 = vadd.f32 %v5047, %v5416
  %v5427 = vadd.f32 %v5048, %v5420
  %v5428 = vadd.f32 %v5049, %v5424
  %v5429 = vperm.slane %v11, 1
  %v5430 = vadd.f32 %v5426, %v5429
  %v5431 = vadd.f32 %v5427, %v5429
  %v5432 = vadd.f32 %v5428, %v5429
  %v5433 = vmax.f32 %v5430, 0.0
  %v5434 = vmax.f32 %v5431, 0.0
  %v5435 = vmax.f32 %v5432, 0.0
  %v5436 = vld [vmem:[%s0 + $0x90] sm:$0xff]
  %v5437 = vld [vmem:[%s0 + $0x98] sm:$0xff]
  %v5438 = vld [vmem:[%s0 + $0xa0] sm:$0xff]
  %v5439 = vld [vmem:[%s0 + $0xa8] sm:$0xff]
  %v5440 = vld [vmem:[%s0 + $0xb0] sm:$0xff]
  %v5441 = vld [vmem:[%s0 + $0xb8] sm:$0xff]
  %vm5442 = vcmask 130048
  %v5444 = vsel %vm5442, %v5433, 0
  %v5447 = vsel %vm5442, %v5434, 0
  %v5450 = vsel %vm5442, %v5435, 0
  %5452 = vmatpush.msra.mxu0 0.0
  %5453 = vmatpush.msra.mxu0 0.0
  %5454 = vmatpush.msra.mxu0 0.0
  %5455 = vmatpush.msra.mxu0 0.0
  %5456 = vmatpush.msra.mxu0 0.0
  %5457 = vmatpush.msra.mxu0 0.0
  %5458 = vmatpush.msra.mxu0 0.0
  %5459 = vmatpush.msra.mxu0 0.0
  %5460 = vmatpush.msra.mxu0 0.0
  %5461 = vmatpush.msra.mxu0 0.0
  %5462 = vmatpush.msra.mxu0 0.0
  %5463 = vmatpush.msra.mxu0 0.0
  %5464 = vmatpush.msra.mxu0 0.0
  %5465 = vmatpush.msra.mxu0 0.0
  %v5466 = vand.u32 %v5439, 4294901760
  %5467 = vmatpush.msra.mxu0 %v5466
  %v5468 = vand.u32 %v5436, 4294901760
  %5469 = vmatpush.msra.mxu0 %v5468
  %v5470 = vand.u32 %v5444, 4294901760
  %v5471 = vsub.f32 %v5444, %v5470
  %v5472 = vand.u32 %v5471, 4294901760
  %v5473 = vsub.f32 %v5471, %v5472
  %v5474 = vand.u32 %v5473, 4294901760
  %5475 = vmatmul.f32.gmra.mxu0 %v5474
  %v5476 = vpop.f32.mrf.mxu0
  %v5477 = vadd.f32 0.0, %v5476
  %v5478 = vand.u32 %v5447, 4294901760
  %v5479 = vsub.f32 %v5447, %v5478
  %v5480 = vand.u32 %v5479, 4294901760
  %v5481 = vsub.f32 %v5479, %v5480
  %v5482 = vand.u32 %v5481, 4294901760
  %5483 = vmatmul.f32.gmra.mxu0 %v5482
  %v5484 = vpop.f32.mrf.mxu0
  %v5485 = vadd.f32 0.0, %v5484
  %v5486 = vand.u32 %v5450, 4294901760
  %v5487 = vsub.f32 %v5450, %v5486
  %v5488 = vand.u32 %v5487, 4294901760
  %v5489 = vsub.f32 %v5487, %v5488
  %v5490 = vand.u32 %v5489, 4294901760
  %5491 = vmatmul.f32.gmra.mxu0 %v5490
  %v5492 = vpop.f32.mrf.mxu0
  %v5493 = vadd.f32 0.0, %v5492
  %5494 = vdwg.mxu0
  %5495 = vmatpush.msra.mxu0 0.0
  %5496 = vmatpush.msra.mxu0 0.0
  %5497 = vmatpush.msra.mxu0 0.0
  %5498 = vmatpush.msra.mxu0 0.0
  %5499 = vmatpush.msra.mxu0 0.0
  %5500 = vmatpush.msra.mxu0 0.0
  %5501 = vmatpush.msra.mxu0 0.0
  %5502 = vmatpush.msra.mxu0 0.0
  %5503 = vmatpush.msra.mxu0 0.0
  %5504 = vmatpush.msra.mxu0 0.0
  %5505 = vmatpush.msra.mxu0 0.0
  %5506 = vmatpush.msra.mxu0 0.0
  %5507 = vmatpush.msra.mxu0 0.0
  %5508 = vmatpush.msra.mxu0 0.0
  %v5509 = vand.u32 %v5439, 4294901760
  %v5510 = vsub.f32 %v5439, %v5509
  %v5511 = vand.u32 %v5510, 4294901760
  %v5512 = vsub.f32 %v5510, %v5511
  %v5513 = vand.u32 %v5512, 4294901760
  %5514 = vmatpush.msra.mxu0 %v5513
  %v5515 = vand.u32 %v5436, 4294901760
  %v5516 = vsub.f32 %v5436, %v5515
  %v5517 = vand.u32 %v5516, 4294901760
  %v5518 = vsub.f32 %v5516, %v5517
  %v5519 = vand.u32 %v5518, 4294901760
  %5520 = vmatpush.msra.mxu0 %v5519
  %v5521 = vand.u32 %v5444, 4294901760
  %5522 = vmatmul.f32.gmra.mxu0 %v5521
  %v5523 = vpop.f32.mrf.mxu0
  %v5524 = vadd.f32 %v5477, %v5523
  %v5525 = vand.u32 %v5447, 4294901760
  %5526 = vmatmul.f32.gmra.mxu0 %v5525
  %v5527 = vpop.f32.mrf.mxu0
  %v5528 = vadd.f32 %v5485, %v5527
  %v5529 = vand.u32 %v5450, 4294901760
  %5530 = vmatmul.f32.gmra.mxu0 %v5529
  %v5531 = vpop.f32.mrf.mxu0
  %v5532 = vadd.f32 %v5493, %v5531
  %5533 = vdwg.mxu0
  %5534 = vmatpush.msra.mxu0 0.0
  %5535 = vmatpush.msra.mxu0 0.0
  %5536 = vmatpush.msra.mxu0 0.0
  %5537 = vmatpush.msra.mxu0 0.0
  %5538 = vmatpush.msra.mxu0 0.0
  %5539 = vmatpush.msra.mxu0 0.0
  %5540 = vmatpush.msra.mxu0 0.0
  %5541 = vmatpush.msra.mxu0 0.0
  %5542 = vmatpush.msra.mxu0 0.0
  %5543 = vmatpush.msra.mxu0 0.0
  %5544 = vmatpush.msra.mxu0 0.0
  %5545 = vmatpush.msra.mxu0 0.0
  %5546 = vmatpush.msra.mxu0 0.0
  %5547 = vmatpush.msra.mxu0 0.0
  %v5548 = vand.u32 %v5439, 4294901760
  %v5549 = vsub.f32 %v5439, %v5548
  %5550 = vmatpush.msra.mxu0 %v5549
  %v5551 = vand.u32 %v5436, 4294901760
  %v5552 = vsub.f32 %v5436, %v5551
  %5553 = vmatpush.msra.mxu0 %v5552
  %v5554 = vand.u32 %v5444, 4294901760
  %v5555 = vsub.f32 %v5444, %v5554
  %5556 = vmatmul.f32.gmra.mxu0 %v5555
  %v5557 = vpop.f32.mrf.mxu0
  %v5558 = vadd.f32 %v5524, %v5557
  %v5559 = vand.u32 %v5447, 4294901760
  %v5560 = vsub.f32 %v5447, %v5559
  %5561 = vmatmul.f32.gmra.mxu0 %v5560
  %v5562 = vpop.f32.mrf.mxu0
  %v5563 = vadd.f32 %v5528, %v5562
  %v5564 = vand.u32 %v5450, 4294901760
  %v5565 = vsub.f32 %v5450, %v5564
  %5566 = vmatmul.f32.gmra.mxu0 %v5565
  %v5567 = vpop.f32.mrf.mxu0
  %v5568 = vadd.f32 %v5532, %v5567
  %5569 = vdwg.mxu0
  %5570 = vmatpush.msra.mxu0 0.0
  %5571 = vmatpush.msra.mxu0 0.0
  %5572 = vmatpush.msra.mxu0 0.0
  %5573 = vmatpush.msra.mxu0 0.0
  %5574 = vmatpush.msra.mxu0 0.0
  %5575 = vmatpush.msra.mxu0 0.0
  %5576 = vmatpush.msra.mxu0 0.0
  %5577 = vmatpush.msra.mxu0 0.0
  %5578 = vmatpush.msra.mxu0 0.0
  %5579 = vmatpush.msra.mxu0 0.0
  %5580 = vmatpush.msra.mxu0 0.0
  %5581 = vmatpush.msra.mxu0 0.0
  %5582 = vmatpush.msra.mxu0 0.0
  %5583 = vmatpush.msra.mxu0 0.0
  %v5584 = vand.u32 %v5439, 4294901760
  %5585 = vmatpush.msra.mxu0 %v5584
  %v5586 = vand.u32 %v5436, 4294901760
  %5587 = vmatpush.msra.mxu0 %v5586
  %v5588 = vand.u32 %v5444, 4294901760
  %v5589 = vsub.f32 %v5444, %v5588
  %v5590 = vand.u32 %v5589, 4294901760
  %5591 = vmatmul.f32.gmra.mxu0 %v5590
  %v5592 = vpop.f32.mrf.mxu0
  %v5593 = vadd.f32 %v5558, %v5592
  %v5594 = vand.u32 %v5447, 4294901760
  %v5595 = vsub.f32 %v5447, %v5594
  %v5596 = vand.u32 %v5595, 4294901760
  %5597 = vmatmul.f32.gmra.mxu0 %v5596
  %v5598 = vpop.f32.mrf.mxu0
  %v5599 = vadd.f32 %v5563, %v5598
  %v5600 = vand.u32 %v5450, 4294901760
  %v5601 = vsub.f32 %v5450, %v5600
  %v5602 = vand.u32 %v5601, 4294901760
  %5603 = vmatmul.f32.gmra.mxu0 %v5602
  %v5604 = vpop.f32.mrf.mxu0
  %v5605 = vadd.f32 %v5568, %v5604
  %5606 = vdwg.mxu0
  %5607 = vmatpush.msra.mxu0 0.0
  %5608 = vmatpush.msra.mxu0 0.0
  %5609 = vmatpush.msra.mxu0 0.0
  %5610 = vmatpush.msra.mxu0 0.0
  %5611 = vmatpush.msra.mxu0 0.0
  %5612 = vmatpush.msra.mxu0 0.0
  %5613 = vmatpush.msra.mxu0 0.0
  %5614 = vmatpush.msra.mxu0 0.0
  %5615 = vmatpush.msra.mxu0 0.0
  %5616 = vmatpush.msra.mxu0 0.0
  %5617 = vmatpush.msra.mxu0 0.0
  %5618 = vmatpush.msra.mxu0 0.0
  %5619 = vmatpush.msra.mxu0 0.0
  %5620 = vmatpush.msra.mxu0 0.0
  %v5621 = vand.u32 %v5439, 4294901760
  %v5622 = vsub.f32 %v5439, %v5621
  %v5623 = vand.u32 %v5622, 4294901760
  %5624 = vmatpush.msra.mxu0 %v5623
  %v5625 = vand.u32 %v5436, 4294901760
  %v5626 = vsub.f32 %v5436, %v5625
  %v5627 = vand.u32 %v5626, 4294901760
  %5628 = vmatpush.msra.mxu0 %v5627
  %v5629 = vand.u32 %v5444, 4294901760
  %5630 = vmatmul.f32.gmra.mxu0 %v5629
  %v5631 = vpop.f32.mrf.mxu0
  %v5632 = vadd.f32 %v5593, %v5631
  %v5633 = vand.u32 %v5447, 4294901760
  %5634 = vmatmul.f32.gmra.mxu0 %v5633
  %v5635 = vpop.f32.mrf.mxu0
  %v5636 = vadd.f32 %v5599, %v5635
  %v5637 = vand.u32 %v5450, 4294901760
  %5638 = vmatmul.f32.gmra.mxu0 %v5637
  %v5639 = vpop.f32.mrf.mxu0
  %v5640 = vadd.f32 %v5605, %v5639
  %5641 = vdwg.mxu0
  %5642 = vmatpush.msra.mxu0 0.0
  %5643 = vmatpush.msra.mxu0 0.0
  %5644 = vmatpush.msra.mxu0 0.0
  %5645 = vmatpush.msra.mxu0 0.0
  %5646 = vmatpush.msra.mxu0 0.0
  %5647 = vmatpush.msra.mxu0 0.0
  %5648 = vmatpush.msra.mxu0 0.0
  %5649 = vmatpush.msra.mxu0 0.0
  %5650 = vmatpush.msra.mxu0 0.0
  %5651 = vmatpush.msra.mxu0 0.0
  %5652 = vmatpush.msra.mxu0 0.0
  %5653 = vmatpush.msra.mxu0 0.0
  %5654 = vmatpush.msra.mxu0 0.0
  %5655 = vmatpush.msra.mxu0 0.0
  %v5656 = vand.u32 %v5439, 4294901760
  %5657 = vmatpush.msra.mxu0 %v5656
  %v5658 = vand.u32 %v5436, 4294901760
  %5659 = vmatpush.msra.mxu0 %v5658
  %v5660 = vand.u32 %v5444, 4294901760
  %5661 = vmatmul.f32.gmra.mxu0 %v5660
  %v5662 = vpop.f32.mrf.mxu0
  %v5663 = vadd.f32 %v5632, %v5662
  %v5664 = vand.u32 %v5447, 4294901760
  %5665 = vmatmul.f32.gmra.mxu0 %v5664
  %v5666 = vpop.f32.mrf.mxu0
  %v5667 = vadd.f32 %v5636, %v5666
  %v5668 = vand.u32 %v5450, 4294901760
  %5669 = vmatmul.f32.gmra.mxu0 %v5668
  %v5670 = vpop.f32.mrf.mxu0
  %v5671 = vadd.f32 %v5640, %v5670
  %5672 = vdwg.mxu0
  %5673 = vmatpush.msra.mxu0 0.0
  %5674 = vmatpush.msra.mxu0 0.0
  %5675 = vmatpush.msra.mxu0 0.0
  %5676 = vmatpush.msra.mxu0 0.0
  %5677 = vmatpush.msra.mxu0 0.0
  %5678 = vmatpush.msra.mxu0 0.0
  %5679 = vmatpush.msra.mxu0 0.0
  %5680 = vmatpush.msra.mxu0 0.0
  %5681 = vmatpush.msra.mxu0 0.0
  %5682 = vmatpush.msra.mxu0 0.0
  %5683 = vmatpush.msra.mxu0 0.0
  %5684 = vmatpush.msra.mxu0 0.0
  %5685 = vmatpush.msra.mxu0 0.0
  %5686 = vmatpush.msra.mxu0 0.0
  %v5687 = vand.u32 %v5440, 4294901760
  %5688 = vmatpush.msra.mxu0 %v5687
  %v5689 = vand.u32 %v5437, 4294901760
  %5690 = vmatpush.msra.mxu0 %v5689
  %v5691 = vand.u32 %v5444, 4294901760
  %v5692 = vsub.f32 %v5444, %v5691
  %v5693 = vand.u32 %v5692, 4294901760
  %v5694 = vsub.f32 %v5692, %v5693
  %v5695 = vand.u32 %v5694, 4294901760
  %5696 = vmatmul.f32.gmra.mxu0 %v5695
  %v5697 = vpop.f32.mrf.mxu0
  %v5698 = vadd.f32 0.0, %v5697
  %v5699 = vand.u32 %v5447, 4294901760
  %v5700 = vsub.f32 %v5447, %v5699
  %v5701 = vand.u32 %v5700, 4294901760
  %v5702 = vsub.f32 %v5700, %v5701
  %v5703 = vand.u32 %v5702, 4294901760
  %5704 = vmatmul.f32.gmra.mxu0 %v5703
  %v5705 = vpop.f32.mrf.mxu0
  %v5706 = vadd.f32 0.0, %v5705
  %v5707 = vand.u32 %v5450, 4294901760
  %v5708 = vsub.f32 %v5450, %v5707
  %v5709 = vand.u32 %v5708, 4294901760
  %v5710 = vsub.f32 %v5708, %v5709
  %v5711 = vand.u32 %v5710, 4294901760
  %5712 = vmatmul.f32.gmra.mxu0 %v5711
  %v5713 = vpop.f32.mrf.mxu0
  %v5714 = vadd.f32 0.0, %v5713
  %5715 = vdwg.mxu0
  %5716 = vmatpush.msra.mxu0 0.0
  %5717 = vmatpush.msra.mxu0 0.0
  %5718 = vmatpush.msra.mxu0 0.0
  %5719 = vmatpush.msra.mxu0 0.0
  %5720 = vmatpush.msra.mxu0 0.0
  %5721 = vmatpush.msra.mxu0 0.0
  %5722 = vmatpush.msra.mxu0 0.0
  %5723 = vmatpush.msra.mxu0 0.0
  %5724 = vmatpush.msra.mxu0 0.0
  %5725 = vmatpush.msra.mxu0 0.0
  %5726 = vmatpush.msra.mxu0 0.0
  %5727 = vmatpush.msra.mxu0 0.0
  %5728 = vmatpush.msra.mxu0 0.0
  %5729 = vmatpush.msra.mxu0 0.0
  %v5730 = vand.u32 %v5440, 4294901760
  %v5731 = vsub.f32 %v5440, %v5730
  %v5732 = vand.u32 %v5731, 4294901760
  %v5733 = vsub.f32 %v5731, %v5732
  %v5734 = vand.u32 %v5733, 4294901760
  %5735 = vmatpush.msra.mxu0 %v5734
  %v5736 = vand.u32 %v5437, 4294901760
  %v5737 = vsub.f32 %v5437, %v5736
  %v5738 = vand.u32 %v5737, 4294901760
  %v5739 = vsub.f32 %v5737, %v5738
  %v5740 = vand.u32 %v5739, 4294901760
  %5741 = vmatpush.msra.mxu0 %v5740
  %v5742 = vand.u32 %v5444, 4294901760
  %5743 = vmatmul.f32.gmra.mxu0 %v5742
  %v5744 = vpop.f32.mrf.mxu0
  %v5745 = vadd.f32 %v5698, %v5744
  %v5746 = vand.u32 %v5447, 4294901760
  %5747 = vmatmul.f32.gmra.mxu0 %v5746
  %v5748 = vpop.f32.mrf.mxu0
  %v5749 = vadd.f32 %v5706, %v5748
  %v5750 = vand.u32 %v5450, 4294901760
  %5751 = vmatmul.f32.gmra.mxu0 %v5750
  %v5752 = vpop.f32.mrf.mxu0
  %v5753 = vadd.f32 %v5714, %v5752
  %5754 = vdwg.mxu0
  %5755 = vmatpush.msra.mxu0 0.0
  %5756 = vmatpush.msra.mxu0 0.0
  %5757 = vmatpush.msra.mxu0 0.0
  %5758 = vmatpush.msra.mxu0 0.0
  %5759 = vmatpush.msra.mxu0 0.0
  %5760 = vmatpush.msra.mxu0 0.0
  %5761 = vmatpush.msra.mxu0 0.0
  %5762 = vmatpush.msra.mxu0 0.0
  %5763 = vmatpush.msra.mxu0 0.0
  %5764 = vmatpush.msra.mxu0 0.0
  %5765 = vmatpush.msra.mxu0 0.0
  %5766 = vmatpush.msra.mxu0 0.0
  %5767 = vmatpush.msra.mxu0 0.0
  %5768 = vmatpush.msra.mxu0 0.0
  %v5769 = vand.u32 %v5440, 4294901760
  %v5770 = vsub.f32 %v5440, %v5769
  %5771 = vmatpush.msra.mxu0 %v5770
  %v5772 = vand.u32 %v5437, 4294901760
  %v5773 = vsub.f32 %v5437, %v5772
  %5774 = vmatpush.msra.mxu0 %v5773
  %v5775 = vand.u32 %v5444, 4294901760
  %v5776 = vsub.f32 %v5444, %v5775
  %5777 = vmatmul.f32.gmra.mxu0 %v5776
  %v5778 = vpop.f32.mrf.mxu0
  %v5779 = vadd.f32 %v5745, %v5778
  %v5780 = vand.u32 %v5447, 4294901760
  %v5781 = vsub.f32 %v5447, %v5780
  %5782 = vmatmul.f32.gmra.mxu0 %v5781
  %v5783 = vpop.f32.mrf.mxu0
  %v5784 = vadd.f32 %v5749, %v5783
  %v5785 = vand.u32 %v5450, 4294901760
  %v5786 = vsub.f32 %v5450, %v5785
  %5787 = vmatmul.f32.gmra.mxu0 %v5786
  %v5788 = vpop.f32.mrf.mxu0
  %v5789 = vadd.f32 %v5753, %v5788
  %5790 = vdwg.mxu0
  %5791 = vmatpush.msra.mxu0 0.0
  %5792 = vmatpush.msra.mxu0 0.0
  %5793 = vmatpush.msra.mxu0 0.0
  %5794 = vmatpush.msra.mxu0 0.0
  %5795 = vmatpush.msra.mxu0 0.0
  %5796 = vmatpush.msra.mxu0 0.0
  %5797 = vmatpush.msra.mxu0 0.0
  %5798 = vmatpush.msra.mxu0 0.0
  %5799 = vmatpush.msra.mxu0 0.0
  %5800 = vmatpush.msra.mxu0 0.0
  %5801 = vmatpush.msra.mxu0 0.0
  %5802 = vmatpush.msra.mxu0 0.0
  %5803 = vmatpush.msra.mxu0 0.0
  %5804 = vmatpush.msra.mxu0 0.0
  %v5805 = vand.u32 %v5440, 4294901760
  %5806 = vmatpush.msra.mxu0 %v5805
  %v5807 = vand.u32 %v5437, 4294901760
  %5808 = vmatpush.msra.mxu0 %v5807
  %v5809 = vand.u32 %v5444, 4294901760
  %v5810 = vsub.f32 %v5444, %v5809
  %v5811 = vand.u32 %v5810, 4294901760
  %5812 = vmatmul.f32.gmra.mxu0 %v5811
  %v5813 = vpop.f32.mrf.mxu0
  %v5814 = vadd.f32 %v5779, %v5813
  %v5815 = vand.u32 %v5447, 4294901760
  %v5816 = vsub.f32 %v5447, %v5815
  %v5817 = vand.u32 %v5816, 4294901760
  %5818 = vmatmul.f32.gmra.mxu0 %v5817
  %v5819 = vpop.f32.mrf.mxu0
  %v5820 = vadd.f32 %v5784, %v5819
  %v5821 = vand.u32 %v5450, 4294901760
  %v5822 = vsub.f32 %v5450, %v5821
  %v5823 = vand.u32 %v5822, 4294901760
  %5824 = vmatmul.f32.gmra.mxu0 %v5823
  %v5825 = vpop.f32.mrf.mxu0
  %v5826 = vadd.f32 %v5789, %v5825
  %5827 = vdwg.mxu0
  %5828 = vmatpush.msra.mxu0 0.0
  %5829 = vmatpush.msra.mxu0 0.0
  %5830 = vmatpush.msra.mxu0 0.0
  %5831 = vmatpush.msra.mxu0 0.0
  %5832 = vmatpush.msra.mxu0 0.0
  %5833 = vmatpush.msra.mxu0 0.0
  %5834 = vmatpush.msra.mxu0 0.0
  %5835 = vmatpush.msra.mxu0 0.0
  %5836 = vmatpush.msra.mxu0 0.0
  %5837 = vmatpush.msra.mxu0 0.0
  %5838 = vmatpush.msra.mxu0 0.0
  %5839 = vmatpush.msra.mxu0 0.0
  %5840 = vmatpush.msra.mxu0 0.0
  %5841 = vmatpush.msra.mxu0 0.0
  %v5842 = vand.u32 %v5440, 4294901760
  %v5843 = vsub.f32 %v5440, %v5842
  %v5844 = vand.u32 %v5843, 4294901760
  %5845 = vmatpush.msra.mxu0 %v5844
  %v5846 = vand.u32 %v5437, 4294901760
  %v5847 = vsub.f32 %v5437, %v5846
  %v5848 = vand.u32 %v5847, 4294901760
  %5849 = vmatpush.msra.mxu0 %v5848
  %v5850 = vand.u32 %v5444, 4294901760
  %5851 = vmatmul.f32.gmra.mxu0 %v5850
  %v5852 = vpop.f32.mrf.mxu0
  %v5853 = vadd.f32 %v5814, %v5852
  %v5854 = vand.u32 %v5447, 4294901760
  %5855 = vmatmul.f32.gmra.mxu0 %v5854
  %v5856 = vpop.f32.mrf.mxu0
  %v5857 = vadd.f32 %v5820, %v5856
  %v5858 = vand.u32 %v5450, 4294901760
  %5859 = vmatmul.f32.gmra.mxu0 %v5858
  %v5860 = vpop.f32.mrf.mxu0
  %v5861 = vadd.f32 %v5826, %v5860
  %5862 = vdwg.mxu0
  %5863 = vmatpush.msra.mxu0 0.0
  %5864 = vmatpush.msra.mxu0 0.0
  %5865 = vmatpush.msra.mxu0 0.0
  %5866 = vmatpush.msra.mxu0 0.0
  %5867 = vmatpush.msra.mxu0 0.0
  %5868 = vmatpush.msra.mxu0 0.0
  %5869 = vmatpush.msra.mxu0 0.0
  %5870 = vmatpush.msra.mxu0 0.0
  %5871 = vmatpush.msra.mxu0 0.0
  %5872 = vmatpush.msra.mxu0 0.0
  %5873 = vmatpush.msra.mxu0 0.0
  %5874 = vmatpush.msra.mxu0 0.0
  %5875 = vmatpush.msra.mxu0 0.0
  %5876 = vmatpush.msra.mxu0 0.0
  %v5877 = vand.u32 %v5440, 4294901760
  %5878 = vmatpush.msra.mxu0 %v5877
  %v5879 = vand.u32 %v5437, 4294901760
  %5880 = vmatpush.msra.mxu0 %v5879
  %v5881 = vand.u32 %v5444, 4294901760
  %5882 = vmatmul.f32.gmra.mxu0 %v5881
  %v5883 = vpop.f32.mrf.mxu0
  %v5884 = vadd.f32 %v5853, %v5883
  %v5885 = vand.u32 %v5447, 4294901760
  %5886 = vmatmul.f32.gmra.mxu0 %v5885
  %v5887 = vpop.f32.mrf.mxu0
  %v5888 = vadd.f32 %v5857, %v5887
  %v5889 = vand.u32 %v5450, 4294901760
  %5890 = vmatmul.f32.gmra.mxu0 %v5889
  %v5891 = vpop.f32.mrf.mxu0
  %v5892 = vadd.f32 %v5861, %v5891
  %5893 = vdwg.mxu0
  %5894 = vmatpush.msra.mxu0 0.0
  %5895 = vmatpush.msra.mxu0 0.0
  %5896 = vmatpush.msra.mxu0 0.0
  %5897 = vmatpush.msra.mxu0 0.0
  %5898 = vmatpush.msra.mxu0 0.0
  %5899 = vmatpush.msra.mxu0 0.0
  %5900 = vmatpush.msra.mxu0 0.0
  %5901 = vmatpush.msra.mxu0 0.0
  %5902 = vmatpush.msra.mxu0 0.0
  %5903 = vmatpush.msra.mxu0 0.0
  %5904 = vmatpush.msra.mxu0 0.0
  %5905 = vmatpush.msra.mxu0 0.0
  %5906 = vmatpush.msra.mxu0 0.0
  %5907 = vmatpush.msra.mxu0 0.0
  %v5908 = vand.u32 %v5441, 4294901760
  %5909 = vmatpush.msra.mxu0 %v5908
  %v5910 = vand.u32 %v5438, 4294901760
  %5911 = vmatpush.msra.mxu0 %v5910
  %v5912 = vand.u32 %v5444, 4294901760
  %v5913 = vsub.f32 %v5444, %v5912
  %v5914 = vand.u32 %v5913, 4294901760
  %v5915 = vsub.f32 %v5913, %v5914
  %v5916 = vand.u32 %v5915, 4294901760
  %5917 = vmatmul.f32.gmra.mxu0 %v5916
  %v5918 = vpop.f32.mrf.mxu0
  %v5919 = vadd.f32 0.0, %v5918
  %v5920 = vand.u32 %v5447, 4294901760
  %v5921 = vsub.f32 %v5447, %v5920
  %v5922 = vand.u32 %v5921, 4294901760
  %v5923 = vsub.f32 %v5921, %v5922
  %v5924 = vand.u32 %v5923, 4294901760
  %5925 = vmatmul.f32.gmra.mxu0 %v5924
  %v5926 = vpop.f32.mrf.mxu0
  %v5927 = vadd.f32 0.0, %v5926
  %v5928 = vand.u32 %v5450, 4294901760
  %v5929 = vsub.f32 %v5450, %v5928
  %v5930 = vand.u32 %v5929, 4294901760
  %v5931 = vsub.f32 %v5929, %v5930
  %v5932 = vand.u32 %v5931, 4294901760
  %5933 = vmatmul.f32.gmra.mxu0 %v5932
  %v5934 = vpop.f32.mrf.mxu0
  %v5935 = vadd.f32 0.0, %v5934
  %5936 = vdwg.mxu0
  %5937 = vmatpush.msra.mxu0 0.0
  %5938 = vmatpush.msra.mxu0 0.0
  %5939 = vmatpush.msra.mxu0 0.0
  %5940 = vmatpush.msra.mxu0 0.0
  %5941 = vmatpush.msra.mxu0 0.0
  %5942 = vmatpush.msra.mxu0 0.0
  %5943 = vmatpush.msra.mxu0 0.0
  %5944 = vmatpush.msra.mxu0 0.0
  %5945 = vmatpush.msra.mxu0 0.0
  %5946 = vmatpush.msra.mxu0 0.0
  %5947 = vmatpush.msra.mxu0 0.0
  %5948 = vmatpush.msra.mxu0 0.0
  %5949 = vmatpush.msra.mxu0 0.0
  %5950 = vmatpush.msra.mxu0 0.0
  %v5951 = vand.u32 %v5441, 4294901760
  %v5952 = vsub.f32 %v5441, %v5951
  %v5953 = vand.u32 %v5952, 4294901760
  %v5954 = vsub.f32 %v5952, %v5953
  %v5955 = vand.u32 %v5954, 4294901760
  %5956 = vmatpush.msra.mxu0 %v5955
  %v5957 = vand.u32 %v5438, 4294901760
  %v5958 = vsub.f32 %v5438, %v5957
  %v5959 = vand.u32 %v5958, 4294901760
  %v5960 = vsub.f32 %v5958, %v5959
  %v5961 = vand.u32 %v5960, 4294901760
  %5962 = vmatpush.msra.mxu0 %v5961
  %v5963 = vand.u32 %v5444, 4294901760
  %5964 = vmatmul.f32.gmra.mxu0 %v5963
  %v5965 = vpop.f32.mrf.mxu0
  %v5966 = vadd.f32 %v5919, %v5965
  %v5967 = vand.u32 %v5447, 4294901760
  %5968 = vmatmul.f32.gmra.mxu0 %v5967
  %v5969 = vpop.f32.mrf.mxu0
  %v5970 = vadd.f32 %v5927, %v5969
  %v5971 = vand.u32 %v5450, 4294901760
  %5972 = vmatmul.f32.gmra.mxu0 %v5971
  %v5973 = vpop.f32.mrf.mxu0
  %v5974 = vadd.f32 %v5935, %v5973
  %5975 = vdwg.mxu0
  %5976 = vmatpush.msra.mxu0 0.0
  %5977 = vmatpush.msra.mxu0 0.0
  %5978 = vmatpush.msra.mxu0 0.0
  %5979 = vmatpush.msra.mxu0 0.0
  %5980 = vmatpush.msra.mxu0 0.0
  %5981 = vmatpush.msra.mxu0 0.0
  %5982 = vmatpush.msra.mxu0 0.0
  %5983 = vmatpush.msra.mxu0 0.0
  %5984 = vmatpush.msra.mxu0 0.0
  %5985 = vmatpush.msra.mxu0 0.0
  %5986 = vmatpush.msra.mxu0 0.0
  %5987 = vmatpush.msra.mxu0 0.0
  %5988 = vmatpush.msra.mxu0 0.0
  %5989 = vmatpush.msra.mxu0 0.0
  %v5990 = vand.u32 %v5441, 4294901760
  %v5991 = vsub.f32 %v5441, %v5990
  %5992 = vmatpush.msra.mxu0 %v5991
  %v5993 = vand.u32 %v5438, 4294901760
  %v5994 = vsub.f32 %v5438, %v5993
  %5995 = vmatpush.msra.mxu0 %v5994
  %v5996 = vand.u32 %v5444, 4294901760
  %v5997 = vsub.f32 %v5444, %v5996
  %5998 = vmatmul.f32.gmra.mxu0 %v5997
  %v5999 = vpop.f32.mrf.mxu0
  %v6000 = vadd.f32 %v5966, %v5999
  %v6001 = vand.u32 %v5447, 4294901760
  %v6002 = vsub.f32 %v5447, %v6001
  %6003 = vmatmul.f32.gmra.mxu0 %v6002
  %v6004 = vpop.f32.mrf.mxu0
  %v6005 = vadd.f32 %v5970, %v6004
  %v6006 = vand.u32 %v5450, 4294901760
  %v6007 = vsub.f32 %v5450, %v6006
  %6008 = vmatmul.f32.gmra.mxu0 %v6007
  %v6009 = vpop.f32.mrf.mxu0
  %v6010 = vadd.f32 %v5974, %v6009
  %6011 = vdwg.mxu0
  %6012 = vmatpush.msra.mxu0 0.0
  %6013 = vmatpush.msra.mxu0 0.0
  %6014 = vmatpush.msra.mxu0 0.0
  %6015 = vmatpush.msra.mxu0 0.0
  %6016 = vmatpush.msra.mxu0 0.0
  %6017 = vmatpush.msra.mxu0 0.0
  %6018 = vmatpush.msra.mxu0 0.0
  %6019 = vmatpush.msra.mxu0 0.0
  %6020 = vmatpush.msra.mxu0 0.0
  %6021 = vmatpush.msra.mxu0 0.0
  %6022 = vmatpush.msra.mxu0 0.0
  %6023 = vmatpush.msra.mxu0 0.0
  %6024 = vmatpush.msra.mxu0 0.0
  %6025 = vmatpush.msra.mxu0 0.0
  %v6026 = vand.u32 %v5441, 4294901760
  %6027 = vmatpush.msra.mxu0 %v6026
  %v6028 = vand.u32 %v5438, 4294901760
  %6029 = vmatpush.msra.mxu0 %v6028
  %v6030 = vand.u32 %v5444, 4294901760
  %v6031 = vsub.f32 %v5444, %v6030
  %v6032 = vand.u32 %v6031, 4294901760
  %6033 = vmatmul.f32.gmra.mxu0 %v6032
  %v6034 = vpop.f32.mrf.mxu0
  %v6035 = vadd.f32 %v6000, %v6034
  %v6036 = vand.u32 %v5447, 4294901760
  %v6037 = vsub.f32 %v5447, %v6036
  %v6038 = vand.u32 %v6037, 4294901760
  %6039 = vmatmul.f32.gmra.mxu0 %v6038
  %v6040 = vpop.f32.mrf.mxu0
  %v6041 = vadd.f32 %v6005, %v6040
  %v6042 = vand.u32 %v5450, 4294901760
  %v6043 = vsub.f32 %v5450, %v6042
  %v6044 = vand.u32 %v6043, 4294901760
  %6045 = vmatmul.f32.gmra.mxu0 %v6044
  %v6046 = vpop.f32.mrf.mxu0
  %v6047 = vadd.f32 %v6010, %v6046
  %6048 = vdwg.mxu0
  %6049 = vmatpush.msra.mxu0 0.0
  %6050 = vmatpush.msra.mxu0 0.0
  %6051 = vmatpush.msra.mxu0 0.0
  %6052 = vmatpush.msra.mxu0 0.0
  %6053 = vmatpush.msra.mxu0 0.0
  %6054 = vmatpush.msra.mxu0 0.0
  %6055 = vmatpush.msra.mxu0 0.0
  %6056 = vmatpush.msra.mxu0 0.0
  %6057 = vmatpush.msra.mxu0 0.0
  %6058 = vmatpush.msra.mxu0 0.0
  %6059 = vmatpush.msra.mxu0 0.0
  %6060 = vmatpush.msra.mxu0 0.0
  %6061 = vmatpush.msra.mxu0 0.0
  %6062 = vmatpush.msra.mxu0 0.0
  %v6063 = vand.u32 %v5441, 4294901760
  %v6064 = vsub.f32 %v5441, %v6063
  %v6065 = vand.u32 %v6064, 4294901760
  %6066 = vmatpush.msra.mxu0 %v6065
  %v6067 = vand.u32 %v5438, 4294901760
  %v6068 = vsub.f32 %v5438, %v6067
  %v6069 = vand.u32 %v6068, 4294901760
  %6070 = vmatpush.msra.mxu0 %v6069
  %v6071 = vand.u32 %v5444, 4294901760
  %6072 = vmatmul.f32.gmra.mxu0 %v6071
  %v6073 = vpop.f32.mrf.mxu0
  %v6074 = vadd.f32 %v6035, %v6073
  %v6075 = vand.u32 %v5447, 4294901760
  %6076 = vmatmul.f32.gmra.mxu0 %v6075
  %v6077 = vpop.f32.mrf.mxu0
  %v6078 = vadd.f32 %v6041, %v6077
  %v6079 = vand.u32 %v5450, 4294901760
  %6080 = vmatmul.f32.gmra.mxu0 %v6079
  %v6081 = vpop.f32.mrf.mxu0
  %v6082 = vadd.f32 %v6047, %v6081
  %6083 = vdwg.mxu0
  %6084 = vmatpush.msra.mxu0 0.0
  %6085 = vmatpush.msra.mxu0 0.0
  %6086 = vmatpush.msra.mxu0 0.0
  %6087 = vmatpush.msra.mxu0 0.0
  %6088 = vmatpush.msra.mxu0 0.0
  %6089 = vmatpush.msra.mxu0 0.0
  %6090 = vmatpush.msra.mxu0 0.0
  %6091 = vmatpush.msra.mxu0 0.0
  %6092 = vmatpush.msra.mxu0 0.0
  %6093 = vmatpush.msra.mxu0 0.0
  %6094 = vmatpush.msra.mxu0 0.0
  %6095 = vmatpush.msra.mxu0 0.0
  %6096 = vmatpush.msra.mxu0 0.0
  %6097 = vmatpush.msra.mxu0 0.0
  %v6098 = vand.u32 %v5441, 4294901760
  %6099 = vmatpush.msra.mxu0 %v6098
  %v6100 = vand.u32 %v5438, 4294901760
  %6101 = vmatpush.msra.mxu0 %v6100
  %v6102 = vand.u32 %v5444, 4294901760
  %6103 = vmatmul.f32.gmra.mxu0 %v6102
  %v6104 = vpop.f32.mrf.mxu0
  %v6105 = vadd.f32 %v6074, %v6104
  %v6106 = vand.u32 %v5447, 4294901760
  %6107 = vmatmul.f32.gmra.mxu0 %v6106
  %v6108 = vpop.f32.mrf.mxu0
  %v6109 = vadd.f32 %v6078, %v6108
  %v6110 = vand.u32 %v5450, 4294901760
  %6111 = vmatmul.f32.gmra.mxu0 %v6110
  %v6112 = vpop.f32.mrf.mxu0
  %v6113 = vadd.f32 %v6082, %v6112
  %6114 = vdwg.mxu0
  %v6115 = vld [vmem:[%s0 + $0x480] sm:$0xff]
  %v6116 = vld [vmem:[%s0 + $0x498] sm:$0xff]
  %6120 = vrot.lane.b32.xlu0 %v5663, 96
  %v6121 = vpop.permute.xlu0 %6120
  %6122 = vrot.lane.b32.xlu0 %v5667, 96
  %v6123 = vpop.permute.xlu0 %6122
  %6124 = vrot.lane.b32.xlu0 %v5671, 96
  %v6125 = vpop.permute.xlu0 %6124
  %vm6129 = vcmask 195584
  %v6131 = vsel %vm6129, %v6116, 0
  %6133 = vmatpush.msra.mxu0 0.0
  %6134 = vmatpush.msra.mxu0 0.0
  %6135 = vmatpush.msra.mxu0 0.0
  %6136 = vmatpush.msra.mxu0 0.0
  %6137 = vmatpush.msra.mxu0 0.0
  %6138 = vmatpush.msra.mxu0 0.0
  %6139 = vmatpush.msra.mxu0 0.0
  %6140 = vmatpush.msra.mxu0 0.0
  %6141 = vmatpush.msra.mxu0 0.0
  %6142 = vmatpush.msra.mxu0 0.0
  %6143 = vmatpush.msra.mxu0 0.0
  %6144 = vmatpush.msra.mxu0 0.0
  %6145 = vmatpush.msra.mxu0 0.0
  %v6146 = vand.u32 %v6125, 4294901760
  %6147 = vmatpush.msra.mxu0 %v6146
  %v6148 = vand.u32 %v6123, 4294901760
  %6149 = vmatpush.msra.mxu0 %v6148
  %v6150 = vand.u32 %v6121, 4294901760
  %6151 = vmatpush.msra.mxu0 %v6150
  %v6152 = vand.u32 %v6131, 4294901760
  %v6153 = vsub.f32 %v6131, %v6152
  %v6154 = vand.u32 %v6153, 4294901760
  %v6155 = vsub.f32 %v6153, %v6154
  %v6156 = vand.u32 %v6155, 4294901760
  %6157 = vmatmul.f32.gmra.mxu0 %v6156
  %v6158 = vpop.f32.mrf.mxu0
  %v6159 = vadd.f32 0.0, %v6158
  %6160 = vdwg.mxu0
  %6161 = vmatpush.msra.mxu0 0.0
  %6162 = vmatpush.msra.mxu0 0.0
  %6163 = vmatpush.msra.mxu0 0.0
  %6164 = vmatpush.msra.mxu0 0.0
  %6165 = vmatpush.msra.mxu0 0.0
  %6166 = vmatpush.msra.mxu0 0.0
  %6167 = vmatpush.msra.mxu0 0.0
  %6168 = vmatpush.msra.mxu0 0.0
  %6169 = vmatpush.msra.mxu0 0.0
  %6170 = vmatpush.msra.mxu0 0.0
  %6171 = vmatpush.msra.mxu0 0.0
  %6172 = vmatpush.msra.mxu0 0.0
  %6173 = vmatpush.msra.mxu0 0.0
  %v6174 = vand.u32 %v6125, 4294901760
  %v6175 = vsub.f32 %v6125, %v6174
  %v6176 = vand.u32 %v6175, 4294901760
  %v6177 = vsub.f32 %v6175, %v6176
  %v6178 = vand.u32 %v6177, 4294901760
  %6179 = vmatpush.msra.mxu0 %v6178
  %v6180 = vand.u32 %v6123, 4294901760
  %v6181 = vsub.f32 %v6123, %v6180
  %v6182 = vand.u32 %v6181, 4294901760
  %v6183 = vsub.f32 %v6181, %v6182
  %v6184 = vand.u32 %v6183, 4294901760
  %6185 = vmatpush.msra.mxu0 %v6184
  %v6186 = vand.u32 %v6121, 4294901760
  %v6187 = vsub.f32 %v6121, %v6186
  %v6188 = vand.u32 %v6187, 4294901760
  %v6189 = vsub.f32 %v6187, %v6188
  %v6190 = vand.u32 %v6189, 4294901760
  %6191 = vmatpush.msra.mxu0 %v6190
  %v6192 = vand.u32 %v6131, 4294901760
  %6193 = vmatmul.f32.gmra.mxu0 %v6192
  %v6194 = vpop.f32.mrf.mxu0
  %v6195 = vadd.f32 %v6159, %v6194
  %6196 = vdwg.mxu0
  %6197 = vmatpush.msra.mxu0 0.0
  %6198 = vmatpush.msra.mxu0 0.0
  %6199 = vmatpush.msra.mxu0 0.0
  %6200 = vmatpush.msra.mxu0 0.0
  %6201 = vmatpush.msra.mxu0 0.0
  %6202 = vmatpush.msra.mxu0 0.0
  %6203 = vmatpush.msra.mxu0 0.0
  %6204 = vmatpush.msra.mxu0 0.0
  %6205 = vmatpush.msra.mxu0 0.0
  %6206 = vmatpush.msra.mxu0 0.0
  %6207 = vmatpush.msra.mxu0 0.0
  %6208 = vmatpush.msra.mxu0 0.0
  %6209 = vmatpush.msra.mxu0 0.0
  %v6210 = vand.u32 %v6125, 4294901760
  %v6211 = vsub.f32 %v6125, %v6210
  %6212 = vmatpush.msra.mxu0 %v6211
  %v6213 = vand.u32 %v6123, 4294901760
  %v6214 = vsub.f32 %v6123, %v6213
  %6215 = vmatpush.msra.mxu0 %v6214
  %v6216 = vand.u32 %v6121, 4294901760
  %v6217 = vsub.f32 %v6121, %v6216
  %6218 = vmatpush.msra.mxu0 %v6217
  %v6219 = vand.u32 %v6131, 4294901760
  %v6220 = vsub.f32 %v6131, %v6219
  %6221 = vmatmul.f32.gmra.mxu0 %v6220
  %v6222 = vpop.f32.mrf.mxu0
  %v6223 = vadd.f32 %v6195, %v6222
  %6224 = vdwg.mxu0
  %6225 = vmatpush.msra.mxu0 0.0
  %6226 = vmatpush.msra.mxu0 0.0
  %6227 = vmatpush.msra.mxu0 0.0
  %6228 = vmatpush.msra.mxu0 0.0
  %6229 = vmatpush.msra.mxu0 0.0
  %6230 = vmatpush.msra.mxu0 0.0
  %6231 = vmatpush.msra.mxu0 0.0
  %6232 = vmatpush.msra.mxu0 0.0
  %6233 = vmatpush.msra.mxu0 0.0
  %6234 = vmatpush.msra.mxu0 0.0
  %6235 = vmatpush.msra.mxu0 0.0
  %6236 = vmatpush.msra.mxu0 0.0
  %6237 = vmatpush.msra.mxu0 0.0
  %v6238 = vand.u32 %v6125, 4294901760
  %6239 = vmatpush.msra.mxu0 %v6238
  %v6240 = vand.u32 %v6123, 4294901760
  %6241 = vmatpush.msra.mxu0 %v6240
  %v6242 = vand.u32 %v6121, 4294901760
  %6243 = vmatpush.msra.mxu0 %v6242
  %v6244 = vand.u32 %v6131, 4294901760
  %v6245 = vsub.f32 %v6131, %v6244
  %v6246 = vand.u32 %v6245, 4294901760
  %6247 = vmatmul.f32.gmra.mxu0 %v6246
  %v6248 = vpop.f32.mrf.mxu0
  %v6249 = vadd.f32 %v6223, %v6248
  %6250 = vdwg.mxu0
  %6251 = vmatpush.msra.mxu0 0.0
  %6252 = vmatpush.msra.mxu0 0.0
  %6253 = vmatpush.msra.mxu0 0.0
  %6254 = vmatpush.msra.mxu0 0.0
  %6255 = vmatpush.msra.mxu0 0.0
  %6256 = vmatpush.msra.mxu0 0.0
  %6257 = vmatpush.msra.mxu0 0.0
  %6258 = vmatpush.msra.mxu0 0.0
  %6259 = vmatpush.msra.mxu0 0.0
  %6260 = vmatpush.msra.mxu0 0.0
  %6261 = vmatpush.msra.mxu0 0.0
  %6262 = vmatpush.msra.mxu0 0.0
  %6263 = vmatpush.msra.mxu0 0.0
  %v6264 = vand.u32 %v6125, 4294901760
  %v6265 = vsub.f32 %v6125, %v6264
  %v6266 = vand.u32 %v6265, 4294901760
  %6267 = vmatpush.msra.mxu0 %v6266
  %v6268 = vand.u32 %v6123, 4294901760
  %v6269 = vsub.f32 %v6123, %v6268
  %v6270 = vand.u32 %v6269, 4294901760
  %6271 = vmatpush.msra.mxu0 %v6270
  %v6272 = vand.u32 %v6121, 4294901760
  %v6273 = vsub.f32 %v6121, %v6272
  %v6274 = vand.u32 %v6273, 4294901760
  %6275 = vmatpush.msra.mxu0 %v6274
  %v6276 = vand.u32 %v6131, 4294901760
  %6277 = vmatmul.f32.gmra.mxu0 %v6276
  %v6278 = vpop.f32.mrf.mxu0
  %v6279 = vadd.f32 %v6249, %v6278
  %6280 = vdwg.mxu0
  %6281 = vmatpush.msra.mxu0 0.0
  %6282 = vmatpush.msra.mxu0 0.0
  %6283 = vmatpush.msra.mxu0 0.0
  %6284 = vmatpush.msra.mxu0 0.0
  %6285 = vmatpush.msra.mxu0 0.0
  %6286 = vmatpush.msra.mxu0 0.0
  %6287 = vmatpush.msra.mxu0 0.0
  %6288 = vmatpush.msra.mxu0 0.0
  %6289 = vmatpush.msra.mxu0 0.0
  %6290 = vmatpush.msra.mxu0 0.0
  %6291 = vmatpush.msra.mxu0 0.0
  %6292 = vmatpush.msra.mxu0 0.0
  %6293 = vmatpush.msra.mxu0 0.0
  %v6294 = vand.u32 %v6125, 4294901760
  %6295 = vmatpush.msra.mxu0 %v6294
  %v6296 = vand.u32 %v6123, 4294901760
  %6297 = vmatpush.msra.mxu0 %v6296
  %v6298 = vand.u32 %v6121, 4294901760
  %6299 = vmatpush.msra.mxu0 %v6298
  %v6300 = vand.u32 %v6131, 4294901760
  %6301 = vmatmul.f32.gmra.mxu0 %v6300
  %v6302 = vpop.f32.mrf.mxu0
  %v6303 = vadd.f32 %v6279, %v6302
  %6304 = vdwg.mxu0
  %v6306 = vsel %vm6129, %v6115, 0
  %6308 = vmatpush.msra.mxu0 0.0
  %6309 = vmatpush.msra.mxu0 0.0
  %6310 = vmatpush.msra.mxu0 0.0
  %6311 = vmatpush.msra.mxu0 0.0
  %6312 = vmatpush.msra.mxu0 0.0
  %6313 = vmatpush.msra.mxu0 0.0
  %6314 = vmatpush.msra.mxu0 0.0
  %6315 = vmatpush.msra.mxu0 0.0
  %6316 = vmatpush.msra.mxu0 0.0
  %6317 = vmatpush.msra.mxu0 0.0
  %6318 = vmatpush.msra.mxu0 0.0
  %6319 = vmatpush.msra.mxu0 0.0
  %6320 = vmatpush.msra.mxu0 0.0
  %v6321 = vand.u32 %v5671, 4294901760
  %6322 = vmatpush.msra.mxu0 %v6321
  %v6323 = vand.u32 %v5667, 4294901760
  %6324 = vmatpush.msra.mxu0 %v6323
  %v6325 = vand.u32 %v5663, 4294901760
  %6326 = vmatpush.msra.mxu0 %v6325
  %v6327 = vand.u32 %v6306, 4294901760
  %v6328 = vsub.f32 %v6306, %v6327
  %v6329 = vand.u32 %v6328, 4294901760
  %v6330 = vsub.f32 %v6328, %v6329
  %v6331 = vand.u32 %v6330, 4294901760
  %6332 = vmatmul.f32.gmra.mxu0 %v6331
  %v6333 = vpop.f32.mrf.mxu0
  %v6334 = vadd.f32 %v6303, %v6333
  %6335 = vdwg.mxu0
  %6336 = vmatpush.msra.mxu0 0.0
  %6337 = vmatpush.msra.mxu0 0.0
  %6338 = vmatpush.msra.mxu0 0.0
  %6339 = vmatpush.msra.mxu0 0.0
  %6340 = vmatpush.msra.mxu0 0.0
  %6341 = vmatpush.msra.mxu0 0.0
  %6342 = vmatpush.msra.mxu0 0.0
  %6343 = vmatpush.msra.mxu0 0.0
  %6344 = vmatpush.msra.mxu0 0.0
  %6345 = vmatpush.msra.mxu0 0.0
  %6346 = vmatpush.msra.mxu0 0.0
  %6347 = vmatpush.msra.mxu0 0.0
  %6348 = vmatpush.msra.mxu0 0.0
  %v6349 = vand.u32 %v5671, 4294901760
  %v6350 = vsub.f32 %v5671, %v6349
  %v6351 = vand.u32 %v6350, 4294901760
  %v6352 = vsub.f32 %v6350, %v6351
  %v6353 = vand.u32 %v6352, 4294901760
  %6354 = vmatpush.msra.mxu0 %v6353
  %v6355 = vand.u32 %v5667, 4294901760
  %v6356 = vsub.f32 %v5667, %v6355
  %v6357 = vand.u32 %v6356, 4294901760
  %v6358 = vsub.f32 %v6356, %v6357
  %v6359 = vand.u32 %v6358, 4294901760
  %6360 = vmatpush.msra.mxu0 %v6359
  %v6361 = vand.u32 %v5663, 4294901760
  %v6362 = vsub.f32 %v5663, %v6361
  %v6363 = vand.u32 %v6362, 4294901760
  %v6364 = vsub.f32 %v6362, %v6363
  %v6365 = vand.u32 %v6364, 4294901760
  %6366 = vmatpush.msra.mxu0 %v6365
  %v6367 = vand.u32 %v6306, 4294901760
  %6368 = vmatmul.f32.gmra.mxu0 %v6367
  %v6369 = vpop.f32.mrf.mxu0
  %v6370 = vadd.f32 %v6334, %v6369
  %6371 = vdwg.mxu0
  %6372 = vmatpush.msra.mxu0 0.0
  %6373 = vmatpush.msra.mxu0 0.0
  %6374 = vmatpush.msra.mxu0 0.0
  %6375 = vmatpush.msra.mxu0 0.0
  %6376 = vmatpush.msra.mxu0 0.0
  %6377 = vmatpush.msra.mxu0 0.0
  %6378 = vmatpush.msra.mxu0 0.0
  %6379 = vmatpush.msra.mxu0 0.0
  %6380 = vmatpush.msra.mxu0 0.0
  %6381 = vmatpush.msra.mxu0 0.0
  %6382 = vmatpush.msra.mxu0 0.0
  %6383 = vmatpush.msra.mxu0 0.0
  %6384 = vmatpush.msra.mxu0 0.0
  %v6385 = vand.u32 %v5671, 4294901760
  %v6386 = vsub.f32 %v5671, %v6385
  %6387 = vmatpush.msra.mxu0 %v6386
  %v6388 = vand.u32 %v5667, 4294901760
  %v6389 = vsub.f32 %v5667, %v6388
  %6390 = vmatpush.msra.mxu0 %v6389
  %v6391 = vand.u32 %v5663, 4294901760
  %v6392 = vsub.f32 %v5663, %v6391
  %6393 = vmatpush.msra.mxu0 %v6392
  %v6394 = vand.u32 %v6306, 4294901760
  %v6395 = vsub.f32 %v6306, %v6394
  %6396 = vmatmul.f32.gmra.mxu0 %v6395
  %v6397 = vpop.f32.mrf.mxu0
  %v6398 = vadd.f32 %v6370, %v6397
  %6399 = vdwg.mxu0
  %6400 = vmatpush.msra.mxu0 0.0
  %6401 = vmatpush.msra.mxu0 0.0
  %6402 = vmatpush.msra.mxu0 0.0
  %6403 = vmatpush.msra.mxu0 0.0
  %6404 = vmatpush.msra.mxu0 0.0
  %6405 = vmatpush.msra.mxu0 0.0
  %6406 = vmatpush.msra.mxu0 0.0
  %6407 = vmatpush.msra.mxu0 0.0
  %6408 = vmatpush.msra.mxu0 0.0
  %6409 = vmatpush.msra.mxu0 0.0
  %6410 = vmatpush.msra.mxu0 0.0
  %6411 = vmatpush.msra.mxu0 0.0
  %6412 = vmatpush.msra.mxu0 0.0
  %v6413 = vand.u32 %v5671, 4294901760
  %6414 = vmatpush.msra.mxu0 %v6413
  %v6415 = vand.u32 %v5667, 4294901760
  %6416 = vmatpush.msra.mxu0 %v6415
  %v6417 = vand.u32 %v5663, 4294901760
  %6418 = vmatpush.msra.mxu0 %v6417
  %v6419 = vand.u32 %v6306, 4294901760
  %v6420 = vsub.f32 %v6306, %v6419
  %v6421 = vand.u32 %v6420, 4294901760
  %6422 = vmatmul.f32.gmra.mxu0 %v6421
  %v6423 = vpop.f32.mrf.mxu0
  %v6424 = vadd.f32 %v6398, %v6423
  %6425 = vdwg.mxu0
  %6426 = vmatpush.msra.mxu0 0.0
  %6427 = vmatpush.msra.mxu0 0.0
  %6428 = vmatpush.msra.mxu0 0.0
  %6429 = vmatpush.msra.mxu0 0.0
  %6430 = vmatpush.msra.mxu0 0.0
  %6431 = vmatpush.msra.mxu0 0.0
  %6432 = vmatpush.msra.mxu0 0.0
  %6433 = vmatpush.msra.mxu0 0.0
  %6434 = vmatpush.msra.mxu0 0.0
  %6435 = vmatpush.msra.mxu0 0.0
  %6436 = vmatpush.msra.mxu0 0.0
  %6437 = vmatpush.msra.mxu0 0.0
  %6438 = vmatpush.msra.mxu0 0.0
  %v6439 = vand.u32 %v5671, 4294901760
  %v6440 = vsub.f32 %v5671, %v6439
  %v6441 = vand.u32 %v6440, 4294901760
  %6442 = vmatpush.msra.mxu0 %v6441
  %v6443 = vand.u32 %v5667, 4294901760
  %v6444 = vsub.f32 %v5667, %v6443
  %v6445 = vand.u32 %v6444, 4294901760
  %6446 = vmatpush.msra.mxu0 %v6445
  %v6447 = vand.u32 %v5663, 4294901760
  %v6448 = vsub.f32 %v5663, %v6447
  %v6449 = vand.u32 %v6448, 4294901760
  %6450 = vmatpush.msra.mxu0 %v6449
  %v6451 = vand.u32 %v6306, 4294901760
  %6452 = vmatmul.f32.gmra.mxu0 %v6451
  %v6453 = vpop.f32.mrf.mxu0
  %v6454 = vadd.f32 %v6424, %v6453
  %6455 = vdwg.mxu0
  %6456 = vmatpush.msra.mxu0 0.0
  %6457 = vmatpush.msra.mxu0 0.0
  %6458 = vmatpush.msra.mxu0 0.0
  %6459 = vmatpush.msra.mxu0 0.0
  %6460 = vmatpush.msra.mxu0 0.0
  %6461 = vmatpush.msra.mxu0 0.0
  %6462 = vmatpush.msra.mxu0 0.0
  %6463 = vmatpush.msra.mxu0 0.0
  %6464 = vmatpush.msra.mxu0 0.0
  %6465 = vmatpush.msra.mxu0 0.0
  %6466 = vmatpush.msra.mxu0 0.0
  %6467 = vmatpush.msra.mxu0 0.0
  %6468 = vmatpush.msra.mxu0 0.0
  %v6469 = vand.u32 %v5671, 4294901760
  %6470 = vmatpush.msra.mxu0 %v6469
  %v6471 = vand.u32 %v5667, 4294901760
  %6472 = vmatpush.msra.mxu0 %v6471
  %v6473 = vand.u32 %v5663, 4294901760
  %6474 = vmatpush.msra.mxu0 %v6473
  %v6475 = vand.u32 %v6306, 4294901760
  %6476 = vmatmul.f32.gmra.mxu0 %v6475
  %v6477 = vpop.f32.mrf.mxu0
  %v6478 = vadd.f32 %v6454, %v6477
  %6479 = vdwg.mxu0
  %v6480 = vld [vmem:[%s0 + $0x4b0] sm:$0xff]
  %6481 = vrot.lane.b32.xlu0 %v5663, 64
  %v6482 = vpop.permute.xlu0 %6481
  %6483 = vrot.lane.b32.xlu0 %v5667, 64
  %v6484 = vpop.permute.xlu0 %6483
  %6485 = vrot.lane.b32.xlu0 %v5671, 64
  %v6486 = vpop.permute.xlu0 %6485
  %v6491 = vsel %vm6129, %v6480, 0
  %6493 = vmatpush.msra.mxu0 0.0
  %6494 = vmatpush.msra.mxu0 0.0
  %6495 = vmatpush.msra.mxu0 0.0
  %6496 = vmatpush.msra.mxu0 0.0
  %6497 = vmatpush.msra.mxu0 0.0
  %6498 = vmatpush.msra.mxu0 0.0
  %6499 = vmatpush.msra.mxu0 0.0
  %6500 = vmatpush.msra.mxu0 0.0
  %6501 = vmatpush.msra.mxu0 0.0
  %6502 = vmatpush.msra.mxu0 0.0
  %6503 = vmatpush.msra.mxu0 0.0
  %6504 = vmatpush.msra.mxu0 0.0
  %6505 = vmatpush.msra.mxu0 0.0
  %v6506 = vand.u32 %v6486, 4294901760
  %6507 = vmatpush.msra.mxu0 %v6506
  %v6508 = vand.u32 %v6484, 4294901760
  %6509 = vmatpush.msra.mxu0 %v6508
  %v6510 = vand.u32 %v6482, 4294901760
  %6511 = vmatpush.msra.mxu0 %v6510
  %v6512 = vand.u32 %v6491, 4294901760
  %v6513 = vsub.f32 %v6491, %v6512
  %v6514 = vand.u32 %v6513, 4294901760
  %v6515 = vsub.f32 %v6513, %v6514
  %v6516 = vand.u32 %v6515, 4294901760
  %6517 = vmatmul.f32.gmra.mxu0 %v6516
  %v6518 = vpop.f32.mrf.mxu0
  %v6519 = vadd.f32 0.0, %v6518
  %6520 = vdwg.mxu0
  %6521 = vmatpush.msra.mxu0 0.0
  %6522 = vmatpush.msra.mxu0 0.0
  %6523 = vmatpush.msra.mxu0 0.0
  %6524 = vmatpush.msra.mxu0 0.0
  %6525 = vmatpush.msra.mxu0 0.0
  %6526 = vmatpush.msra.mxu0 0.0
  %6527 = vmatpush.msra.mxu0 0.0
  %6528 = vmatpush.msra.mxu0 0.0
  %6529 = vmatpush.msra.mxu0 0.0
  %6530 = vmatpush.msra.mxu0 0.0
  %6531 = vmatpush.msra.mxu0 0.0
  %6532 = vmatpush.msra.mxu0 0.0
  %6533 = vmatpush.msra.mxu0 0.0
  %v6534 = vand.u32 %v6486, 4294901760
  %v6535 = vsub.f32 %v6486, %v6534
  %v6536 = vand.u32 %v6535, 4294901760
  %v6537 = vsub.f32 %v6535, %v6536
  %v6538 = vand.u32 %v6537, 4294901760
  %6539 = vmatpush.msra.mxu0 %v6538
  %v6540 = vand.u32 %v6484, 4294901760
  %v6541 = vsub.f32 %v6484, %v6540
  %v6542 = vand.u32 %v6541, 4294901760
  %v6543 = vsub.f32 %v6541, %v6542
  %v6544 = vand.u32 %v6543, 4294901760
  %6545 = vmatpush.msra.mxu0 %v6544
  %v6546 = vand.u32 %v6482, 4294901760
  %v6547 = vsub.f32 %v6482, %v6546
  %v6548 = vand.u32 %v6547, 4294901760
  %v6549 = vsub.f32 %v6547, %v6548
  %v6550 = vand.u32 %v6549, 4294901760
  %6551 = vmatpush.msra.mxu0 %v6550
  %v6552 = vand.u32 %v6491, 4294901760
  %6553 = vmatmul.f32.gmra.mxu0 %v6552
  %v6554 = vpop.f32.mrf.mxu0
  %v6555 = vadd.f32 %v6519, %v6554
  %6556 = vdwg.mxu0
  %6557 = vmatpush.msra.mxu0 0.0
  %6558 = vmatpush.msra.mxu0 0.0
  %6559 = vmatpush.msra.mxu0 0.0
  %6560 = vmatpush.msra.mxu0 0.0
  %6561 = vmatpush.msra.mxu0 0.0
  %6562 = vmatpush.msra.mxu0 0.0
  %6563 = vmatpush.msra.mxu0 0.0
  %6564 = vmatpush.msra.mxu0 0.0
  %6565 = vmatpush.msra.mxu0 0.0
  %6566 = vmatpush.msra.mxu0 0.0
  %6567 = vmatpush.msra.mxu0 0.0
  %6568 = vmatpush.msra.mxu0 0.0
  %6569 = vmatpush.msra.mxu0 0.0
  %v6570 = vand.u32 %v6486, 4294901760
  %v6571 = vsub.f32 %v6486, %v6570
  %6572 = vmatpush.msra.mxu0 %v6571
  %v6573 = vand.u32 %v6484, 4294901760
  %v6574 = vsub.f32 %v6484, %v6573
  %6575 = vmatpush.msra.mxu0 %v6574
  %v6576 = vand.u32 %v6482, 4294901760
  %v6577 = vsub.f32 %v6482, %v6576
  %6578 = vmatpush.msra.mxu0 %v6577
  %v6579 = vand.u32 %v6491, 4294901760
  %v6580 = vsub.f32 %v6491, %v6579
  %6581 = vmatmul.f32.gmra.mxu0 %v6580
  %v6582 = vpop.f32.mrf.mxu0
  %v6583 = vadd.f32 %v6555, %v6582
  %6584 = vdwg.mxu0
  %6585 = vmatpush.msra.mxu0 0.0
  %6586 = vmatpush.msra.mxu0 0.0
  %6587 = vmatpush.msra.mxu0 0.0
  %6588 = vmatpush.msra.mxu0 0.0
  %6589 = vmatpush.msra.mxu0 0.0
  %6590 = vmatpush.msra.mxu0 0.0
  %6591 = vmatpush.msra.mxu0 0.0
  %6592 = vmatpush.msra.mxu0 0.0
  %6593 = vmatpush.msra.mxu0 0.0
  %6594 = vmatpush.msra.mxu0 0.0
  %6595 = vmatpush.msra.mxu0 0.0
  %6596 = vmatpush.msra.mxu0 0.0
  %6597 = vmatpush.msra.mxu0 0.0
  %v6598 = vand.u32 %v6486, 4294901760
  %6599 = vmatpush.msra.mxu0 %v6598
  %v6600 = vand.u32 %v6484, 4294901760
  %6601 = vmatpush.msra.mxu0 %v6600
  %v6602 = vand.u32 %v6482, 4294901760
  %6603 = vmatpush.msra.mxu0 %v6602
  %v6604 = vand.u32 %v6491, 4294901760
  %v6605 = vsub.f32 %v6491, %v6604
  %v6606 = vand.u32 %v6605, 4294901760
  %6607 = vmatmul.f32.gmra.mxu0 %v6606
  %v6608 = vpop.f32.mrf.mxu0
  %v6609 = vadd.f32 %v6583, %v6608
  %6610 = vdwg.mxu0
  %6611 = vmatpush.msra.mxu0 0.0
  %6612 = vmatpush.msra.mxu0 0.0
  %6613 = vmatpush.msra.mxu0 0.0
  %6614 = vmatpush.msra.mxu0 0.0
  %6615 = vmatpush.msra.mxu0 0.0
  %6616 = vmatpush.msra.mxu0 0.0
  %6617 = vmatpush.msra.mxu0 0.0
  %6618 = vmatpush.msra.mxu0 0.0
  %6619 = vmatpush.msra.mxu0 0.0
  %6620 = vmatpush.msra.mxu0 0.0
  %6621 = vmatpush.msra.mxu0 0.0
  %6622 = vmatpush.msra.mxu0 0.0
  %6623 = vmatpush.msra.mxu0 0.0
  %v6624 = vand.u32 %v6486, 4294901760
  %v6625 = vsub.f32 %v6486, %v6624
  %v6626 = vand.u32 %v6625, 4294901760
  %6627 = vmatpush.msra.mxu0 %v6626
  %v6628 = vand.u32 %v6484, 4294901760
  %v6629 = vsub.f32 %v6484, %v6628
  %v6630 = vand.u32 %v6629, 4294901760
  %6631 = vmatpush.msra.mxu0 %v6630
  %v6632 = vand.u32 %v6482, 4294901760
  %v6633 = vsub.f32 %v6482, %v6632
  %v6634 = vand.u32 %v6633, 4294901760
  %6635 = vmatpush.msra.mxu0 %v6634
  %v6636 = vand.u32 %v6491, 4294901760
  %6637 = vmatmul.f32.gmra.mxu0 %v6636
  %v6638 = vpop.f32.mrf.mxu0
  %v6639 = vadd.f32 %v6609, %v6638
  %6640 = vdwg.mxu0
  %6641 = vmatpush.msra.mxu0 0.0
  %6642 = vmatpush.msra.mxu0 0.0
  %6643 = vmatpush.msra.mxu0 0.0
  %6644 = vmatpush.msra.mxu0 0.0
  %6645 = vmatpush.msra.mxu0 0.0
  %6646 = vmatpush.msra.mxu0 0.0
  %6647 = vmatpush.msra.mxu0 0.0
  %6648 = vmatpush.msra.mxu0 0.0
  %6649 = vmatpush.msra.mxu0 0.0
  %6650 = vmatpush.msra.mxu0 0.0
  %6651 = vmatpush.msra.mxu0 0.0
  %6652 = vmatpush.msra.mxu0 0.0
  %6653 = vmatpush.msra.mxu0 0.0
  %v6654 = vand.u32 %v6486, 4294901760
  %6655 = vmatpush.msra.mxu0 %v6654
  %v6656 = vand.u32 %v6484, 4294901760
  %6657 = vmatpush.msra.mxu0 %v6656
  %v6658 = vand.u32 %v6482, 4294901760
  %6659 = vmatpush.msra.mxu0 %v6658
  %v6660 = vand.u32 %v6491, 4294901760
  %6661 = vmatmul.f32.gmra.mxu0 %v6660
  %v6662 = vpop.f32.mrf.mxu0
  %v6663 = vadd.f32 %v6639, %v6662
  %6664 = vdwg.mxu0
  %v6665 = vadd.f32 %v6478, %v6663
  %v6666 = vld [vmem:[%s0 + $0x4c8] sm:$0xff]
  %6667 = vrot.lane.b32.xlu0 %v5663, 32
  %v6668 = vpop.permute.xlu0 %6667
  %6669 = vrot.lane.b32.xlu0 %v5667, 32
  %v6670 = vpop.permute.xlu0 %6669
  %6671 = vrot.lane.b32.xlu0 %v5671, 32
  %v6672 = vpop.permute.xlu0 %6671
  %v6677 = vsel %vm6129, %v6666, 0
  %6679 = vmatpush.msra.mxu0 0.0
  %6680 = vmatpush.msra.mxu0 0.0
  %6681 = vmatpush.msra.mxu0 0.0
  %6682 = vmatpush.msra.mxu0 0.0
  %6683 = vmatpush.msra.mxu0 0.0
  %6684 = vmatpush.msra.mxu0 0.0
  %6685 = vmatpush.msra.mxu0 0.0
  %6686 = vmatpush.msra.mxu0 0.0
  %6687 = vmatpush.msra.mxu0 0.0
  %6688 = vmatpush.msra.mxu0 0.0
  %6689 = vmatpush.msra.mxu0 0.0
  %6690 = vmatpush.msra.mxu0 0.0
  %6691 = vmatpush.msra.mxu0 0.0
  %v6692 = vand.u32 %v6672, 4294901760
  %6693 = vmatpush.msra.mxu0 %v6692
  %v6694 = vand.u32 %v6670, 4294901760
  %6695 = vmatpush.msra.mxu0 %v6694
  %v6696 = vand.u32 %v6668, 4294901760
  %6697 = vmatpush.msra.mxu0 %v6696
  %v6698 = vand.u32 %v6677, 4294901760
  %v6699 = vsub.f32 %v6677, %v6698
  %v6700 = vand.u32 %v6699, 4294901760
  %v6701 = vsub.f32 %v6699, %v6700
  %v6702 = vand.u32 %v6701, 4294901760
  %6703 = vmatmul.f32.gmra.mxu0 %v6702
  %v6704 = vpop.f32.mrf.mxu0
  %v6705 = vadd.f32 0.0, %v6704
  %6706 = vdwg.mxu0
  %6707 = vmatpush.msra.mxu0 0.0
  %6708 = vmatpush.msra.mxu0 0.0
  %6709 = vmatpush.msra.mxu0 0.0
  %6710 = vmatpush.msra.mxu0 0.0
  %6711 = vmatpush.msra.mxu0 0.0
  %6712 = vmatpush.msra.mxu0 0.0
  %6713 = vmatpush.msra.mxu0 0.0
  %6714 = vmatpush.msra.mxu0 0.0
  %6715 = vmatpush.msra.mxu0 0.0
  %6716 = vmatpush.msra.mxu0 0.0
  %6717 = vmatpush.msra.mxu0 0.0
  %6718 = vmatpush.msra.mxu0 0.0
  %6719 = vmatpush.msra.mxu0 0.0
  %v6720 = vand.u32 %v6672, 4294901760
  %v6721 = vsub.f32 %v6672, %v6720
  %v6722 = vand.u32 %v6721, 4294901760
  %v6723 = vsub.f32 %v6721, %v6722
  %v6724 = vand.u32 %v6723, 4294901760
  %6725 = vmatpush.msra.mxu0 %v6724
  %v6726 = vand.u32 %v6670, 4294901760
  %v6727 = vsub.f32 %v6670, %v6726
  %v6728 = vand.u32 %v6727, 4294901760
  %v6729 = vsub.f32 %v6727, %v6728
  %v6730 = vand.u32 %v6729, 4294901760
  %6731 = vmatpush.msra.mxu0 %v6730
  %v6732 = vand.u32 %v6668, 4294901760
  %v6733 = vsub.f32 %v6668, %v6732
  %v6734 = vand.u32 %v6733, 4294901760
  %v6735 = vsub.f32 %v6733, %v6734
  %v6736 = vand.u32 %v6735, 4294901760
  %6737 = vmatpush.msra.mxu0 %v6736
  %v6738 = vand.u32 %v6677, 4294901760
  %6739 = vmatmul.f32.gmra.mxu0 %v6738
  %v6740 = vpop.f32.mrf.mxu0
  %v6741 = vadd.f32 %v6705, %v6740
  %6742 = vdwg.mxu0
  %6743 = vmatpush.msra.mxu0 0.0
  %6744 = vmatpush.msra.mxu0 0.0
  %6745 = vmatpush.msra.mxu0 0.0
  %6746 = vmatpush.msra.mxu0 0.0
  %6747 = vmatpush.msra.mxu0 0.0
  %6748 = vmatpush.msra.mxu0 0.0
  %6749 = vmatpush.msra.mxu0 0.0
  %6750 = vmatpush.msra.mxu0 0.0
  %6751 = vmatpush.msra.mxu0 0.0
  %6752 = vmatpush.msra.mxu0 0.0
  %6753 = vmatpush.msra.mxu0 0.0
  %6754 = vmatpush.msra.mxu0 0.0
  %6755 = vmatpush.msra.mxu0 0.0
  %v6756 = vand.u32 %v6672, 4294901760
  %v6757 = vsub.f32 %v6672, %v6756
  %6758 = vmatpush.msra.mxu0 %v6757
  %v6759 = vand.u32 %v6670, 4294901760
  %v6760 = vsub.f32 %v6670, %v6759
  %6761 = vmatpush.msra.mxu0 %v6760
  %v6762 = vand.u32 %v6668, 4294901760
  %v6763 = vsub.f32 %v6668, %v6762
  %6764 = vmatpush.msra.mxu0 %v6763
  %v6765 = vand.u32 %v6677, 4294901760
  %v6766 = vsub.f32 %v6677, %v6765
  %6767 = vmatmul.f32.gmra.mxu0 %v6766
  %v6768 = vpop.f32.mrf.mxu0
  %v6769 = vadd.f32 %v6741, %v6768
  %6770 = vdwg.mxu0
  %6771 = vmatpush.msra.mxu0 0.0
  %6772 = vmatpush.msra.mxu0 0.0
  %6773 = vmatpush.msra.mxu0 0.0
  %6774 = vmatpush.msra.mxu0 0.0
  %6775 = vmatpush.msra.mxu0 0.0
  %6776 = vmatpush.msra.mxu0 0.0
  %6777 = vmatpush.msra.mxu0 0.0
  %6778 = vmatpush.msra.mxu0 0.0
  %6779 = vmatpush.msra.mxu0 0.0
  %6780 = vmatpush.msra.mxu0 0.0
  %6781 = vmatpush.msra.mxu0 0.0
  %6782 = vmatpush.msra.mxu0 0.0
  %6783 = vmatpush.msra.mxu0 0.0
  %v6784 = vand.u32 %v6672, 4294901760
  %6785 = vmatpush.msra.mxu0 %v6784
  %v6786 = vand.u32 %v6670, 4294901760
  %6787 = vmatpush.msra.mxu0 %v6786
  %v6788 = vand.u32 %v6668, 4294901760
  %6789 = vmatpush.msra.mxu0 %v6788
  %v6790 = vand.u32 %v6677, 4294901760
  %v6791 = vsub.f32 %v6677, %v6790
  %v6792 = vand.u32 %v6791, 4294901760
  %6793 = vmatmul.f32.gmra.mxu0 %v6792
  %v6794 = vpop.f32.mrf.mxu0
  %v6795 = vadd.f32 %v6769, %v6794
  %6796 = vdwg.mxu0
  %6797 = vmatpush.msra.mxu0 0.0
  %6798 = vmatpush.msra.mxu0 0.0
  %6799 = vmatpush.msra.mxu0 0.0
  %6800 = vmatpush.msra.mxu0 0.0
  %6801 = vmatpush.msra.mxu0 0.0
  %6802 = vmatpush.msra.mxu0 0.0
  %6803 = vmatpush.msra.mxu0 0.0
  %6804 = vmatpush.msra.mxu0 0.0
  %6805 = vmatpush.msra.mxu0 0.0
  %6806 = vmatpush.msra.mxu0 0.0
  %6807 = vmatpush.msra.mxu0 0.0
  %6808 = vmatpush.msra.mxu0 0.0
  %6809 = vmatpush.msra.mxu0 0.0
  %v6810 = vand.u32 %v6672, 4294901760
  %v6811 = vsub.f32 %v6672, %v6810
  %v6812 = vand.u32 %v6811, 4294901760
  %6813 = vmatpush.msra.mxu0 %v6812
  %v6814 = vand.u32 %v6670, 4294901760
  %v6815 = vsub.f32 %v6670, %v6814
  %v6816 = vand.u32 %v6815, 4294901760
  %6817 = vmatpush.msra.mxu0 %v6816
  %v6818 = vand.u32 %v6668, 4294901760
  %v6819 = vsub.f32 %v6668, %v6818
  %v6820 = vand.u32 %v6819, 4294901760
  %6821 = vmatpush.msra.mxu0 %v6820
  %v6822 = vand.u32 %v6677, 4294901760
  %6823 = vmatmul.f32.gmra.mxu0 %v6822
  %v6824 = vpop.f32.mrf.mxu0
  %v6825 = vadd.f32 %v6795, %v6824
  %6826 = vdwg.mxu0
  %6827 = vmatpush.msra.mxu0 0.0
  %6828 = vmatpush.msra.mxu0 0.0
  %6829 = vmatpush.msra.mxu0 0.0
  %6830 = vmatpush.msra.mxu0 0.0
  %6831 = vmatpush.msra.mxu0 0.0
  %6832 = vmatpush.msra.mxu0 0.0
  %6833 = vmatpush.msra.mxu0 0.0
  %6834 = vmatpush.msra.mxu0 0.0
  %6835 = vmatpush.msra.mxu0 0.0
  %6836 = vmatpush.msra.mxu0 0.0
  %6837 = vmatpush.msra.mxu0 0.0
  %6838 = vmatpush.msra.mxu0 0.0
  %6839 = vmatpush.msra.mxu0 0.0
  %v6840 = vand.u32 %v6672, 4294901760
  %6841 = vmatpush.msra.mxu0 %v6840
  %v6842 = vand.u32 %v6670, 4294901760
  %6843 = vmatpush.msra.mxu0 %v6842
  %v6844 = vand.u32 %v6668, 4294901760
  %6845 = vmatpush.msra.mxu0 %v6844
  %v6846 = vand.u32 %v6677, 4294901760
  %6847 = vmatmul.f32.gmra.mxu0 %v6846
  %v6848 = vpop.f32.mrf.mxu0
  %v6849 = vadd.f32 %v6825, %v6848
  %6850 = vdwg.mxu0
  %v6851 = vadd.f32 %v6665, %v6849
  %v6852 = vld [vmem:[%s0 + $0x4e0] sm:$0xff]
  %v6854 = vsel %vm6129, %v6852, 0
  %6856 = vmatpush.msra.mxu0 0.0
  %6857 = vmatpush.msra.mxu0 0.0
  %6858 = vmatpush.msra.mxu0 0.0
  %6859 = vmatpush.msra.mxu0 0.0
  %6860 = vmatpush.msra.mxu0 0.0
  %6861 = vmatpush.msra.mxu0 0.0
  %6862 = vmatpush.msra.mxu0 0.0
  %6863 = vmatpush.msra.mxu0 0.0
  %6864 = vmatpush.msra.mxu0 0.0
  %6865 = vmatpush.msra.mxu0 0.0
  %6866 = vmatpush.msra.mxu0 0.0
  %6867 = vmatpush.msra.mxu0 0.0
  %6868 = vmatpush.msra.mxu0 0.0
  %v6869 = vand.u32 %v5892, 4294901760
  %6870 = vmatpush.msra.mxu0 %v6869
  %v6871 = vand.u32 %v5888, 4294901760
  %6872 = vmatpush.msra.mxu0 %v6871
  %v6873 = vand.u32 %v5884, 4294901760
  %6874 = vmatpush.msra.mxu0 %v6873
  %v6875 = vand.u32 %v6854, 4294901760
  %v6876 = vsub.f32 %v6854, %v6875
  %v6877 = vand.u32 %v6876, 4294901760
  %v6878 = vsub.f32 %v6876, %v6877
  %v6879 = vand.u32 %v6878, 4294901760
  %6880 = vmatmul.f32.gmra.mxu0 %v6879
  %v6881 = vpop.f32.mrf.mxu0
  %v6882 = vadd.f32 0.0, %v6881
  %6883 = vdwg.mxu0
  %6884 = vmatpush.msra.mxu0 0.0
  %6885 = vmatpush.msra.mxu0 0.0
  %6886 = vmatpush.msra.mxu0 0.0
  %6887 = vmatpush.msra.mxu0 0.0
  %6888 = vmatpush.msra.mxu0 0.0
  %6889 = vmatpush.msra.mxu0 0.0
  %6890 = vmatpush.msra.mxu0 0.0
  %6891 = vmatpush.msra.mxu0 0.0
  %6892 = vmatpush.msra.mxu0 0.0
  %6893 = vmatpush.msra.mxu0 0.0
  %6894 = vmatpush.msra.mxu0 0.0
  %6895 = vmatpush.msra.mxu0 0.0
  %6896 = vmatpush.msra.mxu0 0.0
  %v6897 = vand.u32 %v5892, 4294901760
  %v6898 = vsub.f32 %v5892, %v6897
  %v6899 = vand.u32 %v6898, 4294901760
  %v6900 = vsub.f32 %v6898, %v6899
  %v6901 = vand.u32 %v6900, 4294901760
  %6902 = vmatpush.msra.mxu0 %v6901
  %v6903 = vand.u32 %v5888, 4294901760
  %v6904 = vsub.f32 %v5888, %v6903
  %v6905 = vand.u32 %v6904, 4294901760
  %v6906 = vsub.f32 %v6904, %v6905
  %v6907 = vand.u32 %v6906, 4294901760
  %6908 = vmatpush.msra.mxu0 %v6907
  %v6909 = vand.u32 %v5884, 4294901760
  %v6910 = vsub.f32 %v5884, %v6909
  %v6911 = vand.u32 %v6910, 4294901760
  %v6912 = vsub.f32 %v6910, %v6911
  %v6913 = vand.u32 %v6912, 4294901760
  %6914 = vmatpush.msra.mxu0 %v6913
  %v6915 = vand.u32 %v6854, 4294901760
  %6916 = vmatmul.f32.gmra.mxu0 %v6915
  %v6917 = vpop.f32.mrf.mxu0
  %v6918 = vadd.f32 %v6882, %v6917
  %6919 = vdwg.mxu0
  %6920 = vmatpush.msra.mxu0 0.0
  %6921 = vmatpush.msra.mxu0 0.0
  %6922 = vmatpush.msra.mxu0 0.0
  %6923 = vmatpush.msra.mxu0 0.0
  %6924 = vmatpush.msra.mxu0 0.0
  %6925 = vmatpush.msra.mxu0 0.0
  %6926 = vmatpush.msra.mxu0 0.0
  %6927 = vmatpush.msra.mxu0 0.0
  %6928 = vmatpush.msra.mxu0 0.0
  %6929 = vmatpush.msra.mxu0 0.0
  %6930 = vmatpush.msra.mxu0 0.0
  %6931 = vmatpush.msra.mxu0 0.0
  %6932 = vmatpush.msra.mxu0 0.0
  %v6933 = vand.u32 %v5892, 4294901760
  %v6934 = vsub.f32 %v5892, %v6933
  %6935 = vmatpush.msra.mxu0 %v6934
  %v6936 = vand.u32 %v5888, 4294901760
  %v6937 = vsub.f32 %v5888, %v6936
  %6938 = vmatpush.msra.mxu0 %v6937
  %v6939 = vand.u32 %v5884, 4294901760
  %v6940 = vsub.f32 %v5884, %v6939
  %6941 = vmatpush.msra.mxu0 %v6940
  %v6942 = vand.u32 %v6854, 4294901760
  %v6943 = vsub.f32 %v6854, %v6942
  %6944 = vmatmul.f32.gmra.mxu0 %v6943
  %v6945 = vpop.f32.mrf.mxu0
  %v6946 = vadd.f32 %v6918, %v6945
  %6947 = vdwg.mxu0
  %6948 = vmatpush.msra.mxu0 0.0
  %6949 = vmatpush.msra.mxu0 0.0
  %6950 = vmatpush.msra.mxu0 0.0
  %6951 = vmatpush.msra.mxu0 0.0
  %6952 = vmatpush.msra.mxu0 0.0
  %6953 = vmatpush.msra.mxu0 0.0
  %6954 = vmatpush.msra.mxu0 0.0
  %6955 = vmatpush.msra.mxu0 0.0
  %6956 = vmatpush.msra.mxu0 0.0
  %6957 = vmatpush.msra.mxu0 0.0
  %6958 = vmatpush.msra.mxu0 0.0
  %6959 = vmatpush.msra.mxu0 0.0
  %6960 = vmatpush.msra.mxu0 0.0
  %v6961 = vand.u32 %v5892, 4294901760
  %6962 = vmatpush.msra.mxu0 %v6961
  %v6963 = vand.u32 %v5888, 4294901760
  %6964 = vmatpush.msra.mxu0 %v6963
  %v6965 = vand.u32 %v5884, 4294901760
  %6966 = vmatpush.msra.mxu0 %v6965
  %v6967 = vand.u32 %v6854, 4294901760
  %v6968 = vsub.f32 %v6854, %v6967
  %v6969 = vand.u32 %v6968, 4294901760
  %6970 = vmatmul.f32.gmra.mxu0 %v6969
  %v6971 = vpop.f32.mrf.mxu0
  %v6972 = vadd.f32 %v6946, %v6971
  %6973 = vdwg.mxu0
  %6974 = vmatpush.msra.mxu0 0.0
  %6975 = vmatpush.msra.mxu0 0.0
  %6976 = vmatpush.msra.mxu0 0.0
  %6977 = vmatpush.msra.mxu0 0.0
  %6978 = vmatpush.msra.mxu0 0.0
  %6979 = vmatpush.msra.mxu0 0.0
  %6980 = vmatpush.msra.mxu0 0.0
  %6981 = vmatpush.msra.mxu0 0.0
  %6982 = vmatpush.msra.mxu0 0.0
  %6983 = vmatpush.msra.mxu0 0.0
  %6984 = vmatpush.msra.mxu0 0.0
  %6985 = vmatpush.msra.mxu0 0.0
  %6986 = vmatpush.msra.mxu0 0.0
  %v6987 = vand.u32 %v5892, 4294901760
  %v6988 = vsub.f32 %v5892, %v6987
  %v6989 = vand.u32 %v6988, 4294901760
  %6990 = vmatpush.msra.mxu0 %v6989
  %v6991 = vand.u32 %v5888, 4294901760
  %v6992 = vsub.f32 %v5888, %v6991
  %v6993 = vand.u32 %v6992, 4294901760
  %6994 = vmatpush.msra.mxu0 %v6993
  %v6995 = vand.u32 %v5884, 4294901760
  %v6996 = vsub.f32 %v5884, %v6995
  %v6997 = vand.u32 %v6996, 4294901760
  %6998 = vmatpush.msra.mxu0 %v6997
  %v6999 = vand.u32 %v6854, 4294901760
  %7000 = vmatmul.f32.gmra.mxu0 %v6999
  %v7001 = vpop.f32.mrf.mxu0
  %v7002 = vadd.f32 %v6972, %v7001
  %7003 = vdwg.mxu0
  %7004 = vmatpush.msra.mxu0 0.0
  %7005 = vmatpush.msra.mxu0 0.0
  %7006 = vmatpush.msra.mxu0 0.0
  %7007 = vmatpush.msra.mxu0 0.0
  %7008 = vmatpush.msra.mxu0 0.0
  %7009 = vmatpush.msra.mxu0 0.0
  %7010 = vmatpush.msra.mxu0 0.0
  %7011 = vmatpush.msra.mxu0 0.0
  %7012 = vmatpush.msra.mxu0 0.0
  %7013 = vmatpush.msra.mxu0 0.0
  %7014 = vmatpush.msra.mxu0 0.0
  %7015 = vmatpush.msra.mxu0 0.0
  %7016 = vmatpush.msra.mxu0 0.0
  %v7017 = vand.u32 %v5892, 4294901760
  %7018 = vmatpush.msra.mxu0 %v7017
  %v7019 = vand.u32 %v5888, 4294901760
  %7020 = vmatpush.msra.mxu0 %v7019
  %v7021 = vand.u32 %v5884, 4294901760
  %7022 = vmatpush.msra.mxu0 %v7021
  %v7023 = vand.u32 %v6854, 4294901760
  %7024 = vmatmul.f32.gmra.mxu0 %v7023
  %v7025 = vpop.f32.mrf.mxu0
  %v7026 = vadd.f32 %v7002, %v7025
  %7027 = vdwg.mxu0
  %v7028 = vadd.f32 %v6851, %v7026
  %v7029 = vld [vmem:[%s0 + $0x4f8] sm:$0xff]
  %7033 = vrot.lane.b32.xlu0 %v5884, 96
  %v7034 = vpop.permute.xlu0 %7033
  %7035 = vrot.lane.b32.xlu0 %v5888, 96
  %v7036 = vpop.permute.xlu0 %7035
  %7037 = vrot.lane.b32.xlu0 %v5892, 96
  %v7038 = vpop.permute.xlu0 %7037
  %v7043 = vsel %vm6129, %v7029, 0
  %7045 = vmatpush.msra.mxu0 0.0
  %7046 = vmatpush.msra.mxu0 0.0
  %7047 = vmatpush.msra.mxu0 0.0
  %7048 = vmatpush.msra.mxu0 0.0
  %7049 = vmatpush.msra.mxu0 0.0
  %7050 = vmatpush.msra.mxu0 0.0
  %7051 = vmatpush.msra.mxu0 0.0
  %7052 = vmatpush.msra.mxu0 0.0
  %7053 = vmatpush.msra.mxu0 0.0
  %7054 = vmatpush.msra.mxu0 0.0
  %7055 = vmatpush.msra.mxu0 0.0
  %7056 = vmatpush.msra.mxu0 0.0
  %7057 = vmatpush.msra.mxu0 0.0
  %v7058 = vand.u32 %v7038, 4294901760
  %7059 = vmatpush.msra.mxu0 %v7058
  %v7060 = vand.u32 %v7036, 4294901760
  %7061 = vmatpush.msra.mxu0 %v7060
  %v7062 = vand.u32 %v7034, 4294901760
  %7063 = vmatpush.msra.mxu0 %v7062
  %v7064 = vand.u32 %v7043, 4294901760
  %v7065 = vsub.f32 %v7043, %v7064
  %v7066 = vand.u32 %v7065, 4294901760
  %v7067 = vsub.f32 %v7065, %v7066
  %v7068 = vand.u32 %v7067, 4294901760
  %7069 = vmatmul.f32.gmra.mxu0 %v7068
  %v7070 = vpop.f32.mrf.mxu0
  %v7071 = vadd.f32 0.0, %v7070
  %7072 = vdwg.mxu0
  %7073 = vmatpush.msra.mxu0 0.0
  %7074 = vmatpush.msra.mxu0 0.0
  %7075 = vmatpush.msra.mxu0 0.0
  %7076 = vmatpush.msra.mxu0 0.0
  %7077 = vmatpush.msra.mxu0 0.0
  %7078 = vmatpush.msra.mxu0 0.0
  %7079 = vmatpush.msra.mxu0 0.0
  %7080 = vmatpush.msra.mxu0 0.0
  %7081 = vmatpush.msra.mxu0 0.0
  %7082 = vmatpush.msra.mxu0 0.0
  %7083 = vmatpush.msra.mxu0 0.0
  %7084 = vmatpush.msra.mxu0 0.0
  %7085 = vmatpush.msra.mxu0 0.0
  %v7086 = vand.u32 %v7038, 4294901760
  %v7087 = vsub.f32 %v7038, %v7086
  %v7088 = vand.u32 %v7087, 4294901760
  %v7089 = vsub.f32 %v7087, %v7088
  %v7090 = vand.u32 %v7089, 4294901760
  %7091 = vmatpush.msra.mxu0 %v7090
  %v7092 = vand.u32 %v7036, 4294901760
  %v7093 = vsub.f32 %v7036, %v7092
  %v7094 = vand.u32 %v7093, 4294901760
  %v7095 = vsub.f32 %v7093, %v7094
  %v7096 = vand.u32 %v7095, 4294901760
  %7097 = vmatpush.msra.mxu0 %v7096
  %v7098 = vand.u32 %v7034, 4294901760
  %v7099 = vsub.f32 %v7034, %v7098
  %v7100 = vand.u32 %v7099, 4294901760
  %v7101 = vsub.f32 %v7099, %v7100
  %v7102 = vand.u32 %v7101, 4294901760
  %7103 = vmatpush.msra.mxu0 %v7102
  %v7104 = vand.u32 %v7043, 4294901760
  %7105 = vmatmul.f32.gmra.mxu0 %v7104
  %v7106 = vpop.f32.mrf.mxu0
  %v7107 = vadd.f32 %v7071, %v7106
  %7108 = vdwg.mxu0
  %7109 = vmatpush.msra.mxu0 0.0
  %7110 = vmatpush.msra.mxu0 0.0
  %7111 = vmatpush.msra.mxu0 0.0
  %7112 = vmatpush.msra.mxu0 0.0
  %7113 = vmatpush.msra.mxu0 0.0
  %7114 = vmatpush.msra.mxu0 0.0
  %7115 = vmatpush.msra.mxu0 0.0
  %7116 = vmatpush.msra.mxu0 0.0
  %7117 = vmatpush.msra.mxu0 0.0
  %7118 = vmatpush.msra.mxu0 0.0
  %7119 = vmatpush.msra.mxu0 0.0
  %7120 = vmatpush.msra.mxu0 0.0
  %7121 = vmatpush.msra.mxu0 0.0
  %v7122 = vand.u32 %v7038, 4294901760
  %v7123 = vsub.f32 %v7038, %v7122
  %7124 = vmatpush.msra.mxu0 %v7123
  %v7125 = vand.u32 %v7036, 4294901760
  %v7126 = vsub.f32 %v7036, %v7125
  %7127 = vmatpush.msra.mxu0 %v7126
  %v7128 = vand.u32 %v7034, 4294901760
  %v7129 = vsub.f32 %v7034, %v7128
  %7130 = vmatpush.msra.mxu0 %v7129
  %v7131 = vand.u32 %v7043, 4294901760
  %v7132 = vsub.f32 %v7043, %v7131
  %7133 = vmatmul.f32.gmra.mxu0 %v7132
  %v7134 = vpop.f32.mrf.mxu0
  %v7135 = vadd.f32 %v7107, %v7134
  %7136 = vdwg.mxu0
  %7137 = vmatpush.msra.mxu0 0.0
  %7138 = vmatpush.msra.mxu0 0.0
  %7139 = vmatpush.msra.mxu0 0.0
  %7140 = vmatpush.msra.mxu0 0.0
  %7141 = vmatpush.msra.mxu0 0.0
  %7142 = vmatpush.msra.mxu0 0.0
  %7143 = vmatpush.msra.mxu0 0.0
  %7144 = vmatpush.msra.mxu0 0.0
  %7145 = vmatpush.msra.mxu0 0.0
  %7146 = vmatpush.msra.mxu0 0.0
  %7147 = vmatpush.msra.mxu0 0.0
  %7148 = vmatpush.msra.mxu0 0.0
  %7149 = vmatpush.msra.mxu0 0.0
  %v7150 = vand.u32 %v7038, 4294901760
  %7151 = vmatpush.msra.mxu0 %v7150
  %v7152 = vand.u32 %v7036, 4294901760
  %7153 = vmatpush.msra.mxu0 %v7152
  %v7154 = vand.u32 %v7034, 4294901760
  %7155 = vmatpush.msra.mxu0 %v7154
  %v7156 = vand.u32 %v7043, 4294901760
  %v7157 = vsub.f32 %v7043, %v7156
  %v7158 = vand.u32 %v7157, 4294901760
  %7159 = vmatmul.f32.gmra.mxu0 %v7158
  %v7160 = vpop.f32.mrf.mxu0
  %v7161 = vadd.f32 %v7135, %v7160
  %7162 = vdwg.mxu0
  %7163 = vmatpush.msra.mxu0 0.0
  %7164 = vmatpush.msra.mxu0 0.0
  %7165 = vmatpush.msra.mxu0 0.0
  %7166 = vmatpush.msra.mxu0 0.0
  %7167 = vmatpush.msra.mxu0 0.0
  %7168 = vmatpush.msra.mxu0 0.0
  %7169 = vmatpush.msra.mxu0 0.0
  %7170 = vmatpush.msra.mxu0 0.0
  %7171 = vmatpush.msra.mxu0 0.0
  %7172 = vmatpush.msra.mxu0 0.0
  %7173 = vmatpush.msra.mxu0 0.0
  %7174 = vmatpush.msra.mxu0 0.0
  %7175 = vmatpush.msra.mxu0 0.0
  %v7176 = vand.u32 %v7038, 4294901760
  %v7177 = vsub.f32 %v7038, %v7176
  %v7178 = vand.u32 %v7177, 4294901760
  %7179 = vmatpush.msra.mxu0 %v7178
  %v7180 = vand.u32 %v7036, 4294901760
  %v7181 = vsub.f32 %v7036, %v7180
  %v7182 = vand.u32 %v7181, 4294901760
  %7183 = vmatpush.msra.mxu0 %v7182
  %v7184 = vand.u32 %v7034, 4294901760
  %v7185 = vsub.f32 %v7034, %v7184
  %v7186 = vand.u32 %v7185, 4294901760
  %7187 = vmatpush.msra.mxu0 %v7186
  %v7188 = vand.u32 %v7043, 4294901760
  %7189 = vmatmul.f32.gmra.mxu0 %v7188
  %v7190 = vpop.f32.mrf.mxu0
  %v7191 = vadd.f32 %v7161, %v7190
  %7192 = vdwg.mxu0
  %7193 = vmatpush.msra.mxu0 0.0
  %7194 = vmatpush.msra.mxu0 0.0
  %7195 = vmatpush.msra.mxu0 0.0
  %7196 = vmatpush.msra.mxu0 0.0
  %7197 = vmatpush.msra.mxu0 0.0
  %7198 = vmatpush.msra.mxu0 0.0
  %7199 = vmatpush.msra.mxu0 0.0
  %7200 = vmatpush.msra.mxu0 0.0
  %7201 = vmatpush.msra.mxu0 0.0
  %7202 = vmatpush.msra.mxu0 0.0
  %7203 = vmatpush.msra.mxu0 0.0
  %7204 = vmatpush.msra.mxu0 0.0
  %7205 = vmatpush.msra.mxu0 0.0
  %v7206 = vand.u32 %v7038, 4294901760
  %7207 = vmatpush.msra.mxu0 %v7206
  %v7208 = vand.u32 %v7036, 4294901760
  %7209 = vmatpush.msra.mxu0 %v7208
  %v7210 = vand.u32 %v7034, 4294901760
  %7211 = vmatpush.msra.mxu0 %v7210
  %v7212 = vand.u32 %v7043, 4294901760
  %7213 = vmatmul.f32.gmra.mxu0 %v7212
  %v7214 = vpop.f32.mrf.mxu0
  %v7215 = vadd.f32 %v7191, %v7214
  %7216 = vdwg.mxu0
  %v7217 = vadd.f32 %v7028, %v7215
  %v7218 = vld [vmem:[%s0 + $0x510] sm:$0xff]
  %7219 = vrot.lane.b32.xlu0 %v5884, 64
  %v7220 = vpop.permute.xlu0 %7219
  %7221 = vrot.lane.b32.xlu0 %v5888, 64
  %v7222 = vpop.permute.xlu0 %7221
  %7223 = vrot.lane.b32.xlu0 %v5892, 64
  %v7224 = vpop.permute.xlu0 %7223
  %v7229 = vsel %vm6129, %v7218, 0
  %7231 = vmatpush.msra.mxu0 0.0
  %7232 = vmatpush.msra.mxu0 0.0
  %7233 = vmatpush.msra.mxu0 0.0
  %7234 = vmatpush.msra.mxu0 0.0
  %7235 = vmatpush.msra.mxu0 0.0
  %7236 = vmatpush.msra.mxu0 0.0
  %7237 = vmatpush.msra.mxu0 0.0
  %7238 = vmatpush.msra.mxu0 0.0
  %7239 = vmatpush.msra.mxu0 0.0
  %7240 = vmatpush.msra.mxu0 0.0
  %7241 = vmatpush.msra.mxu0 0.0
  %7242 = vmatpush.msra.mxu0 0.0
  %7243 = vmatpush.msra.mxu0 0.0
  %v7244 = vand.u32 %v7224, 4294901760
  %7245 = vmatpush.msra.mxu0 %v7244
  %v7246 = vand.u32 %v7222, 4294901760
  %7247 = vmatpush.msra.mxu0 %v7246
  %v7248 = vand.u32 %v7220, 4294901760
  %7249 = vmatpush.msra.mxu0 %v7248
  %v7250 = vand.u32 %v7229, 4294901760
  %v7251 = vsub.f32 %v7229, %v7250
  %v7252 = vand.u32 %v7251, 4294901760
  %v7253 = vsub.f32 %v7251, %v7252
  %v7254 = vand.u32 %v7253, 4294901760
  %7255 = vmatmul.f32.gmra.mxu0 %v7254
  %v7256 = vpop.f32.mrf.mxu0
  %v7257 = vadd.f32 0.0, %v7256
  %7258 = vdwg.mxu0
  %7259 = vmatpush.msra.mxu0 0.0
  %7260 = vmatpush.msra.mxu0 0.0
  %7261 = vmatpush.msra.mxu0 0.0
  %7262 = vmatpush.msra.mxu0 0.0
  %7263 = vmatpush.msra.mxu0 0.0
  %7264 = vmatpush.msra.mxu0 0.0
  %7265 = vmatpush.msra.mxu0 0.0
  %7266 = vmatpush.msra.mxu0 0.0
  %7267 = vmatpush.msra.mxu0 0.0
  %7268 = vmatpush.msra.mxu0 0.0
  %7269 = vmatpush.msra.mxu0 0.0
  %7270 = vmatpush.msra.mxu0 0.0
  %7271 = vmatpush.msra.mxu0 0.0
  %v7272 = vand.u32 %v7224, 4294901760
  %v7273 = vsub.f32 %v7224, %v7272
  %v7274 = vand.u32 %v7273, 4294901760
  %v7275 = vsub.f32 %v7273, %v7274
  %v7276 = vand.u32 %v7275, 4294901760
  %7277 = vmatpush.msra.mxu0 %v7276
  %v7278 = vand.u32 %v7222, 4294901760
  %v7279 = vsub.f32 %v7222, %v7278
  %v7280 = vand.u32 %v7279, 4294901760
  %v7281 = vsub.f32 %v7279, %v7280
  %v7282 = vand.u32 %v7281, 4294901760
  %7283 = vmatpush.msra.mxu0 %v7282
  %v7284 = vand.u32 %v7220, 4294901760
  %v7285 = vsub.f32 %v7220, %v7284
  %v7286 = vand.u32 %v7285, 4294901760
  %v7287 = vsub.f32 %v7285, %v7286
  %v7288 = vand.u32 %v7287, 4294901760
  %7289 = vmatpush.msra.mxu0 %v7288
  %v7290 = vand.u32 %v7229, 4294901760
  %7291 = vmatmul.f32.gmra.mxu0 %v7290
  %v7292 = vpop.f32.mrf.mxu0
  %v7293 = vadd.f32 %v7257, %v7292
  %7294 = vdwg.mxu0
  %7295 = vmatpush.msra.mxu0 0.0
  %7296 = vmatpush.msra.mxu0 0.0
  %7297 = vmatpush.msra.mxu0 0.0
  %7298 = vmatpush.msra.mxu0 0.0
  %7299 = vmatpush.msra.mxu0 0.0
  %7300 = vmatpush.msra.mxu0 0.0
  %7301 = vmatpush.msra.mxu0 0.0
  %7302 = vmatpush.msra.mxu0 0.0
  %7303 = vmatpush.msra.mxu0 0.0
  %7304 = vmatpush.msra.mxu0 0.0
  %7305 = vmatpush.msra.mxu0 0.0
  %7306 = vmatpush.msra.mxu0 0.0
  %7307 = vmatpush.msra.mxu0 0.0
  %v7308 = vand.u32 %v7224, 4294901760
  %v7309 = vsub.f32 %v7224, %v7308
  %7310 = vmatpush.msra.mxu0 %v7309
  %v7311 = vand.u32 %v7222, 4294901760
  %v7312 = vsub.f32 %v7222, %v7311
  %7313 = vmatpush.msra.mxu0 %v7312
  %v7314 = vand.u32 %v7220, 4294901760
  %v7315 = vsub.f32 %v7220, %v7314
  %7316 = vmatpush.msra.mxu0 %v7315
  %v7317 = vand.u32 %v7229, 4294901760
  %v7318 = vsub.f32 %v7229, %v7317
  %7319 = vmatmul.f32.gmra.mxu0 %v7318
  %v7320 = vpop.f32.mrf.mxu0
  %v7321 = vadd.f32 %v7293, %v7320
  %7322 = vdwg.mxu0
  %7323 = vmatpush.msra.mxu0 0.0
  %7324 = vmatpush.msra.mxu0 0.0
  %7325 = vmatpush.msra.mxu0 0.0
  %7326 = vmatpush.msra.mxu0 0.0
  %7327 = vmatpush.msra.mxu0 0.0
  %7328 = vmatpush.msra.mxu0 0.0
  %7329 = vmatpush.msra.mxu0 0.0
  %7330 = vmatpush.msra.mxu0 0.0
  %7331 = vmatpush.msra.mxu0 0.0
  %7332 = vmatpush.msra.mxu0 0.0
  %7333 = vmatpush.msra.mxu0 0.0
  %7334 = vmatpush.msra.mxu0 0.0
  %7335 = vmatpush.msra.mxu0 0.0
  %v7336 = vand.u32 %v7224, 4294901760
  %7337 = vmatpush.msra.mxu0 %v7336
  %v7338 = vand.u32 %v7222, 4294901760
  %7339 = vmatpush.msra.mxu0 %v7338
  %v7340 = vand.u32 %v7220, 4294901760
  %7341 = vmatpush.msra.mxu0 %v7340
  %v7342 = vand.u32 %v7229, 4294901760
  %v7343 = vsub.f32 %v7229, %v7342
  %v7344 = vand.u32 %v7343, 4294901760
  %7345 = vmatmul.f32.gmra.mxu0 %v7344
  %v7346 = vpop.f32.mrf.mxu0
  %v7347 = vadd.f32 %v7321, %v7346
  %7348 = vdwg.mxu0
  %7349 = vmatpush.msra.mxu0 0.0
  %7350 = vmatpush.msra.mxu0 0.0
  %7351 = vmatpush.msra.mxu0 0.0
  %7352 = vmatpush.msra.mxu0 0.0
  %7353 = vmatpush.msra.mxu0 0.0
  %7354 = vmatpush.msra.mxu0 0.0
  %7355 = vmatpush.msra.mxu0 0.0
  %7356 = vmatpush.msra.mxu0 0.0
  %7357 = vmatpush.msra.mxu0 0.0
  %7358 = vmatpush.msra.mxu0 0.0
  %7359 = vmatpush.msra.mxu0 0.0
  %7360 = vmatpush.msra.mxu0 0.0
  %7361 = vmatpush.msra.mxu0 0.0
  %v7362 = vand.u32 %v7224, 4294901760
  %v7363 = vsub.f32 %v7224, %v7362
  %v7364 = vand.u32 %v7363, 4294901760
  %7365 = vmatpush.msra.mxu0 %v7364
  %v7366 = vand.u32 %v7222, 4294901760
  %v7367 = vsub.f32 %v7222, %v7366
  %v7368 = vand.u32 %v7367, 4294901760
  %7369 = vmatpush.msra.mxu0 %v7368
  %v7370 = vand.u32 %v7220, 4294901760
  %v7371 = vsub.f32 %v7220, %v7370
  %v7372 = vand.u32 %v7371, 4294901760
  %7373 = vmatpush.msra.mxu0 %v7372
  %v7374 = vand.u32 %v7229, 4294901760
  %7375 = vmatmul.f32.gmra.mxu0 %v7374
  %v7376 = vpop.f32.mrf.mxu0
  %v7377 = vadd.f32 %v7347, %v7376
  %7378 = vdwg.mxu0
  %7379 = vmatpush.msra.mxu0 0.0
  %7380 = vmatpush.msra.mxu0 0.0
  %7381 = vmatpush.msra.mxu0 0.0
  %7382 = vmatpush.msra.mxu0 0.0
  %7383 = vmatpush.msra.mxu0 0.0
  %7384 = vmatpush.msra.mxu0 0.0
  %7385 = vmatpush.msra.mxu0 0.0
  %7386 = vmatpush.msra.mxu0 0.0
  %7387 = vmatpush.msra.mxu0 0.0
  %7388 = vmatpush.msra.mxu0 0.0
  %7389 = vmatpush.msra.mxu0 0.0
  %7390 = vmatpush.msra.mxu0 0.0
  %7391 = vmatpush.msra.mxu0 0.0
  %v7392 = vand.u32 %v7224, 4294901760
  %7393 = vmatpush.msra.mxu0 %v7392
  %v7394 = vand.u32 %v7222, 4294901760
  %7395 = vmatpush.msra.mxu0 %v7394
  %v7396 = vand.u32 %v7220, 4294901760
  %7397 = vmatpush.msra.mxu0 %v7396
  %v7398 = vand.u32 %v7229, 4294901760
  %7399 = vmatmul.f32.gmra.mxu0 %v7398
  %v7400 = vpop.f32.mrf.mxu0
  %v7401 = vadd.f32 %v7377, %v7400
  %7402 = vdwg.mxu0
  %v7403 = vadd.f32 %v7217, %v7401
  %v7404 = vld [vmem:[%s0 + $0x528] sm:$0xff]
  %7405 = vrot.lane.b32.xlu0 %v5884, 32
  %v7406 = vpop.permute.xlu0 %7405
  %7407 = vrot.lane.b32.xlu0 %v5888, 32
  %v7408 = vpop.permute.xlu0 %7407
  %7409 = vrot.lane.b32.xlu0 %v5892, 32
  %v7410 = vpop.permute.xlu0 %7409
  %v7415 = vsel %vm6129, %v7404, 0
  %7417 = vmatpush.msra.mxu0 0.0
  %7418 = vmatpush.msra.mxu0 0.0
  %7419 = vmatpush.msra.mxu0 0.0
  %7420 = vmatpush.msra.mxu0 0.0
  %7421 = vmatpush.msra.mxu0 0.0
  %7422 = vmatpush.msra.mxu0 0.0
  %7423 = vmatpush.msra.mxu0 0.0
  %7424 = vmatpush.msra.mxu0 0.0
  %7425 = vmatpush.msra.mxu0 0.0
  %7426 = vmatpush.msra.mxu0 0.0
  %7427 = vmatpush.msra.mxu0 0.0
  %7428 = vmatpush.msra.mxu0 0.0
  %7429 = vmatpush.msra.mxu0 0.0
  %v7430 = vand.u32 %v7410, 4294901760
  %7431 = vmatpush.msra.mxu0 %v7430
  %v7432 = vand.u32 %v7408, 4294901760
  %7433 = vmatpush.msra.mxu0 %v7432
  %v7434 = vand.u32 %v7406, 4294901760
  %7435 = vmatpush.msra.mxu0 %v7434
  %v7436 = vand.u32 %v7415, 4294901760
  %v7437 = vsub.f32 %v7415, %v7436
  %v7438 = vand.u32 %v7437, 4294901760
  %v7439 = vsub.f32 %v7437, %v7438
  %v7440 = vand.u32 %v7439, 4294901760
  %7441 = vmatmul.f32.gmra.mxu0 %v7440
  %v7442 = vpop.f32.mrf.mxu0
  %v7443 = vadd.f32 0.0, %v7442
  %7444 = vdwg.mxu0
  %7445 = vmatpush.msra.mxu0 0.0
  %7446 = vmatpush.msra.mxu0 0.0
  %7447 = vmatpush.msra.mxu0 0.0
  %7448 = vmatpush.msra.mxu0 0.0
  %7449 = vmatpush.msra.mxu0 0.0
  %7450 = vmatpush.msra.mxu0 0.0
  %7451 = vmatpush.msra.mxu0 0.0
  %7452 = vmatpush.msra.mxu0 0.0
  %7453 = vmatpush.msra.mxu0 0.0
  %7454 = vmatpush.msra.mxu0 0.0
  %7455 = vmatpush.msra.mxu0 0.0
  %7456 = vmatpush.msra.mxu0 0.0
  %7457 = vmatpush.msra.mxu0 0.0
  %v7458 = vand.u32 %v7410, 4294901760
  %v7459 = vsub.f32 %v7410, %v7458
  %v7460 = vand.u32 %v7459, 4294901760
  %v7461 = vsub.f32 %v7459, %v7460
  %v7462 = vand.u32 %v7461, 4294901760
  %7463 = vmatpush.msra.mxu0 %v7462
  %v7464 = vand.u32 %v7408, 4294901760
  %v7465 = vsub.f32 %v7408, %v7464
  %v7466 = vand.u32 %v7465, 4294901760
  %v7467 = vsub.f32 %v7465, %v7466
  %v7468 = vand.u32 %v7467, 4294901760
  %7469 = vmatpush.msra.mxu0 %v7468
  %v7470 = vand.u32 %v7406, 4294901760
  %v7471 = vsub.f32 %v7406, %v7470
  %v7472 = vand.u32 %v7471, 4294901760
  %v7473 = vsub.f32 %v7471, %v7472
  %v7474 = vand.u32 %v7473, 4294901760
  %7475 = vmatpush.msra.mxu0 %v7474
  %v7476 = vand.u32 %v7415, 4294901760
  %7477 = vmatmul.f32.gmra.mxu0 %v7476
  %v7478 = vpop.f32.mrf.mxu0
  %v7479 = vadd.f32 %v7443, %v7478
  %7480 = vdwg.mxu0
  %7481 = vmatpush.msra.mxu0 0.0
  %7482 = vmatpush.msra.mxu0 0.0
  %7483 = vmatpush.msra.mxu0 0.0
  %7484 = vmatpush.msra.mxu0 0.0
  %7485 = vmatpush.msra.mxu0 0.0
  %7486 = vmatpush.msra.mxu0 0.0
  %7487 = vmatpush.msra.mxu0 0.0
  %7488 = vmatpush.msra.mxu0 0.0
  %7489 = vmatpush.msra.mxu0 0.0
  %7490 = vmatpush.msra.mxu0 0.0
  %7491 = vmatpush.msra.mxu0 0.0
  %7492 = vmatpush.msra.mxu0 0.0
  %7493 = vmatpush.msra.mxu0 0.0
  %v7494 = vand.u32 %v7410, 4294901760
  %v7495 = vsub.f32 %v7410, %v7494
  %7496 = vmatpush.msra.mxu0 %v7495
  %v7497 = vand.u32 %v7408, 4294901760
  %v7498 = vsub.f32 %v7408, %v7497
  %7499 = vmatpush.msra.mxu0 %v7498
  %v7500 = vand.u32 %v7406, 4294901760
  %v7501 = vsub.f32 %v7406, %v7500
  %7502 = vmatpush.msra.mxu0 %v7501
  %v7503 = vand.u32 %v7415, 4294901760
  %v7504 = vsub.f32 %v7415, %v7503
  %7505 = vmatmul.f32.gmra.mxu0 %v7504
  %v7506 = vpop.f32.mrf.mxu0
  %v7507 = vadd.f32 %v7479, %v7506
  %7508 = vdwg.mxu0
  %7509 = vmatpush.msra.mxu0 0.0
  %7510 = vmatpush.msra.mxu0 0.0
  %7511 = vmatpush.msra.mxu0 0.0
  %7512 = vmatpush.msra.mxu0 0.0
  %7513 = vmatpush.msra.mxu0 0.0
  %7514 = vmatpush.msra.mxu0 0.0
  %7515 = vmatpush.msra.mxu0 0.0
  %7516 = vmatpush.msra.mxu0 0.0
  %7517 = vmatpush.msra.mxu0 0.0
  %7518 = vmatpush.msra.mxu0 0.0
  %7519 = vmatpush.msra.mxu0 0.0
  %7520 = vmatpush.msra.mxu0 0.0
  %7521 = vmatpush.msra.mxu0 0.0
  %v7522 = vand.u32 %v7410, 4294901760
  %7523 = vmatpush.msra.mxu0 %v7522
  %v7524 = vand.u32 %v7408, 4294901760
  %7525 = vmatpush.msra.mxu0 %v7524
  %v7526 = vand.u32 %v7406, 4294901760
  %7527 = vmatpush.msra.mxu0 %v7526
  %v7528 = vand.u32 %v7415, 4294901760
  %v7529 = vsub.f32 %v7415, %v7528
  %v7530 = vand.u32 %v7529, 4294901760
  %7531 = vmatmul.f32.gmra.mxu0 %v7530
  %v7532 = vpop.f32.mrf.mxu0
  %v7533 = vadd.f32 %v7507, %v7532
  %7534 = vdwg.mxu0
  %7535 = vmatpush.msra.mxu0 0.0
  %7536 = vmatpush.msra.mxu0 0.0
  %7537 = vmatpush.msra.mxu0 0.0
  %7538 = vmatpush.msra.mxu0 0.0
  %7539 = vmatpush.msra.mxu0 0.0
  %7540 = vmatpush.msra.mxu0 0.0
  %7541 = vmatpush.msra.mxu0 0.0
  %7542 = vmatpush.msra.mxu0 0.0
  %7543 = vmatpush.msra.mxu0 0.0
  %7544 = vmatpush.msra.mxu0 0.0
  %7545 = vmatpush.msra.mxu0 0.0
  %7546 = vmatpush.msra.mxu0 0.0
  %7547 = vmatpush.msra.mxu0 0.0
  %v7548 = vand.u32 %v7410, 4294901760
  %v7549 = vsub.f32 %v7410, %v7548
  %v7550 = vand.u32 %v7549, 4294901760
  %7551 = vmatpush.msra.mxu0 %v7550
  %v7552 = vand.u32 %v7408, 4294901760
  %v7553 = vsub.f32 %v7408, %v7552
  %v7554 = vand.u32 %v7553, 4294901760
  %7555 = vmatpush.msra.mxu0 %v7554
  %v7556 = vand.u32 %v7406, 4294901760
  %v7557 = vsub.f32 %v7406, %v7556
  %v7558 = vand.u32 %v7557, 4294901760
  %7559 = vmatpush.msra.mxu0 %v7558
  %v7560 = vand.u32 %v7415, 4294901760
  %7561 = vmatmul.f32.gmra.mxu0 %v7560
  %v7562 = vpop.f32.mrf.mxu0
  %v7563 = vadd.f32 %v7533, %v7562
  %7564 = vdwg.mxu0
  %7565 = vmatpush.msra.mxu0 0.0
  %7566 = vmatpush.msra.mxu0 0.0
  %7567 = vmatpush.msra.mxu0 0.0
  %7568 = vmatpush.msra.mxu0 0.0
  %7569 = vmatpush.msra.mxu0 0.0
  %7570 = vmatpush.msra.mxu0 0.0
  %7571 = vmatpush.msra.mxu0 0.0
  %7572 = vmatpush.msra.mxu0 0.0
  %7573 = vmatpush.msra.mxu0 0.0
  %7574 = vmatpush.msra.mxu0 0.0
  %7575 = vmatpush.msra.mxu0 0.0
  %7576 = vmatpush.msra.mxu0 0.0
  %7577 = vmatpush.msra.mxu0 0.0
  %v7578 = vand.u32 %v7410, 4294901760
  %7579 = vmatpush.msra.mxu0 %v7578
  %v7580 = vand.u32 %v7408, 4294901760
  %7581 = vmatpush.msra.mxu0 %v7580
  %v7582 = vand.u32 %v7406, 4294901760
  %7583 = vmatpush.msra.mxu0 %v7582
  %v7584 = vand.u32 %v7415, 4294901760
  %7585 = vmatmul.f32.gmra.mxu0 %v7584
  %v7586 = vpop.f32.mrf.mxu0
  %v7587 = vadd.f32 %v7563, %v7586
  %7588 = vdwg.mxu0
  %v7589 = vadd.f32 %v7403, %v7587
  %v7590 = vld [vmem:[%s0 + $0x540] sm:$0xff]
  %v7592 = vsel %vm6129, %v7590, 0
  %7594 = vmatpush.msra.mxu0 0.0
  %7595 = vmatpush.msra.mxu0 0.0
  %7596 = vmatpush.msra.mxu0 0.0
  %7597 = vmatpush.msra.mxu0 0.0
  %7598 = vmatpush.msra.mxu0 0.0
  %7599 = vmatpush.msra.mxu0 0.0
  %7600 = vmatpush.msra.mxu0 0.0
  %7601 = vmatpush.msra.mxu0 0.0
  %7602 = vmatpush.msra.mxu0 0.0
  %7603 = vmatpush.msra.mxu0 0.0
  %7604 = vmatpush.msra.mxu0 0.0
  %7605 = vmatpush.msra.mxu0 0.0
  %7606 = vmatpush.msra.mxu0 0.0
  %v7607 = vand.u32 %v6113, 4294901760
  %7608 = vmatpush.msra.mxu0 %v7607
  %v7609 = vand.u32 %v6109, 4294901760
  %7610 = vmatpush.msra.mxu0 %v7609
  %v7611 = vand.u32 %v6105, 4294901760
  %7612 = vmatpush.msra.mxu0 %v7611
  %v7613 = vand.u32 %v7592, 4294901760
  %v7614 = vsub.f32 %v7592, %v7613
  %v7615 = vand.u32 %v7614, 4294901760
  %v7616 = vsub.f32 %v7614, %v7615
  %v7617 = vand.u32 %v7616, 4294901760
  %7618 = vmatmul.f32.gmra.mxu0 %v7617
  %v7619 = vpop.f32.mrf.mxu0
  %v7620 = vadd.f32 0.0, %v7619
  %7621 = vdwg.mxu0
  %7622 = vmatpush.msra.mxu0 0.0
  %7623 = vmatpush.msra.mxu0 0.0
  %7624 = vmatpush.msra.mxu0 0.0
  %7625 = vmatpush.msra.mxu0 0.0
  %7626 = vmatpush.msra.mxu0 0.0
  %7627 = vmatpush.msra.mxu0 0.0
  %7628 = vmatpush.msra.mxu0 0.0
  %7629 = vmatpush.msra.mxu0 0.0
  %7630 = vmatpush.msra.mxu0 0.0
  %7631 = vmatpush.msra.mxu0 0.0
  %7632 = vmatpush.msra.mxu0 0.0
  %7633 = vmatpush.msra.mxu0 0.0
  %7634 = vmatpush.msra.mxu0 0.0
  %v7635 = vand.u32 %v6113, 4294901760
  %v7636 = vsub.f32 %v6113, %v7635
  %v7637 = vand.u32 %v7636, 4294901760
  %v7638 = vsub.f32 %v7636, %v7637
  %v7639 = vand.u32 %v7638, 4294901760
  %7640 = vmatpush.msra.mxu0 %v7639
  %v7641 = vand.u32 %v6109, 4294901760
  %v7642 = vsub.f32 %v6109, %v7641
  %v7643 = vand.u32 %v7642, 4294901760
  %v7644 = vsub.f32 %v7642, %v7643
  %v7645 = vand.u32 %v7644, 4294901760
  %7646 = vmatpush.msra.mxu0 %v7645
  %v7647 = vand.u32 %v6105, 4294901760
  %v7648 = vsub.f32 %v6105, %v7647
  %v7649 = vand.u32 %v7648, 4294901760
  %v7650 = vsub.f32 %v7648, %v7649
  %v7651 = vand.u32 %v7650, 4294901760
  %7652 = vmatpush.msra.mxu0 %v7651
  %v7653 = vand.u32 %v7592, 4294901760
  %7654 = vmatmul.f32.gmra.mxu0 %v7653
  %v7655 = vpop.f32.mrf.mxu0
  %v7656 = vadd.f32 %v7620, %v7655
  %7657 = vdwg.mxu0
  %7658 = vmatpush.msra.mxu0 0.0
  %7659 = vmatpush.msra.mxu0 0.0
  %7660 = vmatpush.msra.mxu0 0.0
  %7661 = vmatpush.msra.mxu0 0.0
  %7662 = vmatpush.msra.mxu0 0.0
  %7663 = vmatpush.msra.mxu0 0.0
  %7664 = vmatpush.msra.mxu0 0.0
  %7665 = vmatpush.msra.mxu0 0.0
  %7666 = vmatpush.msra.mxu0 0.0
  %7667 = vmatpush.msra.mxu0 0.0
  %7668 = vmatpush.msra.mxu0 0.0
  %7669 = vmatpush.msra.mxu0 0.0
  %7670 = vmatpush.msra.mxu0 0.0
  %v7671 = vand.u32 %v6113, 4294901760
  %v7672 = vsub.f32 %v6113, %v7671
  %7673 = vmatpush.msra.mxu0 %v7672
  %v7674 = vand.u32 %v6109, 4294901760
  %v7675 = vsub.f32 %v6109, %v7674
  %7676 = vmatpush.msra.mxu0 %v7675
  %v7677 = vand.u32 %v6105, 4294901760
  %v7678 = vsub.f32 %v6105, %v7677
  %7679 = vmatpush.msra.mxu0 %v7678
  %v7680 = vand.u32 %v7592, 4294901760
  %v7681 = vsub.f32 %v7592, %v7680
  %7682 = vmatmul.f32.gmra.mxu0 %v7681
  %v7683 = vpop.f32.mrf.mxu0
  %v7684 = vadd.f32 %v7656, %v7683
  %7685 = vdwg.mxu0
  %7686 = vmatpush.msra.mxu0 0.0
  %7687 = vmatpush.msra.mxu0 0.0
  %7688 = vmatpush.msra.mxu0 0.0
  %7689 = vmatpush.msra.mxu0 0.0
  %7690 = vmatpush.msra.mxu0 0.0
  %7691 = vmatpush.msra.mxu0 0.0
  %7692 = vmatpush.msra.mxu0 0.0
  %7693 = vmatpush.msra.mxu0 0.0
  %7694 = vmatpush.msra.mxu0 0.0
  %7695 = vmatpush.msra.mxu0 0.0
  %7696 = vmatpush.msra.mxu0 0.0
  %7697 = vmatpush.msra.mxu0 0.0
  %7698 = vmatpush.msra.mxu0 0.0
  %v7699 = vand.u32 %v6113, 4294901760
  %7700 = vmatpush.msra.mxu0 %v7699
  %v7701 = vand.u32 %v6109, 4294901760
  %7702 = vmatpush.msra.mxu0 %v7701
  %v7703 = vand.u32 %v6105, 4294901760
  %7704 = vmatpush.msra.mxu0 %v7703
  %v7705 = vand.u32 %v7592, 4294901760
  %v7706 = vsub.f32 %v7592, %v7705
  %v7707 = vand.u32 %v7706, 4294901760
  %7708 = vmatmul.f32.gmra.mxu0 %v7707
  %v7709 = vpop.f32.mrf.mxu0
  %v7710 = vadd.f32 %v7684, %v7709
  %7711 = vdwg.mxu0
  %7712 = vmatpush.msra.mxu0 0.0
  %7713 = vmatpush.msra.mxu0 0.0
  %7714 = vmatpush.msra.mxu0 0.0
  %7715 = vmatpush.msra.mxu0 0.0
  %7716 = vmatpush.msra.mxu0 0.0
  %7717 = vmatpush.msra.mxu0 0.0
  %7718 = vmatpush.msra.mxu0 0.0
  %7719 = vmatpush.msra.mxu0 0.0
  %7720 = vmatpush.msra.mxu0 0.0
  %7721 = vmatpush.msra.mxu0 0.0
  %7722 = vmatpush.msra.mxu0 0.0
  %7723 = vmatpush.msra.mxu0 0.0
  %7724 = vmatpush.msra.mxu0 0.0
  %v7725 = vand.u32 %v6113, 4294901760
  %v7726 = vsub.f32 %v6113, %v7725
  %v7727 = vand.u32 %v7726, 4294901760
  %7728 = vmatpush.msra.mxu0 %v7727
  %v7729 = vand.u32 %v6109, 4294901760
  %v7730 = vsub.f32 %v6109, %v7729
  %v7731 = vand.u32 %v7730, 4294901760
  %7732 = vmatpush.msra.mxu0 %v7731
  %v7733 = vand.u32 %v6105, 4294901760
  %v7734 = vsub.f32 %v6105, %v7733
  %v7735 = vand.u32 %v7734, 4294901760
  %7736 = vmatpush.msra.mxu0 %v7735
  %v7737 = vand.u32 %v7592, 4294901760
  %7738 = vmatmul.f32.gmra.mxu0 %v7737
  %v7739 = vpop.f32.mrf.mxu0
  %v7740 = vadd.f32 %v7710, %v7739
  %7741 = vdwg.mxu0
  %7742 = vmatpush.msra.mxu0 0.0
  %7743 = vmatpush.msra.mxu0 0.0
  %7744 = vmatpush.msra.mxu0 0.0
  %7745 = vmatpush.msra.mxu0 0.0
  %7746 = vmatpush.msra.mxu0 0.0
  %7747 = vmatpush.msra.mxu0 0.0
  %7748 = vmatpush.msra.mxu0 0.0
  %7749 = vmatpush.msra.mxu0 0.0
  %7750 = vmatpush.msra.mxu0 0.0
  %7751 = vmatpush.msra.mxu0 0.0
  %7752 = vmatpush.msra.mxu0 0.0
  %7753 = vmatpush.msra.mxu0 0.0
  %7754 = vmatpush.msra.mxu0 0.0
  %v7755 = vand.u32 %v6113, 4294901760
  %7756 = vmatpush.msra.mxu0 %v7755
  %v7757 = vand.u32 %v6109, 4294901760
  %7758 = vmatpush.msra.mxu0 %v7757
  %v7759 = vand.u32 %v6105, 4294901760
  %7760 = vmatpush.msra.mxu0 %v7759
  %v7761 = vand.u32 %v7592, 4294901760
  %7762 = vmatmul.f32.gmra.mxu0 %v7761
  %v7763 = vpop.f32.mrf.mxu0
  %v7764 = vadd.f32 %v7740, %v7763
  %7765 = vdwg.mxu0
  %v7766 = vadd.f32 %v7589, %v7764
  %v7767 = vperm.slane %v11, 2
  %v7768 = vadd.f32 %v7766, %v7767
  %v7769 = vmax.f32 %v7768, 0.0
  %v7770 = vld [vmem:[%s0 + $0xc0] sm:$0xff]
  %v7771 = vld [vmem:[%s0 + $0xd8] sm:$0xff]
  %v7772 = vld [vmem:[%s0 + $0xf0] sm:$0xff]
  %v7773 = vld [vmem:[%s0 + $0x108] sm:$0xff]
  %v7774 = vld [vmem:[%s0 + $0x120] sm:$0xff]
  %v7775 = vld [vmem:[%s0 + $0x138] sm:$0xff]
  %v7776 = vld [vmem:[%s0 + $0x150] sm:$0xff]
  %v7777 = vld [vmem:[%s0 + $0x168] sm:$0xff]
  %vm7778 = vcmask 261120
  %v7780 = vsel %vm7778, %v25, 0
  %7782 = vmatpush.msra.mxu0 0.0
  %7783 = vmatpush.msra.mxu0 0.0
  %7784 = vmatpush.msra.mxu0 0.0
  %7785 = vmatpush.msra.mxu0 0.0
  %7786 = vmatpush.msra.mxu0 0.0
  %7787 = vmatpush.msra.mxu0 0.0
  %7788 = vmatpush.msra.mxu0 0.0
  %7789 = vmatpush.msra.mxu0 0.0
  %7790 = vmatpush.msra.mxu0 0.0
  %7791 = vmatpush.msra.mxu0 0.0
  %7792 = vmatpush.msra.mxu0 0.0
  %7793 = vmatpush.msra.mxu0 0.0
  %v7794 = vand.u32 %v7777, 4294901760
  %7795 = vmatpush.msra.mxu0 %v7794
  %v7796 = vand.u32 %v7776, 4294901760
  %7797 = vmatpush.msra.mxu0 %v7796
  %v7798 = vand.u32 %v7775, 4294901760
  %7799 = vmatpush.msra.mxu0 %v7798
  %v7800 = vand.u32 %v7774, 4294901760
  %7801 = vmatpush.msra.mxu0 %v7800
  %v7802 = vand.u32 %v7780, 4294901760
  %v7803 = vsub.f32 %v7780, %v7802
  %v7804 = vand.u32 %v7803, 4294901760
  %v7805 = vsub.f32 %v7803, %v7804
  %v7806 = vand.u32 %v7805, 4294901760
  %7807 = vmatmul.f32.gmra.mxu0 %v7806
  %v7808 = vpop.f32.mrf.mxu0
  %v7809 = vadd.f32 0.0, %v7808
  %7810 = vdwg.mxu0
  %7811 = vmatpush.msra.mxu0 0.0
  %7812 = vmatpush.msra.mxu0 0.0
  %7813 = vmatpush.msra.mxu0 0.0
  %7814 = vmatpush.msra.mxu0 0.0
  %7815 = vmatpush.msra.mxu0 0.0
  %7816 = vmatpush.msra.mxu0 0.0
  %7817 = vmatpush.msra.mxu0 0.0
  %7818 = vmatpush.msra.mxu0 0.0
  %7819 = vmatpush.msra.mxu0 0.0
  %7820 = vmatpush.msra.mxu0 0.0
  %7821 = vmatpush.msra.mxu0 0.0
  %7822 = vmatpush.msra.mxu0 0.0
  %v7823 = vand.u32 %v7777, 4294901760
  %v7824 = vsub.f32 %v7777, %v7823
  %v7825 = vand.u32 %v7824, 4294901760
  %v7826 = vsub.f32 %v7824, %v7825
  %v7827 = vand.u32 %v7826, 4294901760
  %7828 = vmatpush.msra.mxu0 %v7827
  %v7829 = vand.u32 %v7776, 4294901760
  %v7830 = vsub.f32 %v7776, %v7829
  %v7831 = vand.u32 %v7830, 4294901760
  %v7832 = vsub.f32 %v7830, %v7831
  %v7833 = vand.u32 %v7832, 4294901760
  %7834 = vmatpush.msra.mxu0 %v7833
  %v7835 = vand.u32 %v7775, 4294901760
  %v7836 = vsub.f32 %v7775, %v7835
  %v7837 = vand.u32 %v7836, 4294901760
  %v7838 = vsub.f32 %v7836, %v7837
  %v7839 = vand.u32 %v7838, 4294901760
  %7840 = vmatpush.msra.mxu0 %v7839
  %v7841 = vand.u32 %v7774, 4294901760
  %v7842 = vsub.f32 %v7774, %v7841
  %v7843 = vand.u32 %v7842, 4294901760
  %v7844 = vsub.f32 %v7842, %v7843
  %v7845 = vand.u32 %v7844, 4294901760
  %7846 = vmatpush.msra.mxu0 %v7845
  %v7847 = vand.u32 %v7780, 4294901760
  %7848 = vmatmul.f32.gmra.mxu0 %v7847
  %v7849 = vpop.f32.mrf.mxu0
  %v7850 = vadd.f32 %v7809, %v7849
  %7851 = vdwg.mxu0
  %7852 = vmatpush.msra.mxu0 0.0
  %7853 = vmatpush.msra.mxu0 0.0
  %7854 = vmatpush.msra.mxu0 0.0
  %7855 = vmatpush.msra.mxu0 0.0
  %7856 = vmatpush.msra.mxu0 0.0
  %7857 = vmatpush.msra.mxu0 0.0
  %7858 = vmatpush.msra.mxu0 0.0
  %7859 = vmatpush.msra.mxu0 0.0
  %7860 = vmatpush.msra.mxu0 0.0
  %7861 = vmatpush.msra.mxu0 0.0
  %7862 = vmatpush.msra.mxu0 0.0
  %7863 = vmatpush.msra.mxu0 0.0
  %v7864 = vand.u32 %v7777, 4294901760
  %v7865 = vsub.f32 %v7777, %v7864
  %7866 = vmatpush.msra.mxu0 %v7865
  %v7867 = vand.u32 %v7776, 4294901760
  %v7868 = vsub.f32 %v7776, %v7867
  %7869 = vmatpush.msra.mxu0 %v7868
  %v7870 = vand.u32 %v7775, 4294901760
  %v7871 = vsub.f32 %v7775, %v7870
  %7872 = vmatpush.msra.mxu0 %v7871
  %v7873 = vand.u32 %v7774, 4294901760
  %v7874 = vsub.f32 %v7774, %v7873
  %7875 = vmatpush.msra.mxu0 %v7874
  %v7876 = vand.u32 %v7780, 4294901760
  %v7877 = vsub.f32 %v7780, %v7876
  %7878 = vmatmul.f32.gmra.mxu0 %v7877
  %v7879 = vpop.f32.mrf.mxu0
  %v7880 = vadd.f32 %v7850, %v7879
  %7881 = vdwg.mxu0
  %7882 = vmatpush.msra.mxu0 0.0
  %7883 = vmatpush.msra.mxu0 0.0
  %7884 = vmatpush.msra.mxu0 0.0
  %7885 = vmatpush.msra.mxu0 0.0
  %7886 = vmatpush.msra.mxu0 0.0
  %7887 = vmatpush.msra.mxu0 0.0
  %7888 = vmatpush.msra.mxu0 0.0
  %7889 = vmatpush.msra.mxu0 0.0
  %7890 = vmatpush.msra.mxu0 0.0
  %7891 = vmatpush.msra.mxu0 0.0
  %7892 = vmatpush.msra.mxu0 0.0
  %7893 = vmatpush.msra.mxu0 0.0
  %v7894 = vand.u32 %v7777, 4294901760
  %7895 = vmatpush.msra.mxu0 %v7894
  %v7896 = vand.u32 %v7776, 4294901760
  %7897 = vmatpush.msra.mxu0 %v7896
  %v7898 = vand.u32 %v7775, 4294901760
  %7899 = vmatpush.msra.mxu0 %v7898
  %v7900 = vand.u32 %v7774, 4294901760
  %7901 = vmatpush.msra.mxu0 %v7900
  %v7902 = vand.u32 %v7780, 4294901760
  %v7903 = vsub.f32 %v7780, %v7902
  %v7904 = vand.u32 %v7903, 4294901760
  %7905 = vmatmul.f32.gmra.mxu0 %v7904
  %v7906 = vpop.f32.mrf.mxu0
  %v7907 = vadd.f32 %v7880, %v7906
  %7908 = vdwg.mxu0
  %7909 = vmatpush.msra.mxu0 0.0
  %7910 = vmatpush.msra.mxu0 0.0
  %7911 = vmatpush.msra.mxu0 0.0
  %7912 = vmatpush.msra.mxu0 0.0
  %7913 = vmatpush.msra.mxu0 0.0
  %7914 = vmatpush.msra.mxu0 0.0
  %7915 = vmatpush.msra.mxu0 0.0
  %7916 = vmatpush.msra.mxu0 0.0
  %7917 = vmatpush.msra.mxu0 0.0
  %7918 = vmatpush.msra.mxu0 0.0
  %7919 = vmatpush.msra.mxu0 0.0
  %7920 = vmatpush.msra.mxu0 0.0
  %v7921 = vand.u32 %v7777, 4294901760
  %v7922 = vsub.f32 %v7777, %v7921
  %v7923 = vand.u32 %v7922, 4294901760
  %7924 = vmatpush.msra.mxu0 %v7923
  %v7925 = vand.u32 %v7776, 4294901760
  %v7926 = vsub.f32 %v7776, %v7925
  %v7927 = vand.u32 %v7926, 4294901760
  %7928 = vmatpush.msra.mxu0 %v7927
  %v7929 = vand.u32 %v7775, 4294901760
  %v7930 = vsub.f32 %v7775, %v7929
  %v7931 = vand.u32 %v7930, 4294901760
  %7932 = vmatpush.msra.mxu0 %v7931
  %v7933 = vand.u32 %v7774, 4294901760
  %v7934 = vsub.f32 %v7774, %v7933
  %v7935 = vand.u32 %v7934, 4294901760
  %7936 = vmatpush.msra.mxu0 %v7935
  %v7937 = vand.u32 %v7780, 4294901760
  %7938 = vmatmul.f32.gmra.mxu0 %v7937
  %v7939 = vpop.f32.mrf.mxu0
  %v7940 = vadd.f32 %v7907, %v7939
  %7941 = vdwg.mxu0
  %7942 = vmatpush.msra.mxu0 0.0
  %7943 = vmatpush.msra.mxu0 0.0
  %7944 = vmatpush.msra.mxu0 0.0
  %7945 = vmatpush.msra.mxu0 0.0
  %7946 = vmatpush.msra.mxu0 0.0
  %7947 = vmatpush.msra.mxu0 0.0
  %7948 = vmatpush.msra.mxu0 0.0
  %7949 = vmatpush.msra.mxu0 0.0
  %7950 = vmatpush.msra.mxu0 0.0
  %7951 = vmatpush.msra.mxu0 0.0
  %7952 = vmatpush.msra.mxu0 0.0
  %7953 = vmatpush.msra.mxu0 0.0
  %v7954 = vand.u32 %v7777, 4294901760
  %7955 = vmatpush.msra.mxu0 %v7954
  %v7956 = vand.u32 %v7776, 4294901760
  %7957 = vmatpush.msra.mxu0 %v7956
  %v7958 = vand.u32 %v7775, 4294901760
  %7959 = vmatpush.msra.mxu0 %v7958
  %v7960 = vand.u32 %v7774, 4294901760
  %7961 = vmatpush.msra.mxu0 %v7960
  %v7962 = vand.u32 %v7780, 4294901760
  %7963 = vmatmul.f32.gmra.mxu0 %v7962
  %v7964 = vpop.f32.mrf.mxu0
  %v7965 = vadd.f32 %v7940, %v7964
  %7966 = vdwg.mxu0
  %v7968 = vsel %vm7778, %v7769, 0
  %7970 = vmatpush.msra.mxu0 0.0
  %7971 = vmatpush.msra.mxu0 0.0
  %7972 = vmatpush.msra.mxu0 0.0
  %7973 = vmatpush.msra.mxu0 0.0
  %7974 = vmatpush.msra.mxu0 0.0
  %7975 = vmatpush.msra.mxu0 0.0
  %7976 = vmatpush.msra.mxu0 0.0
  %7977 = vmatpush.msra.mxu0 0.0
  %7978 = vmatpush.msra.mxu0 0.0
  %7979 = vmatpush.msra.mxu0 0.0
  %7980 = vmatpush.msra.mxu0 0.0
  %7981 = vmatpush.msra.mxu0 0.0
  %v7982 = vand.u32 %v7773, 4294901760
  %7983 = vmatpush.msra.mxu0 %v7982
  %v7984 = vand.u32 %v7772, 4294901760
  %7985 = vmatpush.msra.mxu0 %v7984
  %v7986 = vand.u32 %v7771, 4294901760
  %7987 = vmatpush.msra.mxu0 %v7986
  %v7988 = vand.u32 %v7770, 4294901760
  %7989 = vmatpush.msra.mxu0 %v7988
  %v7990 = vand.u32 %v7968, 4294901760
  %v7991 = vsub.f32 %v7968, %v7990
  %v7992 = vand.u32 %v7991, 4294901760
  %v7993 = vsub.f32 %v7991, %v7992
  %v7994 = vand.u32 %v7993, 4294901760
  %7995 = vmatmul.f32.gmra.mxu0 %v7994
  %v7996 = vpop.f32.mrf.mxu0
  %v7997 = vadd.f32 %v7965, %v7996
  %7998 = vdwg.mxu0
  %7999 = vmatpush.msra.mxu0 0.0
  %8000 = vmatpush.msra.mxu0 0.0
  %8001 = vmatpush.msra.mxu0 0.0
  %8002 = vmatpush.msra.mxu0 0.0
  %8003 = vmatpush.msra.mxu0 0.0
  %8004 = vmatpush.msra.mxu0 0.0
  %8005 = vmatpush.msra.mxu0 0.0
  %8006 = vmatpush.msra.mxu0 0.0
  %8007 = vmatpush.msra.mxu0 0.0
  %8008 = vmatpush.msra.mxu0 0.0
  %8009 = vmatpush.msra.mxu0 0.0
  %8010 = vmatpush.msra.mxu0 0.0
  %v8011 = vand.u32 %v7773, 4294901760
  %v8012 = vsub.f32 %v7773, %v8011
  %v8013 = vand.u32 %v8012, 4294901760
  %v8014 = vsub.f32 %v8012, %v8013
  %v8015 = vand.u32 %v8014, 4294901760
  %8016 = vmatpush.msra.mxu0 %v8015
  %v8017 = vand.u32 %v7772, 4294901760
  %v8018 = vsub.f32 %v7772, %v8017
  %v8019 = vand.u32 %v8018, 4294901760
  %v8020 = vsub.f32 %v8018, %v8019
  %v8021 = vand.u32 %v8020, 4294901760
  %8022 = vmatpush.msra.mxu0 %v8021
  %v8023 = vand.u32 %v7771, 4294901760
  %v8024 = vsub.f32 %v7771, %v8023
  %v8025 = vand.u32 %v8024, 4294901760
  %v8026 = vsub.f32 %v8024, %v8025
  %v8027 = vand.u32 %v8026, 4294901760
  %8028 = vmatpush.msra.mxu0 %v8027
  %v8029 = vand.u32 %v7770, 4294901760
  %v8030 = vsub.f32 %v7770, %v8029
  %v8031 = vand.u32 %v8030, 4294901760
  %v8032 = vsub.f32 %v8030, %v8031
  %v8033 = vand.u32 %v8032, 4294901760
  %8034 = vmatpush.msra.mxu0 %v8033
  %v8035 = vand.u32 %v7968, 4294901760
  %8036 = vmatmul.f32.gmra.mxu0 %v8035
  %v8037 = vpop.f32.mrf.mxu0
  %v8038 = vadd.f32 %v7997, %v8037
  %8039 = vdwg.mxu0
  %8040 = vmatpush.msra.mxu0 0.0
  %8041 = vmatpush.msra.mxu0 0.0
  %8042 = vmatpush.msra.mxu0 0.0
  %8043 = vmatpush.msra.mxu0 0.0
  %8044 = vmatpush.msra.mxu0 0.0
  %8045 = vmatpush.msra.mxu0 0.0
  %8046 = vmatpush.msra.mxu0 0.0
  %8047 = vmatpush.msra.mxu0 0.0
  %8048 = vmatpush.msra.mxu0 0.0
  %8049 = vmatpush.msra.mxu0 0.0
  %8050 = vmatpush.msra.mxu0 0.0
  %8051 = vmatpush.msra.mxu0 0.0
  %v8052 = vand.u32 %v7773, 4294901760
  %v8053 = vsub.f32 %v7773, %v8052
  %8054 = vmatpush.msra.mxu0 %v8053
  %v8055 = vand.u32 %v7772, 4294901760
  %v8056 = vsub.f32 %v7772, %v8055
  %8057 = vmatpush.msra.mxu0 %v8056
  %v8058 = vand.u32 %v7771, 4294901760
  %v8059 = vsub.f32 %v7771, %v8058
  %8060 = vmatpush.msra.mxu0 %v8059
  %v8061 = vand.u32 %v7770, 4294901760
  %v8062 = vsub.f32 %v7770, %v8061
  %8063 = vmatpush.msra.mxu0 %v8062
  %v8064 = vand.u32 %v7968, 4294901760
  %v8065 = vsub.f32 %v7968, %v8064
  %8066 = vmatmul.f32.gmra.mxu0 %v8065
  %v8067 = vpop.f32.mrf.mxu0
  %v8068 = vadd.f32 %v8038, %v8067
  %8069 = vdwg.mxu0
  %8070 = vmatpush.msra.mxu0 0.0
  %8071 = vmatpush.msra.mxu0 0.0
  %8072 = vmatpush.msra.mxu0 0.0
  %8073 = vmatpush.msra.mxu0 0.0
  %8074 = vmatpush.msra.mxu0 0.0
  %8075 = vmatpush.msra.mxu0 0.0
  %8076 = vmatpush.msra.mxu0 0.0
  %8077 = vmatpush.msra.mxu0 0.0
  %8078 = vmatpush.msra.mxu0 0.0
  %8079 = vmatpush.msra.mxu0 0.0
  %8080 = vmatpush.msra.mxu0 0.0
  %8081 = vmatpush.msra.mxu0 0.0
  %v8082 = vand.u32 %v7773, 4294901760
  %8083 = vmatpush.msra.mxu0 %v8082
  %v8084 = vand.u32 %v7772, 4294901760
  %8085 = vmatpush.msra.mxu0 %v8084
  %v8086 = vand.u32 %v7771, 4294901760
  %8087 = vmatpush.msra.mxu0 %v8086
  %v8088 = vand.u32 %v7770, 4294901760
  %8089 = vmatpush.msra.mxu0 %v8088
  %v8090 = vand.u32 %v7968, 4294901760
  %v8091 = vsub.f32 %v7968, %v8090
  %v8092 = vand.u32 %v8091, 4294901760
  %8093 = vmatmul.f32.gmra.mxu0 %v8092
  %v8094 = vpop.f32.mrf.mxu0
  %v8095 = vadd.f32 %v8068, %v8094
  %8096 = vdwg.mxu0
  %8097 = vmatpush.msra.mxu0 0.0
  %8098 = vmatpush.msra.mxu0 0.0
  %8099 = vmatpush.msra.mxu0 0.0
  %8100 = vmatpush.msra.mxu0 0.0
  %8101 = vmatpush.msra.mxu0 0.0
  %8102 = vmatpush.msra.mxu0 0.0
  %8103 = vmatpush.msra.mxu0 0.0
  %8104 = vmatpush.msra.mxu0 0.0
  %8105 = vmatpush.msra.mxu0 0.0
  %8106 = vmatpush.msra.mxu0 0.0
  %8107 = vmatpush.msra.mxu0 0.0
  %8108 = vmatpush.msra.mxu0 0.0
  %v8109 = vand.u32 %v7773, 4294901760
  %v8110 = vsub.f32 %v7773, %v8109
  %v8111 = vand.u32 %v8110, 4294901760
  %8112 = vmatpush.msra.mxu0 %v8111
  %v8113 = vand.u32 %v7772, 4294901760
  %v8114 = vsub.f32 %v7772, %v8113
  %v8115 = vand.u32 %v8114, 4294901760
  %8116 = vmatpush.msra.mxu0 %v8115
  %v8117 = vand.u32 %v7771, 4294901760
  %v8118 = vsub.f32 %v7771, %v8117
  %v8119 = vand.u32 %v8118, 4294901760
  %8120 = vmatpush.msra.mxu0 %v8119
  %v8121 = vand.u32 %v7770, 4294901760
  %v8122 = vsub.f32 %v7770, %v8121
  %v8123 = vand.u32 %v8122, 4294901760
  %8124 = vmatpush.msra.mxu0 %v8123
  %v8125 = vand.u32 %v7968, 4294901760
  %8126 = vmatmul.f32.gmra.mxu0 %v8125
  %v8127 = vpop.f32.mrf.mxu0
  %v8128 = vadd.f32 %v8095, %v8127
  %8129 = vdwg.mxu0
  %8130 = vmatpush.msra.mxu0 0.0
  %8131 = vmatpush.msra.mxu0 0.0
  %8132 = vmatpush.msra.mxu0 0.0
  %8133 = vmatpush.msra.mxu0 0.0
  %8134 = vmatpush.msra.mxu0 0.0
  %8135 = vmatpush.msra.mxu0 0.0
  %8136 = vmatpush.msra.mxu0 0.0
  %8137 = vmatpush.msra.mxu0 0.0
  %8138 = vmatpush.msra.mxu0 0.0
  %8139 = vmatpush.msra.mxu0 0.0
  %8140 = vmatpush.msra.mxu0 0.0
  %8141 = vmatpush.msra.mxu0 0.0
  %v8142 = vand.u32 %v7773, 4294901760
  %8143 = vmatpush.msra.mxu0 %v8142
  %v8144 = vand.u32 %v7772, 4294901760
  %8145 = vmatpush.msra.mxu0 %v8144
  %v8146 = vand.u32 %v7771, 4294901760
  %8147 = vmatpush.msra.mxu0 %v8146
  %v8148 = vand.u32 %v7770, 4294901760
  %8149 = vmatpush.msra.mxu0 %v8148
  %v8150 = vand.u32 %v7968, 4294901760
  %8151 = vmatmul.f32.gmra.mxu0 %v8150
  %v8152 = vpop.f32.mrf.mxu0
  %v8153 = vadd.f32 %v8128, %v8152
  %8154 = vdwg.mxu0
  %v8155 = vperm.slane %v11, 3
  %v8156 = vadd.f32 %v8153, %v8155
  %v8157 = vxor.u32 %v8156, 2147483648
  %v8158 = vmul.f32 %v8157, 1.442695
  %v8159 = vpow.pop %v8158
  %v8160 = vadd.f32 %v8159, 1.0
  %v8161 = vrcp.pop %v8160
  %v8162 = vmul.f32 %v8160, %v8161
  %v8163 = vsub.f32 1.0, %v8162
  %v8164 = vmul.f32 %v8161, %v8163
  %v8165 = vadd.f32 %v8161, %v8164
  %vm8166 = vweird.f32 %v8160
  %vm8167 = vweird.f32 %v8161
  %vm8168 = vmor %vm8166, %vm8167
  %v8169 = vsel %vm8168, %v8161, %v8165
  %v8170 = vand.u32 2147483647, %v8160
  %vm8171 = vcmp.eq.f32.partialorder %v8170, 8.507059e+37
  %v8172 = vand.u32 %v8160, 2147483648
  %v8173 = vor.u32 1.1754944e-38, %v8172
  %v8174 = vsel %vm8171, %v8173, %v8169
  %v8175 = vmul.f32 1.0, %v8174
  %8177 = vrot.lane.b32.xlu0 %v8156, 32
  %v8178 = vpop.permute.xlu0 %8177
  %v8180 = vmul.f32 %v8175, %v8178
  %8182 = vrot.lane.b32.xlu0 %v8180, 64
  %v8183 = vpop.permute.xlu0 %8182
  %v8185 = vadd.f32 %v8156, %v8183
  %v8186 = vtanh.pop %v8185
  %v8187 = vsub.f32 1.0, %v8175
  %8189 = vrot.lane.b32.xlu0 %v8186, 96
  %v8190 = vpop.permute.xlu0 %8189
  %v8192 = vmul.f32 %v8187, %v8190
  %8193 = vrot.lane.b32.xlu0 %v25, 32
  %v8194 = vpop.permute.xlu0 %8193
  %v8196 = vmul.f32 %v8175, %v8194
  %v8197 = vadd.f32 %v8192, %v8196
  %v8198 = vld [vmem:[%s0 + $0x180] sm:$0xff]
  %v8199 = vld [vmem:[%s0 + $0x198] sm:$0xff]
  %v8200 = vld [vmem:[%s0 + $0x1b0] sm:$0xff]
  %v8201 = vld [vmem:[%s0 + $0x1c8] sm:$0xff]
  %v8202 = vperm.slane %v11, 4
  %8204 = vrot.lane.b32.xlu0 %v8197, 96
  %v8205 = vpop.permute.xlu0 %8204
  %v8206 = vsel %vm7778, %v8205, 0
  %8208 = vmatpush.msra.mxu0 0.0
  %8209 = vmatpush.msra.mxu0 0.0
  %8210 = vmatpush.msra.mxu0 0.0
  %8211 = vmatpush.msra.mxu0 0.0
  %8212 = vmatpush.msra.mxu0 0.0
  %8213 = vmatpush.msra.mxu0 0.0
  %8214 = vmatpush.msra.mxu0 0.0
  %8215 = vmatpush.msra.mxu0 0.0
  %8216 = vmatpush.msra.mxu0 0.0
  %8217 = vmatpush.msra.mxu0 0.0
  %8218 = vmatpush.msra.mxu0 0.0
  %8219 = vmatpush.msra.mxu0 0.0
  %v8220 = vand.u32 %v8201, 4294901760
  %8221 = vmatpush.msra.mxu0 %v8220
  %v8222 = vand.u32 %v8200, 4294901760
  %8223 = vmatpush.msra.mxu0 %v8222
  %v8224 = vand.u32 %v8199, 4294901760
  %8225 = vmatpush.msra.mxu0 %v8224
  %v8226 = vand.u32 %v8198, 4294901760
  %8227 = vmatpush.msra.mxu0 %v8226
  %v8228 = vand.u32 %v8206, 4294901760
  %v8229 = vsub.f32 %v8206, %v8228
  %v8230 = vand.u32 %v8229, 4294901760
  %v8231 = vsub.f32 %v8229, %v8230
  %v8232 = vand.u32 %v8231, 4294901760
  %8233 = vmatmul.f32.gmra.mxu0 %v8232
  %v8234 = vpop.f32.mrf.mxu0
  %v8235 = vadd.f32 %v8202, %v8234
  %8236 = vdwg.mxu0
  %8237 = vmatpush.msra.mxu0 0.0
  %8238 = vmatpush.msra.mxu0 0.0
  %8239 = vmatpush.msra.mxu0 0.0
  %8240 = vmatpush.msra.mxu0 0.0
  %8241 = vmatpush.msra.mxu0 0.0
  %8242 = vmatpush.msra.mxu0 0.0
  %8243 = vmatpush.msra.mxu0 0.0
  %8244 = vmatpush.msra.mxu0 0.0
  %8245 = vmatpush.msra.mxu0 0.0
  %8246 = vmatpush.msra.mxu0 0.0
  %8247 = vmatpush.msra.mxu0 0.0
  %8248 = vmatpush.msra.mxu0 0.0
  %v8249 = vand.u32 %v8201, 4294901760
  %v8250 = vsub.f32 %v8201, %v8249
  %v8251 = vand.u32 %v8250, 4294901760
  %v8252 = vsub.f32 %v8250, %v8251
  %v8253 = vand.u32 %v8252, 4294901760
  %8254 = vmatpush.msra.mxu0 %v8253
  %v8255 = vand.u32 %v8200, 4294901760
  %v8256 = vsub.f32 %v8200, %v8255
  %v8257 = vand.u32 %v8256, 4294901760
  %v8258 = vsub.f32 %v8256, %v8257
  %v8259 = vand.u32 %v8258, 4294901760
  %8260 = vmatpush.msra.mxu0 %v8259
  %v8261 = vand.u32 %v8199, 4294901760
  %v8262 = vsub.f32 %v8199, %v8261
  %v8263 = vand.u32 %v8262, 4294901760
  %v8264 = vsub.f32 %v8262, %v8263
  %v8265 = vand.u32 %v8264, 4294901760
  %8266 = vmatpush.msra.mxu0 %v8265
  %v8267 = vand.u32 %v8198, 4294901760
  %v8268 = vsub.f32 %v8198, %v8267
  %v8269 = vand.u32 %v8268, 4294901760
  %v8270 = vsub.f32 %v8268, %v8269
  %v8271 = vand.u32 %v8270, 4294901760
  %8272 = vmatpush.msra.mxu0 %v8271
  %v8273 = vand.u32 %v8206, 4294901760
  %8274 = vmatmul.f32.gmra.mxu0 %v8273
  %v8275 = vpop.f32.mrf.mxu0
  %v8276 = vadd.f32 %v8235, %v8275
  %8277 = vdwg.mxu0
  %8278 = vmatpush.msra.mxu0 0.0
  %8279 = vmatpush.msra.mxu0 0.0
  %8280 = vmatpush.msra.mxu0 0.0
  %8281 = vmatpush.msra.mxu0 0.0
  %8282 = vmatpush.msra.mxu0 0.0
  %8283 = vmatpush.msra.mxu0 0.0
  %8284 = vmatpush.msra.mxu0 0.0
  %8285 = vmatpush.msra.mxu0 0.0
  %8286 = vmatpush.msra.mxu0 0.0
  %8287 = vmatpush.msra.mxu0 0.0
  %8288 = vmatpush.msra.mxu0 0.0
  %8289 = vmatpush.msra.mxu0 0.0
  %v8290 = vand.u32 %v8201, 4294901760
  %v8291 = vsub.f32 %v8201, %v8290
  %8292 = vmatpush.msra.mxu0 %v8291
  %v8293 = vand.u32 %v8200, 4294901760
  %v8294 = vsub.f32 %v8200, %v8293
  %8295 = vmatpush.msra.mxu0 %v8294
  %v8296 = vand.u32 %v8199, 4294901760
  %v8297 = vsub.f32 %v8199, %v8296
  %8298 = vmatpush.msra.mxu0 %v8297
  %v8299 = vand.u32 %v8198, 4294901760
  %v8300 = vsub.f32 %v8198, %v8299
  %8301 = vmatpush.msra.mxu0 %v8300
  %v8302 = vand.u32 %v8206, 4294901760
  %v8303 = vsub.f32 %v8206, %v8302
  %8304 = vmatmul.f32.gmra.mxu0 %v8303
  %v8305 = vpop.f32.mrf.mxu0
  %v8306 = vadd.f32 %v8276, %v8305
  %8307 = vdwg.mxu0
  %8308 = vmatpush.msra.mxu0 0.0
  %8309 = vmatpush.msra.mxu0 0.0
  %8310 = vmatpush.msra.mxu0 0.0
  %8311 = vmatpush.msra.mxu0 0.0
  %8312 = vmatpush.msra.mxu0 0.0
  %8313 = vmatpush.msra.mxu0 0.0
  %8314 = vmatpush.msra.mxu0 0.0
  %8315 = vmatpush.msra.mxu0 0.0
  %8316 = vmatpush.msra.mxu0 0.0
  %8317 = vmatpush.msra.mxu0 0.0
  %8318 = vmatpush.msra.mxu0 0.0
  %8319 = vmatpush.msra.mxu0 0.0
  %v8320 = vand.u32 %v8201, 4294901760
  %8321 = vmatpush.msra.mxu0 %v8320
  %v8322 = vand.u32 %v8200, 4294901760
  %8323 = vmatpush.msra.mxu0 %v8322
  %v8324 = vand.u32 %v8199, 4294901760
  %8325 = vmatpush.msra.mxu0 %v8324
  %v8326 = vand.u32 %v8198, 4294901760
  %8327 = vmatpush.msra.mxu0 %v8326
  %v8328 = vand.u32 %v8206, 4294901760
  %v8329 = vsub.f32 %v8206, %v8328
  %v8330 = vand.u32 %v8329, 4294901760
  %8331 = vmatmul.f32.gmra.mxu0 %v8330
  %v8332 = vpop.f32.mrf.mxu0
  %v8333 = vadd.f32 %v8306, %v8332
  %8334 = vdwg.mxu0
  %8335 = vmatpush.msra.mxu0 0.0
  %8336 = vmatpush.msra.mxu0 0.0
  %8337 = vmatpush.msra.mxu0 0.0
  %8338 = vmatpush.msra.mxu0 0.0
  %8339 = vmatpush.msra.mxu0 0.0
  %8340 = vmatpush.msra.mxu0 0.0
  %8341 = vmatpush.msra.mxu0 0.0
  %8342 = vmatpush.msra.mxu0 0.0
  %8343 = vmatpush.msra.mxu0 0.0
  %8344 = vmatpush.msra.mxu0 0.0
  %8345 = vmatpush.msra.mxu0 0.0
  %8346 = vmatpush.msra.mxu0 0.0
  %v8347 = vand.u32 %v8201, 4294901760
  %v8348 = vsub.f32 %v8201, %v8347
  %v8349 = vand.u32 %v8348, 4294901760
  %8350 = vmatpush.msra.mxu0 %v8349
  %v8351 = vand.u32 %v8200, 4294901760
  %v8352 = vsub.f32 %v8200, %v8351
  %v8353 = vand.u32 %v8352, 4294901760
  %8354 = vmatpush.msra.mxu0 %v8353
  %v8355 = vand.u32 %v8199, 4294901760
  %v8356 = vsub.f32 %v8199, %v8355
  %v8357 = vand.u32 %v8356, 4294901760
  %8358 = vmatpush.msra.mxu0 %v8357
  %v8359 = vand.u32 %v8198, 4294901760
  %v8360 = vsub.f32 %v8198, %v8359
  %v8361 = vand.u32 %v8360, 4294901760
  %8362 = vmatpush.msra.mxu0 %v8361
  %v8363 = vand.u32 %v8206, 4294901760
  %8364 = vmatmul.f32.gmra.mxu0 %v8363
  %v8365 = vpop.f32.mrf.mxu0
  %v8366 = vadd.f32 %v8333, %v8365
  %8367 = vdwg.mxu0
  %8368 = vmatpush.msra.mxu0 0.0
  %8369 = vmatpush.msra.mxu0 0.0
  %8370 = vmatpush.msra.mxu0 0.0
  %8371 = vmatpush.msra.mxu0 0.0
  %8372 = vmatpush.msra.mxu0 0.0
  %8373 = vmatpush.msra.mxu0 0.0
  %8374 = vmatpush.msra.mxu0 0.0
  %8375 = vmatpush.msra.mxu0 0.0
  %8376 = vmatpush.msra.mxu0 0.0
  %8377 = vmatpush.msra.mxu0 0.0
  %8378 = vmatpush.msra.mxu0 0.0
  %8379 = vmatpush.msra.mxu0 0.0
  %v8380 = vand.u32 %v8201, 4294901760
  %8381 = vmatpush.msra.mxu0 %v8380
  %v8382 = vand.u32 %v8200, 4294901760
  %8383 = vmatpush.msra.mxu0 %v8382
  %v8384 = vand.u32 %v8199, 4294901760
  %8385 = vmatpush.msra.mxu0 %v8384
  %v8386 = vand.u32 %v8198, 4294901760
  %8387 = vmatpush.msra.mxu0 %v8386
  %v8388 = vand.u32 %v8206, 4294901760
  %8389 = vmatmul.f32.gmra.mxu0 %v8388
  %v8390 = vpop.f32.mrf.mxu0
  %v8391 = vadd.f32 %v8366, %v8390
  %8392 = vdwg.mxu0
  %v8393 = vlaneseq
  %v8394 = vand.u32 %v8393, 127
  %vm8395 = vcmp.ge.s32.totalorder %v8394, 33
  %vm8396 = vcmp.lt.s32.totalorder %v8394, 39
  %vm8397 = vmand %vm8395, %vm8396
  %v8398 = vsel %vm8397, %v8391, -1e+30
  %8399 = vmax.xlane.f32.xlu0 %v8398
  %v8400 = vpop.xlane.xlu0 %8399
  %v8401 = vsub.f32 %v8398, %v8400
  %v8402 = vmul.f32 %v8401, 1.442695
  %v8403 = vpow.pop %v8402
  %8404 = vadd.xlane.f32.xlu0 %v8403
  %v8405 = vpop.xlane.xlu0 %8404
  %v8406 = vlog2.pop %v8405
  %v8407 = vmul.f32 %v8406, 0.6931472
  %v8408 = vsub.f32 %v8401, %v8407
  %v8409 = vld [vmem:[%s1 + $0x70] sm:$0xff]
  %v8410 = vadd.f32 %v8391, %v8409
  %v8411 = vsel %vm8397, %v8410, -1e+30
  %8412 = vmax.xlane.f32.xlu0 %v8411
  %v8413 = vpop.xlane.xlu0 %8412
  %vm8414 = vcmp.ge.f32.partialorder %v8411, %v8413
  %vm8415 = vmand %vm8414, %vm8397
  %v8416 = vsel %vm8415, %v8394, 128
  %v8417 = vand.u32 %v8416, 65535
  %v8418 = vshra.s32 %v8416, 16
  %v8419 = vcvt.s32.f32 %v8417
  %v8420 = vcvt.s32.f32 %v8418
  %8421 = vmin.xlane.f32.xlu0 %v8420
  %v8422 = vpop.xlane.xlu0 %8421
  %vm8423 = vcmp.eq.f32.partialorder %v8420, %v8422
  %v8424 = vsel %vm8423, %v8419, inf
  %8425 = vmin.xlane.f32.xlu0 %v8424
  %v8426 = vpop.xlane.xlu0 %8425
  %v8427 = vcvt.f32.s32 %v8426
  %v8428 = vcvt.f32.s32 %v8422
  %v8429 = vshll.u32 %v8428, 16
  %v8430 = vadd.s32 %v8429, %v8427
  %vm8431 = vcmp.eq.s32.totalorder %v8394, %v8430
  %v8432 = vsel %vm8431, %v8408, 0.0
  %8433 = vadd.xlane.f32.xlu0 %v8432
  %v8434 = vpop.xlane.xlu0 %8433
  %v8435 = vsub.s32 %v8430, 33
  %v8436 = vcvt.s32.f32 %v8435
  %vm8437 = vcmp.eq.s32.totalorder %v8394, 39
  %vm8438 = vcmp.eq.s32.totalorder %v8394, 40
  %v8439 = vsel %vm8438, %v8436, %v8391
  %v8440 = vsel %vm8437, %v8434, %v8439
  %8441 = vst [vmem:[%s2] sm:$0xff] %v8440
  // Predicated region
  $region10: #{actor_critic_forward.1} parent=0 // pred_check
    _
  $region11: #{actor_critic_forward.1} parent=0 // pred_check_branch
    %8443 = sbr.rel (0) target = $region13
  $region12: #{actor_critic_forward.1} parent=0 // pred_region
    _
  $region13: #{actor_critic_forward.1} parent=0 // pred_fallthru
    _
  // Predicated region
  $region14: #{actor_critic_forward.1} parent=0 // pred_check
    _
  $region15: #{actor_critic_forward.1} parent=0 // pred_check_branch
    %8445 = sbr.rel (0) target = $region17
  $region16: #{actor_critic_forward.1} parent=0 // pred_region
    _
  $region17: #{actor_critic_forward.1} parent=0 // pred_fallthru
    _

</llo_original>
